<compile_context>
chip_gen: v6e
topology: v6e:2x2x1
jax: 0.10.0
libtpu: 0.0.40
codegen_flags: <defaults>
</compile_context>

<pallas_src>
import functools

import jax
import jax.numpy as jnp
from jax import lax
from jax.experimental import pallas as pl
from jax.experimental.pallas import tpu as pltpu

_MIB = 1024 * 1024


# ----------------------------------------------------------------------------
# In-kernel helpers
# ----------------------------------------------------------------------------
def _upsample2x_nearest(v):
    """(R, w, C) -> (2R, 2w, C) nearest-neighbour, lane dim (C) untouched."""
    r, w, c = v.shape
    # column repeat: (R, w, C) -> (R, w, 2, C) -> (R, 2w, C)
    v = jnp.broadcast_to(v[:, :, None, :], (r, w, 2, c)).reshape(r, 2 * w, c)
    # row repeat (leading dim, cheap): (R, 2w, C) -> (R, 2, 2w, C) -> (2R, 2w, C)
    v = jnp.broadcast_to(v[:, None, :, :], (r, 2, 2 * w, c)).reshape(2 * r, 2 * w, c)
    return v


def _make_kernel(TR, W, Cx, Cr, Cout, cdt):
    """Fused decoder-block kernel for one (batch, row-tile) grid point."""
    Cin1 = Cx + Cr

    def kernel(xm_ref, xt_ref, xb_ref, rm_ref, rt_ref, rb_ref,
               w1_ref, s1_ref, b1_ref, w2_ref, s2_ref, b2_ref,
               o_ref, pad1_ref, pad2_ref):
        r = pl.program_id(1)
        is_top = r == 0
        is_bot = r == pl.num_programs(1) - 1

        # --- narrow per-step zeroing: only the 'same' left/right pad columns ---
        # (kept per-step on purpose: scratch is per-core under megacore sharding)
        pad1_ref[:, 0:1, :] = jnp.zeros((TR + 4, 1, Cin1), cdt)
        pad1_ref[:, W + 1:W + 2, :] = jnp.zeros((TR + 4, 1, Cin1), cdt)
        pad2_ref[:, 0:1, :] = jnp.zeros((TR + 2, 1, Cout), cdt)
        pad2_ref[:, W + 1:W + 2, :] = jnp.zeros((TR + 2, 1, Cout), cdt)

        # ---- assemble conv1 input tile: cat([upsample2x(x), residual], ch) ----
        # Direct disjoint channel-range stores (no lane concat of xup & rcat).
        xcat = jnp.concatenate([xt_ref[0], xm_ref[0], xb_ref[0]], axis=0)  # (TR//2+2, W//2, Cx)
        xup = _upsample2x_nearest(xcat)                                    # (TR+4, W, Cx)
        rcat = jnp.concatenate([rt_ref[0], rm_ref[0], rb_ref[0]], axis=0)  # (TR+4, W, Cr)

        pad1_ref[:, 1:W + 1, 0:Cx] = xup
        pad1_ref[:, 1:W + 1, Cx:Cin1] = rcat

        # Halo rows that fall outside the image are 'same' zero padding:
        # boundary-only narrow zero stores instead of per-step full-row selects.
        @pl.when(is_top)
        def _():
            for rr in (0, 1):
                pad1_ref[rr] = jnp.zeros((W + 2, Cin1), cdt)

        @pl.when(is_bot)
        def _():
            for rr in (TR + 2, TR + 3):
                pad1_ref[rr] = jnp.zeros((W + 2, Cin1), cdt)

        # ---- conv1 (3x3 'same') + folded BN + ReLU -----------------------------
        # 9 accumulated matmuls of K=Cin1 (dy = free leading-dim offsets,
        # dx = sublane shifts); no 9-way lane concat.
        m1 = (TR + 2) * W
        acc1 = jnp.zeros((m1, Cout), jnp.float32)
        for dy in range(3):
            for dx in range(3):
                tap = pad1_ref[dy:dy + TR + 2, dx:dx + W, :].reshape(m1, Cin1)
                acc1 = acc1 + jnp.dot(tap, w1_ref[dy * 3 + dx],
                                      preferred_element_type=jnp.float32)
        y1 = jnp.maximum(acc1 * s1_ref[...] + b1_ref[...], 0.0)

        # TODO(synk): Dropout2d between c1 and c2 is identity (eval mode only).
        pad2_ref[:, 1:W + 1, :] = y1.reshape(TR + 2, W, Cout).astype(cdt)

        # Intermediate rows outside the image are conv2's 'same' zero padding
        # (NOT conv1-of-zeros) -> overwrite them with zeros at the boundaries.
        @pl.when(is_top)
        def _():
            pad2_ref[0] = jnp.zeros((W + 2, Cout), cdt)

        @pl.when(is_bot)
        def _():
            pad2_ref[TR + 1] = jnp.zeros((W + 2, Cout), cdt)

        # ---- conv2 (3x3 'same') + folded BN + ReLU -----------------------------
        m2 = TR * W
        acc2 = jnp.zeros((m2, Cout), jnp.float32)
        for dy in range(3):
            for dx in range(3):
                tap = pad2_ref[dy:dy + TR, dx:dx + W, :].reshape(m2, Cout)
                acc2 = acc2 + jnp.dot(tap, w2_ref[dy * 3 + dx],
                                      preferred_element_type=jnp.float32)
        y2 = jnp.maximum(acc2 * s2_ref[...] + b2_ref[...], 0.0)
        o_ref[0] = y2.reshape(TR, W, Cout).astype(o_ref.dtype)

    return kernel


# ----------------------------------------------------------------------------
# VMEM-budget helpers (generation aware)
# ----------------------------------------------------------------------------
def _vmem_capacity_bytes():
    try:
        return int(pltpu.get_tpu_info().vmem_capacity_bytes)
    except Exception:
        return 64 * _MIB          # conservative fallback (v7x-sized)


def _vmem_limit_for(capacity):
    if capacity >= 96 * _MIB:     # v5e / v6e: 128 MiB physical VMEM
        return 100 * _MIB
    return max(capacity - 8 * _MIB, 32 * _MIB)   # v7x: 64 MiB -> ~56 MiB


def _step_vmem_bytes(TR, W, Cx, Cr, Cout, itemsize):
    """Rough per-grid-step VMEM footprint for the fused kernel."""
    Cin1 = Cx + Cr
    TRh, Wh = TR // 2, W // 2
    pad1 = (TR + 4) * (W + 2) * Cin1 * itemsize
    pad2 = (TR + 2) * (W + 2) * Cout * itemsize
    x_in = (TRh + 2) * Wh * Cx * itemsize
    r_in = (TR + 4) * W * Cr * itemsize
    o_out = TR * W * Cout * itemsize
    io = 2 * (x_in + r_in + o_out)                      # double-buffered blocks
    wts = 2 * (9 * Cin1 * Cout + 9 * Cout * Cout + 4 * Cout) * 4
    acc = ((TR + 2) * W * (Cin1 + Cout) + TR * W * Cout) * 4   # live f32 values
    return pad1 + pad2 + io + wts + acc


def _pick_row_tile(N, H, W, Cx, Cr, Cout, itemsize, vmem_limit):
    budget = int(0.6 * vmem_limit)                      # headroom for compiler scratch
    cands = sorted((t for t in range(2, H + 1, 2) if H % t == 0), reverse=True)
    if not cands:
        return H
    fits = [t for t in cands
            if _step_vmem_bytes(t, W, Cx, Cr, Cout, itemsize) <= budget]
    # keep both TensorCores busy on v7x: at least 2 grid steps overall
    good = [t for t in fits if N * (H // t) >= 2]
    if good:
        return good[0]
    if fits:
        return fits[0]
    return cands[-1]


# ----------------------------------------------------------------------------
# Pallas wrappers
# ----------------------------------------------------------------------------
@functools.partial(jax.jit, static_argnames=("compute_dtype", "row_tile"))
def decoder_block_nhwc(x_nhwc, residual_nhwc, params, *,
                       compute_dtype=jnp.float32, row_tile=None):
    """Pallas DecoderBlock.forward (eval mode), native NHWC (no transposes)."""
    N, Hh, Wh, Cx = x_nhwc.shape
    Nr, H, W, Cr = residual_nhwc.shape
    assert Nr == N and H == 2 * Hh and W == 2 * Wh
    Cout = params["w1"].shape[-1]
    Cin1 = Cx + Cr
    assert params["w1"].shape == (3, 3, Cin1, Cout)
    assert params["w2"].shape == (3, 3, Cout, Cout)

    cdt = compute_dtype
    cap = _vmem_capacity_bytes()
    vmem_limit = _vmem_limit_for(cap)

    if row_tile is None:
        row_tile = _pick_row_tile(N, H, W, Cx, Cr, Cout,
                                  jnp.dtype(cdt).itemsize, vmem_limit)
    TR = row_tile
    assert H % TR == 0 and TR % 2 == 0, "row_tile must be even and divide H"
    R = H // TR
    TRh = TR // 2

    xh = x_nhwc.astype(cdt)
    rh = residual_nhwc.astype(cdt)

    # Weights as (9, Cin, Cout) so a single static leading index picks one tap;
    # folded-BN scale/bias stay f32.
    w1 = params["w1"].reshape(9, Cin1, Cout).astype(cdt)
    w2 = params["w2"].reshape(9, Cout, Cout).astype(cdt)
    s1 = params["s1"].astype(jnp.float32)
    b1 = params["b1"].astype(jnp.float32)
    s2 = params["s2"].astype(jnp.float32)
    b2 = params["b2"].astype(jnp.float32)

    kernel = _make_kernel(TR, W, Cx, Cr, Cout, cdt)

    in_specs = [
        # x: main row tile + 1-row top/bottom halos (half resolution, clamped).
        pl.BlockSpec((1, TRh, Wh, Cx), lambda n, r: (n, r, 0, 0)),
        pl.BlockSpec((1, 1, Wh, Cx),
                     lambda n, r: (n, jnp.maximum(r * TRh - 1, 0), 0, 0)),
        pl.BlockSpec((1, 1, Wh, Cx),
                     lambda n, r: (n, jnp.minimum((r + 1) * TRh, Hh - 1), 0, 0)),
        # residual: main row tile + 2-row top/bottom halos (full resolution).
        pl.BlockSpec((1, TR, W, Cr), lambda n, r: (n, r, 0, 0)),
        pl.BlockSpec((1, 2, W, Cr),
                     lambda n, r: (n, jnp.maximum(r * TRh - 1, 0), 0, 0)),
        pl.BlockSpec((1, 2, W, Cr),
                     lambda n, r: (n, jnp.minimum((r + 1) * TRh, Hh - 1), 0, 0)),
        # weights + folded BN scale/bias: constant index maps -> resident.
        pl.BlockSpec((9, Cin1, Cout), lambda n, r: (0, 0, 0)),
        pl.BlockSpec((1, Cout), lambda n, r: (0, 0)),
        pl.BlockSpec((1, Cout), lambda n, r: (0, 0)),
        pl.BlockSpec((9, Cout, Cout), lambda n, r: (0, 0, 0)),
        pl.BlockSpec((1, Cout), lambda n, r: (0, 0)),
        pl.BlockSpec((1, Cout), lambda n, r: (0, 0)),
    ]

    out = pl.pallas_call(
        kernel,
        out_shape=jax.ShapeDtypeStruct((N, H, W, Cout), cdt),
        grid=(N, R),
        in_specs=in_specs,
        out_specs=pl.BlockSpec((1, TR, W, Cout), lambda n, r: (n, r, 0, 0)),
        scratch_shapes=[
            pltpu.VMEM((TR + 4, W + 2, Cin1), cdt),   # padded conv1 input tile
            pltpu.VMEM((TR + 2, W + 2, Cout), cdt),   # padded intermediate tile
        ],
        compiler_params=pltpu.CompilerParams(
            dimension_semantics=("parallel", "parallel"),
            vmem_limit_bytes=vmem_limit,
        ),
    )(xh, xh, xh, rh, rh, rh, w1, s1, b1, w2, s2, b2)

    return out


@functools.partial(jax.jit, static_argnames=("compute_dtype", "row_tile"))
def decoder_block(x_nchw, residual_nchw, params, *, compute_dtype=jnp.float32,
                  row_tile=None):
    """NCHW interface matching PyTorch; prefer decoder_block_nhwc in NHWC models
    to avoid the two boundary relayout passes."""
    xh = jnp.transpose(x_nchw, (0, 2, 3, 1))
    rh = jnp.transpose(residual_nchw, (0, 2, 3, 1))
    out = decoder_block_nhwc(xh, rh, params, compute_dtype=compute_dtype,
                             row_tile=row_tile)
    return jnp.transpose(out, (0, 3, 1, 2))


# ----------------------------------------------------------------------------
# Deterministic parameter init (Conv bias + eval-mode BN folded to scale/bias)
# ----------------------------------------------------------------------------
def init_params(key, c_in, c_out):
    def one(k, cin, cout):
        kw, kb, kg, kbe, km, kv = jax.random.split(k, 6)
        w = 0.1 * jax.random.normal(kw, (3, 3, cin, cout), jnp.float32)   # HWIO
        conv_b = 0.05 * jax.random.normal(kb, (cout,), jnp.float32)
        gamma = 1.0 + 0.1 * jax.random.normal(kg, (cout,), jnp.float32)
        beta = 0.1 * jax.random.normal(kbe, (cout,), jnp.float32)
        mean = 0.05 * jax.random.normal(km, (cout,), jnp.float32)
        var = 1.0 + 0.1 * jnp.abs(jax.random.normal(kv, (cout,), jnp.float32))
        scale = gamma / jnp.sqrt(var + 1e-5)
        bias = beta + (conv_b - mean) * scale
        return w, scale.reshape(1, cout), bias.reshape(1, cout)

    k1, k2 = jax.random.split(key)
    w1, s1, b1 = one(k1, c_in, c_out)
    w2, s2, b2 = one(k2, c_out, c_out)
    return dict(w1=w1, s1=s1, b1=b1, w2=w2, s2=s2, b2=b2)


# ----------------------------------------------------------------------------
# Pure-JAX reference (for correctness check)
# ----------------------------------------------------------------------------
def decoder_block_ref(x_nchw, residual_nchw, p):
    x = jnp.transpose(x_nchw, (0, 2, 3, 1))
    res = jnp.transpose(residual_nchw, (0, 2, 3, 1))
    xup = jnp.repeat(jnp.repeat(x, 2, axis=1), 2, axis=2)        # nearest 2x
    h = jnp.concatenate([xup, res], axis=-1)                     # cat([u(x), residual])

    def cbr(hh, w, s, b):
        y = lax.conv_general_dilated(hh, w, (1, 1), "SAME",
                                     dimension_numbers=("NHWC", "HWIO", "NHWC"),
                                     precision=lax.Precision.HIGHEST)
        return jnp.maximum(y * s[0] + b[0], 0.0)

    h1 = cbr(h, p["w1"], p["s1"], p["b1"])
    out = cbr(h1, p["w2"], p["s2"], p["b2"])
    return jnp.transpose(out, (0, 3, 1, 2))


# ----------------------------------------------------------------------------
if __name__ == "__main__":
    key = jax.random.PRNGKey(0)
    k_params, k_x, k_res = jax.random.split(key, 3)

    N = 2
    num_filters = 8            # Cout (and residual channel count)
    H, W = 16, 16              # residual / output spatial size
    Cx = 2 * num_filters       # x comes from the deeper level at half resolution
    Cr = num_filters

    params = init_params(k_params, Cx + Cr, num_filters)
    x = jax.random.normal(k_x, (N, Cx, H // 2, W // 2), jnp.float32)
    residual = jax.random.normal(k_res, (N, Cr, H, W), jnp.float32)

    out_ref = decoder_block_ref(x, residual, params)

    # f32 path with explicit row_tile=8: strict check, exercises 2 row tiles
    # per image (top + bottom boundary handling on different grid steps).
    out = decoder_block(x, residual, params, compute_dtype=jnp.float32, row_tile=8)
    jax.block_until_ready(out)
    assert out.shape == (N, num_filters, H, W)
    assert jnp.allclose(out, out_ref, atol=1e-3, rtol=1e-3), "f32 output mismatch"

    # bf16 path with auto (VMEM-budget-aware) row_tile: loose check.
    out_bf16 = decoder_block(x, residual, params, compute_dtype=jnp.bfloat16)
    jax.block_until_ready(out_bf16)
    assert jnp.allclose(out_bf16.astype(jnp.float32), out_ref,
                        atol=1e-1, rtol=1e-1), "bf16 output mismatch"

    print("KERNEL_OK")
</pallas_src>

<mosaic_0001>
module attributes {stable_mosaic.version = 11 : i64} {
  func.func @kernel(%arg0: i32, %arg1: i32, %arg2: memref<1x4x8x16xf32, #tpu.memory_space<vmem>>, %arg3: memref<1x1x8x16xf32, #tpu.memory_space<vmem>>, %arg4: memref<1x1x8x16xf32, #tpu.memory_space<vmem>>, %arg5: memref<1x8x16x8xf32, #tpu.memory_space<vmem>>, %arg6: memref<1x2x16x8xf32, #tpu.memory_space<vmem>>, %arg7: memref<1x2x16x8xf32, #tpu.memory_space<vmem>>, %arg8: memref<9x24x8xf32, #tpu.memory_space<vmem>>, %arg9: memref<1x8xf32, #tpu.memory_space<vmem>>, %arg10: memref<1x8xf32, #tpu.memory_space<vmem>>, %arg11: memref<9x8x8xf32, #tpu.memory_space<vmem>>, %arg12: memref<1x8xf32, #tpu.memory_space<vmem>>, %arg13: memref<1x8xf32, #tpu.memory_space<vmem>>, %arg14: memref<1x8x16x8xf32, #tpu.memory_space<vmem>>, %arg15: memref<12x18x24xf32, #tpu.memory_space<vmem>>, %arg16: memref<10x18x8xf32, #tpu.memory_space<vmem>>) attributes {dimension_semantics = [#tpu.dimension_semantics<parallel>, #tpu.dimension_semantics<parallel>], iteration_bounds = array<i64: 2, 2>, scalar_prefetch = 0 : i64, scratch_operands = 2 : i64, tpu.core_type = #tpu.core_type<tc>, window_params = [{transform_indices = @transform_0, window_bounds = array<i64: 1, 4, 8, 16>}, {transform_indices = @transform_1, window_bounds = array<i64: 1, 1, 8, 16>}, {transform_indices = @transform_2, window_bounds = array<i64: 1, 1, 8, 16>}, {transform_indices = @transform_3, window_bounds = array<i64: 1, 8, 16, 8>}, {transform_indices = @transform_4, window_bounds = array<i64: 1, 2, 16, 8>}, {transform_indices = @transform_5, window_bounds = array<i64: 1, 2, 16, 8>}, {pipeline_mode = #tpu.pipeline_mode<synchronous>, transform_indices = @transform_6, window_bounds = array<i64: 9, 24, 8>}, {pipeline_mode = #tpu.pipeline_mode<synchronous>, transform_indices = @transform_7, window_bounds = array<i64: 1, 8>}, {pipeline_mode = #tpu.pipeline_mode<synchronous>, transform_indices = @transform_8, window_bounds = array<i64: 1, 8>}, {pipeline_mode = #tpu.pipeline_mode<synchronous>, transform_indices = @transform_9, window_bounds = array<i64: 9, 8, 8>}, {pipeline_mode = #tpu.pipeline_mode<synchronous>, transform_indices = @transform_10, window_bounds = array<i64: 1, 8>}, {pipeline_mode = #tpu.pipeline_mode<synchronous>, transform_indices = @transform_11, window_bounds = array<i64: 1, 8>}, {transform_indices = @transform_12, window_bounds = array<i64: 1, 8, 16, 8>}]} {
    %c0_i32 = arith.constant 0 : i32
    %0 = arith.cmpi eq, %arg1, %c0_i32 : i32
    %c1_i32 = arith.constant 1 : i32
    %1 = arith.cmpi eq, %arg1, %c1_i32 : i32
    %cst = arith.constant 0.000000e+00 : f32
    %2 = vector.broadcast %cst : f32 to vector<12x1x24xf32>
    %c0 = arith.constant 0 : index
    %c0_0 = arith.constant 0 : index
    %c0_1 = arith.constant 0 : index
    %3 = vector.load %arg15[%c0, %c0_0, %c0_1] : memref<12x18x24xf32, #tpu.memory_space<vmem>>, vector<12x1x24xf32>
    tpu.vector_store %arg15[%c0, %c0_0, %c0_1], %2 {strides = array<i32>} : memref<12x18x24xf32, #tpu.memory_space<vmem>>, vector<12x1x24xf32>,
    %cst_2 = arith.constant 0.000000e+00 : f32
    %4 = vector.broadcast %cst_2 : f32 to vector<12x1x24xf32>
    %c0_3 = arith.constant 0 : index
    %c17 = arith.constant 17 : index
    %c0_4 = arith.constant 0 : index
    %5 = vector.load %arg15[%c0_3, %c17, %c0_4] : memref<12x18x24xf32, #tpu.memory_space<vmem>>, vector<12x1x24xf32>
    tpu.vector_store %arg15[%c0_3, %c17, %c0_4], %4 {strides = array<i32>} : memref<12x18x24xf32, #tpu.memory_space<vmem>>, vector<12x1x24xf32>,
    %cst_5 = arith.constant 0.000000e+00 : f32
    %6 = vector.broadcast %cst_5 : f32 to vector<10x1x8xf32>
    %c0_6 = arith.constant 0 : index
    %c0_7 = arith.constant 0 : index
    %c0_8 = arith.constant 0 : index
    %7 = vector.load %arg16[%c0_6, %c0_7, %c0_8] : memref<10x18x8xf32, #tpu.memory_space<vmem>>, vector<10x1x8xf32>
    tpu.vector_store %arg16[%c0_6, %c0_7, %c0_8], %6 {strides = array<i32>} : memref<10x18x8xf32, #tpu.memory_space<vmem>>, vector<10x1x8xf32>,
    %cst_9 = arith.constant 0.000000e+00 : f32
    %8 = vector.broadcast %cst_9 : f32 to vector<10x1x8xf32>
    %c0_10 = arith.constant 0 : index
    %c17_11 = arith.constant 17 : index
    %c0_12 = arith.constant 0 : index
    %9 = vector.load %arg16[%c0_10, %c17_11, %c0_12] : memref<10x18x8xf32, #tpu.memory_space<vmem>>, vector<10x1x8xf32>
    tpu.vector_store %arg16[%c0_10, %c17_11, %c0_12], %8 {strides = array<i32>} : memref<10x18x8xf32, #tpu.memory_space<vmem>>, vector<10x1x8xf32>,
    %c0_13 = arith.constant 0 : index
    %c0_14 = arith.constant 0 : index
    %c0_15 = arith.constant 0 : index
    %c0_16 = arith.constant 0 : index
    %10 = vector.load %arg3[%c0_13, %c0_14, %c0_15, %c0_16] : memref<1x1x8x16xf32, #tpu.memory_space<vmem>>, vector<1x1x8x16xf32>
    %11 = vector.shape_cast %10 : vector<1x1x8x16xf32> to vector<1x8x16xf32>
    %c0_17 = arith.constant 0 : index
    %c0_18 = arith.constant 0 : index
    %c0_19 = arith.constant 0 : index
    %c0_20 = arith.constant 0 : index
    %12 = vector.load %arg2[%c0_17, %c0_18, %c0_19, %c0_20] : memref<1x4x8x16xf32, #tpu.memory_space<vmem>>, vector<1x4x8x16xf32>
    %13 = vector.shape_cast %12 : vector<1x4x8x16xf32> to vector<4x8x16xf32>
    %c0_21 = arith.constant 0 : index
    %c0_22 = arith.constant 0 : index
    %c0_23 = arith.constant 0 : index
    %c0_24 = arith.constant 0 : index
    %14 = vector.load %arg4[%c0_21, %c0_22, %c0_23, %c0_24] : memref<1x1x8x16xf32, #tpu.memory_space<vmem>>, vector<1x1x8x16xf32>
    %15 = vector.shape_cast %14 : vector<1x1x8x16xf32> to vector<1x8x16xf32>
    %16 = tpu.concatenate %11, %13, %15 in 0 : vector<1x8x16xf32>, vector<4x8x16xf32>, vector<1x8x16xf32> -> vector<6x8x16xf32>
    %17 = vector.shape_cast %16 : vector<6x8x16xf32> to vector<6x8x1x16xf32>
    %18 = vector.shape_cast %17 : vector<6x8x1x16xf32> to vector<6x8x1x16xf32>
    %19 = vector.broadcast %18 : vector<6x8x1x16xf32> to vector<6x8x2x16xf32>
    %20 = vector.shape_cast %19 : vector<6x8x2x16xf32> to vector<6x16x16xf32>
    %21 = vector.shape_cast %20 : vector<6x16x16xf32> to vector<6x1x16x16xf32>
    %22 = vector.shape_cast %21 : vector<6x1x16x16xf32> to vector<6x1x16x16xf32>
    %23 = vector.broadcast %22 : vector<6x1x16x16xf32> to vector<6x2x16x16xf32>
    %24 = vector.shape_cast %23 : vector<6x2x16x16xf32> to vector<12x16x16xf32>
    %c0_25 = arith.constant 0 : index
    %c0_26 = arith.constant 0 : index
    %c0_27 = arith.constant 0 : index
    %c0_28 = arith.constant 0 : index
    %25 = vector.load %arg6[%c0_25, %c0_26, %c0_27, %c0_28] : memref<1x2x16x8xf32, #tpu.memory_space<vmem>>, vector<1x2x16x8xf32>
    %26 = vector.shape_cast %25 : vector<1x2x16x8xf32> to vector<2x16x8xf32>
    %c0_29 = arith.constant 0 : index
    %c0_30 = arith.constant 0 : index
    %c0_31 = arith.constant 0 : index
    %c0_32 = arith.constant 0 : index
    %27 = vector.load %arg5[%c0_29, %c0_30, %c0_31, %c0_32] : memref<1x8x16x8xf32, #tpu.memory_space<vmem>>, vector<1x8x16x8xf32>
    %28 = vector.shape_cast %27 : vector<1x8x16x8xf32> to vector<8x16x8xf32>
    %c0_33 = arith.constant 0 : index
    %c0_34 = arith.constant 0 : index
    %c0_35 = arith.constant 0 : index
    %c0_36 = arith.constant 0 : index
    %29 = vector.load %arg7[%c0_33, %c0_34, %c0_35, %c0_36] : memref<1x2x16x8xf32, #tpu.memory_space<vmem>>, vector<1x2x16x8xf32>
    %30 = vector.shape_cast %29 : vector<1x2x16x8xf32> to vector<2x16x8xf32>
    %31 = tpu.concatenate %26, %28, %30 in 0 : vector<2x16x8xf32>, vector<8x16x8xf32>, vector<2x16x8xf32> -> vector<12x16x8xf32>
    %c0_37 = arith.constant 0 : index
    %c1 = arith.constant 1 : index
    %c0_38 = arith.constant 0 : index
    %32 = vector.load %arg15[%c0_37, %c1, %c0_38] : memref<12x18x24xf32, #tpu.memory_space<vmem>>, vector<12x16x16xf32>
    tpu.vector_store %arg15[%c0_37, %c1, %c0_38], %24 {strides = array<i32>} : memref<12x18x24xf32, #tpu.memory_space<vmem>>, vector<12x16x16xf32>,
    %c0_39 = arith.constant 0 : index
    %c1_40 = arith.constant 1 : index
    %c16 = arith.constant 16 : index
    %33 = vector.load %arg15[%c0_39, %c1_40, %c16] : memref<12x18x24xf32, #tpu.memory_space<vmem>>, vector<12x16x8xf32>
    tpu.vector_store %arg15[%c0_39, %c1_40, %c16], %31 {strides = array<i32>} : memref<12x18x24xf32, #tpu.memory_space<vmem>>, vector<12x16x8xf32>,
    %34 = arith.extui %0 : i1 to i32
    %c0_i32_41 = arith.constant 0 : i32
    %35 = arith.cmpi ne, %34, %c0_i32_41 : i32
    scf.if %35 {
      %cst_183 = arith.constant 0.000000e+00 : f32
      %174 = vector.broadcast %cst_183 : f32 to vector<18x24xf32>
      %c0_184 = arith.constant 0 : index
      %c0_185 = arith.constant 0 : index
      %c0_186 = arith.constant 0 : index
      %175 = vector.load %arg15[%c0_184, %c0_185, %c0_186] : memref<12x18x24xf32, #tpu.memory_space<vmem>>, vector<1x18x24xf32>
      %176 = vector.shape_cast %175 : vector<1x18x24xf32> to vector<18x24xf32>
      %177 = vector.shape_cast %174 : vector<18x24xf32> to vector<1x18x24xf32>
      tpu.vector_store %arg15[%c0_184, %c0_185, %c0_186], %177 {strides = array<i32>} : memref<12x18x24xf32, #tpu.memory_space<vmem>>, vector<1x18x24xf32>,
      %cst_187 = arith.constant 0.000000e+00 : f32
      %178 = vector.broadcast %cst_187 : f32 to vector<18x24xf32>
      %c1_188 = arith.constant 1 : index
      %c0_189 = arith.constant 0 : index
      %c0_190 = arith.constant 0 : index
      %179 = vector.load %arg15[%c1_188, %c0_189, %c0_190] : memref<12x18x24xf32, #tpu.memory_space<vmem>>, vector<1x18x24xf32>
      %180 = vector.shape_cast %179 : vector<1x18x24xf32> to vector<18x24xf32>
      %181 = vector.shape_cast %178 : vector<18x24xf32> to vector<1x18x24xf32>
      tpu.vector_store %arg15[%c1_188, %c0_189, %c0_190], %181 {strides = array<i32>} : memref<12x18x24xf32, #tpu.memory_space<vmem>>, vector<1x18x24xf32>,
    } else {
    }
    %36 = arith.extui %1 : i1 to i32
    %c0_i32_42 = arith.constant 0 : i32
    %37 = arith.cmpi ne, %36, %c0_i32_42 : i32
    scf.if %37 {
      %cst_183 = arith.constant 0.000000e+00 : f32
      %174 = vector.broadcast %cst_183 : f32 to vector<18x24xf32>
      %c10 = arith.constant 10 : index
      %c0_184 = arith.constant 0 : index
      %c0_185 = arith.constant 0 : index
      %175 = vector.load %arg15[%c10, %c0_184, %c0_185] : memref<12x18x24xf32, #tpu.memory_space<vmem>>, vector<1x18x24xf32>
      %176 = vector.shape_cast %175 : vector<1x18x24xf32> to vector<18x24xf32>
      %177 = vector.shape_cast %174 : vector<18x24xf32> to vector<1x18x24xf32>
      tpu.vector_store %arg15[%c10, %c0_184, %c0_185], %177 {strides = array<i32>} : memref<12x18x24xf32, #tpu.memory_space<vmem>>, vector<1x18x24xf32>,
      %cst_186 = arith.constant 0.000000e+00 : f32
      %178 = vector.broadcast %cst_186 : f32 to vector<18x24xf32>
      %c11 = arith.constant 11 : index
      %c0_187 = arith.constant 0 : index
      %c0_188 = arith.constant 0 : index
      %179 = vector.load %arg15[%c11, %c0_187, %c0_188] : memref<12x18x24xf32, #tpu.memory_space<vmem>>, vector<1x18x24xf32>
      %180 = vector.shape_cast %179 : vector<1x18x24xf32> to vector<18x24xf32>
      %181 = vector.shape_cast %178 : vector<18x24xf32> to vector<1x18x24xf32>
      tpu.vector_store %arg15[%c11, %c0_187, %c0_188], %181 {strides = array<i32>} : memref<12x18x24xf32, #tpu.memory_space<vmem>>, vector<1x18x24xf32>,
    } else {
    }
    %cst_43 = arith.constant 0.000000e+00 : f32
    %38 = vector.broadcast %cst_43 : f32 to vector<160x8xf32>
    %c0_44 = arith.constant 0 : index
    %c0_45 = arith.constant 0 : index
    %c0_46 = arith.constant 0 : index
    %39 = vector.load %arg15[%c0_44, %c0_45, %c0_46] : memref<12x18x24xf32, #tpu.memory_space<vmem>>, vector<10x16x24xf32>
    %40 = vector.shape_cast %39 : vector<10x16x24xf32> to vector<160x24xf32>
    %c0_47 = arith.constant 0 : index
    %c0_48 = arith.constant 0 : index
    %c0_49 = arith.constant 0 : index
    %41 = vector.load %arg8[%c0_47, %c0_48, %c0_49] : memref<9x24x8xf32, #tpu.memory_space<vmem>>, vector<1x24x8xf32>
    %42 = vector.shape_cast %41 : vector<1x24x8xf32> to vector<24x8xf32>
    %cst_50 = arith.constant dense<0.000000e+00> : vector<160x8xf32>
    %43 = tpu.matmul %40, %42, %cst_50 {dimension_numbers = #tpu.dot_dimension_numbers<[1], [0], [0], [1], [0, 0, 1, 1], [], []>} : vector<160x24xf32>, vector<24x8xf32>, vector<160x8xf32> -> vector<160x8xf32>
    %44 = arith.addf %38, %43 : vector<160x8xf32>
    %c0_51 = arith.constant 0 : index
    %c1_52 = arith.constant 1 : index
    %c0_53 = arith.constant 0 : index
    %45 = vector.load %arg15[%c0_51, %c1_52, %c0_53] : memref<12x18x24xf32, #tpu.memory_space<vmem>>, vector<10x16x24xf32>
    %46 = vector.shape_cast %45 : vector<10x16x24xf32> to vector<160x24xf32>
    %c1_54 = arith.constant 1 : index
    %c0_55 = arith.constant 0 : index
    %c0_56 = arith.constant 0 : index
    %47 = vector.load %arg8[%c1_54, %c0_55, %c0_56] : memref<9x24x8xf32, #tpu.memory_space<vmem>>, vector<1x24x8xf32>
    %48 = vector.shape_cast %47 : vector<1x24x8xf32> to vector<24x8xf32>
    %cst_57 = arith.constant dense<0.000000e+00> : vector<160x8xf32>
    %49 = tpu.matmul %46, %48, %cst_57 {dimension_numbers = #tpu.dot_dimension_numbers<[1], [0], [0], [1], [0, 0, 1, 1], [], []>} : vector<160x24xf32>, vector<24x8xf32>, vector<160x8xf32> -> vector<160x8xf32>
    %50 = arith.addf %44, %49 : vector<160x8xf32>
    %c0_58 = arith.constant 0 : index
    %c2 = arith.constant 2 : index
    %c0_59 = arith.constant 0 : index
    %51 = vector.load %arg15[%c0_58, %c2, %c0_59] : memref<12x18x24xf32, #tpu.memory_space<vmem>>, vector<10x16x24xf32>
    %52 = vector.shape_cast %51 : vector<10x16x24xf32> to vector<160x24xf32>
    %c2_60 = arith.constant 2 : index
    %c0_61 = arith.constant 0 : index
    %c0_62 = arith.constant 0 : index
    %53 = vector.load %arg8[%c2_60, %c0_61, %c0_62] : memref<9x24x8xf32, #tpu.memory_space<vmem>>, vector<1x24x8xf32>
    %54 = vector.shape_cast %53 : vector<1x24x8xf32> to vector<24x8xf32>
    %cst_63 = arith.constant dense<0.000000e+00> : vector<160x8xf32>
    %55 = tpu.matmul %52, %54, %cst_63 {dimension_numbers = #tpu.dot_dimension_numbers<[1], [0], [0], [1], [0, 0, 1, 1], [], []>} : vector<160x24xf32>, vector<24x8xf32>, vector<160x8xf32> -> vector<160x8xf32>
    %56 = arith.addf %50, %55 : vector<160x8xf32>
    %c1_64 = arith.constant 1 : index
    %c0_65 = arith.constant 0 : index
    %c0_66 = arith.constant 0 : index
    %57 = vector.load %arg15[%c1_64, %c0_65, %c0_66] : memref<12x18x24xf32, #tpu.memory_space<vmem>>, vector<10x16x24xf32>
    %58 = vector.shape_cast %57 : vector<10x16x24xf32> to vector<160x24xf32>
    %c3 = arith.constant 3 : index
    %c0_67 = arith.constant 0 : index
    %c0_68 = arith.constant 0 : index
    %59 = vector.load %arg8[%c3, %c0_67, %c0_68] : memref<9x24x8xf32, #tpu.memory_space<vmem>>, vector<1x24x8xf32>
    %60 = vector.shape_cast %59 : vector<1x24x8xf32> to vector<24x8xf32>
    %cst_69 = arith.constant dense<0.000000e+00> : vector<160x8xf32>
    %61 = tpu.matmul %58, %60, %cst_69 {dimension_numbers = #tpu.dot_dimension_numbers<[1], [0], [0], [1], [0, 0, 1, 1], [], []>} : vector<160x24xf32>, vector<24x8xf32>, vector<160x8xf32> -> vector<160x8xf32>
    %62 = arith.addf %56, %61 : vector<160x8xf32>
    %c1_70 = arith.constant 1 : index
    %c1_71 = arith.constant 1 : index
    %c0_72 = arith.constant 0 : index
    %63 = vector.load %arg15[%c1_70, %c1_71, %c0_72] : memref<12x18x24xf32, #tpu.memory_space<vmem>>, vector<10x16x24xf32>
    %64 = vector.shape_cast %63 : vector<10x16x24xf32> to vector<160x24xf32>
    %c4 = arith.constant 4 : index
    %c0_73 = arith.constant 0 : index
    %c0_74 = arith.constant 0 : index
    %65 = vector.load %arg8[%c4, %c0_73, %c0_74] : memref<9x24x8xf32, #tpu.memory_space<vmem>>, vector<1x24x8xf32>
    %66 = vector.shape_cast %65 : vector<1x24x8xf32> to vector<24x8xf32>
    %cst_75 = arith.constant dense<0.000000e+00> : vector<160x8xf32>
    %67 = tpu.matmul %64, %66, %cst_75 {dimension_numbers = #tpu.dot_dimension_numbers<[1], [0], [0], [1], [0, 0, 1, 1], [], []>} : vector<160x24xf32>, vector<24x8xf32>, vector<160x8xf32> -> vector<160x8xf32>
    %68 = arith.addf %62, %67 : vector<160x8xf32>
    %c1_76 = arith.constant 1 : index
    %c2_77 = arith.constant 2 : index
    %c0_78 = arith.constant 0 : index
    %69 = vector.load %arg15[%c1_76, %c2_77, %c0_78] : memref<12x18x24xf32, #tpu.memory_space<vmem>>, vector<10x16x24xf32>
    %70 = vector.shape_cast %69 : vector<10x16x24xf32> to vector<160x24xf32>
    %c5 = arith.constant 5 : index
    %c0_79 = arith.constant 0 : index
    %c0_80 = arith.constant 0 : index
    %71 = vector.load %arg8[%c5, %c0_79, %c0_80] : memref<9x24x8xf32, #tpu.memory_space<vmem>>, vector<1x24x8xf32>
    %72 = vector.shape_cast %71 : vector<1x24x8xf32> to vector<24x8xf32>
    %cst_81 = arith.constant dense<0.000000e+00> : vector<160x8xf32>
    %73 = tpu.matmul %70, %72, %cst_81 {dimension_numbers = #tpu.dot_dimension_numbers<[1], [0], [0], [1], [0, 0, 1, 1], [], []>} : vector<160x24xf32>, vector<24x8xf32>, vector<160x8xf32> -> vector<160x8xf32>
    %74 = arith.addf %68, %73 : vector<160x8xf32>
    %c2_82 = arith.constant 2 : index
    %c0_83 = arith.constant 0 : index
    %c0_84 = arith.constant 0 : index
    %75 = vector.load %arg15[%c2_82, %c0_83, %c0_84] : memref<12x18x24xf32, #tpu.memory_space<vmem>>, vector<10x16x24xf32>
    %76 = vector.shape_cast %75 : vector<10x16x24xf32> to vector<160x24xf32>
    %c6 = arith.constant 6 : index
    %c0_85 = arith.constant 0 : index
    %c0_86 = arith.constant 0 : index
    %77 = vector.load %arg8[%c6, %c0_85, %c0_86] : memref<9x24x8xf32, #tpu.memory_space<vmem>>, vector<1x24x8xf32>
    %78 = vector.shape_cast %77 : vector<1x24x8xf32> to vector<24x8xf32>
    %cst_87 = arith.constant dense<0.000000e+00> : vector<160x8xf32>
    %79 = tpu.matmul %76, %78, %cst_87 {dimension_numbers = #tpu.dot_dimension_numbers<[1], [0], [0], [1], [0, 0, 1, 1], [], []>} : vector<160x24xf32>, vector<24x8xf32>, vector<160x8xf32> -> vector<160x8xf32>
    %80 = arith.addf %74, %79 : vector<160x8xf32>
    %c2_88 = arith.constant 2 : index
    %c1_89 = arith.constant 1 : index
    %c0_90 = arith.constant 0 : index
    %81 = vector.load %arg15[%c2_88, %c1_89, %c0_90] : memref<12x18x24xf32, #tpu.memory_space<vmem>>, vector<10x16x24xf32>
    %82 = vector.shape_cast %81 : vector<10x16x24xf32> to vector<160x24xf32>
    %c7 = arith.constant 7 : index
    %c0_91 = arith.constant 0 : index
    %c0_92 = arith.constant 0 : index
    %83 = vector.load %arg8[%c7, %c0_91, %c0_92] : memref<9x24x8xf32, #tpu.memory_space<vmem>>, vector<1x24x8xf32>
    %84 = vector.shape_cast %83 : vector<1x24x8xf32> to vector<24x8xf32>
    %cst_93 = arith.constant dense<0.000000e+00> : vector<160x8xf32>
    %85 = tpu.matmul %82, %84, %cst_93 {dimension_numbers = #tpu.dot_dimension_numbers<[1], [0], [0], [1], [0, 0, 1, 1], [], []>} : vector<160x24xf32>, vector<24x8xf32>, vector<160x8xf32> -> vector<160x8xf32>
    %86 = arith.addf %80, %85 : vector<160x8xf32>
    %c2_94 = arith.constant 2 : index
    %c2_95 = arith.constant 2 : index
    %c0_96 = arith.constant 0 : index
    %87 = vector.load %arg15[%c2_94, %c2_95, %c0_96] : memref<12x18x24xf32, #tpu.memory_space<vmem>>, vector<10x16x24xf32>
    %88 = vector.shape_cast %87 : vector<10x16x24xf32> to vector<160x24xf32>
    %c8 = arith.constant 8 : index
    %c0_97 = arith.constant 0 : index
    %c0_98 = arith.constant 0 : index
    %89 = vector.load %arg8[%c8, %c0_97, %c0_98] : memref<9x24x8xf32, #tpu.memory_space<vmem>>, vector<1x24x8xf32>
    %90 = vector.shape_cast %89 : vector<1x24x8xf32> to vector<24x8xf32>
    %cst_99 = arith.constant dense<0.000000e+00> : vector<160x8xf32>
    %91 = tpu.matmul %88, %90, %cst_99 {dimension_numbers = #tpu.dot_dimension_numbers<[1], [0], [0], [1], [0, 0, 1, 1], [], []>} : vector<160x24xf32>, vector<24x8xf32>, vector<160x8xf32> -> vector<160x8xf32>
    %92 = arith.addf %86, %91 : vector<160x8xf32>
    %c0_100 = arith.constant 0 : index
    %c0_101 = arith.constant 0 : index
    %93 = vector.load %arg9[%c0_100, %c0_101] : memref<1x8xf32, #tpu.memory_space<vmem>>, vector<1x8xf32>
    %94 = vector.broadcast %93 : vector<1x8xf32> to vector<160x8xf32>
    %95 = arith.mulf %92, %94 : vector<160x8xf32>
    %c0_102 = arith.constant 0 : index
    %c0_103 = arith.constant 0 : index
    %96 = vector.load %arg10[%c0_102, %c0_103] : memref<1x8xf32, #tpu.memory_space<vmem>>, vector<1x8xf32>
    %97 = vector.broadcast %96 : vector<1x8xf32> to vector<160x8xf32>
    %98 = arith.addf %95, %97 : vector<160x8xf32>
    %cst_104 = arith.constant 0.000000e+00 : f32
    %99 = vector.broadcast %cst_104 : f32 to vector<160x8xf32>
    %100 = arith.maximumf %98, %99 : vector<160x8xf32>
    %101 = vector.shape_cast %100 : vector<160x8xf32> to vector<10x16x8xf32>
    %c0_105 = arith.constant 0 : index
    %c1_106 = arith.constant 1 : index
    %c0_107 = arith.constant 0 : index
    %102 = vector.load %arg16[%c0_105, %c1_106, %c0_107] : memref<10x18x8xf32, #tpu.memory_space<vmem>>, vector<10x16x8xf32>
    tpu.vector_store %arg16[%c0_105, %c1_106, %c0_107], %101 {strides = array<i32>} : memref<10x18x8xf32, #tpu.memory_space<vmem>>, vector<10x16x8xf32>,
    %103 = arith.extui %0 : i1 to i32
    %c0_i32_108 = arith.constant 0 : i32
    %104 = arith.cmpi ne, %103, %c0_i32_108 : i32
    scf.if %104 {
      %cst_183 = arith.constant 0.000000e+00 : f32
      %174 = vector.broadcast %cst_183 : f32 to vector<18x8xf32>
      %c0_184 = arith.constant 0 : index
      %c0_185 = arith.constant 0 : index
      %c0_186 = arith.constant 0 : index
      %175 = vector.load %arg16[%c0_184, %c0_185, %c0_186] : memref<10x18x8xf32, #tpu.memory_space<vmem>>, vector<1x18x8xf32>
      %176 = vector.shape_cast %175 : vector<1x18x8xf32> to vector<18x8xf32>
      %177 = vector.shape_cast %174 : vector<18x8xf32> to vector<1x18x8xf32>
      tpu.vector_store %arg16[%c0_184, %c0_185, %c0_186], %177 {strides = array<i32>} : memref<10x18x8xf32, #tpu.memory_space<vmem>>, vector<1x18x8xf32>,
    } else {
    }
    %105 = arith.extui %1 : i1 to i32
    %c0_i32_109 = arith.constant 0 : i32
    %106 = arith.cmpi ne, %105, %c0_i32_109 : i32
    scf.if %106 {
      %cst_183 = arith.constant 0.000000e+00 : f32
      %174 = vector.broadcast %cst_183 : f32 to vector<18x8xf32>
      %c9 = arith.constant 9 : index
      %c0_184 = arith.constant 0 : index
      %c0_185 = arith.constant 0 : index
      %175 = vector.load %arg16[%c9, %c0_184, %c0_185] : memref<10x18x8xf32, #tpu.memory_space<vmem>>, vector<1x18x8xf32>
      %176 = vector.shape_cast %175 : vector<1x18x8xf32> to vector<18x8xf32>
      %177 = vector.shape_cast %174 : vector<18x8xf32> to vector<1x18x8xf32>
      tpu.vector_store %arg16[%c9, %c0_184, %c0_185], %177 {strides = array<i32>} : memref<10x18x8xf32, #tpu.memory_space<vmem>>, vector<1x18x8xf32>,
    } else {
    }
    %cst_110 = arith.constant 0.000000e+00 : f32
    %107 = vector.broadcast %cst_110 : f32 to vector<128x8xf32>
    %c0_111 = arith.constant 0 : index
    %c0_112 = arith.constant 0 : index
    %c0_113 = arith.constant 0 : index
    %108 = vector.load %arg16[%c0_111, %c0_112, %c0_113] : memref<10x18x8xf32, #tpu.memory_space<vmem>>, vector<8x16x8xf32>
    %109 = vector.shape_cast %108 : vector<8x16x8xf32> to vector<128x8xf32>
    %c0_114 = arith.constant 0 : index
    %c0_115 = arith.constant 0 : index
    %c0_116 = arith.constant 0 : index
    %110 = vector.load %arg11[%c0_114, %c0_115, %c0_116] : memref<9x8x8xf32, #tpu.memory_space<vmem>>, vector<1x8x8xf32>
    %111 = vector.shape_cast %110 : vector<1x8x8xf32> to vector<8x8xf32>
    %cst_117 = arith.constant dense<0.000000e+00> : vector<128x8xf32>
    %112 = tpu.matmul %109, %111, %cst_117 {dimension_numbers = #tpu.dot_dimension_numbers<[1], [0], [0], [1], [0, 0, 1, 1], [], []>} : vector<128x8xf32>, vector<8x8xf32>, vector<128x8xf32> -> vector<128x8xf32>
    %113 = arith.addf %107, %112 : vector<128x8xf32>
    %c0_118 = arith.constant 0 : index
    %c1_119 = arith.constant 1 : index
    %c0_120 = arith.constant 0 : index
    %114 = vector.load %arg16[%c0_118, %c1_119, %c0_120] : memref<10x18x8xf32, #tpu.memory_space<vmem>>, vector<8x16x8xf32>
    %115 = vector.shape_cast %114 : vector<8x16x8xf32> to vector<128x8xf32>
    %c1_121 = arith.constant 1 : index
    %c0_122 = arith.constant 0 : index
    %c0_123 = arith.constant 0 : index
    %116 = vector.load %arg11[%c1_121, %c0_122, %c0_123] : memref<9x8x8xf32, #tpu.memory_space<vmem>>, vector<1x8x8xf32>
    %117 = vector.shape_cast %116 : vector<1x8x8xf32> to vector<8x8xf32>
    %cst_124 = arith.constant dense<0.000000e+00> : vector<128x8xf32>
    %118 = tpu.matmul %115, %117, %cst_124 {dimension_numbers = #tpu.dot_dimension_numbers<[1], [0], [0], [1], [0, 0, 1, 1], [], []>} : vector<128x8xf32>, vector<8x8xf32>, vector<128x8xf32> -> vector<128x8xf32>
    %119 = arith.addf %113, %118 : vector<128x8xf32>
    %c0_125 = arith.constant 0 : index
    %c2_126 = arith.constant 2 : index
    %c0_127 = arith.constant 0 : index
    %120 = vector.load %arg16[%c0_125, %c2_126, %c0_127] : memref<10x18x8xf32, #tpu.memory_space<vmem>>, vector<8x16x8xf32>
    %121 = vector.shape_cast %120 : vector<8x16x8xf32> to vector<128x8xf32>
    %c2_128 = arith.constant 2 : index
    %c0_129 = arith.constant 0 : index
    %c0_130 = arith.constant 0 : index
    %122 = vector.load %arg11[%c2_128, %c0_129, %c0_130] : memref<9x8x8xf32, #tpu.memory_space<vmem>>, vector<1x8x8xf32>
    %123 = vector.shape_cast %122 : vector<1x8x8xf32> to vector<8x8xf32>
    %cst_131 = arith.constant dense<0.000000e+00> : vector<128x8xf32>
    %124 = tpu.matmul %121, %123, %cst_131 {dimension_numbers = #tpu.dot_dimension_numbers<[1], [0], [0], [1], [0, 0, 1, 1], [], []>} : vector<128x8xf32>, vector<8x8xf32>, vector<128x8xf32> -> vector<128x8xf32>
    %125 = arith.addf %119, %124 : vector<128x8xf32>
    %c1_132 = arith.constant 1 : index
    %c0_133 = arith.constant 0 : index
    %c0_134 = arith.constant 0 : index
    %126 = vector.load %arg16[%c1_132, %c0_133, %c0_134] : memref<10x18x8xf32, #tpu.memory_space<vmem>>, vector<8x16x8xf32>
    %127 = vector.shape_cast %126 : vector<8x16x8xf32> to vector<128x8xf32>
    %c3_135 = arith.constant 3 : index
    %c0_136 = arith.constant 0 : index
    %c0_137 = arith.constant 0 : index
    %128 = vector.load %arg11[%c3_135, %c0_136, %c0_137] : memref<9x8x8xf32, #tpu.memory_space<vmem>>, vector<1x8x8xf32>
    %129 = vector.shape_cast %128 : vector<1x8x8xf32> to vector<8x8xf32>
    %cst_138 = arith.constant dense<0.000000e+00> : vector<128x8xf32>
    %130 = tpu.matmul %127, %129, %cst_138 {dimension_numbers = #tpu.dot_dimension_numbers<[1], [0], [0], [1], [0, 0, 1, 1], [], []>} : vector<128x8xf32>, vector<8x8xf32>, vector<128x8xf32> -> vector<128x8xf32>
    %131 = arith.addf %125, %130 : vector<128x8xf32>
    %c1_139 = arith.constant 1 : index
    %c1_140 = arith.constant 1 : index
    %c0_141 = arith.constant 0 : index
    %132 = vector.load %arg16[%c1_139, %c1_140, %c0_141] : memref<10x18x8xf32, #tpu.memory_space<vmem>>, vector<8x16x8xf32>
    %133 = vector.shape_cast %132 : vector<8x16x8xf32> to vector<128x8xf32>
    %c4_142 = arith.constant 4 : index
    %c0_143 = arith.constant 0 : index
    %c0_144 = arith.constant 0 : index
    %134 = vector.load %arg11[%c4_142, %c0_143, %c0_144] : memref<9x8x8xf32, #tpu.memory_space<vmem>>, vector<1x8x8xf32>
    %135 = vector.shape_cast %134 : vector<1x8x8xf32> to vector<8x8xf32>
    %cst_145 = arith.constant dense<0.000000e+00> : vector<128x8xf32>
    %136 = tpu.matmul %133, %135, %cst_145 {dimension_numbers = #tpu.dot_dimension_numbers<[1], [0], [0], [1], [0, 0, 1, 1], [], []>} : vector<128x8xf32>, vector<8x8xf32>, vector<128x8xf32> -> vector<128x8xf32>
    %137 = arith.addf %131, %136 : vector<128x8xf32>
    %c1_146 = arith.constant 1 : index
    %c2_147 = arith.constant 2 : index
    %c0_148 = arith.constant 0 : index
    %138 = vector.load %arg16[%c1_146, %c2_147, %c0_148] : memref<10x18x8xf32, #tpu.memory_space<vmem>>, vector<8x16x8xf32>
    %139 = vector.shape_cast %138 : vector<8x16x8xf32> to vector<128x8xf32>
    %c5_149 = arith.constant 5 : index
    %c0_150 = arith.constant 0 : index
    %c0_151 = arith.constant 0 : index
    %140 = vector.load %arg11[%c5_149, %c0_150, %c0_151] : memref<9x8x8xf32, #tpu.memory_space<vmem>>, vector<1x8x8xf32>
    %141 = vector.shape_cast %140 : vector<1x8x8xf32> to vector<8x8xf32>
    %cst_152 = arith.constant dense<0.000000e+00> : vector<128x8xf32>
    %142 = tpu.matmul %139, %141, %cst_152 {dimension_numbers = #tpu.dot_dimension_numbers<[1], [0], [0], [1], [0, 0, 1, 1], [], []>} : vector<128x8xf32>, vector<8x8xf32>, vector<128x8xf32> -> vector<128x8xf32>
    %143 = arith.addf %137, %142 : vector<128x8xf32>
    %c2_153 = arith.constant 2 : index
    %c0_154 = arith.constant 0 : index
    %c0_155 = arith.constant 0 : index
    %144 = vector.load %arg16[%c2_153, %c0_154, %c0_155] : memref<10x18x8xf32, #tpu.memory_space<vmem>>, vector<8x16x8xf32>
    %145 = vector.shape_cast %144 : vector<8x16x8xf32> to vector<128x8xf32>
    %c6_156 = arith.constant 6 : index
    %c0_157 = arith.constant 0 : index
    %c0_158 = arith.constant 0 : index
    %146 = vector.load %arg11[%c6_156, %c0_157, %c0_158] : memref<9x8x8xf32, #tpu.memory_space<vmem>>, vector<1x8x8xf32>
    %147 = vector.shape_cast %146 : vector<1x8x8xf32> to vector<8x8xf32>
    %cst_159 = arith.constant dense<0.000000e+00> : vector<128x8xf32>
    %148 = tpu.matmul %145, %147, %cst_159 {dimension_numbers = #tpu.dot_dimension_numbers<[1], [0], [0], [1], [0, 0, 1, 1], [], []>} : vector<128x8xf32>, vector<8x8xf32>, vector<128x8xf32> -> vector<128x8xf32>
    %149 = arith.addf %143, %148 : vector<128x8xf32>
    %c2_160 = arith.constant 2 : index
    %c1_161 = arith.constant 1 : index
    %c0_162 = arith.constant 0 : index
    %150 = vector.load %arg16[%c2_160, %c1_161, %c0_162] : memref<10x18x8xf32, #tpu.memory_space<vmem>>, vector<8x16x8xf32>
    %151 = vector.shape_cast %150 : vector<8x16x8xf32> to vector<128x8xf32>
    %c7_163 = arith.constant 7 : index
    %c0_164 = arith.constant 0 : index
    %c0_165 = arith.constant 0 : index
    %152 = vector.load %arg11[%c7_163, %c0_164, %c0_165] : memref<9x8x8xf32, #tpu.memory_space<vmem>>, vector<1x8x8xf32>
    %153 = vector.shape_cast %152 : vector<1x8x8xf32> to vector<8x8xf32>
    %cst_166 = arith.constant dense<0.000000e+00> : vector<128x8xf32>
    %154 = tpu.matmul %151, %153, %cst_166 {dimension_numbers = #tpu.dot_dimension_numbers<[1], [0], [0], [1], [0, 0, 1, 1], [], []>} : vector<128x8xf32>, vector<8x8xf32>, vector<128x8xf32> -> vector<128x8xf32>
    %155 = arith.addf %149, %154 : vector<128x8xf32>
    %c2_167 = arith.constant 2 : index
    %c2_168 = arith.constant 2 : index
    %c0_169 = arith.constant 0 : index
    %156 = vector.load %arg16[%c2_167, %c2_168, %c0_169] : memref<10x18x8xf32, #tpu.memory_space<vmem>>, vector<8x16x8xf32>
    %157 = vector.shape_cast %156 : vector<8x16x8xf32> to vector<128x8xf32>
    %c8_170 = arith.constant 8 : index
    %c0_171 = arith.constant 0 : index
    %c0_172 = arith.constant 0 : index
    %158 = vector.load %arg11[%c8_170, %c0_171, %c0_172] : memref<9x8x8xf32, #tpu.memory_space<vmem>>, vector<1x8x8xf32>
    %159 = vector.shape_cast %158 : vector<1x8x8xf32> to vector<8x8xf32>
    %cst_173 = arith.constant dense<0.000000e+00> : vector<128x8xf32>
    %160 = tpu.matmul %157, %159, %cst_173 {dimension_numbers = #tpu.dot_dimension_numbers<[1], [0], [0], [1], [0, 0, 1, 1], [], []>} : vector<128x8xf32>, vector<8x8xf32>, vector<128x8xf32> -> vector<128x8xf32>
    %161 = arith.addf %155, %160 : vector<128x8xf32>
    %c0_174 = arith.constant 0 : index
    %c0_175 = arith.constant 0 : index
    %162 = vector.load %arg12[%c0_174, %c0_175] : memref<1x8xf32, #tpu.memory_space<vmem>>, vector<1x8xf32>
    %163 = vector.broadcast %162 : vector<1x8xf32> to vector<128x8xf32>
    %164 = arith.mulf %161, %163 : vector<128x8xf32>
    %c0_176 = arith.constant 0 : index
    %c0_177 = arith.constant 0 : index
    %165 = vector.load %arg13[%c0_176, %c0_177] : memref<1x8xf32, #tpu.memory_space<vmem>>, vector<1x8xf32>
    %166 = vector.broadcast %165 : vector<1x8xf32> to vector<128x8xf32>
    %167 = arith.addf %164, %166 : vector<128x8xf32>
    %cst_178 = arith.constant 0.000000e+00 : f32
    %168 = vector.broadcast %cst_178 : f32 to vector<128x8xf32>
    %169 = arith.maximumf %167, %168 : vector<128x8xf32>
    %170 = vector.shape_cast %169 : vector<128x8xf32> to vector<8x16x8xf32>
    %c0_179 = arith.constant 0 : index
    %c0_180 = arith.constant 0 : index
    %c0_181 = arith.constant 0 : index
    %c0_182 = arith.constant 0 : index
    %171 = vector.load %arg14[%c0_179, %c0_180, %c0_181, %c0_182] : memref<1x8x16x8xf32, #tpu.memory_space<vmem>>, vector<1x8x16x8xf32>
    %172 = vector.shape_cast %171 : vector<1x8x16x8xf32> to vector<8x16x8xf32>
    %173 = vector.shape_cast %170 : vector<8x16x8xf32> to vector<1x8x16x8xf32>
    tpu.vector_store %arg14[%c0_179, %c0_180, %c0_181, %c0_182], %173 {strides = array<i32>} : memref<1x8x16x8xf32, #tpu.memory_space<vmem>>, vector<1x8x16x8xf32>,
    return
  }
  func.func @transform_0(%arg0: i32, %arg1: i32) -> (i32, i32, i32, i32) {
    %c0_i32 = arith.constant 0 : i32
    %c0_i32_0 = arith.constant 0 : i32
    %c0_i32_1 = arith.constant 0 : i32
    return %arg0, %arg1, %c0_i32, %c0_i32_0 : i32, i32, i32, i32
  }
  func.func @transform_1(%arg0: i32, %arg1: i32) -> (i32, i32, i32, i32) {
    %c4_i32 = arith.constant 4 : i32
    %0 = arith.muli %arg1, %c4_i32 : i32
    %c1_i32 = arith.constant 1 : i32
    %1 = arith.subi %0, %c1_i32 : i32
    %c0_i32 = arith.constant 0 : i32
    %2 = arith.maxsi %1, %c0_i32 : i32
    %c0_i32_0 = arith.constant 0 : i32
    %c0_i32_1 = arith.constant 0 : i32
    %c0_i32_2 = arith.constant 0 : i32
    return %arg0, %2, %c0_i32_0, %c0_i32_1 : i32, i32, i32, i32
  }
  func.func @transform_2(%arg0: i32, %arg1: i32) -> (i32, i32, i32, i32) {
    %c1_i32 = arith.constant 1 : i32
    %0 = arith.addi %arg1, %c1_i32 : i32
    %c4_i32 = arith.constant 4 : i32
    %1 = arith.muli %0, %c4_i32 : i32
    %c7_i32 = arith.constant 7 : i32
    %2 = arith.minsi %1, %c7_i32 : i32
    %c0_i32 = arith.constant 0 : i32
    %c0_i32_0 = arith.constant 0 : i32
    %c0_i32_1 = arith.constant 0 : i32
    return %arg0, %2, %c0_i32, %c0_i32_0 : i32, i32, i32, i32
  }
  func.func @transform_3(%arg0: i32, %arg1: i32) -> (i32, i32, i32, i32) {
    %c0_i32 = arith.constant 0 : i32
    %c0_i32_0 = arith.constant 0 : i32
    %c0_i32_1 = arith.constant 0 : i32
    return %arg0, %arg1, %c0_i32, %c0_i32_0 : i32, i32, i32, i32
  }
  func.func @transform_4(%arg0: i32, %arg1: i32) -> (i32, i32, i32, i32) {
    %c4_i32 = arith.constant 4 : i32
    %0 = arith.muli %arg1, %c4_i32 : i32
    %c1_i32 = arith.constant 1 : i32
    %1 = arith.subi %0, %c1_i32 : i32
    %c0_i32 = arith.constant 0 : i32
    %2 = arith.maxsi %1, %c0_i32 : i32
    %c0_i32_0 = arith.constant 0 : i32
    %c0_i32_1 = arith.constant 0 : i32
    %c0_i32_2 = arith.constant 0 : i32
    return %arg0, %2, %c0_i32_0, %c0_i32_1 : i32, i32, i32, i32
  }
  func.func @transform_5(%arg0: i32, %arg1: i32) -> (i32, i32, i32, i32) {
    %c1_i32 = arith.constant 1 : i32
    %0 = arith.addi %arg1, %c1_i32 : i32
    %c4_i32 = arith.constant 4 : i32
    %1 = arith.muli %0, %c4_i32 : i32
    %c7_i32 = arith.constant 7 : i32
    %2 = arith.minsi %1, %c7_i32 : i32
    %c0_i32 = arith.constant 0 : i32
    %c0_i32_0 = arith.constant 0 : i32
    %c0_i32_1 = arith.constant 0 : i32
    return %arg0, %2, %c0_i32, %c0_i32_0 : i32, i32, i32, i32
  }
  func.func @transform_6(%arg0: i32, %arg1: i32) -> (i32, i32, i32) {
    %c0_i32 = arith.constant 0 : i32
    %c0_i32_0 = arith.constant 0 : i32
    %c0_i32_1 = arith.constant 0 : i32
    %c0_i32_2 = arith.constant 0 : i32
    return %c0_i32, %c0_i32_0, %c0_i32_1 : i32, i32, i32
  }
  func.func @transform_7(%arg0: i32, %arg1: i32) -> (i32, i32) {
    %c0_i32 = arith.constant 0 : i32
    %c0_i32_0 = arith.constant 0 : i32
    %c0_i32_1 = arith.constant 0 : i32
    return %c0_i32, %c0_i32_0 : i32, i32
  }
  func.func @transform_8(%arg0: i32, %arg1: i32) -> (i32, i32) {
    %c0_i32 = arith.constant 0 : i32
    %c0_i32_0 = arith.constant 0 : i32
    %c0_i32_1 = arith.constant 0 : i32
    return %c0_i32, %c0_i32_0 : i32, i32
  }
  func.func @transform_9(%arg0: i32, %arg1: i32) -> (i32, i32, i32) {
    %c0_i32 = arith.constant 0 : i32
    %c0_i32_0 = arith.constant 0 : i32
    %c0_i32_1 = arith.constant 0 : i32
    %c0_i32_2 = arith.constant 0 : i32
    return %c0_i32, %c0_i32_0, %c0_i32_1 : i32, i32, i32
  }
  func.func @transform_10(%arg0: i32, %arg1: i32) -> (i32, i32) {
    %c0_i32 = arith.constant 0 : i32
    %c0_i32_0 = arith.constant 0 : i32
    %c0_i32_1 = arith.constant 0 : i32
    return %c0_i32, %c0_i32_0 : i32, i32
  }
  func.func @transform_11(%arg0: i32, %arg1: i32) -> (i32, i32) {
    %c0_i32 = arith.constant 0 : i32
    %c0_i32_0 = arith.constant 0 : i32
    %c0_i32_1 = arith.constant 0 : i32
    return %c0_i32, %c0_i32_0 : i32, i32
  }
  func.func @transform_12(%arg0: i32, %arg1: i32) -> (i32, i32, i32, i32) {
    %c0_i32 = arith.constant 0 : i32
    %c0_i32_0 = arith.constant 0 : i32
    %c0_i32_1 = arith.constant 0 : i32
    return %arg0, %arg1, %c0_i32, %c0_i32_0 : i32, i32, i32, i32
  }
}

</mosaic_0001>

<llo_original>
// kernel: decoder_block_nhwc.1
$region0: #{decoder_block_nhwc.1}
  #allocation0 [shape = 'u32[]', space=smem, size = 0x4, offset = 0x4, fixed_abs, tag = 'smem constant byte address 0x4 - core index']
  #allocation1 [shape = 'u32[144,128]{1,0:T(1,128)}', space=vmem, size = 0x12000, scoped, tag = 'internal scratch']
  #allocation2 [shape = 'f32[12,18,24]{2,1,0:T(8,128)}', space=vmem, size = 0x24000, scoped, tag = 'scratch operand']
  #allocation3 [shape = 'f32[10,18,8]{2,1,0:T(8,128)}', space=vmem, size = 0x1e000, scoped, tag = 'scratch operand']
  %s0 = inlined_call_operand.vmem [shape: f32[2,8,8,16], index: 0, kind: input, shape index: {}, may-alias: {0,1,2}]
  %s1 = inlined_call_operand.vmem [shape: f32[2,8,8,16], index: 1, kind: input, shape index: {}, may-alias: {0,1,2}]
  %s2 = inlined_call_operand.vmem [shape: f32[2,8,8,16], index: 2, kind: input, shape index: {}, may-alias: {0,1,2}]
  %s3 = inlined_call_operand.vmem [shape: f32[2,16,16,8], index: 3, kind: input, shape index: {}, may-alias: {3,4,5}]
  %s4 = inlined_call_operand.vmem [shape: f32[2,16,16,8], index: 4, kind: input, shape index: {}, may-alias: {3,4,5}]
  %s5 = inlined_call_operand.vmem [shape: f32[2,16,16,8], index: 5, kind: input, shape index: {}, may-alias: {3,4,5}]
  %s6 = inlined_call_operand.vmem [shape: f32[9,24,8], index: 6, kind: input, shape index: {}]
  %s7 = inlined_call_operand.vmem [shape: f32[1,8], index: 7, kind: input, shape index: {}]
  %s8 = inlined_call_operand.vmem [shape: f32[1,8], index: 8, kind: input, shape index: {}]
  %s9 = inlined_call_operand.vmem [shape: f32[9,8,8], index: 9, kind: input, shape index: {}]
  %s10 = inlined_call_operand.vmem [shape: f32[1,8], index: 10, kind: input, shape index: {}]
  %s11 = inlined_call_operand.vmem [shape: f32[1,8], index: 11, kind: input, shape index: {}]
  %s12 = inlined_call_operand.vmem [shape: f32[2,16,16,8], index: 12, kind: output, shape index: {}]
  %s13 = sld [smem:[#allocation0]]
  $region97: #{decoder_block_nhwc.1} parent=0
    _
  %s15 = ssub.s32 1, %s13
  %s16 = scalar_select 0, %s15, %s13
  loop: start=0, step=1, limit=6
  $region2: #{decoder_block_nhwc.1} parent=0 // loop_pre_header
    _
  $region3: #{decoder_block_nhwc.1} parent=0 // loop_header
    %s18 = sphi 0, %s22
    %p19 = scmp.ge.s32.totalorder %s18, 6
    %s25 = sphi 0, %s37
    %s26 = sphi 0, %s33
    %s27 = sphi 0, %s25
    %s28 = sphi 0, %s26
    %s29 = sphi 0, %s27
    %s30 = sphi 0, %s28
    %s42 = sphi 0, %s44
    %s45 = sphi 0, %s42
    %s46 = sphi 0, %s45
    %s62 = sphi 0, %s46
    %s78 = sphi 0, %s80
    %s81 = sphi 0, %s78
    %s82 = sphi 0, %s81
    %s98 = sphi 0, %s82
    %s114 = sphi 0, %s116
    %s117 = sphi 0, %s114
    %s118 = sphi 0, %s117
    %s134 = sphi 0, %s118
    %s142 = sphi 0, %s144
    %s145 = sphi 0, %s142
    %s146 = sphi 0, %s145
    %s162 = sphi 0, %s146
    %s178 = sphi 0, %s180
    %s181 = sphi 0, %s178
    %s182 = sphi 0, %s181
    %s198 = sphi 0, %s182
    %s214 = sphi 0, %s216
    %s217 = sphi 0, %s214
    %s218 = sphi 0, %s217
    %s234 = sphi 0, %s218
    %s238 = sphi 0, %s238
    %s240 = sphi 0, %s238
    %s241 = sphi 0, %s240
    %s255 = sphi 0, %s241
    %s259 = sphi 0, %s259
    %s261 = sphi 0, %s259
    %s262 = sphi 0, %s261
    %s276 = sphi 0, %s262
    %s280 = sphi 0, %s280
    %s282 = sphi 0, %s280
    %s283 = sphi 0, %s282
    %s297 = sphi 0, %s283
    %s301 = sphi 0, %s301
    %s303 = sphi 0, %s301
    %s304 = sphi 0, %s303
    %s318 = sphi 0, %s304
    %s322 = sphi 0, %s322
    %s324 = sphi 0, %s322
    %s325 = sphi 0, %s324
    %s339 = sphi 0, %s325
    %s343 = sphi 0, %s343
    %s345 = sphi 0, %s343
    %s346 = sphi 0, %s345
    %s360 = sphi 0, %s346
    %s368 = sphi 0, %s370
    %s371 = sphi 0, %s368
    %s372 = sphi 0, %s371
    %s388 = sphi 0, %s372
  $region4: #{decoder_block_nhwc.1} parent=0 // loop_header_branch
    %21 = sbr.rel (%p19) target = $region8
  $region5: #{decoder_block_nhwc.1} parent=0 // loop_body
    %s23 = ssub.s32 %s18, 1
    %s24 = ssub.s32 %s18, 2
    %s31 = sadd.s32 1, %s26
    %p32 = scmp.ge.s32.totalorder %s31, 2
    %s33 = scalar_select %p32, 0, %s31
    %s34 = sadd.s32 1, %s25
    %s35 = scalar_select %p32, %s34, %s25
    %p36 = scmp.ge.s32.totalorder %s35, 2
    %s37 = scalar_select %p36, 0, %s35
    %s38 = ssub.s32 %s25, %s37
    %s39 = ssub.s32 %s26, %s33
    %s40 = sor.u32 %s38, %s39
    %p41 = scmp.eq.s32.totalorder %s40, 0
    %s43 = sadd.s32 %s42, 1
    %s44 = scalar_select %p41, %s42, %s43
    %p47 = pneg %p41
    %p48 = scmp.eq.s32.totalorder %s18, 3
    %p49 = por %p47, %p48
    %p50 = scmp.ne.s32.totalorder %s42, %s45
    %p51 = scmp.eq.s32.totalorder %s18, 0
    %p52 = por %p50, %p51
    %p53 = scmp.ne.s32.totalorder %s42, %s45
    %p54 = scmp.eq.s32.totalorder %s23, 3
    %p55 = por %p53, %p54
    %p56 = scmp.ne.s32.totalorder %s45, %s46
    %p57 = scmp.eq.s32.totalorder %s23, 0
    %p58 = por %p56, %p57
    %p59 = scmp.ne.s32.totalorder %s45, %s46
    %p60 = scmp.eq.s32.totalorder %s24, 3
    %p61 = por %p59, %p60
    %p63 = scmp.ne.s32.totalorder %s46, %s62
    %p64 = scmp.eq.s32.totalorder %s24, 0
    %p65 = por %p63, %p64
    %s66 = smul.u32 %s26, 4
    %s67 = ssub.s32 %s66, 1
    %p68 = scmp.gt.s32.totalorder %s67, 0
    %s69 = scalar_select %p68, %s67, 0
    %s70 = smul.u32 %s33, 4
    %s71 = ssub.s32 %s70, 1
    %p72 = scmp.gt.s32.totalorder %s71, 0
    %s73 = scalar_select %p72, %s71, 0
    %s74 = ssub.s32 %s25, %s37
    %s75 = ssub.s32 %s69, %s73
    %s76 = sor.u32 %s74, %s75
    %p77 = scmp.eq.s32.totalorder %s76, 0
    %s79 = sadd.s32 %s78, 1
    %s80 = scalar_select %p77, %s78, %s79
    %p83 = pneg %p77
    %p84 = scmp.eq.s32.totalorder %s18, 3
    %p85 = por %p83, %p84
    %p86 = scmp.ne.s32.totalorder %s78, %s81
    %p87 = scmp.eq.s32.totalorder %s18, 0
    %p88 = por %p86, %p87
    %p89 = scmp.ne.s32.totalorder %s78, %s81
    %p90 = scmp.eq.s32.totalorder %s23, 3
    %p91 = por %p89, %p90
    %p92 = scmp.ne.s32.totalorder %s81, %s82
    %p93 = scmp.eq.s32.totalorder %s23, 0
    %p94 = por %p92, %p93
    %p95 = scmp.ne.s32.totalorder %s81, %s82
    %p96 = scmp.eq.s32.totalorder %s24, 3
    %p97 = por %p95, %p96
    %p99 = scmp.ne.s32.totalorder %s82, %s98
    %p100 = scmp.eq.s32.totalorder %s24, 0
    %p101 = por %p99, %p100
    %s102 = sadd.s32 %s26, 1
    %s103 = smul.u32 %s102, 4
    %p104 = scmp.lt.s32.totalorder %s103, 7
    %s105 = scalar_select %p104, %s103, 7
    %s106 = sadd.s32 %s33, 1
    %s107 = smul.u32 %s106, 4
    %p108 = scmp.lt.s32.totalorder %s107, 7
    %s109 = scalar_select %p108, %s107, 7
    %s110 = ssub.s32 %s25, %s37
    %s111 = ssub.s32 %s105, %s109
    %s112 = sor.u32 %s110, %s111
    %p113 = scmp.eq.s32.totalorder %s112, 0
    %s115 = sadd.s32 %s114, 1
    %s116 = scalar_select %p113, %s114, %s115
    %p119 = pneg %p113
    %p120 = scmp.eq.s32.totalorder %s18, 3
    %p121 = por %p119, %p120
    %p122 = scmp.ne.s32.totalorder %s114, %s117
    %p123 = scmp.eq.s32.totalorder %s18, 0
    %p124 = por %p122, %p123
    %p125 = scmp.ne.s32.totalorder %s114, %s117
    %p126 = scmp.eq.s32.totalorder %s23, 3
    %p127 = por %p125, %p126
    %p128 = scmp.ne.s32.totalorder %s117, %s118
    %p129 = scmp.eq.s32.totalorder %s23, 0
    %p130 = por %p128, %p129
    %p131 = scmp.ne.s32.totalorder %s117, %s118
    %p132 = scmp.eq.s32.totalorder %s24, 3
    %p133 = por %p131, %p132
    %p135 = scmp.ne.s32.totalorder %s118, %s134
    %p136 = scmp.eq.s32.totalorder %s24, 0
    %p137 = por %p135, %p136
    %s138 = ssub.s32 %s25, %s37
    %s139 = ssub.s32 %s26, %s33
    %s140 = sor.u32 %s138, %s139
    %p141 = scmp.eq.s32.totalorder %s140, 0
    %s143 = sadd.s32 %s142, 1
    %s144 = scalar_select %p141, %s142, %s143
    %p147 = pneg %p141
    %p148 = scmp.eq.s32.totalorder %s18, 3
    %p149 = por %p147, %p148
    %p150 = scmp.ne.s32.totalorder %s142, %s145
    %p151 = scmp.eq.s32.totalorder %s18, 0
    %p152 = por %p150, %p151
    %p153 = scmp.ne.s32.totalorder %s142, %s145
    %p154 = scmp.eq.s32.totalorder %s23, 3
    %p155 = por %p153, %p154
    %p156 = scmp.ne.s32.totalorder %s145, %s146
    %p157 = scmp.eq.s32.totalorder %s23, 0
    %p158 = por %p156, %p157
    %p159 = scmp.ne.s32.totalorder %s145, %s146
    %p160 = scmp.eq.s32.totalorder %s24, 3
    %p161 = por %p159, %p160
    %p163 = scmp.ne.s32.totalorder %s146, %s162
    %p164 = scmp.eq.s32.totalorder %s24, 0
    %p165 = por %p163, %p164
    %s166 = smul.u32 %s26, 4
    %s167 = ssub.s32 %s166, 1
    %p168 = scmp.gt.s32.totalorder %s167, 0
    %s169 = scalar_select %p168, %s167, 0
    %s170 = smul.u32 %s33, 4
    %s171 = ssub.s32 %s170, 1
    %p172 = scmp.gt.s32.totalorder %s171, 0
    %s173 = scalar_select %p172, %s171, 0
    %s174 = ssub.s32 %s25, %s37
    %s175 = ssub.s32 %s169, %s173
    %s176 = sor.u32 %s174, %s175
    %p177 = scmp.eq.s32.totalorder %s176, 0
    %s179 = sadd.s32 %s178, 1
    %s180 = scalar_select %p177, %s178, %s179
    %p183 = pneg %p177
    %p184 = scmp.eq.s32.totalorder %s18, 3
    %p185 = por %p183, %p184
    %p186 = scmp.ne.s32.totalorder %s178, %s181
    %p187 = scmp.eq.s32.totalorder %s18, 0
    %p188 = por %p186, %p187
    %p189 = scmp.ne.s32.totalorder %s178, %s181
    %p190 = scmp.eq.s32.totalorder %s23, 3
    %p191 = por %p189, %p190
    %p192 = scmp.ne.s32.totalorder %s181, %s182
    %p193 = scmp.eq.s32.totalorder %s23, 0
    %p194 = por %p192, %p193
    %p195 = scmp.ne.s32.totalorder %s181, %s182
    %p196 = scmp.eq.s32.totalorder %s24, 3
    %p197 = por %p195, %p196
    %p199 = scmp.ne.s32.totalorder %s182, %s198
    %p200 = scmp.eq.s32.totalorder %s24, 0
    %p201 = por %p199, %p200
    %s202 = sadd.s32 %s26, 1
    %s203 = smul.u32 %s202, 4
    %p204 = scmp.lt.s32.totalorder %s203, 7
    %s205 = scalar_select %p204, %s203, 7
    %s206 = sadd.s32 %s33, 1
    %s207 = smul.u32 %s206, 4
    %p208 = scmp.lt.s32.totalorder %s207, 7
    %s209 = scalar_select %p208, %s207, 7
    %s210 = ssub.s32 %s25, %s37
    %s211 = ssub.s32 %s205, %s209
    %s212 = sor.u32 %s210, %s211
    %p213 = scmp.eq.s32.totalorder %s212, 0
    %s215 = sadd.s32 %s214, 1
    %s216 = scalar_select %p213, %s214, %s215
    %p219 = pneg %p213
    %p220 = scmp.eq.s32.totalorder %s18, 3
    %p221 = por %p219, %p220
    %p222 = scmp.ne.s32.totalorder %s214, %s217
    %p223 = scmp.eq.s32.totalorder %s18, 0
    %p224 = por %p222, %p223
    %p225 = scmp.ne.s32.totalorder %s214, %s217
    %p226 = scmp.eq.s32.totalorder %s23, 3
    %p227 = por %p225, %p226
    %p228 = scmp.ne.s32.totalorder %s217, %s218
    %p229 = scmp.eq.s32.totalorder %s23, 0
    %p230 = por %p228, %p229
    %p231 = scmp.ne.s32.totalorder %s217, %s218
    %p232 = scmp.eq.s32.totalorder %s24, 3
    %p233 = por %p231, %p232
    %p235 = scmp.ne.s32.totalorder %s218, %s234
    %p236 = scmp.eq.s32.totalorder %s24, 0
    %p237 = por %p235, %p236
    %s239 = sadd.s32 %s238, 1
    %p242 = scmp.eq.s32.totalorder %s18, 3
    %p243 = scmp.ne.s32.totalorder %s238, %s240
    %p244 = scmp.eq.s32.totalorder %s18, 0
    %p245 = por %p243, %p244
    %p246 = scmp.ne.s32.totalorder %s238, %s240
    %p247 = scmp.eq.s32.totalorder %s23, 3
    %p248 = por %p246, %p247
    %p249 = scmp.ne.s32.totalorder %s240, %s241
    %p250 = scmp.eq.s32.totalorder %s23, 0
    %p251 = por %p249, %p250
    %p252 = scmp.ne.s32.totalorder %s240, %s241
    %p253 = scmp.eq.s32.totalorder %s24, 3
    %p254 = por %p252, %p253
    %p256 = scmp.ne.s32.totalorder %s241, %s255
    %p257 = scmp.eq.s32.totalorder %s24, 0
    %p258 = por %p256, %p257
    %s260 = sadd.s32 %s259, 1
    %p263 = scmp.eq.s32.totalorder %s18, 3
    %p264 = scmp.ne.s32.totalorder %s259, %s261
    %p265 = scmp.eq.s32.totalorder %s18, 0
    %p266 = por %p264, %p265
    %p267 = scmp.ne.s32.totalorder %s259, %s261
    %p268 = scmp.eq.s32.totalorder %s23, 3
    %p269 = por %p267, %p268
    %p270 = scmp.ne.s32.totalorder %s261, %s262
    %p271 = scmp.eq.s32.totalorder %s23, 0
    %p272 = por %p270, %p271
    %p273 = scmp.ne.s32.totalorder %s261, %s262
    %p274 = scmp.eq.s32.totalorder %s24, 3
    %p275 = por %p273, %p274
    %p277 = scmp.ne.s32.totalorder %s262, %s276
    %p278 = scmp.eq.s32.totalorder %s24, 0
    %p279 = por %p277, %p278
    %s281 = sadd.s32 %s280, 1
    %p284 = scmp.eq.s32.totalorder %s18, 3
    %p285 = scmp.ne.s32.totalorder %s280, %s282
    %p286 = scmp.eq.s32.totalorder %s18, 0
    %p287 = por %p285, %p286
    %p288 = scmp.ne.s32.totalorder %s280, %s282
    %p289 = scmp.eq.s32.totalorder %s23, 3
    %p290 = por %p288, %p289
    %p291 = scmp.ne.s32.totalorder %s282, %s283
    %p292 = scmp.eq.s32.totalorder %s23, 0
    %p293 = por %p291, %p292
    %p294 = scmp.ne.s32.totalorder %s282, %s283
    %p295 = scmp.eq.s32.totalorder %s24, 3
    %p296 = por %p294, %p295
    %p298 = scmp.ne.s32.totalorder %s283, %s297
    %p299 = scmp.eq.s32.totalorder %s24, 0
    %p300 = por %p298, %p299
    %s302 = sadd.s32 %s301, 1
    %p305 = scmp.eq.s32.totalorder %s18, 3
    %p306 = scmp.ne.s32.totalorder %s301, %s303
    %p307 = scmp.eq.s32.totalorder %s18, 0
    %p308 = por %p306, %p307
    %p309 = scmp.ne.s32.totalorder %s301, %s303
    %p310 = scmp.eq.s32.totalorder %s23, 3
    %p311 = por %p309, %p310
    %p312 = scmp.ne.s32.totalorder %s303, %s304
    %p313 = scmp.eq.s32.totalorder %s23, 0
    %p314 = por %p312, %p313
    %p315 = scmp.ne.s32.totalorder %s303, %s304
    %p316 = scmp.eq.s32.totalorder %s24, 3
    %p317 = por %p315, %p316
    %p319 = scmp.ne.s32.totalorder %s304, %s318
    %p320 = scmp.eq.s32.totalorder %s24, 0
    %p321 = por %p319, %p320
    %s323 = sadd.s32 %s322, 1
    %p326 = scmp.eq.s32.totalorder %s18, 3
    %p327 = scmp.ne.s32.totalorder %s322, %s324
    %p328 = scmp.eq.s32.totalorder %s18, 0
    %p329 = por %p327, %p328
    %p330 = scmp.ne.s32.totalorder %s322, %s324
    %p331 = scmp.eq.s32.totalorder %s23, 3
    %p332 = por %p330, %p331
    %p333 = scmp.ne.s32.totalorder %s324, %s325
    %p334 = scmp.eq.s32.totalorder %s23, 0
    %p335 = por %p333, %p334
    %p336 = scmp.ne.s32.totalorder %s324, %s325
    %p337 = scmp.eq.s32.totalorder %s24, 3
    %p338 = por %p336, %p337
    %p340 = scmp.ne.s32.totalorder %s325, %s339
    %p341 = scmp.eq.s32.totalorder %s24, 0
    %p342 = por %p340, %p341
    %s344 = sadd.s32 %s343, 1
    %p347 = scmp.eq.s32.totalorder %s18, 3
    %p348 = scmp.ne.s32.totalorder %s343, %s345
    %p349 = scmp.eq.s32.totalorder %s18, 0
    %p350 = por %p348, %p349
    %p351 = scmp.ne.s32.totalorder %s343, %s345
    %p352 = scmp.eq.s32.totalorder %s23, 3
    %p353 = por %p351, %p352
    %p354 = scmp.ne.s32.totalorder %s345, %s346
    %p355 = scmp.eq.s32.totalorder %s23, 0
    %p356 = por %p354, %p355
    %p357 = scmp.ne.s32.totalorder %s345, %s346
    %p358 = scmp.eq.s32.totalorder %s24, 3
    %p359 = por %p357, %p358
    %p361 = scmp.ne.s32.totalorder %s346, %s360
    %p362 = scmp.eq.s32.totalorder %s24, 0
    %p363 = por %p361, %p362
    %s364 = ssub.s32 %s25, %s37
    %s365 = ssub.s32 %s26, %s33
    %s366 = sor.u32 %s364, %s365
    %p367 = scmp.eq.s32.totalorder %s366, 0
    %s369 = sadd.s32 %s368, 1
    %s370 = scalar_select %p367, %s368, %s369
    %p373 = pneg %p367
    %p374 = scmp.eq.s32.totalorder %s18, 3
    %p375 = por %p373, %p374
    %p376 = scmp.ne.s32.totalorder %s368, %s371
    %p377 = scmp.eq.s32.totalorder %s18, 0
    %p378 = por %p376, %p377
    %p379 = scmp.ne.s32.totalorder %s368, %s371
    %p380 = scmp.eq.s32.totalorder %s23, 3
    %p381 = por %p379, %p380
    %p382 = scmp.ne.s32.totalorder %s371, %s372
    %p383 = scmp.eq.s32.totalorder %s23, 0
    %p384 = por %p382, %p383
    %p385 = scmp.ne.s32.totalorder %s371, %s372
    %p386 = scmp.eq.s32.totalorder %s24, 3
    %p387 = por %p385, %p386
    %p389 = scmp.ne.s32.totalorder %s372, %s388
    %p390 = scmp.eq.s32.totalorder %s24, 0
    %p391 = por %p389, %p390
    %p392 = scmp.le.s32.totalorder 1, %s18
    %p393 = scmp.lt.s32.totalorder %s18, 5
    %p394 = pnand %p392, %p393
    %p395 = pneg %p394
    // Predicated region
    $region9: #{decoder_block_nhwc.1} parent=5 // pred_check
      _
    $region10: #{decoder_block_nhwc.1} parent=5 // pred_check_branch
      %397 = sbr.rel (%p394) target = $region12
    $region11: #{decoder_block_nhwc.1} parent=5 // pred_region
      %s398 = ssub.s32 %s18, 1
      // Predicated region
      $region13: #{decoder_block_nhwc.1} parent=11 // pred_check
        %p399 = pneg %p251
      $region14: #{decoder_block_nhwc.1} parent=11 // pred_check_branch
        %401 = sbr.rel (%p399) target = $region16
      $region15: #{decoder_block_nhwc.1} parent=11 // pred_region
        _
      $region16: #{decoder_block_nhwc.1} parent=11 // pred_fallthru
        _
      // Predicated region
      $region17: #{decoder_block_nhwc.1} parent=11 // pred_check
        %p402 = pneg %p272
      $region18: #{decoder_block_nhwc.1} parent=11 // pred_check_branch
        %404 = sbr.rel (%p402) target = $region20
      $region19: #{decoder_block_nhwc.1} parent=11 // pred_region
        _
      $region20: #{decoder_block_nhwc.1} parent=11 // pred_fallthru
        _
      // Predicated region
      $region21: #{decoder_block_nhwc.1} parent=11 // pred_check
        %p405 = pneg %p293
      $region22: #{decoder_block_nhwc.1} parent=11 // pred_check_branch
        %407 = sbr.rel (%p405) target = $region24
      $region23: #{decoder_block_nhwc.1} parent=11 // pred_region
        _
      $region24: #{decoder_block_nhwc.1} parent=11 // pred_fallthru
        _
      // Predicated region
      $region25: #{decoder_block_nhwc.1} parent=11 // pred_check
        %p408 = pneg %p314
      $region26: #{decoder_block_nhwc.1} parent=11 // pred_check_branch
        %410 = sbr.rel (%p408) target = $region28
      $region27: #{decoder_block_nhwc.1} parent=11 // pred_region
        _
      $region28: #{decoder_block_nhwc.1} parent=11 // pred_fallthru
        _
      // Predicated region
      $region29: #{decoder_block_nhwc.1} parent=11 // pred_check
        %p411 = pneg %p335
      $region30: #{decoder_block_nhwc.1} parent=11 // pred_check_branch
        %413 = sbr.rel (%p411) target = $region32
      $region31: #{decoder_block_nhwc.1} parent=11 // pred_region
        _
      $region32: #{decoder_block_nhwc.1} parent=11 // pred_fallthru
        _
      // Predicated region
      $region33: #{decoder_block_nhwc.1} parent=11 // pred_check
        %p414 = pneg %p356
      $region34: #{decoder_block_nhwc.1} parent=11 // pred_check_branch
        %416 = sbr.rel (%p414) target = $region36
      $region35: #{decoder_block_nhwc.1} parent=11 // pred_region
        _
      $region36: #{decoder_block_nhwc.1} parent=11 // pred_fallthru
        _
    $region12: #{decoder_block_nhwc.1} parent=5 // pred_fallthru
      _
    %p417 = scmp.lt.s32.totalorder %s18, 4
    // Predicated region
    $region37: #{decoder_block_nhwc.1} parent=5 // pred_check
      %p418 = pneg %p417
    $region38: #{decoder_block_nhwc.1} parent=5 // pred_check_branch
      %420 = sbr.rel (%p418) target = $region40
    $region39: #{decoder_block_nhwc.1} parent=5 // pred_region
      // Predicated region
      $region41: #{decoder_block_nhwc.1} parent=39 // pred_check
        %p421 = pneg %p52
      $region42: #{decoder_block_nhwc.1} parent=39 // pred_check_branch
        %423 = sbr.rel (%p421) target = $region44
      $region43: #{decoder_block_nhwc.1} parent=39 // pred_region
        %s424 = smul.u32 4, %s26
        %p425 = scmp.lt.s32.totalorder %s25, 1
        %s426 = scalar_select %p425, %s25, 1
        %p427 = scmp.lt.s32.totalorder %s424, 7
        %s428 = scalar_select %p427, %s424, 7
        %s429 = smul.addr %s426, 8
        %s430 = sadd.s32 %s428, %s429
        %s431 = smul.addr %s430, 8
        %s432 = scalar_lea.vmem %s0, %s431
        %s433 = smul.u32 4, %s26
      $region44: #{decoder_block_nhwc.1} parent=39 // pred_fallthru
        _
      // Predicated region
      $region45: #{decoder_block_nhwc.1} parent=39 // pred_check
        %p434 = pneg %p88
      $region46: #{decoder_block_nhwc.1} parent=39 // pred_check_branch
        %436 = sbr.rel (%p434) target = $region48
      $region47: #{decoder_block_nhwc.1} parent=39 // pred_region
        %s437 = smul.u32 %s26, 4
        %s438 = ssub.s32 %s437, 1
        %p439 = scmp.gt.s32.totalorder %s438, 0
        %s440 = scalar_select %p439, %s438, 0
        %p441 = scmp.lt.s32.totalorder %s25, 1
        %s442 = scalar_select %p441, %s25, 1
        %p443 = scmp.lt.s32.totalorder %s440, 7
        %s444 = scalar_select %p443, %s440, 7
        %s445 = smul.addr %s442, 8
        %s446 = sadd.s32 %s444, %s445
        %s447 = smul.addr %s446, 8
        %s448 = scalar_lea.vmem %s1, %s447
        %s449 = smul.u32 %s26, 4
        %s450 = ssub.s32 %s449, 1
        %p451 = scmp.gt.s32.totalorder %s450, 0
        %s452 = scalar_select %p451, %s450, 0
      $region48: #{decoder_block_nhwc.1} parent=39 // pred_fallthru
        _
      // Predicated region
      $region49: #{decoder_block_nhwc.1} parent=39 // pred_check
        %p453 = pneg %p124
      $region50: #{decoder_block_nhwc.1} parent=39 // pred_check_branch
        %455 = sbr.rel (%p453) target = $region52
      $region51: #{decoder_block_nhwc.1} parent=39 // pred_region
        %s456 = sadd.s32 %s26, 1
        %s457 = smul.u32 %s456, 4
        %p458 = scmp.lt.s32.totalorder %s457, 7
        %s459 = scalar_select %p458, %s457, 7
        %p460 = scmp.lt.s32.totalorder %s25, 1
        %s461 = scalar_select %p460, %s25, 1
        %p462 = scmp.lt.s32.totalorder %s459, 7
        %s463 = scalar_select %p462, %s459, 7
        %s464 = smul.addr %s461, 8
        %s465 = sadd.s32 %s463, %s464
        %s466 = smul.addr %s465, 8
        %s467 = scalar_lea.vmem %s2, %s466
        %s468 = sadd.s32 %s26, 1
        %s469 = smul.u32 %s468, 4
        %p470 = scmp.lt.s32.totalorder %s469, 7
        %s471 = scalar_select %p470, %s469, 7
      $region52: #{decoder_block_nhwc.1} parent=39 // pred_fallthru
        _
      // Predicated region
      $region53: #{decoder_block_nhwc.1} parent=39 // pred_check
        %p472 = pneg %p152
      $region54: #{decoder_block_nhwc.1} parent=39 // pred_check_branch
        %474 = sbr.rel (%p472) target = $region56
      $region55: #{decoder_block_nhwc.1} parent=39 // pred_region
        %s475 = smul.u32 8, %s26
        %p476 = scmp.lt.s32.totalorder %s25, 1
        %s477 = scalar_select %p476, %s25, 1
        %p478 = scmp.lt.s32.totalorder %s475, 15
        %s479 = scalar_select %p478, %s475, 15
        %s480 = smul.addr %s479, 2
        %s481 = smul.addr %s477, 32
        %s482 = sadd.s32 %s480, %s481
        %s483 = smul.addr %s482, 8
        %s484 = scalar_lea.vmem %s3, %s483
        %s485 = smul.u32 8, %s26
      $region56: #{decoder_block_nhwc.1} parent=39 // pred_fallthru
        _
      // Predicated region
      $region57: #{decoder_block_nhwc.1} parent=39 // pred_check
        %p486 = pneg %p188
      $region58: #{decoder_block_nhwc.1} parent=39 // pred_check_branch
        %488 = sbr.rel (%p486) target = $region60
      $region59: #{decoder_block_nhwc.1} parent=39 // pred_region
        %s489 = smul.u32 %s26, 4
        %s490 = ssub.s32 %s489, 1
        %p491 = scmp.gt.s32.totalorder %s490, 0
        %s492 = scalar_select %p491, %s490, 0
        %s493 = smul.u32 2, %s492
        %p494 = scmp.lt.s32.totalorder %s25, 1
        %s495 = scalar_select %p494, %s25, 1
        %p496 = scmp.lt.s32.totalorder %s493, 15
        %s497 = scalar_select %p496, %s493, 15
        %s498 = smul.addr %s497, 2
        %s499 = smul.addr %s495, 32
        %s500 = sadd.s32 %s498, %s499
        %s501 = smul.addr %s500, 8
        %s502 = scalar_lea.vmem %s4, %s501
        %s503 = smul.u32 %s26, 4
        %s504 = ssub.s32 %s503, 1
        %p505 = scmp.gt.s32.totalorder %s504, 0
        %s506 = scalar_select %p505, %s504, 0
        %s507 = smul.u32 2, %s506
      $region60: #{decoder_block_nhwc.1} parent=39 // pred_fallthru
        _
      // Predicated region
      $region61: #{decoder_block_nhwc.1} parent=39 // pred_check
        %p508 = pneg %p224
      $region62: #{decoder_block_nhwc.1} parent=39 // pred_check_branch
        %510 = sbr.rel (%p508) target = $region64
      $region63: #{decoder_block_nhwc.1} parent=39 // pred_region
        %s511 = sadd.s32 %s26, 1
        %s512 = smul.u32 %s511, 4
        %p513 = scmp.lt.s32.totalorder %s512, 7
        %s514 = scalar_select %p513, %s512, 7
        %s515 = smul.u32 2, %s514
        %p516 = scmp.lt.s32.totalorder %s25, 1
        %s517 = scalar_select %p516, %s25, 1
        %p518 = scmp.lt.s32.totalorder %s515, 15
        %s519 = scalar_select %p518, %s515, 15
        %s520 = smul.addr %s519, 2
        %s521 = smul.addr %s517, 32
        %s522 = sadd.s32 %s520, %s521
        %s523 = smul.addr %s522, 8
        %s524 = scalar_lea.vmem %s5, %s523
        %s525 = sadd.s32 %s26, 1
        %s526 = smul.u32 %s525, 4
        %p527 = scmp.lt.s32.totalorder %s526, 7
        %s528 = scalar_select %p527, %s526, 7
        %s529 = smul.u32 2, %s528
      $region64: #{decoder_block_nhwc.1} parent=39 // pred_fallthru
        _
    $region40: #{decoder_block_nhwc.1} parent=5 // pred_fallthru
      _
    %p530 = scmp.le.s32.totalorder 1, %s18
    %p531 = scmp.lt.s32.totalorder %s18, 5
    %p532 = pnand %p530, %p531
    %p533 = pneg %p532
    // Predicated region
    $region65: #{decoder_block_nhwc.1} parent=5 // pred_check
      _
    $region66: #{decoder_block_nhwc.1} parent=5 // pred_check_branch
      %535 = sbr.rel (%p532) target = $region68
    $region67: #{decoder_block_nhwc.1} parent=5 // pred_region
      %s536 = ssub.s32 %s18, 1
      %s537 = smul.u32 4, %s28
      %p538 = scmp.lt.s32.totalorder %s27, 1
      %s539 = scalar_select %p538, %s27, 1
      %p540 = scmp.lt.s32.totalorder %s537, 7
      %s541 = scalar_select %p540, %s537, 7
      %s542 = smul.addr %s539, 8
      %s543 = sadd.s32 %s541, %s542
      %s544 = smul.addr %s543, 8
      %s545 = scalar_lea.vmem %s0, %s544
      %p546 = pneg %p58
      %p547 = pneg %p55
      %s548 = smul.u32 %s28, 4
      %s549 = ssub.s32 %s548, 1
      %p550 = scmp.gt.s32.totalorder %s549, 0
      %s551 = scalar_select %p550, %s549, 0
      %p552 = scmp.lt.s32.totalorder %s27, 1
      %s553 = scalar_select %p552, %s27, 1
      %p554 = scmp.lt.s32.totalorder %s551, 7
      %s555 = scalar_select %p554, %s551, 7
      %s556 = smul.addr %s553, 8
      %s557 = sadd.s32 %s555, %s556
      %s558 = smul.addr %s557, 8
      %s559 = scalar_lea.vmem %s1, %s558
      %p560 = pneg %p94
      %p561 = pneg %p91
      %s562 = sadd.s32 %s28, 1
      %s563 = smul.u32 %s562, 4
      %p564 = scmp.lt.s32.totalorder %s563, 7
      %s565 = scalar_select %p564, %s563, 7
      %p566 = scmp.lt.s32.totalorder %s27, 1
      %s567 = scalar_select %p566, %s27, 1
      %p568 = scmp.lt.s32.totalorder %s565, 7
      %s569 = scalar_select %p568, %s565, 7
      %s570 = smul.addr %s567, 8
      %s571 = sadd.s32 %s569, %s570
      %s572 = smul.addr %s571, 8
      %s573 = scalar_lea.vmem %s2, %s572
      %p574 = pneg %p130
      %p575 = pneg %p127
      %s576 = smul.u32 8, %s28
      %p577 = scmp.lt.s32.totalorder %s27, 1
      %s578 = scalar_select %p577, %s27, 1
      %p579 = scmp.lt.s32.totalorder %s576, 15
      %s580 = scalar_select %p579, %s576, 15
      %s581 = smul.addr %s580, 2
      %s582 = smul.addr %s578, 32
      %s583 = sadd.s32 %s581, %s582
      %s584 = smul.addr %s583, 8
      %s585 = scalar_lea.vmem %s3, %s584
      %p586 = pneg %p158
      %p587 = pneg %p155
      %s588 = smul.u32 %s28, 4
      %s589 = ssub.s32 %s588, 1
      %p590 = scmp.gt.s32.totalorder %s589, 0
      %s591 = scalar_select %p590, %s589, 0
      %s592 = smul.u32 2, %s591
      %p593 = scmp.lt.s32.totalorder %s27, 1
      %s594 = scalar_select %p593, %s27, 1
      %p595 = scmp.lt.s32.totalorder %s592, 15
      %s596 = scalar_select %p595, %s592, 15
      %s597 = smul.addr %s596, 2
      %s598 = smul.addr %s594, 32
      %s599 = sadd.s32 %s597, %s598
      %s600 = smul.addr %s599, 8
      %s601 = scalar_lea.vmem %s4, %s600
      %p602 = pneg %p194
      %p603 = pneg %p191
      %s604 = sadd.s32 %s28, 1
      %s605 = smul.u32 %s604, 4
      %p606 = scmp.lt.s32.totalorder %s605, 7
      %s607 = scalar_select %p606, %s605, 7
      %s608 = smul.u32 2, %s607
      %p609 = scmp.lt.s32.totalorder %s27, 1
      %s610 = scalar_select %p609, %s27, 1
      %p611 = scmp.lt.s32.totalorder %s608, 15
      %s612 = scalar_select %p611, %s608, 15
      %s613 = smul.addr %s612, 2
      %s614 = smul.addr %s610, 32
      %s615 = sadd.s32 %s613, %s614
      %s616 = smul.addr %s615, 8
      %s617 = scalar_lea.vmem %s5, %s616
      %p618 = pneg %p230
      %p619 = pneg %p227
      %p620 = pneg %p251
      %p621 = pneg %p248
      %p622 = pneg %p272
      %p623 = pneg %p269
      %p624 = pneg %p293
      %p625 = pneg %p290
      %p626 = pneg %p314
      %p627 = pneg %p311
      %p628 = pneg %p335
      %p629 = pneg %p332
      %p630 = pneg %p356
      %p631 = pneg %p353
      %p632 = pneg %p384
      %p633 = pneg %p381
      %s634 = smul.u32 8, %s28
      %p635 = scmp.lt.s32.totalorder %s27, 1
      %s636 = scalar_select %p635, %s27, 1
      %p637 = scmp.lt.s32.totalorder %s634, 15
      %s638 = scalar_select %p637, %s634, 15
      %s639 = smul.addr %s638, 2
      %s640 = smul.addr %s636, 32
      %s641 = sadd.s32 %s639, %s640
      %s642 = smul.addr %s641, 8
      %s643 = scalar_lea.vmem %s12, %s642
      %s644 = smul.u32 4, %s28
      %p645 = scmp.lt.s32.totalorder %s27, 1
      %s646 = scalar_select %p645, %s27, 1
      %p647 = scmp.lt.s32.totalorder %s644, 7
      %s648 = scalar_select %p647, %s644, 7
      %s649 = smul.addr %s646, 8
      %s650 = sadd.s32 %s648, %s649
      %s651 = smul.addr %s650, 8
      %s652 = scalar_lea.vmem %s0, %s651
      %s653 = smul.u32 4, %s28
      %s654 = smul.u32 %s28, 4
      %s655 = ssub.s32 %s654, 1
      %p656 = scmp.gt.s32.totalorder %s655, 0
      %s657 = scalar_select %p656, %s655, 0
      %p658 = scmp.lt.s32.totalorder %s27, 1
      %s659 = scalar_select %p658, %s27, 1
      %p660 = scmp.lt.s32.totalorder %s657, 7
      %s661 = scalar_select %p660, %s657, 7
      %s662 = smul.addr %s659, 8
      %s663 = sadd.s32 %s661, %s662
      %s664 = smul.addr %s663, 8
      %s665 = scalar_lea.vmem %s1, %s664
      %s666 = smul.u32 %s28, 4
      %s667 = ssub.s32 %s666, 1
      %p668 = scmp.gt.s32.totalorder %s667, 0
      %s669 = scalar_select %p668, %s667, 0
      %s670 = sadd.s32 %s28, 1
      %s671 = smul.u32 %s670, 4
      %p672 = scmp.lt.s32.totalorder %s671, 7
      %s673 = scalar_select %p672, %s671, 7
      %p674 = scmp.lt.s32.totalorder %s27, 1
      %s675 = scalar_select %p674, %s27, 1
      %p676 = scmp.lt.s32.totalorder %s673, 7
      %s677 = scalar_select %p676, %s673, 7
      %s678 = smul.addr %s675, 8
      %s679 = sadd.s32 %s677, %s678
      %s680 = smul.addr %s679, 8
      %s681 = scalar_lea.vmem %s2, %s680
      %s682 = sadd.s32 %s28, 1
      %s683 = smul.u32 %s682, 4
      %p684 = scmp.lt.s32.totalorder %s683, 7
      %s685 = scalar_select %p684, %s683, 7
      %s686 = smul.u32 8, %s28
      %p687 = scmp.lt.s32.totalorder %s27, 1
      %s688 = scalar_select %p687, %s27, 1
      %p689 = scmp.lt.s32.totalorder %s686, 15
      %s690 = scalar_select %p689, %s686, 15
      %s691 = smul.addr %s690, 2
      %s692 = smul.addr %s688, 32
      %s693 = sadd.s32 %s691, %s692
      %s694 = smul.addr %s693, 8
      %s695 = scalar_lea.vmem %s3, %s694
      %s696 = smul.u32 8, %s28
      %s697 = smul.u32 %s28, 4
      %s698 = ssub.s32 %s697, 1
      %p699 = scmp.gt.s32.totalorder %s698, 0
      %s700 = scalar_select %p699, %s698, 0
      %s701 = smul.u32 2, %s700
      %p702 = scmp.lt.s32.totalorder %s27, 1
      %s703 = scalar_select %p702, %s27, 1
      %p704 = scmp.lt.s32.totalorder %s701, 15
      %s705 = scalar_select %p704, %s701, 15
      %s706 = smul.addr %s705, 2
      %s707 = smul.addr %s703, 32
      %s708 = sadd.s32 %s706, %s707
      %s709 = smul.addr %s708, 8
      %s710 = scalar_lea.vmem %s4, %s709
      %s711 = smul.u32 %s28, 4
      %s712 = ssub.s32 %s711, 1
      %p713 = scmp.gt.s32.totalorder %s712, 0
      %s714 = scalar_select %p713, %s712, 0
      %s715 = smul.u32 2, %s714
      %s716 = sadd.s32 %s28, 1
      %s717 = smul.u32 %s716, 4
      %p718 = scmp.lt.s32.totalorder %s717, 7
      %s719 = scalar_select %p718, %s717, 7
      %s720 = smul.u32 2, %s719
      %p721 = scmp.lt.s32.totalorder %s27, 1
      %s722 = scalar_select %p721, %s27, 1
      %p723 = scmp.lt.s32.totalorder %s720, 15
      %s724 = scalar_select %p723, %s720, 15
      %s725 = smul.addr %s724, 2
      %s726 = smul.addr %s722, 32
      %s727 = sadd.s32 %s725, %s726
      %s728 = smul.addr %s727, 8
      %s729 = scalar_lea.vmem %s5, %s728
      %s730 = sadd.s32 %s28, 1
      %s731 = smul.u32 %s730, 4
      %p732 = scmp.lt.s32.totalorder %s731, 7
      %s733 = scalar_select %p732, %s731, 7
      %s734 = smul.u32 2, %s733
      %s735 = smul.u32 8, %s28
      %p736 = scmp.lt.s32.totalorder %s27, 1
      %s737 = scalar_select %p736, %s27, 1
      %p738 = scmp.lt.s32.totalorder %s735, 15
      %s739 = scalar_select %p738, %s735, 15
      %s740 = smul.addr %s739, 2
      %s741 = smul.addr %s737, 32
      %s742 = sadd.s32 %s740, %s741
      %s743 = smul.addr %s742, 8
      %s744 = scalar_lea.vmem %s12, %s743
      %s745 = smul.u32 8, %s28
      %p746 = scmp.eq.s32.totalorder %s28, 0
      %p747 = scmp.eq.s32.totalorder %s28, 1
      %vm748 = vcmask 188416
      %749 = vst.msk [vmem:[#allocation2] sm:$0x1] %vm748, 0.0
      %750 = vst.msk [vmem:[#allocation2 + $0x18] sm:$0x1] %vm748, 0.0
      %751 = vst.msk [vmem:[#allocation2 + $0x30] sm:$0x1] %vm748, 0.0
      %752 = vst.msk [vmem:[#allocation2 + $0x48] sm:$0x1] %vm748, 0.0
      %753 = vst.msk [vmem:[#allocation2 + $0x60] sm:$0x1] %vm748, 0.0
      %754 = vst.msk [vmem:[#allocation2 + $0x78] sm:$0x1] %vm748, 0.0
      %755 = vst.msk [vmem:[#allocation2 + $0x90] sm:$0x1] %vm748, 0.0
      %756 = vst.msk [vmem:[#allocation2 + $0xa8] sm:$0x1] %vm748, 0.0
      %757 = vst.msk [vmem:[#allocation2 + $0xc0] sm:$0x1] %vm748, 0.0
      %758 = vst.msk [vmem:[#allocation2 + $0xd8] sm:$0x1] %vm748, 0.0
      %759 = vst.msk [vmem:[#allocation2 + $0xf0] sm:$0x1] %vm748, 0.0
      %760 = vst.msk [vmem:[#allocation2 + $0x108] sm:$0x1] %vm748, 0.0
      %761 = vst.msk [vmem:[#allocation2 + $0x11] sm:$0x1] %vm748, 0.0
      %762 = vst.msk [vmem:[#allocation2 + $0x29] sm:$0x1] %vm748, 0.0
      %763 = vst.msk [vmem:[#allocation2 + $0x41] sm:$0x1] %vm748, 0.0
      %764 = vst.msk [vmem:[#allocation2 + $0x59] sm:$0x1] %vm748, 0.0
      %765 = vst.msk [vmem:[#allocation2 + $0x71] sm:$0x1] %vm748, 0.0
      %766 = vst.msk [vmem:[#allocation2 + $0x89] sm:$0x1] %vm748, 0.0
      %767 = vst.msk [vmem:[#allocation2 + $0xa1] sm:$0x1] %vm748, 0.0
      %768 = vst.msk [vmem:[#allocation2 + $0xb9] sm:$0x1] %vm748, 0.0
      %769 = vst.msk [vmem:[#allocation2 + $0xd1] sm:$0x1] %vm748, 0.0
      %770 = vst.msk [vmem:[#allocation2 + $0xe9] sm:$0x1] %vm748, 0.0
      %771 = vst.msk [vmem:[#allocation2 + $0x101] sm:$0x1] %vm748, 0.0
      %772 = vst.msk [vmem:[#allocation2 + $0x119] sm:$0x1] %vm748, 0.0
      %vm773 = vcmask 57344
      %774 = vst.msk [vmem:[#allocation3] sm:$0x1] %vm773, 0.0
      %775 = vst.msk [vmem:[#allocation3 + $0x18] sm:$0x1] %vm773, 0.0
      %776 = vst.msk [vmem:[#allocation3 + $0x30] sm:$0x1] %vm773, 0.0
      %777 = vst.msk [vmem:[#allocation3 + $0x48] sm:$0x1] %vm773, 0.0
      %778 = vst.msk [vmem:[#allocation3 + $0x60] sm:$0x1] %vm773, 0.0
      %779 = vst.msk [vmem:[#allocation3 + $0x78] sm:$0x1] %vm773, 0.0
      %780 = vst.msk [vmem:[#allocation3 + $0x90] sm:$0x1] %vm773, 0.0
      %781 = vst.msk [vmem:[#allocation3 + $0xa8] sm:$0x1] %vm773, 0.0
      %782 = vst.msk [vmem:[#allocation3 + $0xc0] sm:$0x1] %vm773, 0.0
      %783 = vst.msk [vmem:[#allocation3 + $0xd8] sm:$0x1] %vm773, 0.0
      %784 = vst.msk [vmem:[#allocation3 + $0x11] sm:$0x1] %vm773, 0.0
      %785 = vst.msk [vmem:[#allocation3 + $0x29] sm:$0x1] %vm773, 0.0
      %786 = vst.msk [vmem:[#allocation3 + $0x41] sm:$0x1] %vm773, 0.0
      %787 = vst.msk [vmem:[#allocation3 + $0x59] sm:$0x1] %vm773, 0.0
      %788 = vst.msk [vmem:[#allocation3 + $0x71] sm:$0x1] %vm773, 0.0
      %789 = vst.msk [vmem:[#allocation3 + $0x89] sm:$0x1] %vm773, 0.0
      %790 = vst.msk [vmem:[#allocation3 + $0xa1] sm:$0x1] %vm773, 0.0
      %791 = vst.msk [vmem:[#allocation3 + $0xb9] sm:$0x1] %vm773, 0.0
      %792 = vst.msk [vmem:[#allocation3 + $0xd1] sm:$0x1] %vm773, 0.0
      %793 = vst.msk [vmem:[#allocation3 + $0xe9] sm:$0x1] %vm773, 0.0
      %v794 = vld [vmem:[%s665] sm:$0xff]
      %v795 = vld [vmem:[%s652] sm:$0xff]
      %v796 = vld [vmem:[%s652 + $0x8] sm:$0xff]
      %v797 = vld [vmem:[%s652 + $0x10] sm:$0xff]
      %v798 = vld [vmem:[%s652 + $0x18] sm:$0xff]
      %v799 = vld [vmem:[%s681] sm:$0xff]
      %v806 = vcombine.high %v794, %v794
      %v808 = vunpack.c.l.s4 1966171168
      %v809 = vunpack.c.0.s8 %v808
      %v810 = vlaneseq
      %v811 = vshrl.u32 %v810, 7
      %v812 = vsub.s32 %v809, %v811
      %v813 = vrot.slane %v794, %v812
      %v815 = vunpack.c.l.s4 1966171168
      %v816 = vunpack.c.0.s8 %v815
      %v817 = vlaneseq
      %v818 = vshrl.u32 %v817, 7
      %v819 = vsub.s32 %v816, %v818
      %v820 = vrot.slane %v806, %v819
      %v821 = vcombine.high %v813, %v813
      %v822 = vcombine.high %v820, %v820
      %v824 = vunpack.c.l.s4 1966171168
      %v825 = vunpack.c.0.s8 %v824
      %v826 = vlaneseq
      %v827 = vshrl.u32 %v826, 7
      %v828 = vsub.s32 %v825, %v827
      %v829 = vrot.slane %v813, %v828
      %v831 = vunpack.c.l.s4 1966171168
      %v832 = vunpack.c.0.s8 %v831
      %v833 = vlaneseq
      %v834 = vshrl.u32 %v833, 7
      %v835 = vsub.s32 %v832, %v834
      %v836 = vrot.slane %v820, %v835
      %v838 = vunpack.c.l.s4 1966171168
      %v839 = vunpack.c.0.s8 %v838
      %v840 = vlaneseq
      %v841 = vshrl.u32 %v840, 7
      %v842 = vsub.s32 %v839, %v841
      %v843 = vrot.slane %v821, %v842
      %v845 = vunpack.c.l.s4 1966171168
      %v846 = vunpack.c.0.s8 %v845
      %v847 = vlaneseq
      %v848 = vshrl.u32 %v847, 7
      %v849 = vsub.s32 %v846, %v848
      %v850 = vrot.slane %v822, %v849
      %v851 = vcombine.high %v829, %v829
      %v852 = vcombine.high %v836, %v836
      %v853 = vcombine.high %v843, %v843
      %v854 = vcombine.high %v850, %v850
      %v855 = vcombine.high %v795, %v795
      %v857 = vunpack.c.l.s4 1966171168
      %v858 = vunpack.c.0.s8 %v857
      %v859 = vlaneseq
      %v860 = vshrl.u32 %v859, 7
      %v861 = vsub.s32 %v858, %v860
      %v862 = vrot.slane %v795, %v861
      %v864 = vunpack.c.l.s4 1966171168
      %v865 = vunpack.c.0.s8 %v864
      %v866 = vlaneseq
      %v867 = vshrl.u32 %v866, 7
      %v868 = vsub.s32 %v865, %v867
      %v869 = vrot.slane %v855, %v868
      %v870 = vcombine.high %v862, %v862
      %v871 = vcombine.high %v869, %v869
      %v873 = vunpack.c.l.s4 1966171168
      %v874 = vunpack.c.0.s8 %v873
      %v875 = vlaneseq
      %v876 = vshrl.u32 %v875, 7
      %v877 = vsub.s32 %v874, %v876
      %v878 = vrot.slane %v862, %v877
      %v880 = vunpack.c.l.s4 1966171168
      %v881 = vunpack.c.0.s8 %v880
      %v882 = vlaneseq
      %v883 = vshrl.u32 %v882, 7
      %v884 = vsub.s32 %v881, %v883
      %v885 = vrot.slane %v869, %v884
      %v887 = vunpack.c.l.s4 1966171168
      %v888 = vunpack.c.0.s8 %v887
      %v889 = vlaneseq
      %v890 = vshrl.u32 %v889, 7
      %v891 = vsub.s32 %v888, %v890
      %v892 = vrot.slane %v870, %v891
      %v894 = vunpack.c.l.s4 1966171168
      %v895 = vunpack.c.0.s8 %v894
      %v896 = vlaneseq
      %v897 = vshrl.u32 %v896, 7
      %v898 = vsub.s32 %v895, %v897
      %v899 = vrot.slane %v871, %v898
      %v900 = vcombine.high %v878, %v878
      %v901 = vcombine.high %v885, %v885
      %v902 = vcombine.high %v892, %v892
      %v903 = vcombine.high %v899, %v899
      %v904 = vcombine.high %v796, %v796
      %v906 = vunpack.c.l.s4 1966171168
      %v907 = vunpack.c.0.s8 %v906
      %v908 = vlaneseq
      %v909 = vshrl.u32 %v908, 7
      %v910 = vsub.s32 %v907, %v909
      %v911 = vrot.slane %v796, %v910
      %v913 = vunpack.c.l.s4 1966171168
      %v914 = vunpack.c.0.s8 %v913
      %v915 = vlaneseq
      %v916 = vshrl.u32 %v915, 7
      %v917 = vsub.s32 %v914, %v916
      %v918 = vrot.slane %v904, %v917
      %v919 = vcombine.high %v911, %v911
      %v920 = vcombine.high %v918, %v918
      %v922 = vunpack.c.l.s4 1966171168
      %v923 = vunpack.c.0.s8 %v922
      %v924 = vlaneseq
      %v925 = vshrl.u32 %v924, 7
      %v926 = vsub.s32 %v923, %v925
      %v927 = vrot.slane %v911, %v926
      %v929 = vunpack.c.l.s4 1966171168
      %v930 = vunpack.c.0.s8 %v929
      %v931 = vlaneseq
      %v932 = vshrl.u32 %v931, 7
      %v933 = vsub.s32 %v930, %v932
      %v934 = vrot.slane %v918, %v933
      %v936 = vunpack.c.l.s4 1966171168
      %v937 = vunpack.c.0.s8 %v936
      %v938 = vlaneseq
      %v939 = vshrl.u32 %v938, 7
      %v940 = vsub.s32 %v937, %v939
      %v941 = vrot.slane %v919, %v940
      %v943 = vunpack.c.l.s4 1966171168
      %v944 = vunpack.c.0.s8 %v943
      %v945 = vlaneseq
      %v946 = vshrl.u32 %v945, 7
      %v947 = vsub.s32 %v944, %v946
      %v948 = vrot.slane %v920, %v947
      %v949 = vcombine.high %v927, %v927
      %v950 = vcombine.high %v934, %v934
      %v951 = vcombine.high %v941, %v941
      %v952 = vcombine.high %v948, %v948
      %v953 = vcombine.high %v797, %v797
      %v955 = vunpack.c.l.s4 1966171168
      %v956 = vunpack.c.0.s8 %v955
      %v957 = vlaneseq
      %v958 = vshrl.u32 %v957, 7
      %v959 = vsub.s32 %v956, %v958
      %v960 = vrot.slane %v797, %v959
      %v962 = vunpack.c.l.s4 1966171168
      %v963 = vunpack.c.0.s8 %v962
      %v964 = vlaneseq
      %v965 = vshrl.u32 %v964, 7
      %v966 = vsub.s32 %v963, %v965
      %v967 = vrot.slane %v953, %v966
      %v968 = vcombine.high %v960, %v960
      %v969 = vcombine.high %v967, %v967
      %v971 = vunpack.c.l.s4 1966171168
      %v972 = vunpack.c.0.s8 %v971
      %v973 = vlaneseq
      %v974 = vshrl.u32 %v973, 7
      %v975 = vsub.s32 %v972, %v974
      %v976 = vrot.slane %v960, %v975
      %v978 = vunpack.c.l.s4 1966171168
      %v979 = vunpack.c.0.s8 %v978
      %v980 = vlaneseq
      %v981 = vshrl.u32 %v980, 7
      %v982 = vsub.s32 %v979, %v981
      %v983 = vrot.slane %v967, %v982
      %v985 = vunpack.c.l.s4 1966171168
      %v986 = vunpack.c.0.s8 %v985
      %v987 = vlaneseq
      %v988 = vshrl.u32 %v987, 7
      %v989 = vsub.s32 %v986, %v988
      %v990 = vrot.slane %v968, %v989
      %v992 = vunpack.c.l.s4 1966171168
      %v993 = vunpack.c.0.s8 %v992
      %v994 = vlaneseq
      %v995 = vshrl.u32 %v994, 7
      %v996 = vsub.s32 %v993, %v995
      %v997 = vrot.slane %v969, %v996
      %v998 = vcombine.high %v976, %v976
      %v999 = vcombine.high %v983, %v983
      %v1000 = vcombine.high %v990, %v990
      %v1001 = vcombine.high %v997, %v997
      %v1002 = vcombine.high %v798, %v798
      %v1004 = vunpack.c.l.s4 1966171168
      %v1005 = vunpack.c.0.s8 %v1004
      %v1006 = vlaneseq
      %v1007 = vshrl.u32 %v1006, 7
      %v1008 = vsub.s32 %v1005, %v1007
      %v1009 = vrot.slane %v798, %v1008
      %v1011 = vunpack.c.l.s4 1966171168
      %v1012 = vunpack.c.0.s8 %v1011
      %v1013 = vlaneseq
      %v1014 = vshrl.u32 %v1013, 7
      %v1015 = vsub.s32 %v1012, %v1014
      %v1016 = vrot.slane %v1002, %v1015
      %v1017 = vcombine.high %v1009, %v1009
      %v1018 = vcombine.high %v1016, %v1016
      %v1020 = vunpack.c.l.s4 1966171168
      %v1021 = vunpack.c.0.s8 %v1020
      %v1022 = vlaneseq
      %v1023 = vshrl.u32 %v1022, 7
      %v1024 = vsub.s32 %v1021, %v1023
      %v1025 = vrot.slane %v1009, %v1024
      %v1027 = vunpack.c.l.s4 1966171168
      %v1028 = vunpack.c.0.s8 %v1027
      %v1029 = vlaneseq
      %v1030 = vshrl.u32 %v1029, 7
      %v1031 = vsub.s32 %v1028, %v1030
      %v1032 = vrot.slane %v1016, %v1031
      %v1034 = vunpack.c.l.s4 1966171168
      %v1035 = vunpack.c.0.s8 %v1034
      %v1036 = vlaneseq
      %v1037 = vshrl.u32 %v1036, 7
      %v1038 = vsub.s32 %v1035, %v1037
      %v1039 = vrot.slane %v1017, %v1038
      %v1041 = vunpack.c.l.s4 1966171168
      %v1042 = vunpack.c.0.s8 %v1041
      %v1043 = vlaneseq
      %v1044 = vshrl.u32 %v1043, 7
      %v1045 = vsub.s32 %v1042, %v1044
      %v1046 = vrot.slane %v1018, %v1045
      %v1047 = vcombine.high %v1025, %v1025
      %v1048 = vcombine.high %v1032, %v1032
      %v1049 = vcombine.high %v1039, %v1039
      %v1050 = vcombine.high %v1046, %v1046
      %v1051 = vcombine.high %v799, %v799
      %v1053 = vunpack.c.l.s4 1966171168
      %v1054 = vunpack.c.0.s8 %v1053
      %v1055 = vlaneseq
      %v1056 = vshrl.u32 %v1055, 7
      %v1057 = vsub.s32 %v1054, %v1056
      %v1058 = vrot.slane %v799, %v1057
      %v1060 = vunpack.c.l.s4 1966171168
      %v1061 = vunpack.c.0.s8 %v1060
      %v1062 = vlaneseq
      %v1063 = vshrl.u32 %v1062, 7
      %v1064 = vsub.s32 %v1061, %v1063
      %v1065 = vrot.slane %v1051, %v1064
      %v1066 = vcombine.high %v1058, %v1058
      %v1067 = vcombine.high %v1065, %v1065
      %v1069 = vunpack.c.l.s4 1966171168
      %v1070 = vunpack.c.0.s8 %v1069
      %v1071 = vlaneseq
      %v1072 = vshrl.u32 %v1071, 7
      %v1073 = vsub.s32 %v1070, %v1072
      %v1074 = vrot.slane %v1058, %v1073
      %v1076 = vunpack.c.l.s4 1966171168
      %v1077 = vunpack.c.0.s8 %v1076
      %v1078 = vlaneseq
      %v1079 = vshrl.u32 %v1078, 7
      %v1080 = vsub.s32 %v1077, %v1079
      %v1081 = vrot.slane %v1065, %v1080
      %v1083 = vunpack.c.l.s4 1966171168
      %v1084 = vunpack.c.0.s8 %v1083
      %v1085 = vlaneseq
      %v1086 = vshrl.u32 %v1085, 7
      %v1087 = vsub.s32 %v1084, %v1086
      %v1088 = vrot.slane %v1066, %v1087
      %v1090 = vunpack.c.l.s4 1966171168
      %v1091 = vunpack.c.0.s8 %v1090
      %v1092 = vlaneseq
      %v1093 = vshrl.u32 %v1092, 7
      %v1094 = vsub.s32 %v1091, %v1093
      %v1095 = vrot.slane %v1067, %v1094
      %v1096 = vcombine.high %v1074, %v1074
      %v1097 = vcombine.high %v1081, %v1081
      %v1098 = vcombine.high %v1088, %v1088
      %v1099 = vcombine.high %v1095, %v1095
      %v1100 = vlaneseq
      %v1101 = vshrl.u32 %v1100, 7
      %v1102 = vsub.s32 0, %v1101
      %v1103 = vrot.slane %v829, %v1102
      %v1104 = vlaneseq
      %v1105 = vshrl.u32 %v1104, 7
      %v1106 = vsub.s32 0, %v1105
      %v1107 = vrot.slane %v843, %v1106
      %v1108 = vlaneseq
      %v1109 = vshrl.u32 %v1108, 7
      %v1110 = vsub.s32 0, %v1109
      %v1111 = vrot.slane %v851, %v1110
      %v1112 = vlaneseq
      %v1113 = vshrl.u32 %v1112, 7
      %v1114 = vsub.s32 0, %v1113
      %v1115 = vrot.slane %v853, %v1114
      %v1116 = vlaneseq
      %v1117 = vshrl.u32 %v1116, 7
      %v1118 = vsub.s32 0, %v1117
      %v1119 = vrot.slane %v836, %v1118
      %v1120 = vlaneseq
      %v1121 = vshrl.u32 %v1120, 7
      %v1122 = vsub.s32 0, %v1121
      %v1123 = vrot.slane %v850, %v1122
      %v1124 = vlaneseq
      %v1125 = vshrl.u32 %v1124, 7
      %v1126 = vsub.s32 0, %v1125
      %v1127 = vrot.slane %v852, %v1126
      %v1128 = vlaneseq
      %v1129 = vshrl.u32 %v1128, 7
      %v1130 = vsub.s32 0, %v1129
      %v1131 = vrot.slane %v854, %v1130
      %v1132 = vlaneseq
      %v1133 = vshrl.u32 %v1132, 7
      %v1134 = vsub.s32 0, %v1133
      %v1135 = vrot.slane %v878, %v1134
      %v1136 = vlaneseq
      %v1137 = vshrl.u32 %v1136, 7
      %v1138 = vsub.s32 0, %v1137
      %v1139 = vrot.slane %v892, %v1138
      %v1140 = vlaneseq
      %v1141 = vshrl.u32 %v1140, 7
      %v1142 = vsub.s32 0, %v1141
      %v1143 = vrot.slane %v900, %v1142
      %v1144 = vlaneseq
      %v1145 = vshrl.u32 %v1144, 7
      %v1146 = vsub.s32 0, %v1145
      %v1147 = vrot.slane %v902, %v1146
      %v1148 = vlaneseq
      %v1149 = vshrl.u32 %v1148, 7
      %v1150 = vsub.s32 0, %v1149
      %v1151 = vrot.slane %v885, %v1150
      %v1152 = vlaneseq
      %v1153 = vshrl.u32 %v1152, 7
      %v1154 = vsub.s32 0, %v1153
      %v1155 = vrot.slane %v899, %v1154
      %v1156 = vlaneseq
      %v1157 = vshrl.u32 %v1156, 7
      %v1158 = vsub.s32 0, %v1157
      %v1159 = vrot.slane %v901, %v1158
      %v1160 = vlaneseq
      %v1161 = vshrl.u32 %v1160, 7
      %v1162 = vsub.s32 0, %v1161
      %v1163 = vrot.slane %v903, %v1162
      %v1164 = vlaneseq
      %v1165 = vshrl.u32 %v1164, 7
      %v1166 = vsub.s32 0, %v1165
      %v1167 = vrot.slane %v927, %v1166
      %v1168 = vlaneseq
      %v1169 = vshrl.u32 %v1168, 7
      %v1170 = vsub.s32 0, %v1169
      %v1171 = vrot.slane %v941, %v1170
      %v1172 = vlaneseq
      %v1173 = vshrl.u32 %v1172, 7
      %v1174 = vsub.s32 0, %v1173
      %v1175 = vrot.slane %v949, %v1174
      %v1176 = vlaneseq
      %v1177 = vshrl.u32 %v1176, 7
      %v1178 = vsub.s32 0, %v1177
      %v1179 = vrot.slane %v951, %v1178
      %v1180 = vlaneseq
      %v1181 = vshrl.u32 %v1180, 7
      %v1182 = vsub.s32 0, %v1181
      %v1183 = vrot.slane %v934, %v1182
      %v1184 = vlaneseq
      %v1185 = vshrl.u32 %v1184, 7
      %v1186 = vsub.s32 0, %v1185
      %v1187 = vrot.slane %v948, %v1186
      %v1188 = vlaneseq
      %v1189 = vshrl.u32 %v1188, 7
      %v1190 = vsub.s32 0, %v1189
      %v1191 = vrot.slane %v950, %v1190
      %v1192 = vlaneseq
      %v1193 = vshrl.u32 %v1192, 7
      %v1194 = vsub.s32 0, %v1193
      %v1195 = vrot.slane %v952, %v1194
      %v1196 = vlaneseq
      %v1197 = vshrl.u32 %v1196, 7
      %v1198 = vsub.s32 0, %v1197
      %v1199 = vrot.slane %v976, %v1198
      %v1200 = vlaneseq
      %v1201 = vshrl.u32 %v1200, 7
      %v1202 = vsub.s32 0, %v1201
      %v1203 = vrot.slane %v990, %v1202
      %v1204 = vlaneseq
      %v1205 = vshrl.u32 %v1204, 7
      %v1206 = vsub.s32 0, %v1205
      %v1207 = vrot.slane %v998, %v1206
      %v1208 = vlaneseq
      %v1209 = vshrl.u32 %v1208, 7
      %v1210 = vsub.s32 0, %v1209
      %v1211 = vrot.slane %v1000, %v1210
      %v1212 = vlaneseq
      %v1213 = vshrl.u32 %v1212, 7
      %v1214 = vsub.s32 0, %v1213
      %v1215 = vrot.slane %v983, %v1214
      %v1216 = vlaneseq
      %v1217 = vshrl.u32 %v1216, 7
      %v1218 = vsub.s32 0, %v1217
      %v1219 = vrot.slane %v997, %v1218
      %v1220 = vlaneseq
      %v1221 = vshrl.u32 %v1220, 7
      %v1222 = vsub.s32 0, %v1221
      %v1223 = vrot.slane %v999, %v1222
      %v1224 = vlaneseq
      %v1225 = vshrl.u32 %v1224, 7
      %v1226 = vsub.s32 0, %v1225
      %v1227 = vrot.slane %v1001, %v1226
      %v1228 = vlaneseq
      %v1229 = vshrl.u32 %v1228, 7
      %v1230 = vsub.s32 0, %v1229
      %v1231 = vrot.slane %v1025, %v1230
      %v1232 = vlaneseq
      %v1233 = vshrl.u32 %v1232, 7
      %v1234 = vsub.s32 0, %v1233
      %v1235 = vrot.slane %v1039, %v1234
      %v1236 = vlaneseq
      %v1237 = vshrl.u32 %v1236, 7
      %v1238 = vsub.s32 0, %v1237
      %v1239 = vrot.slane %v1047, %v1238
      %v1240 = vlaneseq
      %v1241 = vshrl.u32 %v1240, 7
      %v1242 = vsub.s32 0, %v1241
      %v1243 = vrot.slane %v1049, %v1242
      %v1244 = vlaneseq
      %v1245 = vshrl.u32 %v1244, 7
      %v1246 = vsub.s32 0, %v1245
      %v1247 = vrot.slane %v1032, %v1246
      %v1248 = vlaneseq
      %v1249 = vshrl.u32 %v1248, 7
      %v1250 = vsub.s32 0, %v1249
      %v1251 = vrot.slane %v1046, %v1250
      %v1252 = vlaneseq
      %v1253 = vshrl.u32 %v1252, 7
      %v1254 = vsub.s32 0, %v1253
      %v1255 = vrot.slane %v1048, %v1254
      %v1256 = vlaneseq
      %v1257 = vshrl.u32 %v1256, 7
      %v1258 = vsub.s32 0, %v1257
      %v1259 = vrot.slane %v1050, %v1258
      %v1260 = vlaneseq
      %v1261 = vshrl.u32 %v1260, 7
      %v1262 = vsub.s32 0, %v1261
      %v1263 = vrot.slane %v1074, %v1262
      %v1264 = vlaneseq
      %v1265 = vshrl.u32 %v1264, 7
      %v1266 = vsub.s32 0, %v1265
      %v1267 = vrot.slane %v1088, %v1266
      %v1268 = vlaneseq
      %v1269 = vshrl.u32 %v1268, 7
      %v1270 = vsub.s32 0, %v1269
      %v1271 = vrot.slane %v1096, %v1270
      %v1272 = vlaneseq
      %v1273 = vshrl.u32 %v1272, 7
      %v1274 = vsub.s32 0, %v1273
      %v1275 = vrot.slane %v1098, %v1274
      %v1276 = vlaneseq
      %v1277 = vshrl.u32 %v1276, 7
      %v1278 = vsub.s32 0, %v1277
      %v1279 = vrot.slane %v1081, %v1278
      %v1280 = vlaneseq
      %v1281 = vshrl.u32 %v1280, 7
      %v1282 = vsub.s32 0, %v1281
      %v1283 = vrot.slane %v1095, %v1282
      %v1284 = vlaneseq
      %v1285 = vshrl.u32 %v1284, 7
      %v1286 = vsub.s32 0, %v1285
      %v1287 = vrot.slane %v1097, %v1286
      %v1288 = vlaneseq
      %v1289 = vshrl.u32 %v1288, 7
      %v1290 = vsub.s32 0, %v1289
      %v1291 = vrot.slane %v1099, %v1290
      %v1292 = vld [vmem:[%s710] sm:$0xff]
      %v1293 = vld [vmem:[%s710 + $0x8] sm:$0xff]
      %v1294 = vld [vmem:[%s710 + $0x10] sm:$0xff]
      %v1295 = vld [vmem:[%s710 + $0x18] sm:$0xff]
      %v1296 = vld [vmem:[%s695] sm:$0xff]
      %v1297 = vld [vmem:[%s695 + $0x8] sm:$0xff]
      %v1298 = vld [vmem:[%s695 + $0x10] sm:$0xff]
      %v1299 = vld [vmem:[%s695 + $0x18] sm:$0xff]
      %v1300 = vld [vmem:[%s695 + $0x20] sm:$0xff]
      %v1301 = vld [vmem:[%s695 + $0x28] sm:$0xff]
      %v1302 = vld [vmem:[%s695 + $0x30] sm:$0xff]
      %v1303 = vld [vmem:[%s695 + $0x38] sm:$0xff]
      %v1304 = vld [vmem:[%s695 + $0x40] sm:$0xff]
      %v1305 = vld [vmem:[%s695 + $0x48] sm:$0xff]
      %v1306 = vld [vmem:[%s695 + $0x50] sm:$0xff]
      %v1307 = vld [vmem:[%s695 + $0x58] sm:$0xff]
      %v1308 = vld [vmem:[%s695 + $0x60] sm:$0xff]
      %v1309 = vld [vmem:[%s695 + $0x68] sm:$0xff]
      %v1310 = vld [vmem:[%s695 + $0x70] sm:$0xff]
      %v1311 = vld [vmem:[%s695 + $0x78] sm:$0xff]
      %v1312 = vld [vmem:[%s729] sm:$0xff]
      %v1313 = vld [vmem:[%s729 + $0x8] sm:$0xff]
      %v1314 = vld [vmem:[%s729 + $0x10] sm:$0xff]
      %v1315 = vld [vmem:[%s729 + $0x18] sm:$0xff]
      %v1316 = vcombine.low %v1103, %v1107
      %v1317 = vcombine.low %v1111, %v1115
      %v1319 = vunpack.c.l.s4 1983009808
      %v1320 = vunpack.c.0.s8 %v1319
      %v1321 = vlaneseq
      %v1322 = vshrl.u32 %v1321, 7
      %v1323 = vsub.s32 %v1320, %v1322
      %v1324 = vrot.slane %v1316, %v1323
      %v1326 = vunpack.c.l.s4 1983009808
      %v1327 = vunpack.c.0.s8 %v1326
      %v1328 = vlaneseq
      %v1329 = vshrl.u32 %v1328, 7
      %v1330 = vsub.s32 %v1327, %v1329
      %v1331 = vrot.slane %v1317, %v1330
      %v1332 = vcombine.low %v1324, %v1331
      %v1333 = vcombine.low %v1119, %v1123
      %v1334 = vcombine.low %v1127, %v1131
      %v1336 = vunpack.c.l.s4 1983009808
      %v1337 = vunpack.c.0.s8 %v1336
      %v1338 = vlaneseq
      %v1339 = vshrl.u32 %v1338, 7
      %v1340 = vsub.s32 %v1337, %v1339
      %v1341 = vrot.slane %v1333, %v1340
      %v1343 = vunpack.c.l.s4 1983009808
      %v1344 = vunpack.c.0.s8 %v1343
      %v1345 = vlaneseq
      %v1346 = vshrl.u32 %v1345, 7
      %v1347 = vsub.s32 %v1344, %v1346
      %v1348 = vrot.slane %v1334, %v1347
      %v1349 = vcombine.low %v1341, %v1348
      %v1350 = vcombine.low %v1135, %v1139
      %v1351 = vcombine.low %v1143, %v1147
      %v1353 = vunpack.c.l.s4 1983009808
      %v1354 = vunpack.c.0.s8 %v1353
      %v1355 = vlaneseq
      %v1356 = vshrl.u32 %v1355, 7
      %v1357 = vsub.s32 %v1354, %v1356
      %v1358 = vrot.slane %v1350, %v1357
      %v1360 = vunpack.c.l.s4 1983009808
      %v1361 = vunpack.c.0.s8 %v1360
      %v1362 = vlaneseq
      %v1363 = vshrl.u32 %v1362, 7
      %v1364 = vsub.s32 %v1361, %v1363
      %v1365 = vrot.slane %v1351, %v1364
      %v1366 = vcombine.low %v1358, %v1365
      %v1367 = vcombine.low %v1151, %v1155
      %v1368 = vcombine.low %v1159, %v1163
      %v1370 = vunpack.c.l.s4 1983009808
      %v1371 = vunpack.c.0.s8 %v1370
      %v1372 = vlaneseq
      %v1373 = vshrl.u32 %v1372, 7
      %v1374 = vsub.s32 %v1371, %v1373
      %v1375 = vrot.slane %v1367, %v1374
      %v1377 = vunpack.c.l.s4 1983009808
      %v1378 = vunpack.c.0.s8 %v1377
      %v1379 = vlaneseq
      %v1380 = vshrl.u32 %v1379, 7
      %v1381 = vsub.s32 %v1378, %v1380
      %v1382 = vrot.slane %v1368, %v1381
      %v1383 = vcombine.low %v1375, %v1382
      %v1384 = vcombine.low %v1167, %v1171
      %v1385 = vcombine.low %v1175, %v1179
      %v1387 = vunpack.c.l.s4 1983009808
      %v1388 = vunpack.c.0.s8 %v1387
      %v1389 = vlaneseq
      %v1390 = vshrl.u32 %v1389, 7
      %v1391 = vsub.s32 %v1388, %v1390
      %v1392 = vrot.slane %v1384, %v1391
      %v1394 = vunpack.c.l.s4 1983009808
      %v1395 = vunpack.c.0.s8 %v1394
      %v1396 = vlaneseq
      %v1397 = vshrl.u32 %v1396, 7
      %v1398 = vsub.s32 %v1395, %v1397
      %v1399 = vrot.slane %v1385, %v1398
      %v1400 = vcombine.low %v1392, %v1399
      %v1401 = vcombine.low %v1183, %v1187
      %v1402 = vcombine.low %v1191, %v1195
      %v1404 = vunpack.c.l.s4 1983009808
      %v1405 = vunpack.c.0.s8 %v1404
      %v1406 = vlaneseq
      %v1407 = vshrl.u32 %v1406, 7
      %v1408 = vsub.s32 %v1405, %v1407
      %v1409 = vrot.slane %v1401, %v1408
      %v1411 = vunpack.c.l.s4 1983009808
      %v1412 = vunpack.c.0.s8 %v1411
      %v1413 = vlaneseq
      %v1414 = vshrl.u32 %v1413, 7
      %v1415 = vsub.s32 %v1412, %v1414
      %v1416 = vrot.slane %v1402, %v1415
      %v1417 = vcombine.low %v1409, %v1416
      %v1418 = vcombine.low %v1199, %v1203
      %v1419 = vcombine.low %v1207, %v1211
      %v1421 = vunpack.c.l.s4 1983009808
      %v1422 = vunpack.c.0.s8 %v1421
      %v1423 = vlaneseq
      %v1424 = vshrl.u32 %v1423, 7
      %v1425 = vsub.s32 %v1422, %v1424
      %v1426 = vrot.slane %v1418, %v1425
      %v1428 = vunpack.c.l.s4 1983009808
      %v1429 = vunpack.c.0.s8 %v1428
      %v1430 = vlaneseq
      %v1431 = vshrl.u32 %v1430, 7
      %v1432 = vsub.s32 %v1429, %v1431
      %v1433 = vrot.slane %v1419, %v1432
      %v1434 = vcombine.low %v1426, %v1433
      %v1435 = vcombine.low %v1215, %v1219
      %v1436 = vcombine.low %v1223, %v1227
      %v1438 = vunpack.c.l.s4 1983009808
      %v1439 = vunpack.c.0.s8 %v1438
      %v1440 = vlaneseq
      %v1441 = vshrl.u32 %v1440, 7
      %v1442 = vsub.s32 %v1439, %v1441
      %v1443 = vrot.slane %v1435, %v1442
      %v1445 = vunpack.c.l.s4 1983009808
      %v1446 = vunpack.c.0.s8 %v1445
      %v1447 = vlaneseq
      %v1448 = vshrl.u32 %v1447, 7
      %v1449 = vsub.s32 %v1446, %v1448
      %v1450 = vrot.slane %v1436, %v1449
      %v1451 = vcombine.low %v1443, %v1450
      %v1452 = vcombine.low %v1231, %v1235
      %v1453 = vcombine.low %v1239, %v1243
      %v1455 = vunpack.c.l.s4 1983009808
      %v1456 = vunpack.c.0.s8 %v1455
      %v1457 = vlaneseq
      %v1458 = vshrl.u32 %v1457, 7
      %v1459 = vsub.s32 %v1456, %v1458
      %v1460 = vrot.slane %v1452, %v1459
      %v1462 = vunpack.c.l.s4 1983009808
      %v1463 = vunpack.c.0.s8 %v1462
      %v1464 = vlaneseq
      %v1465 = vshrl.u32 %v1464, 7
      %v1466 = vsub.s32 %v1463, %v1465
      %v1467 = vrot.slane %v1453, %v1466
      %v1468 = vcombine.low %v1460, %v1467
      %v1469 = vcombine.low %v1247, %v1251
      %v1470 = vcombine.low %v1255, %v1259
      %v1472 = vunpack.c.l.s4 1983009808
      %v1473 = vunpack.c.0.s8 %v1472
      %v1474 = vlaneseq
      %v1475 = vshrl.u32 %v1474, 7
      %v1476 = vsub.s32 %v1473, %v1475
      %v1477 = vrot.slane %v1469, %v1476
      %v1479 = vunpack.c.l.s4 1983009808
      %v1480 = vunpack.c.0.s8 %v1479
      %v1481 = vlaneseq
      %v1482 = vshrl.u32 %v1481, 7
      %v1483 = vsub.s32 %v1480, %v1482
      %v1484 = vrot.slane %v1470, %v1483
      %v1485 = vcombine.low %v1477, %v1484
      %v1486 = vcombine.low %v1263, %v1267
      %v1487 = vcombine.low %v1271, %v1275
      %v1489 = vunpack.c.l.s4 1983009808
      %v1490 = vunpack.c.0.s8 %v1489
      %v1491 = vlaneseq
      %v1492 = vshrl.u32 %v1491, 7
      %v1493 = vsub.s32 %v1490, %v1492
      %v1494 = vrot.slane %v1486, %v1493
      %v1496 = vunpack.c.l.s4 1983009808
      %v1497 = vunpack.c.0.s8 %v1496
      %v1498 = vlaneseq
      %v1499 = vshrl.u32 %v1498, 7
      %v1500 = vsub.s32 %v1497, %v1499
      %v1501 = vrot.slane %v1487, %v1500
      %v1502 = vcombine.low %v1494, %v1501
      %v1503 = vcombine.low %v1279, %v1283
      %v1504 = vcombine.low %v1287, %v1291
      %v1506 = vunpack.c.l.s4 1983009808
      %v1507 = vunpack.c.0.s8 %v1506
      %v1508 = vlaneseq
      %v1509 = vshrl.u32 %v1508, 7
      %v1510 = vsub.s32 %v1507, %v1509
      %v1511 = vrot.slane %v1503, %v1510
      %v1513 = vunpack.c.l.s4 1983009808
      %v1514 = vunpack.c.0.s8 %v1513
      %v1515 = vlaneseq
      %v1516 = vshrl.u32 %v1515, 7
      %v1517 = vsub.s32 %v1514, %v1516
      %v1518 = vrot.slane %v1504, %v1517
      %v1519 = vcombine.low %v1511, %v1518
      %vm1532 = vcmask 130048
      %1533 = vst.msk [vmem:[#allocation2 + $0x1] sm:$0xff] %vm1532, %v1332
      %1534 = vst.msk [vmem:[#allocation2 + $0x9] sm:$0xff] %vm1532, %v1349
      %1535 = vst.msk [vmem:[#allocation2 + $0x19] sm:$0xff] %vm1532, %v1332
      %1536 = vst.msk [vmem:[#allocation2 + $0x21] sm:$0xff] %vm1532, %v1349
      %1537 = vst.msk [vmem:[#allocation2 + $0x31] sm:$0xff] %vm1532, %v1366
      %1538 = vst.msk [vmem:[#allocation2 + $0x39] sm:$0xff] %vm1532, %v1383
      %1539 = vst.msk [vmem:[#allocation2 + $0x49] sm:$0xff] %vm1532, %v1366
      %1540 = vst.msk [vmem:[#allocation2 + $0x51] sm:$0xff] %vm1532, %v1383
      %1541 = vst.msk [vmem:[#allocation2 + $0x61] sm:$0xff] %vm1532, %v1400
      %1542 = vst.msk [vmem:[#allocation2 + $0x69] sm:$0xff] %vm1532, %v1417
      %1543 = vst.msk [vmem:[#allocation2 + $0x79] sm:$0xff] %vm1532, %v1400
      %1544 = vst.msk [vmem:[#allocation2 + $0x81] sm:$0xff] %vm1532, %v1417
      %1545 = vst.msk [vmem:[#allocation2 + $0x91] sm:$0xff] %vm1532, %v1434
      %1546 = vst.msk [vmem:[#allocation2 + $0x99] sm:$0xff] %vm1532, %v1451
      %1547 = vst.msk [vmem:[#allocation2 + $0xa9] sm:$0xff] %vm1532, %v1434
      %1548 = vst.msk [vmem:[#allocation2 + $0xb1] sm:$0xff] %vm1532, %v1451
      %1549 = vst.msk [vmem:[#allocation2 + $0xc1] sm:$0xff] %vm1532, %v1468
      %1550 = vst.msk [vmem:[#allocation2 + $0xc9] sm:$0xff] %vm1532, %v1485
      %1551 = vst.msk [vmem:[#allocation2 + $0xd9] sm:$0xff] %vm1532, %v1468
      %1552 = vst.msk [vmem:[#allocation2 + $0xe1] sm:$0xff] %vm1532, %v1485
      %1553 = vst.msk [vmem:[#allocation2 + $0xf1] sm:$0xff] %vm1532, %v1502
      %1554 = vst.msk [vmem:[#allocation2 + $0xf9] sm:$0xff] %vm1532, %v1519
      %1555 = vst.msk [vmem:[#allocation2 + $0x109] sm:$0xff] %vm1532, %v1502
      %1556 = vst.msk [vmem:[#allocation2 + $0x111] sm:$0xff] %vm1532, %v1519
      %1581 = vrot.lane.b32.xlu0 %v1292, 16
      %v1582 = vpop.permute.xlu0 %1581
      %1583 = vrot.lane.b32.xlu0 %v1293, 16
      %v1584 = vpop.permute.xlu0 %1583
      %1585 = vrot.lane.b32.xlu0 %v1294, 16
      %v1586 = vpop.permute.xlu0 %1585
      %1587 = vrot.lane.b32.xlu0 %v1295, 16
      %v1588 = vpop.permute.xlu0 %1587
      %1589 = vrot.lane.b32.xlu0 %v1296, 16
      %v1590 = vpop.permute.xlu0 %1589
      %1591 = vrot.lane.b32.xlu0 %v1297, 16
      %v1592 = vpop.permute.xlu0 %1591
      %1593 = vrot.lane.b32.xlu0 %v1298, 16
      %v1594 = vpop.permute.xlu0 %1593
      %1595 = vrot.lane.b32.xlu0 %v1299, 16
      %v1596 = vpop.permute.xlu0 %1595
      %1597 = vrot.lane.b32.xlu0 %v1300, 16
      %v1598 = vpop.permute.xlu0 %1597
      %1599 = vrot.lane.b32.xlu0 %v1301, 16
      %v1600 = vpop.permute.xlu0 %1599
      %1601 = vrot.lane.b32.xlu0 %v1302, 16
      %v1602 = vpop.permute.xlu0 %1601
      %1603 = vrot.lane.b32.xlu0 %v1303, 16
      %v1604 = vpop.permute.xlu0 %1603
      %1605 = vrot.lane.b32.xlu0 %v1304, 16
      %v1606 = vpop.permute.xlu0 %1605
      %1607 = vrot.lane.b32.xlu0 %v1305, 16
      %v1608 = vpop.permute.xlu0 %1607
      %1609 = vrot.lane.b32.xlu0 %v1306, 16
      %v1610 = vpop.permute.xlu0 %1609
      %1611 = vrot.lane.b32.xlu0 %v1307, 16
      %v1612 = vpop.permute.xlu0 %1611
      %1613 = vrot.lane.b32.xlu0 %v1308, 16
      %v1614 = vpop.permute.xlu0 %1613
      %1615 = vrot.lane.b32.xlu0 %v1309, 16
      %v1616 = vpop.permute.xlu0 %1615
      %1617 = vrot.lane.b32.xlu0 %v1310, 16
      %v1618 = vpop.permute.xlu0 %1617
      %1619 = vrot.lane.b32.xlu0 %v1311, 16
      %v1620 = vpop.permute.xlu0 %1619
      %1621 = vrot.lane.b32.xlu0 %v1312, 16
      %v1622 = vpop.permute.xlu0 %1621
      %1623 = vrot.lane.b32.xlu0 %v1313, 16
      %v1624 = vpop.permute.xlu0 %1623
      %1625 = vrot.lane.b32.xlu0 %v1314, 16
      %v1626 = vpop.permute.xlu0 %1625
      %1627 = vrot.lane.b32.xlu0 %v1315, 16
      %v1628 = vpop.permute.xlu0 %1627
      %vm1653 = vcmask 195712
      %1654 = vst.msk [vmem:[#allocation2 + $0x1] sm:$0xff] %vm1653, %v1582
      %1655 = vst.msk [vmem:[#allocation2 + $0x9] sm:$0xff] %vm1653, %v1584
      %1656 = vst.msk [vmem:[#allocation2 + $0x19] sm:$0xff] %vm1653, %v1586
      %1657 = vst.msk [vmem:[#allocation2 + $0x21] sm:$0xff] %vm1653, %v1588
      %1658 = vst.msk [vmem:[#allocation2 + $0x31] sm:$0xff] %vm1653, %v1590
      %1659 = vst.msk [vmem:[#allocation2 + $0x39] sm:$0xff] %vm1653, %v1592
      %1660 = vst.msk [vmem:[#allocation2 + $0x49] sm:$0xff] %vm1653, %v1594
      %1661 = vst.msk [vmem:[#allocation2 + $0x51] sm:$0xff] %vm1653, %v1596
      %1662 = vst.msk [vmem:[#allocation2 + $0x61] sm:$0xff] %vm1653, %v1598
      %1663 = vst.msk [vmem:[#allocation2 + $0x69] sm:$0xff] %vm1653, %v1600
      %1664 = vst.msk [vmem:[#allocation2 + $0x79] sm:$0xff] %vm1653, %v1602
      %1665 = vst.msk [vmem:[#allocation2 + $0x81] sm:$0xff] %vm1653, %v1604
      %1666 = vst.msk [vmem:[#allocation2 + $0x91] sm:$0xff] %vm1653, %v1606
      %1667 = vst.msk [vmem:[#allocation2 + $0x99] sm:$0xff] %vm1653, %v1608
      %1668 = vst.msk [vmem:[#allocation2 + $0xa9] sm:$0xff] %vm1653, %v1610
      %1669 = vst.msk [vmem:[#allocation2 + $0xb1] sm:$0xff] %vm1653, %v1612
      %1670 = vst.msk [vmem:[#allocation2 + $0xc1] sm:$0xff] %vm1653, %v1614
      %1671 = vst.msk [vmem:[#allocation2 + $0xc9] sm:$0xff] %vm1653, %v1616
      %1672 = vst.msk [vmem:[#allocation2 + $0xd9] sm:$0xff] %vm1653, %v1618
      %1673 = vst.msk [vmem:[#allocation2 + $0xe1] sm:$0xff] %vm1653, %v1620
      %1674 = vst.msk [vmem:[#allocation2 + $0xf1] sm:$0xff] %vm1653, %v1622
      %1675 = vst.msk [vmem:[#allocation2 + $0xf9] sm:$0xff] %vm1653, %v1624
      %1676 = vst.msk [vmem:[#allocation2 + $0x109] sm:$0xff] %vm1653, %v1626
      %1677 = vst.msk [vmem:[#allocation2 + $0x111] sm:$0xff] %vm1653, %v1628
      // Predicated region
      $region69: #{decoder_block_nhwc.1} parent=67 // pred_check
        %p1678 = pneg %p746
      $region70: #{decoder_block_nhwc.1} parent=67 // pred_check_branch
        %1680 = sbr.rel (%p1678) target = $region72
      $region71: #{decoder_block_nhwc.1} parent=67 // pred_region
        %vm1681 = vcmask 195584
        %1682 = vst.msk [vmem:[#allocation2] sm:$0xff] %vm1681, 0.0
        %1683 = vst.msk [vmem:[#allocation2 + $0x8] sm:$0xff] %vm1681, 0.0
        %vm1684 = vcmask 189440
        %1685 = vst.msk [vmem:[#allocation2 + $0x10] sm:$0x3] %vm1684, 0.0
        %s1686 = scalar_lea.vmem [#allocation2], 24
        %1687 = vst.msk [vmem:[%s1686] sm:$0xff] %vm1681, 0.0
        %1688 = vst.msk [vmem:[%s1686 + $0x8] sm:$0xff] %vm1681, 0.0
        %1689 = vst.msk [vmem:[%s1686 + $0x10] sm:$0x3] %vm1684, 0.0
      $region72: #{decoder_block_nhwc.1} parent=67 // pred_fallthru
        _
      // Predicated region
      $region73: #{decoder_block_nhwc.1} parent=67 // pred_check
        %p1690 = pneg %p747
      $region74: #{decoder_block_nhwc.1} parent=67 // pred_check_branch
        %1692 = sbr.rel (%p1690) target = $region76
      $region75: #{decoder_block_nhwc.1} parent=67 // pred_region
        %s1693 = scalar_lea.vmem [#allocation2], 240
        %vm1694 = vcmask 195584
        %1695 = vst.msk [vmem:[%s1693] sm:$0xff] %vm1694, 0.0
        %1696 = vst.msk [vmem:[%s1693 + $0x8] sm:$0xff] %vm1694, 0.0
        %vm1697 = vcmask 189440
        %1698 = vst.msk [vmem:[%s1693 + $0x10] sm:$0x3] %vm1697, 0.0
        %s1699 = scalar_lea.vmem [#allocation2], 264
        %1700 = vst.msk [vmem:[%s1699] sm:$0xff] %vm1694, 0.0
        %1701 = vst.msk [vmem:[%s1699 + $0x8] sm:$0xff] %vm1694, 0.0
        %1702 = vst.msk [vmem:[%s1699 + $0x10] sm:$0x3] %vm1697, 0.0
      $region76: #{decoder_block_nhwc.1} parent=67 // pred_fallthru
        _
      %v1703 = vld [vmem:[#allocation2] sm:$0xff]
      %v1704 = vld [vmem:[#allocation2 + $0x8] sm:$0xff]
      %v1705 = vld [vmem:[#allocation2 + $0x18] sm:$0xff]
      %v1706 = vld [vmem:[#allocation2 + $0x20] sm:$0xff]
      %v1707 = vld [vmem:[#allocation2 + $0x30] sm:$0xff]
      %v1708 = vld [vmem:[#allocation2 + $0x38] sm:$0xff]
      %v1709 = vld [vmem:[#allocation2 + $0x48] sm:$0xff]
      %v1710 = vld [vmem:[#allocation2 + $0x50] sm:$0xff]
      %v1711 = vld [vmem:[#allocation2 + $0x60] sm:$0xff]
      %v1712 = vld [vmem:[#allocation2 + $0x68] sm:$0xff]
      %v1713 = vld [vmem:[#allocation2 + $0x78] sm:$0xff]
      %v1714 = vld [vmem:[#allocation2 + $0x80] sm:$0xff]
      %v1715 = vld [vmem:[#allocation2 + $0x90] sm:$0xff]
      %v1716 = vld [vmem:[#allocation2 + $0x98] sm:$0xff]
      %v1717 = vld [vmem:[#allocation2 + $0xa8] sm:$0xff]
      %v1718 = vld [vmem:[#allocation2 + $0xb0] sm:$0xff]
      %v1719 = vld [vmem:[#allocation2 + $0xc0] sm:$0xff]
      %v1720 = vld [vmem:[#allocation2 + $0xc8] sm:$0xff]
      %v1721 = vld [vmem:[#allocation2 + $0xd8] sm:$0xff]
      %v1722 = vld [vmem:[#allocation2 + $0xe0] sm:$0xff]
      %v1723 = vld [vmem:[%s6] sm:$0xff]
      %v1724 = vld [vmem:[%s6 + $0x8] sm:$0xff]
      %v1725 = vld [vmem:[%s6 + $0x10] sm:$0xff]
      %v1726 = vld [vmem:[#allocation2 + $0x1] sm:$0xff]
      %v1727 = vld [vmem:[#allocation2 + $0x9] sm:$0xff]
      %v1728 = vld [vmem:[#allocation2 + $0x19] sm:$0xff]
      %v1729 = vld [vmem:[#allocation2 + $0x21] sm:$0xff]
      %v1730 = vld [vmem:[#allocation2 + $0x31] sm:$0xff]
      %v1731 = vld [vmem:[#allocation2 + $0x39] sm:$0xff]
      %v1732 = vld [vmem:[#allocation2 + $0x49] sm:$0xff]
      %v1733 = vld [vmem:[#allocation2 + $0x51] sm:$0xff]
      %v1734 = vld [vmem:[#allocation2 + $0x61] sm:$0xff]
      %v1735 = vld [vmem:[#allocation2 + $0x69] sm:$0xff]
      %v1736 = vld [vmem:[#allocation2 + $0x79] sm:$0xff]
      %v1737 = vld [vmem:[#allocation2 + $0x81] sm:$0xff]
      %v1738 = vld [vmem:[#allocation2 + $0x91] sm:$0xff]
      %v1739 = vld [vmem:[#allocation2 + $0x99] sm:$0xff]
      %v1740 = vld [vmem:[#allocation2 + $0xa9] sm:$0xff]
      %v1741 = vld [vmem:[#allocation2 + $0xb1] sm:$0xff]
      %v1742 = vld [vmem:[#allocation2 + $0xc1] sm:$0xff]
      %v1743 = vld [vmem:[#allocation2 + $0xc9] sm:$0xff]
      %v1744 = vld [vmem:[#allocation2 + $0xd9] sm:$0xff]
      %v1745 = vld [vmem:[#allocation2 + $0xe1] sm:$0xff]
      %s1746 = scalar_lea.vmem %s6, 24
      %v1747 = vld [vmem:[%s1746] sm:$0xff]
      %v1748 = vld [vmem:[%s1746 + $0x8] sm:$0xff]
      %v1749 = vld [vmem:[%s1746 + $0x10] sm:$0xff]
      %vm1750 = vcmask 195584
      %v1752 = vsel %vm1750, %v1726, 0
      %v1755 = vsel %vm1750, %v1727, 0
      %v1758 = vsel %vm1750, %v1728, 0
      %v1761 = vsel %vm1750, %v1729, 0
      %v1764 = vsel %vm1750, %v1730, 0
      %v1767 = vsel %vm1750, %v1731, 0
      %v1770 = vsel %vm1750, %v1732, 0
      %v1773 = vsel %vm1750, %v1733, 0
      %v1776 = vsel %vm1750, %v1734, 0
      %v1779 = vsel %vm1750, %v1735, 0
      %v1782 = vsel %vm1750, %v1736, 0
      %v1785 = vsel %vm1750, %v1737, 0
      %v1788 = vsel %vm1750, %v1738, 0
      %v1791 = vsel %vm1750, %v1739, 0
      %v1794 = vsel %vm1750, %v1740, 0
      %v1797 = vsel %vm1750, %v1741, 0
      %v1800 = vsel %vm1750, %v1742, 0
      %v1803 = vsel %vm1750, %v1743, 0
      %v1806 = vsel %vm1750, %v1744, 0
      %v1809 = vsel %vm1750, %v1745, 0
      %1811 = vmatprep.subr.mxu0 0.0
      %1812 = vmatpush1.msra.mxu0 0.0
      %1813 = vmatprep.subr.mxu0 0.0
      %1814 = vmatpush1.msra.mxu0 0.0
      %1815 = vmatprep.subr.mxu0 0.0
      %1816 = vmatpush1.msra.mxu0 0.0
      %1817 = vmatprep.subr.mxu0 0.0
      %1818 = vmatpush1.msra.mxu0 0.0
      %1819 = vmatprep.subr.mxu0 0.0
      %1820 = vmatpush1.msra.mxu0 0.0
      %1821 = vmatprep.subr.mxu0 0.0
      %1822 = vmatpush1.msra.mxu0 0.0
      %1823 = vmatprep.subr.mxu0 0.0
      %1824 = vmatpush1.msra.mxu0 0.0
      %1825 = vmatprep.subr.mxu0 0.0
      %1826 = vmatpush1.msra.mxu0 0.0
      %1827 = vmatprep.subr.mxu0 0.0
      %1828 = vmatpush1.msra.mxu0 0.0
      %1829 = vmatprep.subr.mxu0 0.0
      %1830 = vmatpush1.msra.mxu0 0.0
      %1831 = vmatprep.subr.mxu0 0.0
      %1832 = vmatpush1.msra.mxu0 0.0
      %1833 = vmatprep.subr.mxu0 0.0
      %1834 = vmatpush1.msra.mxu0 0.0
      %1835 = vmatprep.subr.mxu0 0.0
      %1836 = vmatpush1.msra.mxu0 0.0
      %1837 = vmatprep.subr.mxu0 0.0
      %1838 = vmatpush1.msra.mxu0 %v1749
      %1839 = vmatprep.subr.mxu0 0.0
      %1840 = vmatpush1.msra.mxu0 %v1748
      %1841 = vmatprep.subr.mxu0 0.0
      %1842 = vmatpush1.msra.mxu0 %v1747
      %1843 = vmatprep.subr.mxu0 0.0
      %1844 = vmatpush2.msra.mxu0 0.0
      %1845 = vmatprep.subr.mxu0 0.0
      %1846 = vmatpush2.msra.mxu0 0.0
      %1847 = vmatprep.subr.mxu0 0.0
      %1848 = vmatpush2.msra.mxu0 0.0
      %1849 = vmatprep.subr.mxu0 0.0
      %1850 = vmatpush2.msra.mxu0 0.0
      %1851 = vmatprep.subr.mxu0 0.0
      %1852 = vmatpush2.msra.mxu0 0.0
      %1853 = vmatprep.subr.mxu0 0.0
      %1854 = vmatpush2.msra.mxu0 0.0
      %1855 = vmatprep.subr.mxu0 0.0
      %1856 = vmatpush2.msra.mxu0 0.0
      %1857 = vmatprep.subr.mxu0 0.0
      %1858 = vmatpush2.msra.mxu0 0.0
      %1859 = vmatprep.subr.mxu0 0.0
      %1860 = vmatpush2.msra.mxu0 0.0
      %1861 = vmatprep.subr.mxu0 0.0
      %1862 = vmatpush2.msra.mxu0 0.0
      %1863 = vmatprep.subr.mxu0 0.0
      %1864 = vmatpush2.msra.mxu0 0.0
      %1865 = vmatprep.subr.mxu0 0.0
      %1866 = vmatpush2.msra.mxu0 0.0
      %1867 = vmatprep.subr.mxu0 0.0
      %1868 = vmatpush2.msra.mxu0 0.0
      %1869 = vmatprep.subr.mxu0 0.0
      %1870 = vmatpush2.msra.mxu0 0.0
      %1871 = vmatprep.subr.mxu0 0.0
      %1872 = vmatpush2.msra.mxu0 0.0
      %1873 = vmatprep.subr.mxu0 0.0
      %1874 = vmatpush2.msra.mxu0 0.0
      %1875 = vmatprep.mubr.f32.mxu0 0.0
      %1876 = vmatmul.mubr.f32.gmra.mxu0 %v1752
      %v1877 = vpop.f32.mrf.mxu0
      %v1878 = vadd.f32 0.0, %v1877
      %v1879 = vpop.f32.mrf.mxu0
      %1880 = vmatprep.mubr.f32.mxu0 0.0
      %1881 = vmatmul.mubr.f32.gmra.mxu0 %v1755
      %v1882 = vpop.f32.mrf.mxu0
      %v1883 = vadd.f32 0.0, %v1882
      %v1884 = vpop.f32.mrf.mxu0
      %1885 = vmatprep.mubr.f32.mxu0 0.0
      %1886 = vmatmul.mubr.f32.gmra.mxu0 %v1758
      %v1887 = vpop.f32.mrf.mxu0
      %v1888 = vadd.f32 0.0, %v1887
      %v1889 = vpop.f32.mrf.mxu0
      %1890 = vmatprep.mubr.f32.mxu0 0.0
      %1891 = vmatmul.mubr.f32.gmra.mxu0 %v1761
      %v1892 = vpop.f32.mrf.mxu0
      %v1893 = vadd.f32 0.0, %v1892
      %v1894 = vpop.f32.mrf.mxu0
      %1895 = vmatprep.mubr.f32.mxu0 0.0
      %1896 = vmatmul.mubr.f32.gmra.mxu0 %v1764
      %v1897 = vpop.f32.mrf.mxu0
      %v1898 = vadd.f32 0.0, %v1897
      %v1899 = vpop.f32.mrf.mxu0
      %1900 = vmatprep.mubr.f32.mxu0 0.0
      %1901 = vmatmul.mubr.f32.gmra.mxu0 %v1767
      %v1902 = vpop.f32.mrf.mxu0
      %v1903 = vadd.f32 0.0, %v1902
      %v1904 = vpop.f32.mrf.mxu0
      %1905 = vmatprep.mubr.f32.mxu0 0.0
      %1906 = vmatmul.mubr.f32.gmra.mxu0 %v1770
      %v1907 = vpop.f32.mrf.mxu0
      %v1908 = vadd.f32 0.0, %v1907
      %v1909 = vpop.f32.mrf.mxu0
      %1910 = vmatprep.mubr.f32.mxu0 0.0
      %1911 = vmatmul.mubr.f32.gmra.mxu0 %v1773
      %v1912 = vpop.f32.mrf.mxu0
      %v1913 = vadd.f32 0.0, %v1912
      %v1914 = vpop.f32.mrf.mxu0
      %1915 = vmatprep.mubr.f32.mxu0 0.0
      %1916 = vmatmul.mubr.f32.gmra.mxu0 %v1776
      %v1917 = vpop.f32.mrf.mxu0
      %v1918 = vadd.f32 0.0, %v1917
      %v1919 = vpop.f32.mrf.mxu0
      %1920 = vmatprep.mubr.f32.mxu0 0.0
      %1921 = vmatmul.mubr.f32.gmra.mxu0 %v1779
      %v1922 = vpop.f32.mrf.mxu0
      %v1923 = vadd.f32 0.0, %v1922
      %v1924 = vpop.f32.mrf.mxu0
      %1925 = vmatprep.mubr.f32.mxu0 0.0
      %1926 = vmatmul.mubr.f32.gmra.mxu0 %v1782
      %v1927 = vpop.f32.mrf.mxu0
      %v1928 = vadd.f32 0.0, %v1927
      %v1929 = vpop.f32.mrf.mxu0
      %1930 = vmatprep.mubr.f32.mxu0 0.0
      %1931 = vmatmul.mubr.f32.gmra.mxu0 %v1785
      %v1932 = vpop.f32.mrf.mxu0
      %v1933 = vadd.f32 0.0, %v1932
      %v1934 = vpop.f32.mrf.mxu0
      %1935 = vmatprep.mubr.f32.mxu0 0.0
      %1936 = vmatmul.mubr.f32.gmra.mxu0 %v1788
      %v1937 = vpop.f32.mrf.mxu0
      %v1938 = vadd.f32 0.0, %v1937
      %v1939 = vpop.f32.mrf.mxu0
      %1940 = vmatprep.mubr.f32.mxu0 0.0
      %1941 = vmatmul.mubr.f32.gmra.mxu0 %v1791
      %v1942 = vpop.f32.mrf.mxu0
      %v1943 = vadd.f32 0.0, %v1942
      %v1944 = vpop.f32.mrf.mxu0
      %1945 = vmatprep.mubr.f32.mxu0 0.0
      %1946 = vmatmul.mubr.f32.gmra.mxu0 %v1794
      %v1947 = vpop.f32.mrf.mxu0
      %v1948 = vadd.f32 0.0, %v1947
      %v1949 = vpop.f32.mrf.mxu0
      %1950 = vmatprep.mubr.f32.mxu0 0.0
      %1951 = vmatmul.mubr.f32.gmra.mxu0 %v1797
      %v1952 = vpop.f32.mrf.mxu0
      %v1953 = vadd.f32 0.0, %v1952
      %v1954 = vpop.f32.mrf.mxu0
      %1955 = vmatprep.mubr.f32.mxu0 0.0
      %1956 = vmatmul.mubr.f32.gmra.mxu0 %v1800
      %v1957 = vpop.f32.mrf.mxu0
      %v1958 = vadd.f32 0.0, %v1957
      %v1959 = vpop.f32.mrf.mxu0
      %1960 = vmatprep.mubr.f32.mxu0 0.0
      %1961 = vmatmul.mubr.f32.gmra.mxu0 %v1803
      %v1962 = vpop.f32.mrf.mxu0
      %v1963 = vadd.f32 0.0, %v1962
      %v1964 = vpop.f32.mrf.mxu0
      %1965 = vmatprep.mubr.f32.mxu0 0.0
      %1966 = vmatmul.mubr.f32.gmra.mxu0 %v1806
      %v1967 = vpop.f32.mrf.mxu0
      %v1968 = vadd.f32 0.0, %v1967
      %v1969 = vpop.f32.mrf.mxu0
      %1970 = vmatprep.mubr.f32.mxu0 0.0
      %1971 = vmatmul.mubr.f32.gmra.mxu0 %v1809
      %v1972 = vpop.f32.mrf.mxu0
      %v1973 = vadd.f32 0.0, %v1972
      %v1974 = vpop.f32.mrf.mxu0
      %1975 = vdwg.mxu0
      %v1977 = vsel %vm1750, %v1703, 0
      %v1980 = vsel %vm1750, %v1704, 0
      %v1983 = vsel %vm1750, %v1705, 0
      %v1986 = vsel %vm1750, %v1706, 0
      %v1989 = vsel %vm1750, %v1707, 0
      %v1992 = vsel %vm1750, %v1708, 0
      %v1995 = vsel %vm1750, %v1709, 0
      %v1998 = vsel %vm1750, %v1710, 0
      %v2001 = vsel %vm1750, %v1711, 0
      %v2004 = vsel %vm1750, %v1712, 0
      %v2007 = vsel %vm1750, %v1713, 0
      %v2010 = vsel %vm1750, %v1714, 0
      %v2013 = vsel %vm1750, %v1715, 0
      %v2016 = vsel %vm1750, %v1716, 0
      %v2019 = vsel %vm1750, %v1717, 0
      %v2022 = vsel %vm1750, %v1718, 0
      %v2025 = vsel %vm1750, %v1719, 0
      %v2028 = vsel %vm1750, %v1720, 0
      %v2031 = vsel %vm1750, %v1721, 0
      %v2034 = vsel %vm1750, %v1722, 0
      %2036 = vmatprep.subr.mxu0 0.0
      %2037 = vmatpush1.msra.mxu0 0.0
      %2038 = vmatprep.subr.mxu0 0.0
      %2039 = vmatpush1.msra.mxu0 0.0
      %2040 = vmatprep.subr.mxu0 0.0
      %2041 = vmatpush1.msra.mxu0 0.0
      %2042 = vmatprep.subr.mxu0 0.0
      %2043 = vmatpush1.msra.mxu0 0.0
      %2044 = vmatprep.subr.mxu0 0.0
      %2045 = vmatpush1.msra.mxu0 0.0
      %2046 = vmatprep.subr.mxu0 0.0
      %2047 = vmatpush1.msra.mxu0 0.0
      %2048 = vmatprep.subr.mxu0 0.0
      %2049 = vmatpush1.msra.mxu0 0.0
      %2050 = vmatprep.subr.mxu0 0.0
      %2051 = vmatpush1.msra.mxu0 0.0
      %2052 = vmatprep.subr.mxu0 0.0
      %2053 = vmatpush1.msra.mxu0 0.0
      %2054 = vmatprep.subr.mxu0 0.0
      %2055 = vmatpush1.msra.mxu0 0.0
      %2056 = vmatprep.subr.mxu0 0.0
      %2057 = vmatpush1.msra.mxu0 0.0
      %2058 = vmatprep.subr.mxu0 0.0
      %2059 = vmatpush1.msra.mxu0 0.0
      %2060 = vmatprep.subr.mxu0 0.0
      %2061 = vmatpush1.msra.mxu0 0.0
      %2062 = vmatprep.subr.mxu0 0.0
      %2063 = vmatpush1.msra.mxu0 %v1725
      %2064 = vmatprep.subr.mxu0 0.0
      %2065 = vmatpush1.msra.mxu0 %v1724
      %2066 = vmatprep.subr.mxu0 0.0
      %2067 = vmatpush1.msra.mxu0 %v1723
      %2068 = vmatprep.subr.mxu0 0.0
      %2069 = vmatpush2.msra.mxu0 0.0
      %2070 = vmatprep.subr.mxu0 0.0
      %2071 = vmatpush2.msra.mxu0 0.0
      %2072 = vmatprep.subr.mxu0 0.0
      %2073 = vmatpush2.msra.mxu0 0.0
      %2074 = vmatprep.subr.mxu0 0.0
      %2075 = vmatpush2.msra.mxu0 0.0
      %2076 = vmatprep.subr.mxu0 0.0
      %2077 = vmatpush2.msra.mxu0 0.0
      %2078 = vmatprep.subr.mxu0 0.0
      %2079 = vmatpush2.msra.mxu0 0.0
      %2080 = vmatprep.subr.mxu0 0.0
      %2081 = vmatpush2.msra.mxu0 0.0
      %2082 = vmatprep.subr.mxu0 0.0
      %2083 = vmatpush2.msra.mxu0 0.0
      %2084 = vmatprep.subr.mxu0 0.0
      %2085 = vmatpush2.msra.mxu0 0.0
      %2086 = vmatprep.subr.mxu0 0.0
      %2087 = vmatpush2.msra.mxu0 0.0
      %2088 = vmatprep.subr.mxu0 0.0
      %2089 = vmatpush2.msra.mxu0 0.0
      %2090 = vmatprep.subr.mxu0 0.0
      %2091 = vmatpush2.msra.mxu0 0.0
      %2092 = vmatprep.subr.mxu0 0.0
      %2093 = vmatpush2.msra.mxu0 0.0
      %2094 = vmatprep.subr.mxu0 0.0
      %2095 = vmatpush2.msra.mxu0 0.0
      %2096 = vmatprep.subr.mxu0 0.0
      %2097 = vmatpush2.msra.mxu0 0.0
      %2098 = vmatprep.subr.mxu0 0.0
      %2099 = vmatpush2.msra.mxu0 0.0
      %2100 = vmatprep.mubr.f32.mxu0 0.0
      %2101 = vmatmul.mubr.f32.gmra.mxu0 %v1977
      %v2102 = vpop.f32.mrf.mxu0
      %v2103 = vadd.f32 %v1878, %v2102
      %v2104 = vpop.f32.mrf.mxu0
      %2105 = vmatprep.mubr.f32.mxu0 0.0
      %2106 = vmatmul.mubr.f32.gmra.mxu0 %v1980
      %v2107 = vpop.f32.mrf.mxu0
      %v2108 = vadd.f32 %v1883, %v2107
      %v2109 = vpop.f32.mrf.mxu0
      %2110 = vmatprep.mubr.f32.mxu0 0.0
      %2111 = vmatmul.mubr.f32.gmra.mxu0 %v1983
      %v2112 = vpop.f32.mrf.mxu0
      %v2113 = vadd.f32 %v1888, %v2112
      %v2114 = vpop.f32.mrf.mxu0
      %2115 = vmatprep.mubr.f32.mxu0 0.0
      %2116 = vmatmul.mubr.f32.gmra.mxu0 %v1986
      %v2117 = vpop.f32.mrf.mxu0
      %v2118 = vadd.f32 %v1893, %v2117
      %v2119 = vpop.f32.mrf.mxu0
      %2120 = vmatprep.mubr.f32.mxu0 0.0
      %2121 = vmatmul.mubr.f32.gmra.mxu0 %v1989
      %v2122 = vpop.f32.mrf.mxu0
      %v2123 = vadd.f32 %v1898, %v2122
      %v2124 = vpop.f32.mrf.mxu0
      %2125 = vmatprep.mubr.f32.mxu0 0.0
      %2126 = vmatmul.mubr.f32.gmra.mxu0 %v1992
      %v2127 = vpop.f32.mrf.mxu0
      %v2128 = vadd.f32 %v1903, %v2127
      %v2129 = vpop.f32.mrf.mxu0
      %2130 = vmatprep.mubr.f32.mxu0 0.0
      %2131 = vmatmul.mubr.f32.gmra.mxu0 %v1995
      %v2132 = vpop.f32.mrf.mxu0
      %v2133 = vadd.f32 %v1908, %v2132
      %v2134 = vpop.f32.mrf.mxu0
      %2135 = vmatprep.mubr.f32.mxu0 0.0
      %2136 = vmatmul.mubr.f32.gmra.mxu0 %v1998
      %v2137 = vpop.f32.mrf.mxu0
      %v2138 = vadd.f32 %v1913, %v2137
      %v2139 = vpop.f32.mrf.mxu0
      %2140 = vmatprep.mubr.f32.mxu0 0.0
      %2141 = vmatmul.mubr.f32.gmra.mxu0 %v2001
      %v2142 = vpop.f32.mrf.mxu0
      %v2143 = vadd.f32 %v1918, %v2142
      %v2144 = vpop.f32.mrf.mxu0
      %2145 = vmatprep.mubr.f32.mxu0 0.0
      %2146 = vmatmul.mubr.f32.gmra.mxu0 %v2004
      %v2147 = vpop.f32.mrf.mxu0
      %v2148 = vadd.f32 %v1923, %v2147
      %v2149 = vpop.f32.mrf.mxu0
      %2150 = vmatprep.mubr.f32.mxu0 0.0
      %2151 = vmatmul.mubr.f32.gmra.mxu0 %v2007
      %v2152 = vpop.f32.mrf.mxu0
      %v2153 = vadd.f32 %v1928, %v2152
      %v2154 = vpop.f32.mrf.mxu0
      %2155 = vmatprep.mubr.f32.mxu0 0.0
      %2156 = vmatmul.mubr.f32.gmra.mxu0 %v2010
      %v2157 = vpop.f32.mrf.mxu0
      %v2158 = vadd.f32 %v1933, %v2157
      %v2159 = vpop.f32.mrf.mxu0
      %2160 = vmatprep.mubr.f32.mxu0 0.0
      %2161 = vmatmul.mubr.f32.gmra.mxu0 %v2013
      %v2162 = vpop.f32.mrf.mxu0
      %v2163 = vadd.f32 %v1938, %v2162
      %v2164 = vpop.f32.mrf.mxu0
      %2165 = vmatprep.mubr.f32.mxu0 0.0
      %2166 = vmatmul.mubr.f32.gmra.mxu0 %v2016
      %v2167 = vpop.f32.mrf.mxu0
      %v2168 = vadd.f32 %v1943, %v2167
      %v2169 = vpop.f32.mrf.mxu0
      %2170 = vmatprep.mubr.f32.mxu0 0.0
      %2171 = vmatmul.mubr.f32.gmra.mxu0 %v2019
      %v2172 = vpop.f32.mrf.mxu0
      %v2173 = vadd.f32 %v1948, %v2172
      %v2174 = vpop.f32.mrf.mxu0
      %2175 = vmatprep.mubr.f32.mxu0 0.0
      %2176 = vmatmul.mubr.f32.gmra.mxu0 %v2022
      %v2177 = vpop.f32.mrf.mxu0
      %v2178 = vadd.f32 %v1953, %v2177
      %v2179 = vpop.f32.mrf.mxu0
      %2180 = vmatprep.mubr.f32.mxu0 0.0
      %2181 = vmatmul.mubr.f32.gmra.mxu0 %v2025
      %v2182 = vpop.f32.mrf.mxu0
      %v2183 = vadd.f32 %v1958, %v2182
      %v2184 = vpop.f32.mrf.mxu0
      %2185 = vmatprep.mubr.f32.mxu0 0.0
      %2186 = vmatmul.mubr.f32.gmra.mxu0 %v2028
      %v2187 = vpop.f32.mrf.mxu0
      %v2188 = vadd.f32 %v1963, %v2187
      %v2189 = vpop.f32.mrf.mxu0
      %2190 = vmatprep.mubr.f32.mxu0 0.0
      %2191 = vmatmul.mubr.f32.gmra.mxu0 %v2031
      %v2192 = vpop.f32.mrf.mxu0
      %v2193 = vadd.f32 %v1968, %v2192
      %v2194 = vpop.f32.mrf.mxu0
      %2195 = vmatprep.mubr.f32.mxu0 0.0
      %2196 = vmatmul.mubr.f32.gmra.mxu0 %v2034
      %v2197 = vpop.f32.mrf.mxu0
      %v2198 = vadd.f32 %v1973, %v2197
      %v2199 = vpop.f32.mrf.mxu0
      %2200 = vdwg.mxu0
      %v2201 = vld [vmem:[#allocation2 + $0x2] sm:$0xff]
      %v2202 = vld [vmem:[#allocation2 + $0xa] sm:$0xff]
      %v2203 = vld [vmem:[#allocation2 + $0x1a] sm:$0xff]
      %v2204 = vld [vmem:[#allocation2 + $0x22] sm:$0xff]
      %v2205 = vld [vmem:[#allocation2 + $0x32] sm:$0xff]
      %v2206 = vld [vmem:[#allocation2 + $0x3a] sm:$0xff]
      %v2207 = vld [vmem:[#allocation2 + $0x4a] sm:$0xff]
      %v2208 = vld [vmem:[#allocation2 + $0x52] sm:$0xff]
      %v2209 = vld [vmem:[#allocation2 + $0x62] sm:$0xff]
      %v2210 = vld [vmem:[#allocation2 + $0x6a] sm:$0xff]
      %v2211 = vld [vmem:[#allocation2 + $0x7a] sm:$0xff]
      %v2212 = vld [vmem:[#allocation2 + $0x82] sm:$0xff]
      %v2213 = vld [vmem:[#allocation2 + $0x92] sm:$0xff]
      %v2214 = vld [vmem:[#allocation2 + $0x9a] sm:$0xff]
      %v2215 = vld [vmem:[#allocation2 + $0xaa] sm:$0xff]
      %v2216 = vld [vmem:[#allocation2 + $0xb2] sm:$0xff]
      %v2217 = vld [vmem:[#allocation2 + $0xc2] sm:$0xff]
      %v2218 = vld [vmem:[#allocation2 + $0xca] sm:$0xff]
      %v2219 = vld [vmem:[#allocation2 + $0xda] sm:$0xff]
      %v2220 = vld [vmem:[#allocation2 + $0xe2] sm:$0xff]
      %s2221 = scalar_lea.vmem %s6, 48
      %v2222 = vld [vmem:[%s2221] sm:$0xff]
      %v2223 = vld [vmem:[%s2221 + $0x8] sm:$0xff]
      %v2224 = vld [vmem:[%s2221 + $0x10] sm:$0xff]
      %v2226 = vsel %vm1750, %v2201, 0
      %v2229 = vsel %vm1750, %v2202, 0
      %v2232 = vsel %vm1750, %v2203, 0
      %v2235 = vsel %vm1750, %v2204, 0
      %v2238 = vsel %vm1750, %v2205, 0
      %v2241 = vsel %vm1750, %v2206, 0
      %v2244 = vsel %vm1750, %v2207, 0
      %v2247 = vsel %vm1750, %v2208, 0
      %v2250 = vsel %vm1750, %v2209, 0
      %v2253 = vsel %vm1750, %v2210, 0
      %v2256 = vsel %vm1750, %v2211, 0
      %v2259 = vsel %vm1750, %v2212, 0
      %v2262 = vsel %vm1750, %v2213, 0
      %v2265 = vsel %vm1750, %v2214, 0
      %v2268 = vsel %vm1750, %v2215, 0
      %v2271 = vsel %vm1750, %v2216, 0
      %v2274 = vsel %vm1750, %v2217, 0
      %v2277 = vsel %vm1750, %v2218, 0
      %v2280 = vsel %vm1750, %v2219, 0
      %v2283 = vsel %vm1750, %v2220, 0
      %2285 = vmatprep.subr.mxu0 0.0
      %2286 = vmatpush1.msra.mxu0 0.0
      %2287 = vmatprep.subr.mxu0 0.0
      %2288 = vmatpush1.msra.mxu0 0.0
      %2289 = vmatprep.subr.mxu0 0.0
      %2290 = vmatpush1.msra.mxu0 0.0
      %2291 = vmatprep.subr.mxu0 0.0
      %2292 = vmatpush1.msra.mxu0 0.0
      %2293 = vmatprep.subr.mxu0 0.0
      %2294 = vmatpush1.msra.mxu0 0.0
      %2295 = vmatprep.subr.mxu0 0.0
      %2296 = vmatpush1.msra.mxu0 0.0
      %2297 = vmatprep.subr.mxu0 0.0
      %2298 = vmatpush1.msra.mxu0 0.0
      %2299 = vmatprep.subr.mxu0 0.0
      %2300 = vmatpush1.msra.mxu0 0.0
      %2301 = vmatprep.subr.mxu0 0.0
      %2302 = vmatpush1.msra.mxu0 0.0
      %2303 = vmatprep.subr.mxu0 0.0
      %2304 = vmatpush1.msra.mxu0 0.0
      %2305 = vmatprep.subr.mxu0 0.0
      %2306 = vmatpush1.msra.mxu0 0.0
      %2307 = vmatprep.subr.mxu0 0.0
      %2308 = vmatpush1.msra.mxu0 0.0
      %2309 = vmatprep.subr.mxu0 0.0
      %2310 = vmatpush1.msra.mxu0 0.0
      %2311 = vmatprep.subr.mxu0 0.0
      %2312 = vmatpush1.msra.mxu0 %v2224
      %2313 = vmatprep.subr.mxu0 0.0
      %2314 = vmatpush1.msra.mxu0 %v2223
      %2315 = vmatprep.subr.mxu0 0.0
      %2316 = vmatpush1.msra.mxu0 %v2222
      %2317 = vmatprep.subr.mxu0 0.0
      %2318 = vmatpush2.msra.mxu0 0.0
      %2319 = vmatprep.subr.mxu0 0.0
      %2320 = vmatpush2.msra.mxu0 0.0
      %2321 = vmatprep.subr.mxu0 0.0
      %2322 = vmatpush2.msra.mxu0 0.0
      %2323 = vmatprep.subr.mxu0 0.0
      %2324 = vmatpush2.msra.mxu0 0.0
      %2325 = vmatprep.subr.mxu0 0.0
      %2326 = vmatpush2.msra.mxu0 0.0
      %2327 = vmatprep.subr.mxu0 0.0
      %2328 = vmatpush2.msra.mxu0 0.0
      %2329 = vmatprep.subr.mxu0 0.0
      %2330 = vmatpush2.msra.mxu0 0.0
      %2331 = vmatprep.subr.mxu0 0.0
      %2332 = vmatpush2.msra.mxu0 0.0
      %2333 = vmatprep.subr.mxu0 0.0
      %2334 = vmatpush2.msra.mxu0 0.0
      %2335 = vmatprep.subr.mxu0 0.0
      %2336 = vmatpush2.msra.mxu0 0.0
      %2337 = vmatprep.subr.mxu0 0.0
      %2338 = vmatpush2.msra.mxu0 0.0
      %2339 = vmatprep.subr.mxu0 0.0
      %2340 = vmatpush2.msra.mxu0 0.0
      %2341 = vmatprep.subr.mxu0 0.0
      %2342 = vmatpush2.msra.mxu0 0.0
      %2343 = vmatprep.subr.mxu0 0.0
      %2344 = vmatpush2.msra.mxu0 0.0
      %2345 = vmatprep.subr.mxu0 0.0
      %2346 = vmatpush2.msra.mxu0 0.0
      %2347 = vmatprep.subr.mxu0 0.0
      %2348 = vmatpush2.msra.mxu0 0.0
      %2349 = vmatprep.mubr.f32.mxu0 0.0
      %2350 = vmatmul.mubr.f32.gmra.mxu0 %v2226
      %v2351 = vpop.f32.mrf.mxu0
      %v2352 = vadd.f32 0.0, %v2351
      %v2353 = vpop.f32.mrf.mxu0
      %2354 = vmatprep.mubr.f32.mxu0 0.0
      %2355 = vmatmul.mubr.f32.gmra.mxu0 %v2229
      %v2356 = vpop.f32.mrf.mxu0
      %v2357 = vadd.f32 0.0, %v2356
      %v2358 = vpop.f32.mrf.mxu0
      %2359 = vmatprep.mubr.f32.mxu0 0.0
      %2360 = vmatmul.mubr.f32.gmra.mxu0 %v2232
      %v2361 = vpop.f32.mrf.mxu0
      %v2362 = vadd.f32 0.0, %v2361
      %v2363 = vpop.f32.mrf.mxu0
      %2364 = vmatprep.mubr.f32.mxu0 0.0
      %2365 = vmatmul.mubr.f32.gmra.mxu0 %v2235
      %v2366 = vpop.f32.mrf.mxu0
      %v2367 = vadd.f32 0.0, %v2366
      %v2368 = vpop.f32.mrf.mxu0
      %2369 = vmatprep.mubr.f32.mxu0 0.0
      %2370 = vmatmul.mubr.f32.gmra.mxu0 %v2238
      %v2371 = vpop.f32.mrf.mxu0
      %v2372 = vadd.f32 0.0, %v2371
      %v2373 = vpop.f32.mrf.mxu0
      %2374 = vmatprep.mubr.f32.mxu0 0.0
      %2375 = vmatmul.mubr.f32.gmra.mxu0 %v2241
      %v2376 = vpop.f32.mrf.mxu0
      %v2377 = vadd.f32 0.0, %v2376
      %v2378 = vpop.f32.mrf.mxu0
      %2379 = vmatprep.mubr.f32.mxu0 0.0
      %2380 = vmatmul.mubr.f32.gmra.mxu0 %v2244
      %v2381 = vpop.f32.mrf.mxu0
      %v2382 = vadd.f32 0.0, %v2381
      %v2383 = vpop.f32.mrf.mxu0
      %2384 = vmatprep.mubr.f32.mxu0 0.0
      %2385 = vmatmul.mubr.f32.gmra.mxu0 %v2247
      %v2386 = vpop.f32.mrf.mxu0
      %v2387 = vadd.f32 0.0, %v2386
      %v2388 = vpop.f32.mrf.mxu0
      %2389 = vmatprep.mubr.f32.mxu0 0.0
      %2390 = vmatmul.mubr.f32.gmra.mxu0 %v2250
      %v2391 = vpop.f32.mrf.mxu0
      %v2392 = vadd.f32 0.0, %v2391
      %v2393 = vpop.f32.mrf.mxu0
      %2394 = vmatprep.mubr.f32.mxu0 0.0
      %2395 = vmatmul.mubr.f32.gmra.mxu0 %v2253
      %v2396 = vpop.f32.mrf.mxu0
      %v2397 = vadd.f32 0.0, %v2396
      %v2398 = vpop.f32.mrf.mxu0
      %2399 = vmatprep.mubr.f32.mxu0 0.0
      %2400 = vmatmul.mubr.f32.gmra.mxu0 %v2256
      %v2401 = vpop.f32.mrf.mxu0
      %v2402 = vadd.f32 0.0, %v2401
      %v2403 = vpop.f32.mrf.mxu0
      %2404 = vmatprep.mubr.f32.mxu0 0.0
      %2405 = vmatmul.mubr.f32.gmra.mxu0 %v2259
      %v2406 = vpop.f32.mrf.mxu0
      %v2407 = vadd.f32 0.0, %v2406
      %v2408 = vpop.f32.mrf.mxu0
      %2409 = vmatprep.mubr.f32.mxu0 0.0
      %2410 = vmatmul.mubr.f32.gmra.mxu0 %v2262
      %v2411 = vpop.f32.mrf.mxu0
      %v2412 = vadd.f32 0.0, %v2411
      %v2413 = vpop.f32.mrf.mxu0
      %2414 = vmatprep.mubr.f32.mxu0 0.0
      %2415 = vmatmul.mubr.f32.gmra.mxu0 %v2265
      %v2416 = vpop.f32.mrf.mxu0
      %v2417 = vadd.f32 0.0, %v2416
      %v2418 = vpop.f32.mrf.mxu0
      %2419 = vmatprep.mubr.f32.mxu0 0.0
      %2420 = vmatmul.mubr.f32.gmra.mxu0 %v2268
      %v2421 = vpop.f32.mrf.mxu0
      %v2422 = vadd.f32 0.0, %v2421
      %v2423 = vpop.f32.mrf.mxu0
      %2424 = vmatprep.mubr.f32.mxu0 0.0
      %2425 = vmatmul.mubr.f32.gmra.mxu0 %v2271
      %v2426 = vpop.f32.mrf.mxu0
      %v2427 = vadd.f32 0.0, %v2426
      %v2428 = vpop.f32.mrf.mxu0
      %2429 = vmatprep.mubr.f32.mxu0 0.0
      %2430 = vmatmul.mubr.f32.gmra.mxu0 %v2274
      %v2431 = vpop.f32.mrf.mxu0
      %v2432 = vadd.f32 0.0, %v2431
      %v2433 = vpop.f32.mrf.mxu0
      %2434 = vmatprep.mubr.f32.mxu0 0.0
      %2435 = vmatmul.mubr.f32.gmra.mxu0 %v2277
      %v2436 = vpop.f32.mrf.mxu0
      %v2437 = vadd.f32 0.0, %v2436
      %v2438 = vpop.f32.mrf.mxu0
      %2439 = vmatprep.mubr.f32.mxu0 0.0
      %2440 = vmatmul.mubr.f32.gmra.mxu0 %v2280
      %v2441 = vpop.f32.mrf.mxu0
      %v2442 = vadd.f32 0.0, %v2441
      %v2443 = vpop.f32.mrf.mxu0
      %2444 = vmatprep.mubr.f32.mxu0 0.0
      %2445 = vmatmul.mubr.f32.gmra.mxu0 %v2283
      %v2446 = vpop.f32.mrf.mxu0
      %v2447 = vadd.f32 0.0, %v2446
      %v2448 = vpop.f32.mrf.mxu0
      %2449 = vdwg.mxu0
      %v2450 = vadd.f32 %v2103, %v2352
      %v2451 = vadd.f32 %v2108, %v2357
      %v2452 = vadd.f32 %v2113, %v2362
      %v2453 = vadd.f32 %v2118, %v2367
      %v2454 = vadd.f32 %v2123, %v2372
      %v2455 = vadd.f32 %v2128, %v2377
      %v2456 = vadd.f32 %v2133, %v2382
      %v2457 = vadd.f32 %v2138, %v2387
      %v2458 = vadd.f32 %v2143, %v2392
      %v2459 = vadd.f32 %v2148, %v2397
      %v2460 = vadd.f32 %v2153, %v2402
      %v2461 = vadd.f32 %v2158, %v2407
      %v2462 = vadd.f32 %v2163, %v2412
      %v2463 = vadd.f32 %v2168, %v2417
      %v2464 = vadd.f32 %v2173, %v2422
      %v2465 = vadd.f32 %v2178, %v2427
      %v2466 = vadd.f32 %v2183, %v2432
      %v2467 = vadd.f32 %v2188, %v2437
      %v2468 = vadd.f32 %v2193, %v2442
      %v2469 = vadd.f32 %v2198, %v2447
      %s2470 = scalar_lea.vmem [#allocation2], 24
      %v2471 = vld [vmem:[%s2470] sm:$0xff]
      %v2472 = vld [vmem:[%s2470 + $0x8] sm:$0xff]
      %v2473 = vld [vmem:[%s2470 + $0x18] sm:$0xff]
      %v2474 = vld [vmem:[%s2470 + $0x20] sm:$0xff]
      %v2475 = vld [vmem:[%s2470 + $0x30] sm:$0xff]
      %v2476 = vld [vmem:[%s2470 + $0x38] sm:$0xff]
      %v2477 = vld [vmem:[%s2470 + $0x48] sm:$0xff]
      %v2478 = vld [vmem:[%s2470 + $0x50] sm:$0xff]
      %v2479 = vld [vmem:[%s2470 + $0x60] sm:$0xff]
      %v2480 = vld [vmem:[%s2470 + $0x68] sm:$0xff]
      %v2481 = vld [vmem:[%s2470 + $0x78] sm:$0xff]
      %v2482 = vld [vmem:[%s2470 + $0x80] sm:$0xff]
      %v2483 = vld [vmem:[%s2470 + $0x90] sm:$0xff]
      %v2484 = vld [vmem:[%s2470 + $0x98] sm:$0xff]
      %v2485 = vld [vmem:[%s2470 + $0xa8] sm:$0xff]
      %v2486 = vld [vmem:[%s2470 + $0xb0] sm:$0xff]
      %v2487 = vld [vmem:[%s2470 + $0xc0] sm:$0xff]
      %v2488 = vld [vmem:[%s2470 + $0xc8] sm:$0xff]
      %v2489 = vld [vmem:[%s2470 + $0xd8] sm:$0xff]
      %v2490 = vld [vmem:[%s2470 + $0xe0] sm:$0xff]
      %s2491 = scalar_lea.vmem %s6, 72
      %v2492 = vld [vmem:[%s2491] sm:$0xff]
      %v2493 = vld [vmem:[%s2491 + $0x8] sm:$0xff]
      %v2494 = vld [vmem:[%s2491 + $0x10] sm:$0xff]
      %v2496 = vsel %vm1750, %v2471, 0
      %v2499 = vsel %vm1750, %v2472, 0
      %v2502 = vsel %vm1750, %v2473, 0
      %v2505 = vsel %vm1750, %v2474, 0
      %v2508 = vsel %vm1750, %v2475, 0
      %v2511 = vsel %vm1750, %v2476, 0
      %v2514 = vsel %vm1750, %v2477, 0
      %v2517 = vsel %vm1750, %v2478, 0
      %v2520 = vsel %vm1750, %v2479, 0
      %v2523 = vsel %vm1750, %v2480, 0
      %v2526 = vsel %vm1750, %v2481, 0
      %v2529 = vsel %vm1750, %v2482, 0
      %v2532 = vsel %vm1750, %v2483, 0
      %v2535 = vsel %vm1750, %v2484, 0
      %v2538 = vsel %vm1750, %v2485, 0
      %v2541 = vsel %vm1750, %v2486, 0
      %v2544 = vsel %vm1750, %v2487, 0
      %v2547 = vsel %vm1750, %v2488, 0
      %v2550 = vsel %vm1750, %v2489, 0
      %v2553 = vsel %vm1750, %v2490, 0
      %2555 = vmatprep.subr.mxu0 0.0
      %2556 = vmatpush1.msra.mxu0 0.0
      %2557 = vmatprep.subr.mxu0 0.0
      %2558 = vmatpush1.msra.mxu0 0.0
      %2559 = vmatprep.subr.mxu0 0.0
      %2560 = vmatpush1.msra.mxu0 0.0
      %2561 = vmatprep.subr.mxu0 0.0
      %2562 = vmatpush1.msra.mxu0 0.0
      %2563 = vmatprep.subr.mxu0 0.0
      %2564 = vmatpush1.msra.mxu0 0.0
      %2565 = vmatprep.subr.mxu0 0.0
      %2566 = vmatpush1.msra.mxu0 0.0
      %2567 = vmatprep.subr.mxu0 0.0
      %2568 = vmatpush1.msra.mxu0 0.0
      %2569 = vmatprep.subr.mxu0 0.0
      %2570 = vmatpush1.msra.mxu0 0.0
      %2571 = vmatprep.subr.mxu0 0.0
      %2572 = vmatpush1.msra.mxu0 0.0
      %2573 = vmatprep.subr.mxu0 0.0
      %2574 = vmatpush1.msra.mxu0 0.0
      %2575 = vmatprep.subr.mxu0 0.0
      %2576 = vmatpush1.msra.mxu0 0.0
      %2577 = vmatprep.subr.mxu0 0.0
      %2578 = vmatpush1.msra.mxu0 0.0
      %2579 = vmatprep.subr.mxu0 0.0
      %2580 = vmatpush1.msra.mxu0 0.0
      %2581 = vmatprep.subr.mxu0 0.0
      %2582 = vmatpush1.msra.mxu0 %v2494
      %2583 = vmatprep.subr.mxu0 0.0
      %2584 = vmatpush1.msra.mxu0 %v2493
      %2585 = vmatprep.subr.mxu0 0.0
      %2586 = vmatpush1.msra.mxu0 %v2492
      %2587 = vmatprep.subr.mxu0 0.0
      %2588 = vmatpush2.msra.mxu0 0.0
      %2589 = vmatprep.subr.mxu0 0.0
      %2590 = vmatpush2.msra.mxu0 0.0
      %2591 = vmatprep.subr.mxu0 0.0
      %2592 = vmatpush2.msra.mxu0 0.0
      %2593 = vmatprep.subr.mxu0 0.0
      %2594 = vmatpush2.msra.mxu0 0.0
      %2595 = vmatprep.subr.mxu0 0.0
      %2596 = vmatpush2.msra.mxu0 0.0
      %2597 = vmatprep.subr.mxu0 0.0
      %2598 = vmatpush2.msra.mxu0 0.0
      %2599 = vmatprep.subr.mxu0 0.0
      %2600 = vmatpush2.msra.mxu0 0.0
      %2601 = vmatprep.subr.mxu0 0.0
      %2602 = vmatpush2.msra.mxu0 0.0
      %2603 = vmatprep.subr.mxu0 0.0
      %2604 = vmatpush2.msra.mxu0 0.0
      %2605 = vmatprep.subr.mxu0 0.0
      %2606 = vmatpush2.msra.mxu0 0.0
      %2607 = vmatprep.subr.mxu0 0.0
      %2608 = vmatpush2.msra.mxu0 0.0
      %2609 = vmatprep.subr.mxu0 0.0
      %2610 = vmatpush2.msra.mxu0 0.0
      %2611 = vmatprep.subr.mxu0 0.0
      %2612 = vmatpush2.msra.mxu0 0.0
      %2613 = vmatprep.subr.mxu0 0.0
      %2614 = vmatpush2.msra.mxu0 0.0
      %2615 = vmatprep.subr.mxu0 0.0
      %2616 = vmatpush2.msra.mxu0 0.0
      %2617 = vmatprep.subr.mxu0 0.0
      %2618 = vmatpush2.msra.mxu0 0.0
      %2619 = vmatprep.mubr.f32.mxu0 0.0
      %2620 = vmatmul.mubr.f32.gmra.mxu0 %v2496
      %v2621 = vpop.f32.mrf.mxu0
      %v2622 = vadd.f32 0.0, %v2621
      %v2623 = vpop.f32.mrf.mxu0
      %2624 = vmatprep.mubr.f32.mxu0 0.0
      %2625 = vmatmul.mubr.f32.gmra.mxu0 %v2499
      %v2626 = vpop.f32.mrf.mxu0
      %v2627 = vadd.f32 0.0, %v2626
      %v2628 = vpop.f32.mrf.mxu0
      %2629 = vmatprep.mubr.f32.mxu0 0.0
      %2630 = vmatmul.mubr.f32.gmra.mxu0 %v2502
      %v2631 = vpop.f32.mrf.mxu0
      %v2632 = vadd.f32 0.0, %v2631
      %v2633 = vpop.f32.mrf.mxu0
      %2634 = vmatprep.mubr.f32.mxu0 0.0
      %2635 = vmatmul.mubr.f32.gmra.mxu0 %v2505
      %v2636 = vpop.f32.mrf.mxu0
      %v2637 = vadd.f32 0.0, %v2636
      %v2638 = vpop.f32.mrf.mxu0
      %2639 = vmatprep.mubr.f32.mxu0 0.0
      %2640 = vmatmul.mubr.f32.gmra.mxu0 %v2508
      %v2641 = vpop.f32.mrf.mxu0
      %v2642 = vadd.f32 0.0, %v2641
      %v2643 = vpop.f32.mrf.mxu0
      %2644 = vmatprep.mubr.f32.mxu0 0.0
      %2645 = vmatmul.mubr.f32.gmra.mxu0 %v2511
      %v2646 = vpop.f32.mrf.mxu0
      %v2647 = vadd.f32 0.0, %v2646
      %v2648 = vpop.f32.mrf.mxu0
      %2649 = vmatprep.mubr.f32.mxu0 0.0
      %2650 = vmatmul.mubr.f32.gmra.mxu0 %v2514
      %v2651 = vpop.f32.mrf.mxu0
      %v2652 = vadd.f32 0.0, %v2651
      %v2653 = vpop.f32.mrf.mxu0
      %2654 = vmatprep.mubr.f32.mxu0 0.0
      %2655 = vmatmul.mubr.f32.gmra.mxu0 %v2517
      %v2656 = vpop.f32.mrf.mxu0
      %v2657 = vadd.f32 0.0, %v2656
      %v2658 = vpop.f32.mrf.mxu0
      %2659 = vmatprep.mubr.f32.mxu0 0.0
      %2660 = vmatmul.mubr.f32.gmra.mxu0 %v2520
      %v2661 = vpop.f32.mrf.mxu0
      %v2662 = vadd.f32 0.0, %v2661
      %v2663 = vpop.f32.mrf.mxu0
      %2664 = vmatprep.mubr.f32.mxu0 0.0
      %2665 = vmatmul.mubr.f32.gmra.mxu0 %v2523
      %v2666 = vpop.f32.mrf.mxu0
      %v2667 = vadd.f32 0.0, %v2666
      %v2668 = vpop.f32.mrf.mxu0
      %2669 = vmatprep.mubr.f32.mxu0 0.0
      %2670 = vmatmul.mubr.f32.gmra.mxu0 %v2526
      %v2671 = vpop.f32.mrf.mxu0
      %v2672 = vadd.f32 0.0, %v2671
      %v2673 = vpop.f32.mrf.mxu0
      %2674 = vmatprep.mubr.f32.mxu0 0.0
      %2675 = vmatmul.mubr.f32.gmra.mxu0 %v2529
      %v2676 = vpop.f32.mrf.mxu0
      %v2677 = vadd.f32 0.0, %v2676
      %v2678 = vpop.f32.mrf.mxu0
      %2679 = vmatprep.mubr.f32.mxu0 0.0
      %2680 = vmatmul.mubr.f32.gmra.mxu0 %v2532
      %v2681 = vpop.f32.mrf.mxu0
      %v2682 = vadd.f32 0.0, %v2681
      %v2683 = vpop.f32.mrf.mxu0
      %2684 = vmatprep.mubr.f32.mxu0 0.0
      %2685 = vmatmul.mubr.f32.gmra.mxu0 %v2535
      %v2686 = vpop.f32.mrf.mxu0
      %v2687 = vadd.f32 0.0, %v2686
      %v2688 = vpop.f32.mrf.mxu0
      %2689 = vmatprep.mubr.f32.mxu0 0.0
      %2690 = vmatmul.mubr.f32.gmra.mxu0 %v2538
      %v2691 = vpop.f32.mrf.mxu0
      %v2692 = vadd.f32 0.0, %v2691
      %v2693 = vpop.f32.mrf.mxu0
      %2694 = vmatprep.mubr.f32.mxu0 0.0
      %2695 = vmatmul.mubr.f32.gmra.mxu0 %v2541
      %v2696 = vpop.f32.mrf.mxu0
      %v2697 = vadd.f32 0.0, %v2696
      %v2698 = vpop.f32.mrf.mxu0
      %2699 = vmatprep.mubr.f32.mxu0 0.0
      %2700 = vmatmul.mubr.f32.gmra.mxu0 %v2544
      %v2701 = vpop.f32.mrf.mxu0
      %v2702 = vadd.f32 0.0, %v2701
      %v2703 = vpop.f32.mrf.mxu0
      %2704 = vmatprep.mubr.f32.mxu0 0.0
      %2705 = vmatmul.mubr.f32.gmra.mxu0 %v2547
      %v2706 = vpop.f32.mrf.mxu0
      %v2707 = vadd.f32 0.0, %v2706
      %v2708 = vpop.f32.mrf.mxu0
      %2709 = vmatprep.mubr.f32.mxu0 0.0
      %2710 = vmatmul.mubr.f32.gmra.mxu0 %v2550
      %v2711 = vpop.f32.mrf.mxu0
      %v2712 = vadd.f32 0.0, %v2711
      %v2713 = vpop.f32.mrf.mxu0
      %2714 = vmatprep.mubr.f32.mxu0 0.0
      %2715 = vmatmul.mubr.f32.gmra.mxu0 %v2553
      %v2716 = vpop.f32.mrf.mxu0
      %v2717 = vadd.f32 0.0, %v2716
      %v2718 = vpop.f32.mrf.mxu0
      %2719 = vdwg.mxu0
      %v2720 = vadd.f32 %v2450, %v2622
      %v2721 = vadd.f32 %v2451, %v2627
      %v2722 = vadd.f32 %v2452, %v2632
      %v2723 = vadd.f32 %v2453, %v2637
      %v2724 = vadd.f32 %v2454, %v2642
      %v2725 = vadd.f32 %v2455, %v2647
      %v2726 = vadd.f32 %v2456, %v2652
      %v2727 = vadd.f32 %v2457, %v2657
      %v2728 = vadd.f32 %v2458, %v2662
      %v2729 = vadd.f32 %v2459, %v2667
      %v2730 = vadd.f32 %v2460, %v2672
      %v2731 = vadd.f32 %v2461, %v2677
      %v2732 = vadd.f32 %v2462, %v2682
      %v2733 = vadd.f32 %v2463, %v2687
      %v2734 = vadd.f32 %v2464, %v2692
      %v2735 = vadd.f32 %v2465, %v2697
      %v2736 = vadd.f32 %v2466, %v2702
      %v2737 = vadd.f32 %v2467, %v2707
      %v2738 = vadd.f32 %v2468, %v2712
      %v2739 = vadd.f32 %v2469, %v2717
      %v2740 = vld [vmem:[%s2470 + $0x1] sm:$0xff]
      %v2741 = vld [vmem:[%s2470 + $0x9] sm:$0xff]
      %v2742 = vld [vmem:[%s2470 + $0x19] sm:$0xff]
      %v2743 = vld [vmem:[%s2470 + $0x21] sm:$0xff]
      %v2744 = vld [vmem:[%s2470 + $0x31] sm:$0xff]
      %v2745 = vld [vmem:[%s2470 + $0x39] sm:$0xff]
      %v2746 = vld [vmem:[%s2470 + $0x49] sm:$0xff]
      %v2747 = vld [vmem:[%s2470 + $0x51] sm:$0xff]
      %v2748 = vld [vmem:[%s2470 + $0x61] sm:$0xff]
      %v2749 = vld [vmem:[%s2470 + $0x69] sm:$0xff]
      %v2750 = vld [vmem:[%s2470 + $0x79] sm:$0xff]
      %v2751 = vld [vmem:[%s2470 + $0x81] sm:$0xff]
      %v2752 = vld [vmem:[%s2470 + $0x91] sm:$0xff]
      %v2753 = vld [vmem:[%s2470 + $0x99] sm:$0xff]
      %v2754 = vld [vmem:[%s2470 + $0xa9] sm:$0xff]
      %v2755 = vld [vmem:[%s2470 + $0xb1] sm:$0xff]
      %v2756 = vld [vmem:[%s2470 + $0xc1] sm:$0xff]
      %v2757 = vld [vmem:[%s2470 + $0xc9] sm:$0xff]
      %v2758 = vld [vmem:[%s2470 + $0xd9] sm:$0xff]
      %v2759 = vld [vmem:[%s2470 + $0xe1] sm:$0xff]
      %s2760 = scalar_lea.vmem %s6, 96
      %v2761 = vld [vmem:[%s2760] sm:$0xff]
      %v2762 = vld [vmem:[%s2760 + $0x8] sm:$0xff]
      %v2763 = vld [vmem:[%s2760 + $0x10] sm:$0xff]
      %v2765 = vsel %vm1750, %v2740, 0
      %v2768 = vsel %vm1750, %v2741, 0
      %v2771 = vsel %vm1750, %v2742, 0
      %v2774 = vsel %vm1750, %v2743, 0
      %v2777 = vsel %vm1750, %v2744, 0
      %v2780 = vsel %vm1750, %v2745, 0
      %v2783 = vsel %vm1750, %v2746, 0
      %v2786 = vsel %vm1750, %v2747, 0
      %v2789 = vsel %vm1750, %v2748, 0
      %v2792 = vsel %vm1750, %v2749, 0
      %v2795 = vsel %vm1750, %v2750, 0
      %v2798 = vsel %vm1750, %v2751, 0
      %v2801 = vsel %vm1750, %v2752, 0
      %v2804 = vsel %vm1750, %v2753, 0
      %v2807 = vsel %vm1750, %v2754, 0
      %v2810 = vsel %vm1750, %v2755, 0
      %v2813 = vsel %vm1750, %v2756, 0
      %v2816 = vsel %vm1750, %v2757, 0
      %v2819 = vsel %vm1750, %v2758, 0
      %v2822 = vsel %vm1750, %v2759, 0
      %2824 = vmatprep.subr.mxu0 0.0
      %2825 = vmatpush1.msra.mxu0 0.0
      %2826 = vmatprep.subr.mxu0 0.0
      %2827 = vmatpush1.msra.mxu0 0.0
      %2828 = vmatprep.subr.mxu0 0.0
      %2829 = vmatpush1.msra.mxu0 0.0
      %2830 = vmatprep.subr.mxu0 0.0
      %2831 = vmatpush1.msra.mxu0 0.0
      %2832 = vmatprep.subr.mxu0 0.0
      %2833 = vmatpush1.msra.mxu0 0.0
      %2834 = vmatprep.subr.mxu0 0.0
      %2835 = vmatpush1.msra.mxu0 0.0
      %2836 = vmatprep.subr.mxu0 0.0
      %2837 = vmatpush1.msra.mxu0 0.0
      %2838 = vmatprep.subr.mxu0 0.0
      %2839 = vmatpush1.msra.mxu0 0.0
      %2840 = vmatprep.subr.mxu0 0.0
      %2841 = vmatpush1.msra.mxu0 0.0
      %2842 = vmatprep.subr.mxu0 0.0
      %2843 = vmatpush1.msra.mxu0 0.0
      %2844 = vmatprep.subr.mxu0 0.0
      %2845 = vmatpush1.msra.mxu0 0.0
      %2846 = vmatprep.subr.mxu0 0.0
      %2847 = vmatpush1.msra.mxu0 0.0
      %2848 = vmatprep.subr.mxu0 0.0
      %2849 = vmatpush1.msra.mxu0 0.0
      %2850 = vmatprep.subr.mxu0 0.0
      %2851 = vmatpush1.msra.mxu0 %v2763
      %2852 = vmatprep.subr.mxu0 0.0
      %2853 = vmatpush1.msra.mxu0 %v2762
      %2854 = vmatprep.subr.mxu0 0.0
      %2855 = vmatpush1.msra.mxu0 %v2761
      %2856 = vmatprep.subr.mxu0 0.0
      %2857 = vmatpush2.msra.mxu0 0.0
      %2858 = vmatprep.subr.mxu0 0.0
      %2859 = vmatpush2.msra.mxu0 0.0
      %2860 = vmatprep.subr.mxu0 0.0
      %2861 = vmatpush2.msra.mxu0 0.0
      %2862 = vmatprep.subr.mxu0 0.0
      %2863 = vmatpush2.msra.mxu0 0.0
      %2864 = vmatprep.subr.mxu0 0.0
      %2865 = vmatpush2.msra.mxu0 0.0
      %2866 = vmatprep.subr.mxu0 0.0
      %2867 = vmatpush2.msra.mxu0 0.0
      %2868 = vmatprep.subr.mxu0 0.0
      %2869 = vmatpush2.msra.mxu0 0.0
      %2870 = vmatprep.subr.mxu0 0.0
      %2871 = vmatpush2.msra.mxu0 0.0
      %2872 = vmatprep.subr.mxu0 0.0
      %2873 = vmatpush2.msra.mxu0 0.0
      %2874 = vmatprep.subr.mxu0 0.0
      %2875 = vmatpush2.msra.mxu0 0.0
      %2876 = vmatprep.subr.mxu0 0.0
      %2877 = vmatpush2.msra.mxu0 0.0
      %2878 = vmatprep.subr.mxu0 0.0
      %2879 = vmatpush2.msra.mxu0 0.0
      %2880 = vmatprep.subr.mxu0 0.0
      %2881 = vmatpush2.msra.mxu0 0.0
      %2882 = vmatprep.subr.mxu0 0.0
      %2883 = vmatpush2.msra.mxu0 0.0
      %2884 = vmatprep.subr.mxu0 0.0
      %2885 = vmatpush2.msra.mxu0 0.0
      %2886 = vmatprep.subr.mxu0 0.0
      %2887 = vmatpush2.msra.mxu0 0.0
      %2888 = vmatprep.mubr.f32.mxu0 0.0
      %2889 = vmatmul.mubr.f32.gmra.mxu0 %v2765
      %v2890 = vpop.f32.mrf.mxu0
      %v2891 = vadd.f32 0.0, %v2890
      %v2892 = vpop.f32.mrf.mxu0
      %2893 = vmatprep.mubr.f32.mxu0 0.0
      %2894 = vmatmul.mubr.f32.gmra.mxu0 %v2768
      %v2895 = vpop.f32.mrf.mxu0
      %v2896 = vadd.f32 0.0, %v2895
      %v2897 = vpop.f32.mrf.mxu0
      %2898 = vmatprep.mubr.f32.mxu0 0.0
      %2899 = vmatmul.mubr.f32.gmra.mxu0 %v2771
      %v2900 = vpop.f32.mrf.mxu0
      %v2901 = vadd.f32 0.0, %v2900
      %v2902 = vpop.f32.mrf.mxu0
      %2903 = vmatprep.mubr.f32.mxu0 0.0
      %2904 = vmatmul.mubr.f32.gmra.mxu0 %v2774
      %v2905 = vpop.f32.mrf.mxu0
      %v2906 = vadd.f32 0.0, %v2905
      %v2907 = vpop.f32.mrf.mxu0
      %2908 = vmatprep.mubr.f32.mxu0 0.0
      %2909 = vmatmul.mubr.f32.gmra.mxu0 %v2777
      %v2910 = vpop.f32.mrf.mxu0
      %v2911 = vadd.f32 0.0, %v2910
      %v2912 = vpop.f32.mrf.mxu0
      %2913 = vmatprep.mubr.f32.mxu0 0.0
      %2914 = vmatmul.mubr.f32.gmra.mxu0 %v2780
      %v2915 = vpop.f32.mrf.mxu0
      %v2916 = vadd.f32 0.0, %v2915
      %v2917 = vpop.f32.mrf.mxu0
      %2918 = vmatprep.mubr.f32.mxu0 0.0
      %2919 = vmatmul.mubr.f32.gmra.mxu0 %v2783
      %v2920 = vpop.f32.mrf.mxu0
      %v2921 = vadd.f32 0.0, %v2920
      %v2922 = vpop.f32.mrf.mxu0
      %2923 = vmatprep.mubr.f32.mxu0 0.0
      %2924 = vmatmul.mubr.f32.gmra.mxu0 %v2786
      %v2925 = vpop.f32.mrf.mxu0
      %v2926 = vadd.f32 0.0, %v2925
      %v2927 = vpop.f32.mrf.mxu0
      %2928 = vmatprep.mubr.f32.mxu0 0.0
      %2929 = vmatmul.mubr.f32.gmra.mxu0 %v2789
      %v2930 = vpop.f32.mrf.mxu0
      %v2931 = vadd.f32 0.0, %v2930
      %v2932 = vpop.f32.mrf.mxu0
      %2933 = vmatprep.mubr.f32.mxu0 0.0
      %2934 = vmatmul.mubr.f32.gmra.mxu0 %v2792
      %v2935 = vpop.f32.mrf.mxu0
      %v2936 = vadd.f32 0.0, %v2935
      %v2937 = vpop.f32.mrf.mxu0
      %2938 = vmatprep.mubr.f32.mxu0 0.0
      %2939 = vmatmul.mubr.f32.gmra.mxu0 %v2795
      %v2940 = vpop.f32.mrf.mxu0
      %v2941 = vadd.f32 0.0, %v2940
      %v2942 = vpop.f32.mrf.mxu0
      %2943 = vmatprep.mubr.f32.mxu0 0.0
      %2944 = vmatmul.mubr.f32.gmra.mxu0 %v2798
      %v2945 = vpop.f32.mrf.mxu0
      %v2946 = vadd.f32 0.0, %v2945
      %v2947 = vpop.f32.mrf.mxu0
      %2948 = vmatprep.mubr.f32.mxu0 0.0
      %2949 = vmatmul.mubr.f32.gmra.mxu0 %v2801
      %v2950 = vpop.f32.mrf.mxu0
      %v2951 = vadd.f32 0.0, %v2950
      %v2952 = vpop.f32.mrf.mxu0
      %2953 = vmatprep.mubr.f32.mxu0 0.0
      %2954 = vmatmul.mubr.f32.gmra.mxu0 %v2804
      %v2955 = vpop.f32.mrf.mxu0
      %v2956 = vadd.f32 0.0, %v2955
      %v2957 = vpop.f32.mrf.mxu0
      %2958 = vmatprep.mubr.f32.mxu0 0.0
      %2959 = vmatmul.mubr.f32.gmra.mxu0 %v2807
      %v2960 = vpop.f32.mrf.mxu0
      %v2961 = vadd.f32 0.0, %v2960
      %v2962 = vpop.f32.mrf.mxu0
      %2963 = vmatprep.mubr.f32.mxu0 0.0
      %2964 = vmatmul.mubr.f32.gmra.mxu0 %v2810
      %v2965 = vpop.f32.mrf.mxu0
      %v2966 = vadd.f32 0.0, %v2965
      %v2967 = vpop.f32.mrf.mxu0
      %2968 = vmatprep.mubr.f32.mxu0 0.0
      %2969 = vmatmul.mubr.f32.gmra.mxu0 %v2813
      %v2970 = vpop.f32.mrf.mxu0
      %v2971 = vadd.f32 0.0, %v2970
      %v2972 = vpop.f32.mrf.mxu0
      %2973 = vmatprep.mubr.f32.mxu0 0.0
      %2974 = vmatmul.mubr.f32.gmra.mxu0 %v2816
      %v2975 = vpop.f32.mrf.mxu0
      %v2976 = vadd.f32 0.0, %v2975
      %v2977 = vpop.f32.mrf.mxu0
      %2978 = vmatprep.mubr.f32.mxu0 0.0
      %2979 = vmatmul.mubr.f32.gmra.mxu0 %v2819
      %v2980 = vpop.f32.mrf.mxu0
      %v2981 = vadd.f32 0.0, %v2980
      %v2982 = vpop.f32.mrf.mxu0
      %2983 = vmatprep.mubr.f32.mxu0 0.0
      %2984 = vmatmul.mubr.f32.gmra.mxu0 %v2822
      %v2985 = vpop.f32.mrf.mxu0
      %v2986 = vadd.f32 0.0, %v2985
      %v2987 = vpop.f32.mrf.mxu0
      %2988 = vdwg.mxu0
      %v2989 = vadd.f32 %v2720, %v2891
      %v2990 = vadd.f32 %v2721, %v2896
      %v2991 = vadd.f32 %v2722, %v2901
      %v2992 = vadd.f32 %v2723, %v2906
      %v2993 = vadd.f32 %v2724, %v2911
      %v2994 = vadd.f32 %v2725, %v2916
      %v2995 = vadd.f32 %v2726, %v2921
      %v2996 = vadd.f32 %v2727, %v2926
      %v2997 = vadd.f32 %v2728, %v2931
      %v2998 = vadd.f32 %v2729, %v2936
      %v2999 = vadd.f32 %v2730, %v2941
      %v3000 = vadd.f32 %v2731, %v2946
      %v3001 = vadd.f32 %v2732, %v2951
      %v3002 = vadd.f32 %v2733, %v2956
      %v3003 = vadd.f32 %v2734, %v2961
      %v3004 = vadd.f32 %v2735, %v2966
      %v3005 = vadd.f32 %v2736, %v2971
      %v3006 = vadd.f32 %v2737, %v2976
      %v3007 = vadd.f32 %v2738, %v2981
      %v3008 = vadd.f32 %v2739, %v2986
      %v3009 = vld [vmem:[%s2470 + $0x2] sm:$0xff]
      %v3010 = vld [vmem:[%s2470 + $0xa] sm:$0xff]
      %v3011 = vld [vmem:[%s2470 + $0x1a] sm:$0xff]
      %v3012 = vld [vmem:[%s2470 + $0x22] sm:$0xff]
      %v3013 = vld [vmem:[%s2470 + $0x32] sm:$0xff]
      %v3014 = vld [vmem:[%s2470 + $0x3a] sm:$0xff]
      %v3015 = vld [vmem:[%s2470 + $0x4a] sm:$0xff]
      %v3016 = vld [vmem:[%s2470 + $0x52] sm:$0xff]
      %v3017 = vld [vmem:[%s2470 + $0x62] sm:$0xff]
      %v3018 = vld [vmem:[%s2470 + $0x6a] sm:$0xff]
      %v3019 = vld [vmem:[%s2470 + $0x7a] sm:$0xff]
      %v3020 = vld [vmem:[%s2470 + $0x82] sm:$0xff]
      %v3021 = vld [vmem:[%s2470 + $0x92] sm:$0xff]
      %v3022 = vld [vmem:[%s2470 + $0x9a] sm:$0xff]
      %v3023 = vld [vmem:[%s2470 + $0xaa] sm:$0xff]
      %v3024 = vld [vmem:[%s2470 + $0xb2] sm:$0xff]
      %v3025 = vld [vmem:[%s2470 + $0xc2] sm:$0xff]
      %v3026 = vld [vmem:[%s2470 + $0xca] sm:$0xff]
      %v3027 = vld [vmem:[%s2470 + $0xda] sm:$0xff]
      %v3028 = vld [vmem:[%s2470 + $0xe2] sm:$0xff]
      %s3029 = scalar_lea.vmem %s6, 120
      %v3030 = vld [vmem:[%s3029] sm:$0xff]
      %v3031 = vld [vmem:[%s3029 + $0x8] sm:$0xff]
      %v3032 = vld [vmem:[%s3029 + $0x10] sm:$0xff]
      %v3034 = vsel %vm1750, %v3009, 0
      %v3037 = vsel %vm1750, %v3010, 0
      %v3040 = vsel %vm1750, %v3011, 0
      %v3043 = vsel %vm1750, %v3012, 0
      %v3046 = vsel %vm1750, %v3013, 0
      %v3049 = vsel %vm1750, %v3014, 0
      %v3052 = vsel %vm1750, %v3015, 0
      %v3055 = vsel %vm1750, %v3016, 0
      %v3058 = vsel %vm1750, %v3017, 0
      %v3061 = vsel %vm1750, %v3018, 0
      %v3064 = vsel %vm1750, %v3019, 0
      %v3067 = vsel %vm1750, %v3020, 0
      %v3070 = vsel %vm1750, %v3021, 0
      %v3073 = vsel %vm1750, %v3022, 0
      %v3076 = vsel %vm1750, %v3023, 0
      %v3079 = vsel %vm1750, %v3024, 0
      %v3082 = vsel %vm1750, %v3025, 0
      %v3085 = vsel %vm1750, %v3026, 0
      %v3088 = vsel %vm1750, %v3027, 0
      %v3091 = vsel %vm1750, %v3028, 0
      %3093 = vmatprep.subr.mxu0 0.0
      %3094 = vmatpush1.msra.mxu0 0.0
      %3095 = vmatprep.subr.mxu0 0.0
      %3096 = vmatpush1.msra.mxu0 0.0
      %3097 = vmatprep.subr.mxu0 0.0
      %3098 = vmatpush1.msra.mxu0 0.0
      %3099 = vmatprep.subr.mxu0 0.0
      %3100 = vmatpush1.msra.mxu0 0.0
      %3101 = vmatprep.subr.mxu0 0.0
      %3102 = vmatpush1.msra.mxu0 0.0
      %3103 = vmatprep.subr.mxu0 0.0
      %3104 = vmatpush1.msra.mxu0 0.0
      %3105 = vmatprep.subr.mxu0 0.0
      %3106 = vmatpush1.msra.mxu0 0.0
      %3107 = vmatprep.subr.mxu0 0.0
      %3108 = vmatpush1.msra.mxu0 0.0
      %3109 = vmatprep.subr.mxu0 0.0
      %3110 = vmatpush1.msra.mxu0 0.0
      %3111 = vmatprep.subr.mxu0 0.0
      %3112 = vmatpush1.msra.mxu0 0.0
      %3113 = vmatprep.subr.mxu0 0.0
      %3114 = vmatpush1.msra.mxu0 0.0
      %3115 = vmatprep.subr.mxu0 0.0
      %3116 = vmatpush1.msra.mxu0 0.0
      %3117 = vmatprep.subr.mxu0 0.0
      %3118 = vmatpush1.msra.mxu0 0.0
      %3119 = vmatprep.subr.mxu0 0.0
      %3120 = vmatpush1.msra.mxu0 %v3032
      %3121 = vmatprep.subr.mxu0 0.0
      %3122 = vmatpush1.msra.mxu0 %v3031
      %3123 = vmatprep.subr.mxu0 0.0
      %3124 = vmatpush1.msra.mxu0 %v3030
      %3125 = vmatprep.subr.mxu0 0.0
      %3126 = vmatpush2.msra.mxu0 0.0
      %3127 = vmatprep.subr.mxu0 0.0
      %3128 = vmatpush2.msra.mxu0 0.0
      %3129 = vmatprep.subr.mxu0 0.0
      %3130 = vmatpush2.msra.mxu0 0.0
      %3131 = vmatprep.subr.mxu0 0.0
      %3132 = vmatpush2.msra.mxu0 0.0
      %3133 = vmatprep.subr.mxu0 0.0
      %3134 = vmatpush2.msra.mxu0 0.0
      %3135 = vmatprep.subr.mxu0 0.0
      %3136 = vmatpush2.msra.mxu0 0.0
      %3137 = vmatprep.subr.mxu0 0.0
      %3138 = vmatpush2.msra.mxu0 0.0
      %3139 = vmatprep.subr.mxu0 0.0
      %3140 = vmatpush2.msra.mxu0 0.0
      %3141 = vmatprep.subr.mxu0 0.0
      %3142 = vmatpush2.msra.mxu0 0.0
      %3143 = vmatprep.subr.mxu0 0.0
      %3144 = vmatpush2.msra.mxu0 0.0
      %3145 = vmatprep.subr.mxu0 0.0
      %3146 = vmatpush2.msra.mxu0 0.0
      %3147 = vmatprep.subr.mxu0 0.0
      %3148 = vmatpush2.msra.mxu0 0.0
      %3149 = vmatprep.subr.mxu0 0.0
      %3150 = vmatpush2.msra.mxu0 0.0
      %3151 = vmatprep.subr.mxu0 0.0
      %3152 = vmatpush2.msra.mxu0 0.0
      %3153 = vmatprep.subr.mxu0 0.0
      %3154 = vmatpush2.msra.mxu0 0.0
      %3155 = vmatprep.subr.mxu0 0.0
      %3156 = vmatpush2.msra.mxu0 0.0
      %3157 = vmatprep.mubr.f32.mxu0 0.0
      %3158 = vmatmul.mubr.f32.gmra.mxu0 %v3034
      %v3159 = vpop.f32.mrf.mxu0
      %v3160 = vadd.f32 0.0, %v3159
      %v3161 = vpop.f32.mrf.mxu0
      %3162 = vmatprep.mubr.f32.mxu0 0.0
      %3163 = vmatmul.mubr.f32.gmra.mxu0 %v3037
      %v3164 = vpop.f32.mrf.mxu0
      %v3165 = vadd.f32 0.0, %v3164
      %v3166 = vpop.f32.mrf.mxu0
      %3167 = vmatprep.mubr.f32.mxu0 0.0
      %3168 = vmatmul.mubr.f32.gmra.mxu0 %v3040
      %v3169 = vpop.f32.mrf.mxu0
      %v3170 = vadd.f32 0.0, %v3169
      %v3171 = vpop.f32.mrf.mxu0
      %3172 = vmatprep.mubr.f32.mxu0 0.0
      %3173 = vmatmul.mubr.f32.gmra.mxu0 %v3043
      %v3174 = vpop.f32.mrf.mxu0
      %v3175 = vadd.f32 0.0, %v3174
      %v3176 = vpop.f32.mrf.mxu0
      %3177 = vmatprep.mubr.f32.mxu0 0.0
      %3178 = vmatmul.mubr.f32.gmra.mxu0 %v3046
      %v3179 = vpop.f32.mrf.mxu0
      %v3180 = vadd.f32 0.0, %v3179
      %v3181 = vpop.f32.mrf.mxu0
      %3182 = vmatprep.mubr.f32.mxu0 0.0
      %3183 = vmatmul.mubr.f32.gmra.mxu0 %v3049
      %v3184 = vpop.f32.mrf.mxu0
      %v3185 = vadd.f32 0.0, %v3184
      %v3186 = vpop.f32.mrf.mxu0
      %3187 = vmatprep.mubr.f32.mxu0 0.0
      %3188 = vmatmul.mubr.f32.gmra.mxu0 %v3052
      %v3189 = vpop.f32.mrf.mxu0
      %v3190 = vadd.f32 0.0, %v3189
      %v3191 = vpop.f32.mrf.mxu0
      %3192 = vmatprep.mubr.f32.mxu0 0.0
      %3193 = vmatmul.mubr.f32.gmra.mxu0 %v3055
      %v3194 = vpop.f32.mrf.mxu0
      %v3195 = vadd.f32 0.0, %v3194
      %v3196 = vpop.f32.mrf.mxu0
      %3197 = vmatprep.mubr.f32.mxu0 0.0
      %3198 = vmatmul.mubr.f32.gmra.mxu0 %v3058
      %v3199 = vpop.f32.mrf.mxu0
      %v3200 = vadd.f32 0.0, %v3199
      %v3201 = vpop.f32.mrf.mxu0
      %3202 = vmatprep.mubr.f32.mxu0 0.0
      %3203 = vmatmul.mubr.f32.gmra.mxu0 %v3061
      %v3204 = vpop.f32.mrf.mxu0
      %v3205 = vadd.f32 0.0, %v3204
      %v3206 = vpop.f32.mrf.mxu0
      %3207 = vmatprep.mubr.f32.mxu0 0.0
      %3208 = vmatmul.mubr.f32.gmra.mxu0 %v3064
      %v3209 = vpop.f32.mrf.mxu0
      %v3210 = vadd.f32 0.0, %v3209
      %v3211 = vpop.f32.mrf.mxu0
      %3212 = vmatprep.mubr.f32.mxu0 0.0
      %3213 = vmatmul.mubr.f32.gmra.mxu0 %v3067
      %v3214 = vpop.f32.mrf.mxu0
      %v3215 = vadd.f32 0.0, %v3214
      %v3216 = vpop.f32.mrf.mxu0
      %3217 = vmatprep.mubr.f32.mxu0 0.0
      %3218 = vmatmul.mubr.f32.gmra.mxu0 %v3070
      %v3219 = vpop.f32.mrf.mxu0
      %v3220 = vadd.f32 0.0, %v3219
      %v3221 = vpop.f32.mrf.mxu0
      %3222 = vmatprep.mubr.f32.mxu0 0.0
      %3223 = vmatmul.mubr.f32.gmra.mxu0 %v3073
      %v3224 = vpop.f32.mrf.mxu0
      %v3225 = vadd.f32 0.0, %v3224
      %v3226 = vpop.f32.mrf.mxu0
      %3227 = vmatprep.mubr.f32.mxu0 0.0
      %3228 = vmatmul.mubr.f32.gmra.mxu0 %v3076
      %v3229 = vpop.f32.mrf.mxu0
      %v3230 = vadd.f32 0.0, %v3229
      %v3231 = vpop.f32.mrf.mxu0
      %3232 = vmatprep.mubr.f32.mxu0 0.0
      %3233 = vmatmul.mubr.f32.gmra.mxu0 %v3079
      %v3234 = vpop.f32.mrf.mxu0
      %v3235 = vadd.f32 0.0, %v3234
      %v3236 = vpop.f32.mrf.mxu0
      %3237 = vmatprep.mubr.f32.mxu0 0.0
      %3238 = vmatmul.mubr.f32.gmra.mxu0 %v3082
      %v3239 = vpop.f32.mrf.mxu0
      %v3240 = vadd.f32 0.0, %v3239
      %v3241 = vpop.f32.mrf.mxu0
      %3242 = vmatprep.mubr.f32.mxu0 0.0
      %3243 = vmatmul.mubr.f32.gmra.mxu0 %v3085
      %v3244 = vpop.f32.mrf.mxu0
      %v3245 = vadd.f32 0.0, %v3244
      %v3246 = vpop.f32.mrf.mxu0
      %3247 = vmatprep.mubr.f32.mxu0 0.0
      %3248 = vmatmul.mubr.f32.gmra.mxu0 %v3088
      %v3249 = vpop.f32.mrf.mxu0
      %v3250 = vadd.f32 0.0, %v3249
      %v3251 = vpop.f32.mrf.mxu0
      %3252 = vmatprep.mubr.f32.mxu0 0.0
      %3253 = vmatmul.mubr.f32.gmra.mxu0 %v3091
      %v3254 = vpop.f32.mrf.mxu0
      %v3255 = vadd.f32 0.0, %v3254
      %v3256 = vpop.f32.mrf.mxu0
      %3257 = vdwg.mxu0
      %v3258 = vadd.f32 %v2989, %v3160
      %v3259 = vadd.f32 %v2990, %v3165
      %v3260 = vadd.f32 %v2991, %v3170
      %v3261 = vadd.f32 %v2992, %v3175
      %v3262 = vadd.f32 %v2993, %v3180
      %v3263 = vadd.f32 %v2994, %v3185
      %v3264 = vadd.f32 %v2995, %v3190
      %v3265 = vadd.f32 %v2996, %v3195
      %v3266 = vadd.f32 %v2997, %v3200
      %v3267 = vadd.f32 %v2998, %v3205
      %v3268 = vadd.f32 %v2999, %v3210
      %v3269 = vadd.f32 %v3000, %v3215
      %v3270 = vadd.f32 %v3001, %v3220
      %v3271 = vadd.f32 %v3002, %v3225
      %v3272 = vadd.f32 %v3003, %v3230
      %v3273 = vadd.f32 %v3004, %v3235
      %v3274 = vadd.f32 %v3005, %v3240
      %v3275 = vadd.f32 %v3006, %v3245
      %v3276 = vadd.f32 %v3007, %v3250
      %v3277 = vadd.f32 %v3008, %v3255
      %s3278 = scalar_lea.vmem [#allocation2], 48
      %v3279 = vld [vmem:[%s3278] sm:$0xff]
      %v3280 = vld [vmem:[%s3278 + $0x8] sm:$0xff]
      %v3281 = vld [vmem:[%s3278 + $0x18] sm:$0xff]
      %v3282 = vld [vmem:[%s3278 + $0x20] sm:$0xff]
      %v3283 = vld [vmem:[%s3278 + $0x30] sm:$0xff]
      %v3284 = vld [vmem:[%s3278 + $0x38] sm:$0xff]
      %v3285 = vld [vmem:[%s3278 + $0x48] sm:$0xff]
      %v3286 = vld [vmem:[%s3278 + $0x50] sm:$0xff]
      %v3287 = vld [vmem:[%s3278 + $0x60] sm:$0xff]
      %v3288 = vld [vmem:[%s3278 + $0x68] sm:$0xff]
      %v3289 = vld [vmem:[%s3278 + $0x78] sm:$0xff]
      %v3290 = vld [vmem:[%s3278 + $0x80] sm:$0xff]
      %v3291 = vld [vmem:[%s3278 + $0x90] sm:$0xff]
      %v3292 = vld [vmem:[%s3278 + $0x98] sm:$0xff]
      %v3293 = vld [vmem:[%s3278 + $0xa8] sm:$0xff]
      %v3294 = vld [vmem:[%s3278 + $0xb0] sm:$0xff]
      %v3295 = vld [vmem:[%s3278 + $0xc0] sm:$0xff]
      %v3296 = vld [vmem:[%s3278 + $0xc8] sm:$0xff]
      %v3297 = vld [vmem:[%s3278 + $0xd8] sm:$0xff]
      %v3298 = vld [vmem:[%s3278 + $0xe0] sm:$0xff]
      %s3299 = scalar_lea.vmem %s6, 144
      %v3300 = vld [vmem:[%s3299] sm:$0xff]
      %v3301 = vld [vmem:[%s3299 + $0x8] sm:$0xff]
      %v3302 = vld [vmem:[%s3299 + $0x10] sm:$0xff]
      %v3304 = vsel %vm1750, %v3279, 0
      %v3307 = vsel %vm1750, %v3280, 0
      %v3310 = vsel %vm1750, %v3281, 0
      %v3313 = vsel %vm1750, %v3282, 0
      %v3316 = vsel %vm1750, %v3283, 0
      %v3319 = vsel %vm1750, %v3284, 0
      %v3322 = vsel %vm1750, %v3285, 0
      %v3325 = vsel %vm1750, %v3286, 0
      %v3328 = vsel %vm1750, %v3287, 0
      %v3331 = vsel %vm1750, %v3288, 0
      %v3334 = vsel %vm1750, %v3289, 0
      %v3337 = vsel %vm1750, %v3290, 0
      %v3340 = vsel %vm1750, %v3291, 0
      %v3343 = vsel %vm1750, %v3292, 0
      %v3346 = vsel %vm1750, %v3293, 0
      %v3349 = vsel %vm1750, %v3294, 0
      %v3352 = vsel %vm1750, %v3295, 0
      %v3355 = vsel %vm1750, %v3296, 0
      %v3358 = vsel %vm1750, %v3297, 0
      %v3361 = vsel %vm1750, %v3298, 0
      %3363 = vmatprep.subr.mxu0 0.0
      %3364 = vmatpush1.msra.mxu0 0.0
      %3365 = vmatprep.subr.mxu0 0.0
      %3366 = vmatpush1.msra.mxu0 0.0
      %3367 = vmatprep.subr.mxu0 0.0
      %3368 = vmatpush1.msra.mxu0 0.0
      %3369 = vmatprep.subr.mxu0 0.0
      %3370 = vmatpush1.msra.mxu0 0.0
      %3371 = vmatprep.subr.mxu0 0.0
      %3372 = vmatpush1.msra.mxu0 0.0
      %3373 = vmatprep.subr.mxu0 0.0
      %3374 = vmatpush1.msra.mxu0 0.0
      %3375 = vmatprep.subr.mxu0 0.0
      %3376 = vmatpush1.msra.mxu0 0.0
      %3377 = vmatprep.subr.mxu0 0.0
      %3378 = vmatpush1.msra.mxu0 0.0
      %3379 = vmatprep.subr.mxu0 0.0
      %3380 = vmatpush1.msra.mxu0 0.0
      %3381 = vmatprep.subr.mxu0 0.0
      %3382 = vmatpush1.msra.mxu0 0.0
      %3383 = vmatprep.subr.mxu0 0.0
      %3384 = vmatpush1.msra.mxu0 0.0
      %3385 = vmatprep.subr.mxu0 0.0
      %3386 = vmatpush1.msra.mxu0 0.0
      %3387 = vmatprep.subr.mxu0 0.0
      %3388 = vmatpush1.msra.mxu0 0.0
      %3389 = vmatprep.subr.mxu0 0.0
      %3390 = vmatpush1.msra.mxu0 %v3302
      %3391 = vmatprep.subr.mxu0 0.0
      %3392 = vmatpush1.msra.mxu0 %v3301
      %3393 = vmatprep.subr.mxu0 0.0
      %3394 = vmatpush1.msra.mxu0 %v3300
      %3395 = vmatprep.subr.mxu0 0.0
      %3396 = vmatpush2.msra.mxu0 0.0
      %3397 = vmatprep.subr.mxu0 0.0
      %3398 = vmatpush2.msra.mxu0 0.0
      %3399 = vmatprep.subr.mxu0 0.0
      %3400 = vmatpush2.msra.mxu0 0.0
      %3401 = vmatprep.subr.mxu0 0.0
      %3402 = vmatpush2.msra.mxu0 0.0
      %3403 = vmatprep.subr.mxu0 0.0
      %3404 = vmatpush2.msra.mxu0 0.0
      %3405 = vmatprep.subr.mxu0 0.0
      %3406 = vmatpush2.msra.mxu0 0.0
      %3407 = vmatprep.subr.mxu0 0.0
      %3408 = vmatpush2.msra.mxu0 0.0
      %3409 = vmatprep.subr.mxu0 0.0
      %3410 = vmatpush2.msra.mxu0 0.0
      %3411 = vmatprep.subr.mxu0 0.0
      %3412 = vmatpush2.msra.mxu0 0.0
      %3413 = vmatprep.subr.mxu0 0.0
      %3414 = vmatpush2.msra.mxu0 0.0
      %3415 = vmatprep.subr.mxu0 0.0
      %3416 = vmatpush2.msra.mxu0 0.0
      %3417 = vmatprep.subr.mxu0 0.0
      %3418 = vmatpush2.msra.mxu0 0.0
      %3419 = vmatprep.subr.mxu0 0.0
      %3420 = vmatpush2.msra.mxu0 0.0
      %3421 = vmatprep.subr.mxu0 0.0
      %3422 = vmatpush2.msra.mxu0 0.0
      %3423 = vmatprep.subr.mxu0 0.0
      %3424 = vmatpush2.msra.mxu0 0.0
      %3425 = vmatprep.subr.mxu0 0.0
      %3426 = vmatpush2.msra.mxu0 0.0
      %3427 = vmatprep.mubr.f32.mxu0 0.0
      %3428 = vmatmul.mubr.f32.gmra.mxu0 %v3304
      %v3429 = vpop.f32.mrf.mxu0
      %v3430 = vadd.f32 0.0, %v3429
      %v3431 = vpop.f32.mrf.mxu0
      %3432 = vmatprep.mubr.f32.mxu0 0.0
      %3433 = vmatmul.mubr.f32.gmra.mxu0 %v3307
      %v3434 = vpop.f32.mrf.mxu0
      %v3435 = vadd.f32 0.0, %v3434
      %v3436 = vpop.f32.mrf.mxu0
      %3437 = vmatprep.mubr.f32.mxu0 0.0
      %3438 = vmatmul.mubr.f32.gmra.mxu0 %v3310
      %v3439 = vpop.f32.mrf.mxu0
      %v3440 = vadd.f32 0.0, %v3439
      %v3441 = vpop.f32.mrf.mxu0
      %3442 = vmatprep.mubr.f32.mxu0 0.0
      %3443 = vmatmul.mubr.f32.gmra.mxu0 %v3313
      %v3444 = vpop.f32.mrf.mxu0
      %v3445 = vadd.f32 0.0, %v3444
      %v3446 = vpop.f32.mrf.mxu0
      %3447 = vmatprep.mubr.f32.mxu0 0.0
      %3448 = vmatmul.mubr.f32.gmra.mxu0 %v3316
      %v3449 = vpop.f32.mrf.mxu0
      %v3450 = vadd.f32 0.0, %v3449
      %v3451 = vpop.f32.mrf.mxu0
      %3452 = vmatprep.mubr.f32.mxu0 0.0
      %3453 = vmatmul.mubr.f32.gmra.mxu0 %v3319
      %v3454 = vpop.f32.mrf.mxu0
      %v3455 = vadd.f32 0.0, %v3454
      %v3456 = vpop.f32.mrf.mxu0
      %3457 = vmatprep.mubr.f32.mxu0 0.0
      %3458 = vmatmul.mubr.f32.gmra.mxu0 %v3322
      %v3459 = vpop.f32.mrf.mxu0
      %v3460 = vadd.f32 0.0, %v3459
      %v3461 = vpop.f32.mrf.mxu0
      %3462 = vmatprep.mubr.f32.mxu0 0.0
      %3463 = vmatmul.mubr.f32.gmra.mxu0 %v3325
      %v3464 = vpop.f32.mrf.mxu0
      %v3465 = vadd.f32 0.0, %v3464
      %v3466 = vpop.f32.mrf.mxu0
      %3467 = vmatprep.mubr.f32.mxu0 0.0
      %3468 = vmatmul.mubr.f32.gmra.mxu0 %v3328
      %v3469 = vpop.f32.mrf.mxu0
      %v3470 = vadd.f32 0.0, %v3469
      %v3471 = vpop.f32.mrf.mxu0
      %3472 = vmatprep.mubr.f32.mxu0 0.0
      %3473 = vmatmul.mubr.f32.gmra.mxu0 %v3331
      %v3474 = vpop.f32.mrf.mxu0
      %v3475 = vadd.f32 0.0, %v3474
      %v3476 = vpop.f32.mrf.mxu0
      %3477 = vmatprep.mubr.f32.mxu0 0.0
      %3478 = vmatmul.mubr.f32.gmra.mxu0 %v3334
      %v3479 = vpop.f32.mrf.mxu0
      %v3480 = vadd.f32 0.0, %v3479
      %v3481 = vpop.f32.mrf.mxu0
      %3482 = vmatprep.mubr.f32.mxu0 0.0
      %3483 = vmatmul.mubr.f32.gmra.mxu0 %v3337
      %v3484 = vpop.f32.mrf.mxu0
      %v3485 = vadd.f32 0.0, %v3484
      %v3486 = vpop.f32.mrf.mxu0
      %3487 = vmatprep.mubr.f32.mxu0 0.0
      %3488 = vmatmul.mubr.f32.gmra.mxu0 %v3340
      %v3489 = vpop.f32.mrf.mxu0
      %v3490 = vadd.f32 0.0, %v3489
      %v3491 = vpop.f32.mrf.mxu0
      %3492 = vmatprep.mubr.f32.mxu0 0.0
      %3493 = vmatmul.mubr.f32.gmra.mxu0 %v3343
      %v3494 = vpop.f32.mrf.mxu0
      %v3495 = vadd.f32 0.0, %v3494
      %v3496 = vpop.f32.mrf.mxu0
      %3497 = vmatprep.mubr.f32.mxu0 0.0
      %3498 = vmatmul.mubr.f32.gmra.mxu0 %v3346
      %v3499 = vpop.f32.mrf.mxu0
      %v3500 = vadd.f32 0.0, %v3499
      %v3501 = vpop.f32.mrf.mxu0
      %3502 = vmatprep.mubr.f32.mxu0 0.0
      %3503 = vmatmul.mubr.f32.gmra.mxu0 %v3349
      %v3504 = vpop.f32.mrf.mxu0
      %v3505 = vadd.f32 0.0, %v3504
      %v3506 = vpop.f32.mrf.mxu0
      %3507 = vmatprep.mubr.f32.mxu0 0.0
      %3508 = vmatmul.mubr.f32.gmra.mxu0 %v3352
      %v3509 = vpop.f32.mrf.mxu0
      %v3510 = vadd.f32 0.0, %v3509
      %v3511 = vpop.f32.mrf.mxu0
      %3512 = vmatprep.mubr.f32.mxu0 0.0
      %3513 = vmatmul.mubr.f32.gmra.mxu0 %v3355
      %v3514 = vpop.f32.mrf.mxu0
      %v3515 = vadd.f32 0.0, %v3514
      %v3516 = vpop.f32.mrf.mxu0
      %3517 = vmatprep.mubr.f32.mxu0 0.0
      %3518 = vmatmul.mubr.f32.gmra.mxu0 %v3358
      %v3519 = vpop.f32.mrf.mxu0
      %v3520 = vadd.f32 0.0, %v3519
      %v3521 = vpop.f32.mrf.mxu0
      %3522 = vmatprep.mubr.f32.mxu0 0.0
      %3523 = vmatmul.mubr.f32.gmra.mxu0 %v3361
      %v3524 = vpop.f32.mrf.mxu0
      %v3525 = vadd.f32 0.0, %v3524
      %v3526 = vpop.f32.mrf.mxu0
      %3527 = vdwg.mxu0
      %v3528 = vadd.f32 %v3258, %v3430
      %v3529 = vadd.f32 %v3259, %v3435
      %v3530 = vadd.f32 %v3260, %v3440
      %v3531 = vadd.f32 %v3261, %v3445
      %v3532 = vadd.f32 %v3262, %v3450
      %v3533 = vadd.f32 %v3263, %v3455
      %v3534 = vadd.f32 %v3264, %v3460
      %v3535 = vadd.f32 %v3265, %v3465
      %v3536 = vadd.f32 %v3266, %v3470
      %v3537 = vadd.f32 %v3267, %v3475
      %v3538 = vadd.f32 %v3268, %v3480
      %v3539 = vadd.f32 %v3269, %v3485
      %v3540 = vadd.f32 %v3270, %v3490
      %v3541 = vadd.f32 %v3271, %v3495
      %v3542 = vadd.f32 %v3272, %v3500
      %v3543 = vadd.f32 %v3273, %v3505
      %v3544 = vadd.f32 %v3274, %v3510
      %v3545 = vadd.f32 %v3275, %v3515
      %v3546 = vadd.f32 %v3276, %v3520
      %v3547 = vadd.f32 %v3277, %v3525
      %v3548 = vld [vmem:[%s3278 + $0x1] sm:$0xff]
      %v3549 = vld [vmem:[%s3278 + $0x9] sm:$0xff]
      %v3550 = vld [vmem:[%s3278 + $0x19] sm:$0xff]
      %v3551 = vld [vmem:[%s3278 + $0x21] sm:$0xff]
      %v3552 = vld [vmem:[%s3278 + $0x31] sm:$0xff]
      %v3553 = vld [vmem:[%s3278 + $0x39] sm:$0xff]
      %v3554 = vld [vmem:[%s3278 + $0x49] sm:$0xff]
      %v3555 = vld [vmem:[%s3278 + $0x51] sm:$0xff]
      %v3556 = vld [vmem:[%s3278 + $0x61] sm:$0xff]
      %v3557 = vld [vmem:[%s3278 + $0x69] sm:$0xff]
      %v3558 = vld [vmem:[%s3278 + $0x79] sm:$0xff]
      %v3559 = vld [vmem:[%s3278 + $0x81] sm:$0xff]
      %v3560 = vld [vmem:[%s3278 + $0x91] sm:$0xff]
      %v3561 = vld [vmem:[%s3278 + $0x99] sm:$0xff]
      %v3562 = vld [vmem:[%s3278 + $0xa9] sm:$0xff]
      %v3563 = vld [vmem:[%s3278 + $0xb1] sm:$0xff]
      %v3564 = vld [vmem:[%s3278 + $0xc1] sm:$0xff]
      %v3565 = vld [vmem:[%s3278 + $0xc9] sm:$0xff]
      %v3566 = vld [vmem:[%s3278 + $0xd9] sm:$0xff]
      %v3567 = vld [vmem:[%s3278 + $0xe1] sm:$0xff]
      %s3568 = scalar_lea.vmem %s6, 168
      %v3569 = vld [vmem:[%s3568] sm:$0xff]
      %v3570 = vld [vmem:[%s3568 + $0x8] sm:$0xff]
      %v3571 = vld [vmem:[%s3568 + $0x10] sm:$0xff]
      %v3573 = vsel %vm1750, %v3548, 0
      %v3576 = vsel %vm1750, %v3549, 0
      %v3579 = vsel %vm1750, %v3550, 0
      %v3582 = vsel %vm1750, %v3551, 0
      %v3585 = vsel %vm1750, %v3552, 0
      %v3588 = vsel %vm1750, %v3553, 0
      %v3591 = vsel %vm1750, %v3554, 0
      %v3594 = vsel %vm1750, %v3555, 0
      %v3597 = vsel %vm1750, %v3556, 0
      %v3600 = vsel %vm1750, %v3557, 0
      %v3603 = vsel %vm1750, %v3558, 0
      %v3606 = vsel %vm1750, %v3559, 0
      %v3609 = vsel %vm1750, %v3560, 0
      %v3612 = vsel %vm1750, %v3561, 0
      %v3615 = vsel %vm1750, %v3562, 0
      %v3618 = vsel %vm1750, %v3563, 0
      %v3621 = vsel %vm1750, %v3564, 0
      %v3624 = vsel %vm1750, %v3565, 0
      %v3627 = vsel %vm1750, %v3566, 0
      %v3630 = vsel %vm1750, %v3567, 0
      %3632 = vmatprep.subr.mxu0 0.0
      %3633 = vmatpush1.msra.mxu0 0.0
      %3634 = vmatprep.subr.mxu0 0.0
      %3635 = vmatpush1.msra.mxu0 0.0
      %3636 = vmatprep.subr.mxu0 0.0
      %3637 = vmatpush1.msra.mxu0 0.0
      %3638 = vmatprep.subr.mxu0 0.0
      %3639 = vmatpush1.msra.mxu0 0.0
      %3640 = vmatprep.subr.mxu0 0.0
      %3641 = vmatpush1.msra.mxu0 0.0
      %3642 = vmatprep.subr.mxu0 0.0
      %3643 = vmatpush1.msra.mxu0 0.0
      %3644 = vmatprep.subr.mxu0 0.0
      %3645 = vmatpush1.msra.mxu0 0.0
      %3646 = vmatprep.subr.mxu0 0.0
      %3647 = vmatpush1.msra.mxu0 0.0
      %3648 = vmatprep.subr.mxu0 0.0
      %3649 = vmatpush1.msra.mxu0 0.0
      %3650 = vmatprep.subr.mxu0 0.0
      %3651 = vmatpush1.msra.mxu0 0.0
      %3652 = vmatprep.subr.mxu0 0.0
      %3653 = vmatpush1.msra.mxu0 0.0
      %3654 = vmatprep.subr.mxu0 0.0
      %3655 = vmatpush1.msra.mxu0 0.0
      %3656 = vmatprep.subr.mxu0 0.0
      %3657 = vmatpush1.msra.mxu0 0.0
      %3658 = vmatprep.subr.mxu0 0.0
      %3659 = vmatpush1.msra.mxu0 %v3571
      %3660 = vmatprep.subr.mxu0 0.0
      %3661 = vmatpush1.msra.mxu0 %v3570
      %3662 = vmatprep.subr.mxu0 0.0
      %3663 = vmatpush1.msra.mxu0 %v3569
      %3664 = vmatprep.subr.mxu0 0.0
      %3665 = vmatpush2.msra.mxu0 0.0
      %3666 = vmatprep.subr.mxu0 0.0
      %3667 = vmatpush2.msra.mxu0 0.0
      %3668 = vmatprep.subr.mxu0 0.0
      %3669 = vmatpush2.msra.mxu0 0.0
      %3670 = vmatprep.subr.mxu0 0.0
      %3671 = vmatpush2.msra.mxu0 0.0
      %3672 = vmatprep.subr.mxu0 0.0
      %3673 = vmatpush2.msra.mxu0 0.0
      %3674 = vmatprep.subr.mxu0 0.0
      %3675 = vmatpush2.msra.mxu0 0.0
      %3676 = vmatprep.subr.mxu0 0.0
      %3677 = vmatpush2.msra.mxu0 0.0
      %3678 = vmatprep.subr.mxu0 0.0
      %3679 = vmatpush2.msra.mxu0 0.0
      %3680 = vmatprep.subr.mxu0 0.0
      %3681 = vmatpush2.msra.mxu0 0.0
      %3682 = vmatprep.subr.mxu0 0.0
      %3683 = vmatpush2.msra.mxu0 0.0
      %3684 = vmatprep.subr.mxu0 0.0
      %3685 = vmatpush2.msra.mxu0 0.0
      %3686 = vmatprep.subr.mxu0 0.0
      %3687 = vmatpush2.msra.mxu0 0.0
      %3688 = vmatprep.subr.mxu0 0.0
      %3689 = vmatpush2.msra.mxu0 0.0
      %3690 = vmatprep.subr.mxu0 0.0
      %3691 = vmatpush2.msra.mxu0 0.0
      %3692 = vmatprep.subr.mxu0 0.0
      %3693 = vmatpush2.msra.mxu0 0.0
      %3694 = vmatprep.subr.mxu0 0.0
      %3695 = vmatpush2.msra.mxu0 0.0
      %3696 = vmatprep.mubr.f32.mxu0 0.0
      %3697 = vmatmul.mubr.f32.gmra.mxu0 %v3573
      %v3698 = vpop.f32.mrf.mxu0
      %v3699 = vadd.f32 0.0, %v3698
      %v3700 = vpop.f32.mrf.mxu0
      %3701 = vmatprep.mubr.f32.mxu0 0.0
      %3702 = vmatmul.mubr.f32.gmra.mxu0 %v3576
      %v3703 = vpop.f32.mrf.mxu0
      %v3704 = vadd.f32 0.0, %v3703
      %v3705 = vpop.f32.mrf.mxu0
      %3706 = vmatprep.mubr.f32.mxu0 0.0
      %3707 = vmatmul.mubr.f32.gmra.mxu0 %v3579
      %v3708 = vpop.f32.mrf.mxu0
      %v3709 = vadd.f32 0.0, %v3708
      %v3710 = vpop.f32.mrf.mxu0
      %3711 = vmatprep.mubr.f32.mxu0 0.0
      %3712 = vmatmul.mubr.f32.gmra.mxu0 %v3582
      %v3713 = vpop.f32.mrf.mxu0
      %v3714 = vadd.f32 0.0, %v3713
      %v3715 = vpop.f32.mrf.mxu0
      %3716 = vmatprep.mubr.f32.mxu0 0.0
      %3717 = vmatmul.mubr.f32.gmra.mxu0 %v3585
      %v3718 = vpop.f32.mrf.mxu0
      %v3719 = vadd.f32 0.0, %v3718
      %v3720 = vpop.f32.mrf.mxu0
      %3721 = vmatprep.mubr.f32.mxu0 0.0
      %3722 = vmatmul.mubr.f32.gmra.mxu0 %v3588
      %v3723 = vpop.f32.mrf.mxu0
      %v3724 = vadd.f32 0.0, %v3723
      %v3725 = vpop.f32.mrf.mxu0
      %3726 = vmatprep.mubr.f32.mxu0 0.0
      %3727 = vmatmul.mubr.f32.gmra.mxu0 %v3591
      %v3728 = vpop.f32.mrf.mxu0
      %v3729 = vadd.f32 0.0, %v3728
      %v3730 = vpop.f32.mrf.mxu0
      %3731 = vmatprep.mubr.f32.mxu0 0.0
      %3732 = vmatmul.mubr.f32.gmra.mxu0 %v3594
      %v3733 = vpop.f32.mrf.mxu0
      %v3734 = vadd.f32 0.0, %v3733
      %v3735 = vpop.f32.mrf.mxu0
      %3736 = vmatprep.mubr.f32.mxu0 0.0
      %3737 = vmatmul.mubr.f32.gmra.mxu0 %v3597
      %v3738 = vpop.f32.mrf.mxu0
      %v3739 = vadd.f32 0.0, %v3738
      %v3740 = vpop.f32.mrf.mxu0
      %3741 = vmatprep.mubr.f32.mxu0 0.0
      %3742 = vmatmul.mubr.f32.gmra.mxu0 %v3600
      %v3743 = vpop.f32.mrf.mxu0
      %v3744 = vadd.f32 0.0, %v3743
      %v3745 = vpop.f32.mrf.mxu0
      %3746 = vmatprep.mubr.f32.mxu0 0.0
      %3747 = vmatmul.mubr.f32.gmra.mxu0 %v3603
      %v3748 = vpop.f32.mrf.mxu0
      %v3749 = vadd.f32 0.0, %v3748
      %v3750 = vpop.f32.mrf.mxu0
      %3751 = vmatprep.mubr.f32.mxu0 0.0
      %3752 = vmatmul.mubr.f32.gmra.mxu0 %v3606
      %v3753 = vpop.f32.mrf.mxu0
      %v3754 = vadd.f32 0.0, %v3753
      %v3755 = vpop.f32.mrf.mxu0
      %3756 = vmatprep.mubr.f32.mxu0 0.0
      %3757 = vmatmul.mubr.f32.gmra.mxu0 %v3609
      %v3758 = vpop.f32.mrf.mxu0
      %v3759 = vadd.f32 0.0, %v3758
      %v3760 = vpop.f32.mrf.mxu0
      %3761 = vmatprep.mubr.f32.mxu0 0.0
      %3762 = vmatmul.mubr.f32.gmra.mxu0 %v3612
      %v3763 = vpop.f32.mrf.mxu0
      %v3764 = vadd.f32 0.0, %v3763
      %v3765 = vpop.f32.mrf.mxu0
      %3766 = vmatprep.mubr.f32.mxu0 0.0
      %3767 = vmatmul.mubr.f32.gmra.mxu0 %v3615
      %v3768 = vpop.f32.mrf.mxu0
      %v3769 = vadd.f32 0.0, %v3768
      %v3770 = vpop.f32.mrf.mxu0
      %3771 = vmatprep.mubr.f32.mxu0 0.0
      %3772 = vmatmul.mubr.f32.gmra.mxu0 %v3618
      %v3773 = vpop.f32.mrf.mxu0
      %v3774 = vadd.f32 0.0, %v3773
      %v3775 = vpop.f32.mrf.mxu0
      %3776 = vmatprep.mubr.f32.mxu0 0.0
      %3777 = vmatmul.mubr.f32.gmra.mxu0 %v3621
      %v3778 = vpop.f32.mrf.mxu0
      %v3779 = vadd.f32 0.0, %v3778
      %v3780 = vpop.f32.mrf.mxu0
      %3781 = vmatprep.mubr.f32.mxu0 0.0
      %3782 = vmatmul.mubr.f32.gmra.mxu0 %v3624
      %v3783 = vpop.f32.mrf.mxu0
      %v3784 = vadd.f32 0.0, %v3783
      %v3785 = vpop.f32.mrf.mxu0
      %3786 = vmatprep.mubr.f32.mxu0 0.0
      %3787 = vmatmul.mubr.f32.gmra.mxu0 %v3627
      %v3788 = vpop.f32.mrf.mxu0
      %v3789 = vadd.f32 0.0, %v3788
      %v3790 = vpop.f32.mrf.mxu0
      %3791 = vmatprep.mubr.f32.mxu0 0.0
      %3792 = vmatmul.mubr.f32.gmra.mxu0 %v3630
      %v3793 = vpop.f32.mrf.mxu0
      %v3794 = vadd.f32 0.0, %v3793
      %v3795 = vpop.f32.mrf.mxu0
      %3796 = vdwg.mxu0
      %v3797 = vadd.f32 %v3528, %v3699
      %v3798 = vadd.f32 %v3529, %v3704
      %v3799 = vadd.f32 %v3530, %v3709
      %v3800 = vadd.f32 %v3531, %v3714
      %v3801 = vadd.f32 %v3532, %v3719
      %v3802 = vadd.f32 %v3533, %v3724
      %v3803 = vadd.f32 %v3534, %v3729
      %v3804 = vadd.f32 %v3535, %v3734
      %v3805 = vadd.f32 %v3536, %v3739
      %v3806 = vadd.f32 %v3537, %v3744
      %v3807 = vadd.f32 %v3538, %v3749
      %v3808 = vadd.f32 %v3539, %v3754
      %v3809 = vadd.f32 %v3540, %v3759
      %v3810 = vadd.f32 %v3541, %v3764
      %v3811 = vadd.f32 %v3542, %v3769
      %v3812 = vadd.f32 %v3543, %v3774
      %v3813 = vadd.f32 %v3544, %v3779
      %v3814 = vadd.f32 %v3545, %v3784
      %v3815 = vadd.f32 %v3546, %v3789
      %v3816 = vadd.f32 %v3547, %v3794
      %v3817 = vld [vmem:[%s3278 + $0x2] sm:$0xff]
      %v3818 = vld [vmem:[%s3278 + $0xa] sm:$0xff]
      %v3819 = vld [vmem:[%s3278 + $0x1a] sm:$0xff]
      %v3820 = vld [vmem:[%s3278 + $0x22] sm:$0xff]
      %v3821 = vld [vmem:[%s3278 + $0x32] sm:$0xff]
      %v3822 = vld [vmem:[%s3278 + $0x3a] sm:$0xff]
      %v3823 = vld [vmem:[%s3278 + $0x4a] sm:$0xff]
      %v3824 = vld [vmem:[%s3278 + $0x52] sm:$0xff]
      %v3825 = vld [vmem:[%s3278 + $0x62] sm:$0xff]
      %v3826 = vld [vmem:[%s3278 + $0x6a] sm:$0xff]
      %v3827 = vld [vmem:[%s3278 + $0x7a] sm:$0xff]
      %v3828 = vld [vmem:[%s3278 + $0x82] sm:$0xff]
      %v3829 = vld [vmem:[%s3278 + $0x92] sm:$0xff]
      %v3830 = vld [vmem:[%s3278 + $0x9a] sm:$0xff]
      %v3831 = vld [vmem:[%s3278 + $0xaa] sm:$0xff]
      %v3832 = vld [vmem:[%s3278 + $0xb2] sm:$0xff]
      %v3833 = vld [vmem:[%s3278 + $0xc2] sm:$0xff]
      %v3834 = vld [vmem:[%s3278 + $0xca] sm:$0xff]
      %v3835 = vld [vmem:[%s3278 + $0xda] sm:$0xff]
      %v3836 = vld [vmem:[%s3278 + $0xe2] sm:$0xff]
      %s3837 = scalar_lea.vmem %s6, 192
      %v3838 = vld [vmem:[%s3837] sm:$0xff]
      %v3839 = vld [vmem:[%s3837 + $0x8] sm:$0xff]
      %v3840 = vld [vmem:[%s3837 + $0x10] sm:$0xff]
      %v3842 = vsel %vm1750, %v3817, 0
      %v3845 = vsel %vm1750, %v3818, 0
      %v3848 = vsel %vm1750, %v3819, 0
      %v3851 = vsel %vm1750, %v3820, 0
      %v3854 = vsel %vm1750, %v3821, 0
      %v3857 = vsel %vm1750, %v3822, 0
      %v3860 = vsel %vm1750, %v3823, 0
      %v3863 = vsel %vm1750, %v3824, 0
      %v3866 = vsel %vm1750, %v3825, 0
      %v3869 = vsel %vm1750, %v3826, 0
      %v3872 = vsel %vm1750, %v3827, 0
      %v3875 = vsel %vm1750, %v3828, 0
      %v3878 = vsel %vm1750, %v3829, 0
      %v3881 = vsel %vm1750, %v3830, 0
      %v3884 = vsel %vm1750, %v3831, 0
      %v3887 = vsel %vm1750, %v3832, 0
      %v3890 = vsel %vm1750, %v3833, 0
      %v3893 = vsel %vm1750, %v3834, 0
      %v3896 = vsel %vm1750, %v3835, 0
      %v3899 = vsel %vm1750, %v3836, 0
      %3901 = vmatprep.subr.mxu0 0.0
      %3902 = vmatpush1.msra.mxu0 0.0
      %3903 = vmatprep.subr.mxu0 0.0
      %3904 = vmatpush1.msra.mxu0 0.0
      %3905 = vmatprep.subr.mxu0 0.0
      %3906 = vmatpush1.msra.mxu0 0.0
      %3907 = vmatprep.subr.mxu0 0.0
      %3908 = vmatpush1.msra.mxu0 0.0
      %3909 = vmatprep.subr.mxu0 0.0
      %3910 = vmatpush1.msra.mxu0 0.0
      %3911 = vmatprep.subr.mxu0 0.0
      %3912 = vmatpush1.msra.mxu0 0.0
      %3913 = vmatprep.subr.mxu0 0.0
      %3914 = vmatpush1.msra.mxu0 0.0
      %3915 = vmatprep.subr.mxu0 0.0
      %3916 = vmatpush1.msra.mxu0 0.0
      %3917 = vmatprep.subr.mxu0 0.0
      %3918 = vmatpush1.msra.mxu0 0.0
      %3919 = vmatprep.subr.mxu0 0.0
      %3920 = vmatpush1.msra.mxu0 0.0
      %3921 = vmatprep.subr.mxu0 0.0
      %3922 = vmatpush1.msra.mxu0 0.0
      %3923 = vmatprep.subr.mxu0 0.0
      %3924 = vmatpush1.msra.mxu0 0.0
      %3925 = vmatprep.subr.mxu0 0.0
      %3926 = vmatpush1.msra.mxu0 0.0
      %3927 = vmatprep.subr.mxu0 0.0
      %3928 = vmatpush1.msra.mxu0 %v3840
      %3929 = vmatprep.subr.mxu0 0.0
      %3930 = vmatpush1.msra.mxu0 %v3839
      %3931 = vmatprep.subr.mxu0 0.0
      %3932 = vmatpush1.msra.mxu0 %v3838
      %3933 = vmatprep.subr.mxu0 0.0
      %3934 = vmatpush2.msra.mxu0 0.0
      %3935 = vmatprep.subr.mxu0 0.0
      %3936 = vmatpush2.msra.mxu0 0.0
      %3937 = vmatprep.subr.mxu0 0.0
      %3938 = vmatpush2.msra.mxu0 0.0
      %3939 = vmatprep.subr.mxu0 0.0
      %3940 = vmatpush2.msra.mxu0 0.0
      %3941 = vmatprep.subr.mxu0 0.0
      %3942 = vmatpush2.msra.mxu0 0.0
      %3943 = vmatprep.subr.mxu0 0.0
      %3944 = vmatpush2.msra.mxu0 0.0
      %3945 = vmatprep.subr.mxu0 0.0
      %3946 = vmatpush2.msra.mxu0 0.0
      %3947 = vmatprep.subr.mxu0 0.0
      %3948 = vmatpush2.msra.mxu0 0.0
      %3949 = vmatprep.subr.mxu0 0.0
      %3950 = vmatpush2.msra.mxu0 0.0
      %3951 = vmatprep.subr.mxu0 0.0
      %3952 = vmatpush2.msra.mxu0 0.0
      %3953 = vmatprep.subr.mxu0 0.0
      %3954 = vmatpush2.msra.mxu0 0.0
      %3955 = vmatprep.subr.mxu0 0.0
      %3956 = vmatpush2.msra.mxu0 0.0
      %3957 = vmatprep.subr.mxu0 0.0
      %3958 = vmatpush2.msra.mxu0 0.0
      %3959 = vmatprep.subr.mxu0 0.0
      %3960 = vmatpush2.msra.mxu0 0.0
      %3961 = vmatprep.subr.mxu0 0.0
      %3962 = vmatpush2.msra.mxu0 0.0
      %3963 = vmatprep.subr.mxu0 0.0
      %3964 = vmatpush2.msra.mxu0 0.0
      %3965 = vmatprep.mubr.f32.mxu0 0.0
      %3966 = vmatmul.mubr.f32.gmra.mxu0 %v3842
      %v3967 = vpop.f32.mrf.mxu0
      %v3968 = vadd.f32 0.0, %v3967
      %v3969 = vpop.f32.mrf.mxu0
      %3970 = vmatprep.mubr.f32.mxu0 0.0
      %3971 = vmatmul.mubr.f32.gmra.mxu0 %v3845
      %v3972 = vpop.f32.mrf.mxu0
      %v3973 = vadd.f32 0.0, %v3972
      %v3974 = vpop.f32.mrf.mxu0
      %3975 = vmatprep.mubr.f32.mxu0 0.0
      %3976 = vmatmul.mubr.f32.gmra.mxu0 %v3848
      %v3977 = vpop.f32.mrf.mxu0
      %v3978 = vadd.f32 0.0, %v3977
      %v3979 = vpop.f32.mrf.mxu0
      %3980 = vmatprep.mubr.f32.mxu0 0.0
      %3981 = vmatmul.mubr.f32.gmra.mxu0 %v3851
      %v3982 = vpop.f32.mrf.mxu0
      %v3983 = vadd.f32 0.0, %v3982
      %v3984 = vpop.f32.mrf.mxu0
      %3985 = vmatprep.mubr.f32.mxu0 0.0
      %3986 = vmatmul.mubr.f32.gmra.mxu0 %v3854
      %v3987 = vpop.f32.mrf.mxu0
      %v3988 = vadd.f32 0.0, %v3987
      %v3989 = vpop.f32.mrf.mxu0
      %3990 = vmatprep.mubr.f32.mxu0 0.0
      %3991 = vmatmul.mubr.f32.gmra.mxu0 %v3857
      %v3992 = vpop.f32.mrf.mxu0
      %v3993 = vadd.f32 0.0, %v3992
      %v3994 = vpop.f32.mrf.mxu0
      %3995 = vmatprep.mubr.f32.mxu0 0.0
      %3996 = vmatmul.mubr.f32.gmra.mxu0 %v3860
      %v3997 = vpop.f32.mrf.mxu0
      %v3998 = vadd.f32 0.0, %v3997
      %v3999 = vpop.f32.mrf.mxu0
      %4000 = vmatprep.mubr.f32.mxu0 0.0
      %4001 = vmatmul.mubr.f32.gmra.mxu0 %v3863
      %v4002 = vpop.f32.mrf.mxu0
      %v4003 = vadd.f32 0.0, %v4002
      %v4004 = vpop.f32.mrf.mxu0
      %4005 = vmatprep.mubr.f32.mxu0 0.0
      %4006 = vmatmul.mubr.f32.gmra.mxu0 %v3866
      %v4007 = vpop.f32.mrf.mxu0
      %v4008 = vadd.f32 0.0, %v4007
      %v4009 = vpop.f32.mrf.mxu0
      %4010 = vmatprep.mubr.f32.mxu0 0.0
      %4011 = vmatmul.mubr.f32.gmra.mxu0 %v3869
      %v4012 = vpop.f32.mrf.mxu0
      %v4013 = vadd.f32 0.0, %v4012
      %v4014 = vpop.f32.mrf.mxu0
      %4015 = vmatprep.mubr.f32.mxu0 0.0
      %4016 = vmatmul.mubr.f32.gmra.mxu0 %v3872
      %v4017 = vpop.f32.mrf.mxu0
      %v4018 = vadd.f32 0.0, %v4017
      %v4019 = vpop.f32.mrf.mxu0
      %4020 = vmatprep.mubr.f32.mxu0 0.0
      %4021 = vmatmul.mubr.f32.gmra.mxu0 %v3875
      %v4022 = vpop.f32.mrf.mxu0
      %v4023 = vadd.f32 0.0, %v4022
      %v4024 = vpop.f32.mrf.mxu0
      %4025 = vmatprep.mubr.f32.mxu0 0.0
      %4026 = vmatmul.mubr.f32.gmra.mxu0 %v3878
      %v4027 = vpop.f32.mrf.mxu0
      %v4028 = vadd.f32 0.0, %v4027
      %v4029 = vpop.f32.mrf.mxu0
      %4030 = vmatprep.mubr.f32.mxu0 0.0
      %4031 = vmatmul.mubr.f32.gmra.mxu0 %v3881
      %v4032 = vpop.f32.mrf.mxu0
      %v4033 = vadd.f32 0.0, %v4032
      %v4034 = vpop.f32.mrf.mxu0
      %4035 = vmatprep.mubr.f32.mxu0 0.0
      %4036 = vmatmul.mubr.f32.gmra.mxu0 %v3884
      %v4037 = vpop.f32.mrf.mxu0
      %v4038 = vadd.f32 0.0, %v4037
      %v4039 = vpop.f32.mrf.mxu0
      %4040 = vmatprep.mubr.f32.mxu0 0.0
      %4041 = vmatmul.mubr.f32.gmra.mxu0 %v3887
      %v4042 = vpop.f32.mrf.mxu0
      %v4043 = vadd.f32 0.0, %v4042
      %v4044 = vpop.f32.mrf.mxu0
      %4045 = vmatprep.mubr.f32.mxu0 0.0
      %4046 = vmatmul.mubr.f32.gmra.mxu0 %v3890
      %v4047 = vpop.f32.mrf.mxu0
      %v4048 = vadd.f32 0.0, %v4047
      %v4049 = vpop.f32.mrf.mxu0
      %4050 = vmatprep.mubr.f32.mxu0 0.0
      %4051 = vmatmul.mubr.f32.gmra.mxu0 %v3893
      %v4052 = vpop.f32.mrf.mxu0
      %v4053 = vadd.f32 0.0, %v4052
      %v4054 = vpop.f32.mrf.mxu0
      %4055 = vmatprep.mubr.f32.mxu0 0.0
      %4056 = vmatmul.mubr.f32.gmra.mxu0 %v3896
      %v4057 = vpop.f32.mrf.mxu0
      %v4058 = vadd.f32 0.0, %v4057
      %v4059 = vpop.f32.mrf.mxu0
      %4060 = vmatprep.mubr.f32.mxu0 0.0
      %4061 = vmatmul.mubr.f32.gmra.mxu0 %v3899
      %v4062 = vpop.f32.mrf.mxu0
      %v4063 = vadd.f32 0.0, %v4062
      %v4064 = vpop.f32.mrf.mxu0
      %4065 = vdwg.mxu0
      %v4066 = vadd.f32 %v3797, %v3968
      %v4067 = vadd.f32 %v3798, %v3973
      %v4068 = vadd.f32 %v3799, %v3978
      %v4069 = vadd.f32 %v3800, %v3983
      %v4070 = vadd.f32 %v3801, %v3988
      %v4071 = vadd.f32 %v3802, %v3993
      %v4072 = vadd.f32 %v3803, %v3998
      %v4073 = vadd.f32 %v3804, %v4003
      %v4074 = vadd.f32 %v3805, %v4008
      %v4075 = vadd.f32 %v3806, %v4013
      %v4076 = vadd.f32 %v3807, %v4018
      %v4077 = vadd.f32 %v3808, %v4023
      %v4078 = vadd.f32 %v3809, %v4028
      %v4079 = vadd.f32 %v3810, %v4033
      %v4080 = vadd.f32 %v3811, %v4038
      %v4081 = vadd.f32 %v3812, %v4043
      %v4082 = vadd.f32 %v3813, %v4048
      %v4083 = vadd.f32 %v3814, %v4053
      %v4084 = vadd.f32 %v3815, %v4058
      %v4085 = vadd.f32 %v3816, %v4063
      %v4086 = vld [vmem:[%s7] sm:$0x1]
      %v4088 = vlaneseq
      %v4089 = vshrl.u32 %v4088, 7
      %v4090 = vsub.s32 0, %v4089
      %v4091 = vrot.slane %v4086, %v4090
      %v4093 = vmul.f32 %v4066, %v4091
      %v4094 = vmul.f32 %v4067, %v4091
      %v4095 = vmul.f32 %v4068, %v4091
      %v4096 = vmul.f32 %v4069, %v4091
      %v4097 = vmul.f32 %v4070, %v4091
      %v4098 = vmul.f32 %v4071, %v4091
      %v4099 = vmul.f32 %v4072, %v4091
      %v4100 = vmul.f32 %v4073, %v4091
      %v4101 = vmul.f32 %v4074, %v4091
      %v4102 = vmul.f32 %v4075, %v4091
      %v4103 = vmul.f32 %v4076, %v4091
      %v4104 = vmul.f32 %v4077, %v4091
      %v4105 = vmul.f32 %v4078, %v4091
      %v4106 = vmul.f32 %v4079, %v4091
      %v4107 = vmul.f32 %v4080, %v4091
      %v4108 = vmul.f32 %v4081, %v4091
      %v4109 = vmul.f32 %v4082, %v4091
      %v4110 = vmul.f32 %v4083, %v4091
      %v4111 = vmul.f32 %v4084, %v4091
      %v4112 = vmul.f32 %v4085, %v4091
      %v4113 = vld [vmem:[%s8] sm:$0x1]
      %v4115 = vlaneseq
      %v4116 = vshrl.u32 %v4115, 7
      %v4117 = vsub.s32 0, %v4116
      %v4118 = vrot.slane %v4113, %v4117
      %v4120 = vadd.f32 %v4093, %v4118
      %v4121 = vadd.f32 %v4094, %v4118
      %v4122 = vadd.f32 %v4095, %v4118
      %v4123 = vadd.f32 %v4096, %v4118
      %v4124 = vadd.f32 %v4097, %v4118
      %v4125 = vadd.f32 %v4098, %v4118
      %v4126 = vadd.f32 %v4099, %v4118
      %v4127 = vadd.f32 %v4100, %v4118
      %v4128 = vadd.f32 %v4101, %v4118
      %v4129 = vadd.f32 %v4102, %v4118
      %v4130 = vadd.f32 %v4103, %v4118
      %v4131 = vadd.f32 %v4104, %v4118
      %v4132 = vadd.f32 %v4105, %v4118
      %v4133 = vadd.f32 %v4106, %v4118
      %v4134 = vadd.f32 %v4107, %v4118
      %v4135 = vadd.f32 %v4108, %v4118
      %v4136 = vadd.f32 %v4109, %v4118
      %v4137 = vadd.f32 %v4110, %v4118
      %v4138 = vadd.f32 %v4111, %v4118
      %v4139 = vadd.f32 %v4112, %v4118
      %v4140 = vmax.f32 %v4120, 0.0
      %v4141 = vmax.f32 %v4121, 0.0
      %v4142 = vmax.f32 %v4122, 0.0
      %v4143 = vmax.f32 %v4123, 0.0
      %v4144 = vmax.f32 %v4124, 0.0
      %v4145 = vmax.f32 %v4125, 0.0
      %v4146 = vmax.f32 %v4126, 0.0
      %v4147 = vmax.f32 %v4127, 0.0
      %v4148 = vmax.f32 %v4128, 0.0
      %v4149 = vmax.f32 %v4129, 0.0
      %v4150 = vmax.f32 %v4130, 0.0
      %v4151 = vmax.f32 %v4131, 0.0
      %v4152 = vmax.f32 %v4132, 0.0
      %v4153 = vmax.f32 %v4133, 0.0
      %v4154 = vmax.f32 %v4134, 0.0
      %v4155 = vmax.f32 %v4135, 0.0
      %v4156 = vmax.f32 %v4136, 0.0
      %v4157 = vmax.f32 %v4137, 0.0
      %v4158 = vmax.f32 %v4138, 0.0
      %v4159 = vmax.f32 %v4139, 0.0
      %vm4160 = vcmask 64512
      %4161 = vst.msk [vmem:[#allocation3 + $0x1] sm:$0xff] %vm4160, %v4140
      %4162 = vst.msk [vmem:[#allocation3 + $0x9] sm:$0xff] %vm4160, %v4141
      %4163 = vst.msk [vmem:[#allocation3 + $0x19] sm:$0xff] %vm4160, %v4142
      %4164 = vst.msk [vmem:[#allocation3 + $0x21] sm:$0xff] %vm4160, %v4143
      %4165 = vst.msk [vmem:[#allocation3 + $0x31] sm:$0xff] %vm4160, %v4144
      %4166 = vst.msk [vmem:[#allocation3 + $0x39] sm:$0xff] %vm4160, %v4145
      %4167 = vst.msk [vmem:[#allocation3 + $0x49] sm:$0xff] %vm4160, %v4146
      %4168 = vst.msk [vmem:[#allocation3 + $0x51] sm:$0xff] %vm4160, %v4147
      %4169 = vst.msk [vmem:[#allocation3 + $0x61] sm:$0xff] %vm4160, %v4148
      %4170 = vst.msk [vmem:[#allocation3 + $0x69] sm:$0xff] %vm4160, %v4149
      %4171 = vst.msk [vmem:[#allocation3 + $0x79] sm:$0xff] %vm4160, %v4150
      %4172 = vst.msk [vmem:[#allocation3 + $0x81] sm:$0xff] %vm4160, %v4151
      %4173 = vst.msk [vmem:[#allocation3 + $0x91] sm:$0xff] %vm4160, %v4152
      %4174 = vst.msk [vmem:[#allocation3 + $0x99] sm:$0xff] %vm4160, %v4153
      %4175 = vst.msk [vmem:[#allocation3 + $0xa9] sm:$0xff] %vm4160, %v4154
      %4176 = vst.msk [vmem:[#allocation3 + $0xb1] sm:$0xff] %vm4160, %v4155
      %4177 = vst.msk [vmem:[#allocation3 + $0xc1] sm:$0xff] %vm4160, %v4156
      %4178 = vst.msk [vmem:[#allocation3 + $0xc9] sm:$0xff] %vm4160, %v4157
      %4179 = vst.msk [vmem:[#allocation3 + $0xd9] sm:$0xff] %vm4160, %v4158
      %4180 = vst.msk [vmem:[#allocation3 + $0xe1] sm:$0xff] %vm4160, %v4159
      // Predicated region
      $region77: #{decoder_block_nhwc.1} parent=67 // pred_check
        %p4181 = pneg %p746
      $region78: #{decoder_block_nhwc.1} parent=67 // pred_check_branch
        %4183 = sbr.rel (%p4181) target = $region80
      $region79: #{decoder_block_nhwc.1} parent=67 // pred_region
        %4184 = vst.msk [vmem:[#allocation3] sm:$0xff] %vm4160, 0.0
        %4185 = vst.msk [vmem:[#allocation3 + $0x8] sm:$0xff] %vm4160, 0.0
        %vm4186 = vcmask 58368
        %4187 = vst.msk [vmem:[#allocation3 + $0x10] sm:$0x3] %vm4186, 0.0
      $region80: #{decoder_block_nhwc.1} parent=67 // pred_fallthru
        _
      // Predicated region
      $region81: #{decoder_block_nhwc.1} parent=67 // pred_check
        %p4188 = pneg %p747
      $region82: #{decoder_block_nhwc.1} parent=67 // pred_check_branch
        %4190 = sbr.rel (%p4188) target = $region84
      $region83: #{decoder_block_nhwc.1} parent=67 // pred_region
        %s4191 = scalar_lea.vmem [#allocation3], 216
        %4192 = vst.msk [vmem:[%s4191] sm:$0xff] %vm4160, 0.0
        %4193 = vst.msk [vmem:[%s4191 + $0x8] sm:$0xff] %vm4160, 0.0
        %vm4194 = vcmask 58368
        %4195 = vst.msk [vmem:[%s4191 + $0x10] sm:$0x3] %vm4194, 0.0
      $region84: #{decoder_block_nhwc.1} parent=67 // pred_fallthru
        _
      %v4196 = vld [vmem:[#allocation3] sm:$0xff]
      %v4197 = vld [vmem:[#allocation3 + $0x8] sm:$0xff]
      %v4198 = vld [vmem:[#allocation3 + $0x18] sm:$0xff]
      %v4199 = vld [vmem:[#allocation3 + $0x20] sm:$0xff]
      %v4200 = vld [vmem:[#allocation3 + $0x30] sm:$0xff]
      %v4201 = vld [vmem:[#allocation3 + $0x38] sm:$0xff]
      %v4202 = vld [vmem:[#allocation3 + $0x48] sm:$0xff]
      %v4203 = vld [vmem:[#allocation3 + $0x50] sm:$0xff]
      %v4204 = vld [vmem:[#allocation3 + $0x60] sm:$0xff]
      %v4205 = vld [vmem:[#allocation3 + $0x68] sm:$0xff]
      %v4206 = vld [vmem:[#allocation3 + $0x78] sm:$0xff]
      %v4207 = vld [vmem:[#allocation3 + $0x80] sm:$0xff]
      %v4208 = vld [vmem:[#allocation3 + $0x90] sm:$0xff]
      %v4209 = vld [vmem:[#allocation3 + $0x98] sm:$0xff]
      %v4210 = vld [vmem:[#allocation3 + $0xa8] sm:$0xff]
      %v4211 = vld [vmem:[#allocation3 + $0xb0] sm:$0xff]
      %v4212 = vld [vmem:[%s9] sm:$0xff]
      %v4213 = vld [vmem:[#allocation3 + $0x1] sm:$0xff]
      %v4214 = vld [vmem:[#allocation3 + $0x9] sm:$0xff]
      %v4215 = vld [vmem:[#allocation3 + $0x19] sm:$0xff]
      %v4216 = vld [vmem:[#allocation3 + $0x21] sm:$0xff]
      %v4217 = vld [vmem:[#allocation3 + $0x31] sm:$0xff]
      %v4218 = vld [vmem:[#allocation3 + $0x39] sm:$0xff]
      %v4219 = vld [vmem:[#allocation3 + $0x49] sm:$0xff]
      %v4220 = vld [vmem:[#allocation3 + $0x51] sm:$0xff]
      %v4221 = vld [vmem:[#allocation3 + $0x61] sm:$0xff]
      %v4222 = vld [vmem:[#allocation3 + $0x69] sm:$0xff]
      %v4223 = vld [vmem:[#allocation3 + $0x79] sm:$0xff]
      %v4224 = vld [vmem:[#allocation3 + $0x81] sm:$0xff]
      %v4225 = vld [vmem:[#allocation3 + $0x91] sm:$0xff]
      %v4226 = vld [vmem:[#allocation3 + $0x99] sm:$0xff]
      %v4227 = vld [vmem:[#allocation3 + $0xa9] sm:$0xff]
      %v4228 = vld [vmem:[#allocation3 + $0xb1] sm:$0xff]
      %s4229 = scalar_lea.vmem %s9, 8
      %v4230 = vld [vmem:[%s4229] sm:$0xff]
      %v4232 = vsel %vm4160, %v4213, 0
      %v4235 = vsel %vm4160, %v4214, 0
      %v4238 = vsel %vm4160, %v4215, 0
      %v4241 = vsel %vm4160, %v4216, 0
      %v4244 = vsel %vm4160, %v4217, 0
      %v4247 = vsel %vm4160, %v4218, 0
      %v4250 = vsel %vm4160, %v4219, 0
      %v4253 = vsel %vm4160, %v4220, 0
      %v4256 = vsel %vm4160, %v4221, 0
      %v4259 = vsel %vm4160, %v4222, 0
      %v4262 = vsel %vm4160, %v4223, 0
      %v4265 = vsel %vm4160, %v4224, 0
      %v4268 = vsel %vm4160, %v4225, 0
      %v4271 = vsel %vm4160, %v4226, 0
      %v4274 = vsel %vm4160, %v4227, 0
      %v4277 = vsel %vm4160, %v4228, 0
      %4279 = vmatprep.subr.mxu0 0.0
      %4280 = vmatpush1.msra.mxu0 0.0
      %4281 = vmatprep.subr.mxu0 0.0
      %4282 = vmatpush1.msra.mxu0 0.0
      %4283 = vmatprep.subr.mxu0 0.0
      %4284 = vmatpush1.msra.mxu0 0.0
      %4285 = vmatprep.subr.mxu0 0.0
      %4286 = vmatpush1.msra.mxu0 0.0
      %4287 = vmatprep.subr.mxu0 0.0
      %4288 = vmatpush1.msra.mxu0 0.0
      %4289 = vmatprep.subr.mxu0 0.0
      %4290 = vmatpush1.msra.mxu0 0.0
      %4291 = vmatprep.subr.mxu0 0.0
      %4292 = vmatpush1.msra.mxu0 0.0
      %4293 = vmatprep.subr.mxu0 0.0
      %4294 = vmatpush1.msra.mxu0 0.0
      %4295 = vmatprep.subr.mxu0 0.0
      %4296 = vmatpush1.msra.mxu0 0.0
      %4297 = vmatprep.subr.mxu0 0.0
      %4298 = vmatpush1.msra.mxu0 0.0
      %4299 = vmatprep.subr.mxu0 0.0
      %4300 = vmatpush1.msra.mxu0 0.0
      %4301 = vmatprep.subr.mxu0 0.0
      %4302 = vmatpush1.msra.mxu0 0.0
      %4303 = vmatprep.subr.mxu0 0.0
      %4304 = vmatpush1.msra.mxu0 0.0
      %4305 = vmatprep.subr.mxu0 0.0
      %4306 = vmatpush1.msra.mxu0 0.0
      %4307 = vmatprep.subr.mxu0 0.0
      %4308 = vmatpush1.msra.mxu0 0.0
      %4309 = vmatprep.subr.mxu0 0.0
      %4310 = vmatpush1.msra.mxu0 %v4230
      %4311 = vmatprep.subr.mxu0 0.0
      %4312 = vmatpush2.msra.mxu0 0.0
      %4313 = vmatprep.subr.mxu0 0.0
      %4314 = vmatpush2.msra.mxu0 0.0
      %4315 = vmatprep.subr.mxu0 0.0
      %4316 = vmatpush2.msra.mxu0 0.0
      %4317 = vmatprep.subr.mxu0 0.0
      %4318 = vmatpush2.msra.mxu0 0.0
      %4319 = vmatprep.subr.mxu0 0.0
      %4320 = vmatpush2.msra.mxu0 0.0
      %4321 = vmatprep.subr.mxu0 0.0
      %4322 = vmatpush2.msra.mxu0 0.0
      %4323 = vmatprep.subr.mxu0 0.0
      %4324 = vmatpush2.msra.mxu0 0.0
      %4325 = vmatprep.subr.mxu0 0.0
      %4326 = vmatpush2.msra.mxu0 0.0
      %4327 = vmatprep.subr.mxu0 0.0
      %4328 = vmatpush2.msra.mxu0 0.0
      %4329 = vmatprep.subr.mxu0 0.0
      %4330 = vmatpush2.msra.mxu0 0.0
      %4331 = vmatprep.subr.mxu0 0.0
      %4332 = vmatpush2.msra.mxu0 0.0
      %4333 = vmatprep.subr.mxu0 0.0
      %4334 = vmatpush2.msra.mxu0 0.0
      %4335 = vmatprep.subr.mxu0 0.0
      %4336 = vmatpush2.msra.mxu0 0.0
      %4337 = vmatprep.subr.mxu0 0.0
      %4338 = vmatpush2.msra.mxu0 0.0
      %4339 = vmatprep.subr.mxu0 0.0
      %4340 = vmatpush2.msra.mxu0 0.0
      %4341 = vmatprep.subr.mxu0 0.0
      %4342 = vmatpush2.msra.mxu0 0.0
      %4343 = vmatprep.mubr.f32.mxu0 0.0
      %4344 = vmatmul.mubr.f32.gmra.mxu0 %v4232
      %v4345 = vpop.f32.mrf.mxu0
      %v4346 = vadd.f32 0.0, %v4345
      %v4347 = vpop.f32.mrf.mxu0
      %4348 = vmatprep.mubr.f32.mxu0 0.0
      %4349 = vmatmul.mubr.f32.gmra.mxu0 %v4235
      %v4350 = vpop.f32.mrf.mxu0
      %v4351 = vadd.f32 0.0, %v4350
      %v4352 = vpop.f32.mrf.mxu0
      %4353 = vmatprep.mubr.f32.mxu0 0.0
      %4354 = vmatmul.mubr.f32.gmra.mxu0 %v4238
      %v4355 = vpop.f32.mrf.mxu0
      %v4356 = vadd.f32 0.0, %v4355
      %v4357 = vpop.f32.mrf.mxu0
      %4358 = vmatprep.mubr.f32.mxu0 0.0
      %4359 = vmatmul.mubr.f32.gmra.mxu0 %v4241
      %v4360 = vpop.f32.mrf.mxu0
      %v4361 = vadd.f32 0.0, %v4360
      %v4362 = vpop.f32.mrf.mxu0
      %4363 = vmatprep.mubr.f32.mxu0 0.0
      %4364 = vmatmul.mubr.f32.gmra.mxu0 %v4244
      %v4365 = vpop.f32.mrf.mxu0
      %v4366 = vadd.f32 0.0, %v4365
      %v4367 = vpop.f32.mrf.mxu0
      %4368 = vmatprep.mubr.f32.mxu0 0.0
      %4369 = vmatmul.mubr.f32.gmra.mxu0 %v4247
      %v4370 = vpop.f32.mrf.mxu0
      %v4371 = vadd.f32 0.0, %v4370
      %v4372 = vpop.f32.mrf.mxu0
      %4373 = vmatprep.mubr.f32.mxu0 0.0
      %4374 = vmatmul.mubr.f32.gmra.mxu0 %v4250
      %v4375 = vpop.f32.mrf.mxu0
      %v4376 = vadd.f32 0.0, %v4375
      %v4377 = vpop.f32.mrf.mxu0
      %4378 = vmatprep.mubr.f32.mxu0 0.0
      %4379 = vmatmul.mubr.f32.gmra.mxu0 %v4253
      %v4380 = vpop.f32.mrf.mxu0
      %v4381 = vadd.f32 0.0, %v4380
      %v4382 = vpop.f32.mrf.mxu0
      %4383 = vmatprep.mubr.f32.mxu0 0.0
      %4384 = vmatmul.mubr.f32.gmra.mxu0 %v4256
      %v4385 = vpop.f32.mrf.mxu0
      %v4386 = vadd.f32 0.0, %v4385
      %v4387 = vpop.f32.mrf.mxu0
      %4388 = vmatprep.mubr.f32.mxu0 0.0
      %4389 = vmatmul.mubr.f32.gmra.mxu0 %v4259
      %v4390 = vpop.f32.mrf.mxu0
      %v4391 = vadd.f32 0.0, %v4390
      %v4392 = vpop.f32.mrf.mxu0
      %4393 = vmatprep.mubr.f32.mxu0 0.0
      %4394 = vmatmul.mubr.f32.gmra.mxu0 %v4262
      %v4395 = vpop.f32.mrf.mxu0
      %v4396 = vadd.f32 0.0, %v4395
      %v4397 = vpop.f32.mrf.mxu0
      %4398 = vmatprep.mubr.f32.mxu0 0.0
      %4399 = vmatmul.mubr.f32.gmra.mxu0 %v4265
      %v4400 = vpop.f32.mrf.mxu0
      %v4401 = vadd.f32 0.0, %v4400
      %v4402 = vpop.f32.mrf.mxu0
      %4403 = vmatprep.mubr.f32.mxu0 0.0
      %4404 = vmatmul.mubr.f32.gmra.mxu0 %v4268
      %v4405 = vpop.f32.mrf.mxu0
      %v4406 = vadd.f32 0.0, %v4405
      %v4407 = vpop.f32.mrf.mxu0
      %4408 = vmatprep.mubr.f32.mxu0 0.0
      %4409 = vmatmul.mubr.f32.gmra.mxu0 %v4271
      %v4410 = vpop.f32.mrf.mxu0
      %v4411 = vadd.f32 0.0, %v4410
      %v4412 = vpop.f32.mrf.mxu0
      %4413 = vmatprep.mubr.f32.mxu0 0.0
      %4414 = vmatmul.mubr.f32.gmra.mxu0 %v4274
      %v4415 = vpop.f32.mrf.mxu0
      %v4416 = vadd.f32 0.0, %v4415
      %v4417 = vpop.f32.mrf.mxu0
      %4418 = vmatprep.mubr.f32.mxu0 0.0
      %4419 = vmatmul.mubr.f32.gmra.mxu0 %v4277
      %v4420 = vpop.f32.mrf.mxu0
      %v4421 = vadd.f32 0.0, %v4420
      %v4422 = vpop.f32.mrf.mxu0
      %4423 = vdwg.mxu0
      %v4425 = vsel %vm4160, %v4196, 0
      %v4428 = vsel %vm4160, %v4197, 0
      %v4431 = vsel %vm4160, %v4198, 0
      %v4434 = vsel %vm4160, %v4199, 0
      %v4437 = vsel %vm4160, %v4200, 0
      %v4440 = vsel %vm4160, %v4201, 0
      %v4443 = vsel %vm4160, %v4202, 0
      %v4446 = vsel %vm4160, %v4203, 0
      %v4449 = vsel %vm4160, %v4204, 0
      %v4452 = vsel %vm4160, %v4205, 0
      %v4455 = vsel %vm4160, %v4206, 0
      %v4458 = vsel %vm4160, %v4207, 0
      %v4461 = vsel %vm4160, %v4208, 0
      %v4464 = vsel %vm4160, %v4209, 0
      %v4467 = vsel %vm4160, %v4210, 0
      %v4470 = vsel %vm4160, %v4211, 0
      %4472 = vmatprep.subr.mxu0 0.0
      %4473 = vmatpush1.msra.mxu0 0.0
      %4474 = vmatprep.subr.mxu0 0.0
      %4475 = vmatpush1.msra.mxu0 0.0
      %4476 = vmatprep.subr.mxu0 0.0
      %4477 = vmatpush1.msra.mxu0 0.0
      %4478 = vmatprep.subr.mxu0 0.0
      %4479 = vmatpush1.msra.mxu0 0.0
      %4480 = vmatprep.subr.mxu0 0.0
      %4481 = vmatpush1.msra.mxu0 0.0
      %4482 = vmatprep.subr.mxu0 0.0
      %4483 = vmatpush1.msra.mxu0 0.0
      %4484 = vmatprep.subr.mxu0 0.0
      %4485 = vmatpush1.msra.mxu0 0.0
      %4486 = vmatprep.subr.mxu0 0.0
      %4487 = vmatpush1.msra.mxu0 0.0
      %4488 = vmatprep.subr.mxu0 0.0
      %4489 = vmatpush1.msra.mxu0 0.0
      %4490 = vmatprep.subr.mxu0 0.0
      %4491 = vmatpush1.msra.mxu0 0.0
      %4492 = vmatprep.subr.mxu0 0.0
      %4493 = vmatpush1.msra.mxu0 0.0
      %4494 = vmatprep.subr.mxu0 0.0
      %4495 = vmatpush1.msra.mxu0 0.0
      %4496 = vmatprep.subr.mxu0 0.0
      %4497 = vmatpush1.msra.mxu0 0.0
      %4498 = vmatprep.subr.mxu0 0.0
      %4499 = vmatpush1.msra.mxu0 0.0
      %4500 = vmatprep.subr.mxu0 0.0
      %4501 = vmatpush1.msra.mxu0 0.0
      %4502 = vmatprep.subr.mxu0 0.0
      %4503 = vmatpush1.msra.mxu0 %v4212
      %4504 = vmatprep.subr.mxu0 0.0
      %4505 = vmatpush2.msra.mxu0 0.0
      %4506 = vmatprep.subr.mxu0 0.0
      %4507 = vmatpush2.msra.mxu0 0.0
      %4508 = vmatprep.subr.mxu0 0.0
      %4509 = vmatpush2.msra.mxu0 0.0
      %4510 = vmatprep.subr.mxu0 0.0
      %4511 = vmatpush2.msra.mxu0 0.0
      %4512 = vmatprep.subr.mxu0 0.0
      %4513 = vmatpush2.msra.mxu0 0.0
      %4514 = vmatprep.subr.mxu0 0.0
      %4515 = vmatpush2.msra.mxu0 0.0
      %4516 = vmatprep.subr.mxu0 0.0
      %4517 = vmatpush2.msra.mxu0 0.0
      %4518 = vmatprep.subr.mxu0 0.0
      %4519 = vmatpush2.msra.mxu0 0.0
      %4520 = vmatprep.subr.mxu0 0.0
      %4521 = vmatpush2.msra.mxu0 0.0
      %4522 = vmatprep.subr.mxu0 0.0
      %4523 = vmatpush2.msra.mxu0 0.0
      %4524 = vmatprep.subr.mxu0 0.0
      %4525 = vmatpush2.msra.mxu0 0.0
      %4526 = vmatprep.subr.mxu0 0.0
      %4527 = vmatpush2.msra.mxu0 0.0
      %4528 = vmatprep.subr.mxu0 0.0
      %4529 = vmatpush2.msra.mxu0 0.0
      %4530 = vmatprep.subr.mxu0 0.0
      %4531 = vmatpush2.msra.mxu0 0.0
      %4532 = vmatprep.subr.mxu0 0.0
      %4533 = vmatpush2.msra.mxu0 0.0
      %4534 = vmatprep.subr.mxu0 0.0
      %4535 = vmatpush2.msra.mxu0 0.0
      %4536 = vmatprep.mubr.f32.mxu0 0.0
      %4537 = vmatmul.mubr.f32.gmra.mxu0 %v4425
      %v4538 = vpop.f32.mrf.mxu0
      %v4539 = vadd.f32 %v4346, %v4538
      %v4540 = vpop.f32.mrf.mxu0
      %4541 = vmatprep.mubr.f32.mxu0 0.0
      %4542 = vmatmul.mubr.f32.gmra.mxu0 %v4428
      %v4543 = vpop.f32.mrf.mxu0
      %v4544 = vadd.f32 %v4351, %v4543
      %v4545 = vpop.f32.mrf.mxu0
      %4546 = vmatprep.mubr.f32.mxu0 0.0
      %4547 = vmatmul.mubr.f32.gmra.mxu0 %v4431
      %v4548 = vpop.f32.mrf.mxu0
      %v4549 = vadd.f32 %v4356, %v4548
      %v4550 = vpop.f32.mrf.mxu0
      %4551 = vmatprep.mubr.f32.mxu0 0.0
      %4552 = vmatmul.mubr.f32.gmra.mxu0 %v4434
      %v4553 = vpop.f32.mrf.mxu0
      %v4554 = vadd.f32 %v4361, %v4553
      %v4555 = vpop.f32.mrf.mxu0
      %4556 = vmatprep.mubr.f32.mxu0 0.0
      %4557 = vmatmul.mubr.f32.gmra.mxu0 %v4437
      %v4558 = vpop.f32.mrf.mxu0
      %v4559 = vadd.f32 %v4366, %v4558
      %v4560 = vpop.f32.mrf.mxu0
      %4561 = vmatprep.mubr.f32.mxu0 0.0
      %4562 = vmatmul.mubr.f32.gmra.mxu0 %v4440
      %v4563 = vpop.f32.mrf.mxu0
      %v4564 = vadd.f32 %v4371, %v4563
      %v4565 = vpop.f32.mrf.mxu0
      %4566 = vmatprep.mubr.f32.mxu0 0.0
      %4567 = vmatmul.mubr.f32.gmra.mxu0 %v4443
      %v4568 = vpop.f32.mrf.mxu0
      %v4569 = vadd.f32 %v4376, %v4568
      %v4570 = vpop.f32.mrf.mxu0
      %4571 = vmatprep.mubr.f32.mxu0 0.0
      %4572 = vmatmul.mubr.f32.gmra.mxu0 %v4446
      %v4573 = vpop.f32.mrf.mxu0
      %v4574 = vadd.f32 %v4381, %v4573
      %v4575 = vpop.f32.mrf.mxu0
      %4576 = vmatprep.mubr.f32.mxu0 0.0
      %4577 = vmatmul.mubr.f32.gmra.mxu0 %v4449
      %v4578 = vpop.f32.mrf.mxu0
      %v4579 = vadd.f32 %v4386, %v4578
      %v4580 = vpop.f32.mrf.mxu0
      %4581 = vmatprep.mubr.f32.mxu0 0.0
      %4582 = vmatmul.mubr.f32.gmra.mxu0 %v4452
      %v4583 = vpop.f32.mrf.mxu0
      %v4584 = vadd.f32 %v4391, %v4583
      %v4585 = vpop.f32.mrf.mxu0
      %4586 = vmatprep.mubr.f32.mxu0 0.0
      %4587 = vmatmul.mubr.f32.gmra.mxu0 %v4455
      %v4588 = vpop.f32.mrf.mxu0
      %v4589 = vadd.f32 %v4396, %v4588
      %v4590 = vpop.f32.mrf.mxu0
      %4591 = vmatprep.mubr.f32.mxu0 0.0
      %4592 = vmatmul.mubr.f32.gmra.mxu0 %v4458
      %v4593 = vpop.f32.mrf.mxu0
      %v4594 = vadd.f32 %v4401, %v4593
      %v4595 = vpop.f32.mrf.mxu0
      %4596 = vmatprep.mubr.f32.mxu0 0.0
      %4597 = vmatmul.mubr.f32.gmra.mxu0 %v4461
      %v4598 = vpop.f32.mrf.mxu0
      %v4599 = vadd.f32 %v4406, %v4598
      %v4600 = vpop.f32.mrf.mxu0
      %4601 = vmatprep.mubr.f32.mxu0 0.0
      %4602 = vmatmul.mubr.f32.gmra.mxu0 %v4464
      %v4603 = vpop.f32.mrf.mxu0
      %v4604 = vadd.f32 %v4411, %v4603
      %v4605 = vpop.f32.mrf.mxu0
      %4606 = vmatprep.mubr.f32.mxu0 0.0
      %4607 = vmatmul.mubr.f32.gmra.mxu0 %v4467
      %v4608 = vpop.f32.mrf.mxu0
      %v4609 = vadd.f32 %v4416, %v4608
      %v4610 = vpop.f32.mrf.mxu0
      %4611 = vmatprep.mubr.f32.mxu0 0.0
      %4612 = vmatmul.mubr.f32.gmra.mxu0 %v4470
      %v4613 = vpop.f32.mrf.mxu0
      %v4614 = vadd.f32 %v4421, %v4613
      %v4615 = vpop.f32.mrf.mxu0
      %4616 = vdwg.mxu0
      %v4617 = vld [vmem:[#allocation3 + $0x2] sm:$0xff]
      %v4618 = vld [vmem:[#allocation3 + $0xa] sm:$0xff]
      %v4619 = vld [vmem:[#allocation3 + $0x1a] sm:$0xff]
      %v4620 = vld [vmem:[#allocation3 + $0x22] sm:$0xff]
      %v4621 = vld [vmem:[#allocation3 + $0x32] sm:$0xff]
      %v4622 = vld [vmem:[#allocation3 + $0x3a] sm:$0xff]
      %v4623 = vld [vmem:[#allocation3 + $0x4a] sm:$0xff]
      %v4624 = vld [vmem:[#allocation3 + $0x52] sm:$0xff]
      %v4625 = vld [vmem:[#allocation3 + $0x62] sm:$0xff]
      %v4626 = vld [vmem:[#allocation3 + $0x6a] sm:$0xff]
      %v4627 = vld [vmem:[#allocation3 + $0x7a] sm:$0xff]
      %v4628 = vld [vmem:[#allocation3 + $0x82] sm:$0xff]
      %v4629 = vld [vmem:[#allocation3 + $0x92] sm:$0xff]
      %v4630 = vld [vmem:[#allocation3 + $0x9a] sm:$0xff]
      %v4631 = vld [vmem:[#allocation3 + $0xaa] sm:$0xff]
      %v4632 = vld [vmem:[#allocation3 + $0xb2] sm:$0xff]
      %s4633 = scalar_lea.vmem %s9, 16
      %v4634 = vld [vmem:[%s4633] sm:$0xff]
      %v4636 = vsel %vm4160, %v4617, 0
      %v4639 = vsel %vm4160, %v4618, 0
      %v4642 = vsel %vm4160, %v4619, 0
      %v4645 = vsel %vm4160, %v4620, 0
      %v4648 = vsel %vm4160, %v4621, 0
      %v4651 = vsel %vm4160, %v4622, 0
      %v4654 = vsel %vm4160, %v4623, 0
      %v4657 = vsel %vm4160, %v4624, 0
      %v4660 = vsel %vm4160, %v4625, 0
      %v4663 = vsel %vm4160, %v4626, 0
      %v4666 = vsel %vm4160, %v4627, 0
      %v4669 = vsel %vm4160, %v4628, 0
      %v4672 = vsel %vm4160, %v4629, 0
      %v4675 = vsel %vm4160, %v4630, 0
      %v4678 = vsel %vm4160, %v4631, 0
      %v4681 = vsel %vm4160, %v4632, 0
      %4683 = vmatprep.subr.mxu0 0.0
      %4684 = vmatpush1.msra.mxu0 0.0
      %4685 = vmatprep.subr.mxu0 0.0
      %4686 = vmatpush1.msra.mxu0 0.0
      %4687 = vmatprep.subr.mxu0 0.0
      %4688 = vmatpush1.msra.mxu0 0.0
      %4689 = vmatprep.subr.mxu0 0.0
      %4690 = vmatpush1.msra.mxu0 0.0
      %4691 = vmatprep.subr.mxu0 0.0
      %4692 = vmatpush1.msra.mxu0 0.0
      %4693 = vmatprep.subr.mxu0 0.0
      %4694 = vmatpush1.msra.mxu0 0.0
      %4695 = vmatprep.subr.mxu0 0.0
      %4696 = vmatpush1.msra.mxu0 0.0
      %4697 = vmatprep.subr.mxu0 0.0
      %4698 = vmatpush1.msra.mxu0 0.0
      %4699 = vmatprep.subr.mxu0 0.0
      %4700 = vmatpush1.msra.mxu0 0.0
      %4701 = vmatprep.subr.mxu0 0.0
      %4702 = vmatpush1.msra.mxu0 0.0
      %4703 = vmatprep.subr.mxu0 0.0
      %4704 = vmatpush1.msra.mxu0 0.0
      %4705 = vmatprep.subr.mxu0 0.0
      %4706 = vmatpush1.msra.mxu0 0.0
      %4707 = vmatprep.subr.mxu0 0.0
      %4708 = vmatpush1.msra.mxu0 0.0
      %4709 = vmatprep.subr.mxu0 0.0
      %4710 = vmatpush1.msra.mxu0 0.0
      %4711 = vmatprep.subr.mxu0 0.0
      %4712 = vmatpush1.msra.mxu0 0.0
      %4713 = vmatprep.subr.mxu0 0.0
      %4714 = vmatpush1.msra.mxu0 %v4634
      %4715 = vmatprep.subr.mxu0 0.0
      %4716 = vmatpush2.msra.mxu0 0.0
      %4717 = vmatprep.subr.mxu0 0.0
      %4718 = vmatpush2.msra.mxu0 0.0
      %4719 = vmatprep.subr.mxu0 0.0
      %4720 = vmatpush2.msra.mxu0 0.0
      %4721 = vmatprep.subr.mxu0 0.0
      %4722 = vmatpush2.msra.mxu0 0.0
      %4723 = vmatprep.subr.mxu0 0.0
      %4724 = vmatpush2.msra.mxu0 0.0
      %4725 = vmatprep.subr.mxu0 0.0
      %4726 = vmatpush2.msra.mxu0 0.0
      %4727 = vmatprep.subr.mxu0 0.0
      %4728 = vmatpush2.msra.mxu0 0.0
      %4729 = vmatprep.subr.mxu0 0.0
      %4730 = vmatpush2.msra.mxu0 0.0
      %4731 = vmatprep.subr.mxu0 0.0
      %4732 = vmatpush2.msra.mxu0 0.0
      %4733 = vmatprep.subr.mxu0 0.0
      %4734 = vmatpush2.msra.mxu0 0.0
      %4735 = vmatprep.subr.mxu0 0.0
      %4736 = vmatpush2.msra.mxu0 0.0
      %4737 = vmatprep.subr.mxu0 0.0
      %4738 = vmatpush2.msra.mxu0 0.0
      %4739 = vmatprep.subr.mxu0 0.0
      %4740 = vmatpush2.msra.mxu0 0.0
      %4741 = vmatprep.subr.mxu0 0.0
      %4742 = vmatpush2.msra.mxu0 0.0
      %4743 = vmatprep.subr.mxu0 0.0
      %4744 = vmatpush2.msra.mxu0 0.0
      %4745 = vmatprep.subr.mxu0 0.0
      %4746 = vmatpush2.msra.mxu0 0.0
      %4747 = vmatprep.mubr.f32.mxu0 0.0
      %4748 = vmatmul.mubr.f32.gmra.mxu0 %v4636
      %v4749 = vpop.f32.mrf.mxu0
      %v4750 = vadd.f32 0.0, %v4749
      %v4751 = vpop.f32.mrf.mxu0
      %4752 = vmatprep.mubr.f32.mxu0 0.0
      %4753 = vmatmul.mubr.f32.gmra.mxu0 %v4639
      %v4754 = vpop.f32.mrf.mxu0
      %v4755 = vadd.f32 0.0, %v4754
      %v4756 = vpop.f32.mrf.mxu0
      %4757 = vmatprep.mubr.f32.mxu0 0.0
      %4758 = vmatmul.mubr.f32.gmra.mxu0 %v4642
      %v4759 = vpop.f32.mrf.mxu0
      %v4760 = vadd.f32 0.0, %v4759
      %v4761 = vpop.f32.mrf.mxu0
      %4762 = vmatprep.mubr.f32.mxu0 0.0
      %4763 = vmatmul.mubr.f32.gmra.mxu0 %v4645
      %v4764 = vpop.f32.mrf.mxu0
      %v4765 = vadd.f32 0.0, %v4764
      %v4766 = vpop.f32.mrf.mxu0
      %4767 = vmatprep.mubr.f32.mxu0 0.0
      %4768 = vmatmul.mubr.f32.gmra.mxu0 %v4648
      %v4769 = vpop.f32.mrf.mxu0
      %v4770 = vadd.f32 0.0, %v4769
      %v4771 = vpop.f32.mrf.mxu0
      %4772 = vmatprep.mubr.f32.mxu0 0.0
      %4773 = vmatmul.mubr.f32.gmra.mxu0 %v4651
      %v4774 = vpop.f32.mrf.mxu0
      %v4775 = vadd.f32 0.0, %v4774
      %v4776 = vpop.f32.mrf.mxu0
      %4777 = vmatprep.mubr.f32.mxu0 0.0
      %4778 = vmatmul.mubr.f32.gmra.mxu0 %v4654
      %v4779 = vpop.f32.mrf.mxu0
      %v4780 = vadd.f32 0.0, %v4779
      %v4781 = vpop.f32.mrf.mxu0
      %4782 = vmatprep.mubr.f32.mxu0 0.0
      %4783 = vmatmul.mubr.f32.gmra.mxu0 %v4657
      %v4784 = vpop.f32.mrf.mxu0
      %v4785 = vadd.f32 0.0, %v4784
      %v4786 = vpop.f32.mrf.mxu0
      %4787 = vmatprep.mubr.f32.mxu0 0.0
      %4788 = vmatmul.mubr.f32.gmra.mxu0 %v4660
      %v4789 = vpop.f32.mrf.mxu0
      %v4790 = vadd.f32 0.0, %v4789
      %v4791 = vpop.f32.mrf.mxu0
      %4792 = vmatprep.mubr.f32.mxu0 0.0
      %4793 = vmatmul.mubr.f32.gmra.mxu0 %v4663
      %v4794 = vpop.f32.mrf.mxu0
      %v4795 = vadd.f32 0.0, %v4794
      %v4796 = vpop.f32.mrf.mxu0
      %4797 = vmatprep.mubr.f32.mxu0 0.0
      %4798 = vmatmul.mubr.f32.gmra.mxu0 %v4666
      %v4799 = vpop.f32.mrf.mxu0
      %v4800 = vadd.f32 0.0, %v4799
      %v4801 = vpop.f32.mrf.mxu0
      %4802 = vmatprep.mubr.f32.mxu0 0.0
      %4803 = vmatmul.mubr.f32.gmra.mxu0 %v4669
      %v4804 = vpop.f32.mrf.mxu0
      %v4805 = vadd.f32 0.0, %v4804
      %v4806 = vpop.f32.mrf.mxu0
      %4807 = vmatprep.mubr.f32.mxu0 0.0
      %4808 = vmatmul.mubr.f32.gmra.mxu0 %v4672
      %v4809 = vpop.f32.mrf.mxu0
      %v4810 = vadd.f32 0.0, %v4809
      %v4811 = vpop.f32.mrf.mxu0
      %4812 = vmatprep.mubr.f32.mxu0 0.0
      %4813 = vmatmul.mubr.f32.gmra.mxu0 %v4675
      %v4814 = vpop.f32.mrf.mxu0
      %v4815 = vadd.f32 0.0, %v4814
      %v4816 = vpop.f32.mrf.mxu0
      %4817 = vmatprep.mubr.f32.mxu0 0.0
      %4818 = vmatmul.mubr.f32.gmra.mxu0 %v4678
      %v4819 = vpop.f32.mrf.mxu0
      %v4820 = vadd.f32 0.0, %v4819
      %v4821 = vpop.f32.mrf.mxu0
      %4822 = vmatprep.mubr.f32.mxu0 0.0
      %4823 = vmatmul.mubr.f32.gmra.mxu0 %v4681
      %v4824 = vpop.f32.mrf.mxu0
      %v4825 = vadd.f32 0.0, %v4824
      %v4826 = vpop.f32.mrf.mxu0
      %4827 = vdwg.mxu0
      %v4828 = vadd.f32 %v4539, %v4750
      %v4829 = vadd.f32 %v4544, %v4755
      %v4830 = vadd.f32 %v4549, %v4760
      %v4831 = vadd.f32 %v4554, %v4765
      %v4832 = vadd.f32 %v4559, %v4770
      %v4833 = vadd.f32 %v4564, %v4775
      %v4834 = vadd.f32 %v4569, %v4780
      %v4835 = vadd.f32 %v4574, %v4785
      %v4836 = vadd.f32 %v4579, %v4790
      %v4837 = vadd.f32 %v4584, %v4795
      %v4838 = vadd.f32 %v4589, %v4800
      %v4839 = vadd.f32 %v4594, %v4805
      %v4840 = vadd.f32 %v4599, %v4810
      %v4841 = vadd.f32 %v4604, %v4815
      %v4842 = vadd.f32 %v4609, %v4820
      %v4843 = vadd.f32 %v4614, %v4825
      %s4844 = scalar_lea.vmem [#allocation3], 24
      %v4845 = vld [vmem:[%s4844] sm:$0xff]
      %v4846 = vld [vmem:[%s4844 + $0x8] sm:$0xff]
      %v4847 = vld [vmem:[%s4844 + $0x18] sm:$0xff]
      %v4848 = vld [vmem:[%s4844 + $0x20] sm:$0xff]
      %v4849 = vld [vmem:[%s4844 + $0x30] sm:$0xff]
      %v4850 = vld [vmem:[%s4844 + $0x38] sm:$0xff]
      %v4851 = vld [vmem:[%s4844 + $0x48] sm:$0xff]
      %v4852 = vld [vmem:[%s4844 + $0x50] sm:$0xff]
      %v4853 = vld [vmem:[%s4844 + $0x60] sm:$0xff]
      %v4854 = vld [vmem:[%s4844 + $0x68] sm:$0xff]
      %v4855 = vld [vmem:[%s4844 + $0x78] sm:$0xff]
      %v4856 = vld [vmem:[%s4844 + $0x80] sm:$0xff]
      %v4857 = vld [vmem:[%s4844 + $0x90] sm:$0xff]
      %v4858 = vld [vmem:[%s4844 + $0x98] sm:$0xff]
      %v4859 = vld [vmem:[%s4844 + $0xa8] sm:$0xff]
      %v4860 = vld [vmem:[%s4844 + $0xb0] sm:$0xff]
      %s4861 = scalar_lea.vmem %s9, 24
      %v4862 = vld [vmem:[%s4861] sm:$0xff]
      %v4864 = vsel %vm4160, %v4845, 0
      %v4867 = vsel %vm4160, %v4846, 0
      %v4870 = vsel %vm4160, %v4847, 0
      %v4873 = vsel %vm4160, %v4848, 0
      %v4876 = vsel %vm4160, %v4849, 0
      %v4879 = vsel %vm4160, %v4850, 0
      %v4882 = vsel %vm4160, %v4851, 0
      %v4885 = vsel %vm4160, %v4852, 0
      %v4888 = vsel %vm4160, %v4853, 0
      %v4891 = vsel %vm4160, %v4854, 0
      %v4894 = vsel %vm4160, %v4855, 0
      %v4897 = vsel %vm4160, %v4856, 0
      %v4900 = vsel %vm4160, %v4857, 0
      %v4903 = vsel %vm4160, %v4858, 0
      %v4906 = vsel %vm4160, %v4859, 0
      %v4909 = vsel %vm4160, %v4860, 0
      %4911 = vmatprep.subr.mxu0 0.0
      %4912 = vmatpush1.msra.mxu0 0.0
      %4913 = vmatprep.subr.mxu0 0.0
      %4914 = vmatpush1.msra.mxu0 0.0
      %4915 = vmatprep.subr.mxu0 0.0
      %4916 = vmatpush1.msra.mxu0 0.0
      %4917 = vmatprep.subr.mxu0 0.0
      %4918 = vmatpush1.msra.mxu0 0.0
      %4919 = vmatprep.subr.mxu0 0.0
      %4920 = vmatpush1.msra.mxu0 0.0
      %4921 = vmatprep.subr.mxu0 0.0
      %4922 = vmatpush1.msra.mxu0 0.0
      %4923 = vmatprep.subr.mxu0 0.0
      %4924 = vmatpush1.msra.mxu0 0.0
      %4925 = vmatprep.subr.mxu0 0.0
      %4926 = vmatpush1.msra.mxu0 0.0
      %4927 = vmatprep.subr.mxu0 0.0
      %4928 = vmatpush1.msra.mxu0 0.0
      %4929 = vmatprep.subr.mxu0 0.0
      %4930 = vmatpush1.msra.mxu0 0.0
      %4931 = vmatprep.subr.mxu0 0.0
      %4932 = vmatpush1.msra.mxu0 0.0
      %4933 = vmatprep.subr.mxu0 0.0
      %4934 = vmatpush1.msra.mxu0 0.0
      %4935 = vmatprep.subr.mxu0 0.0
      %4936 = vmatpush1.msra.mxu0 0.0
      %4937 = vmatprep.subr.mxu0 0.0
      %4938 = vmatpush1.msra.mxu0 0.0
      %4939 = vmatprep.subr.mxu0 0.0
      %4940 = vmatpush1.msra.mxu0 0.0
      %4941 = vmatprep.subr.mxu0 0.0
      %4942 = vmatpush1.msra.mxu0 %v4862
      %4943 = vmatprep.subr.mxu0 0.0
      %4944 = vmatpush2.msra.mxu0 0.0
      %4945 = vmatprep.subr.mxu0 0.0
      %4946 = vmatpush2.msra.mxu0 0.0
      %4947 = vmatprep.subr.mxu0 0.0
      %4948 = vmatpush2.msra.mxu0 0.0
      %4949 = vmatprep.subr.mxu0 0.0
      %4950 = vmatpush2.msra.mxu0 0.0
      %4951 = vmatprep.subr.mxu0 0.0
      %4952 = vmatpush2.msra.mxu0 0.0
      %4953 = vmatprep.subr.mxu0 0.0
      %4954 = vmatpush2.msra.mxu0 0.0
      %4955 = vmatprep.subr.mxu0 0.0
      %4956 = vmatpush2.msra.mxu0 0.0
      %4957 = vmatprep.subr.mxu0 0.0
      %4958 = vmatpush2.msra.mxu0 0.0
      %4959 = vmatprep.subr.mxu0 0.0
      %4960 = vmatpush2.msra.mxu0 0.0
      %4961 = vmatprep.subr.mxu0 0.0
      %4962 = vmatpush2.msra.mxu0 0.0
      %4963 = vmatprep.subr.mxu0 0.0
      %4964 = vmatpush2.msra.mxu0 0.0
      %4965 = vmatprep.subr.mxu0 0.0
      %4966 = vmatpush2.msra.mxu0 0.0
      %4967 = vmatprep.subr.mxu0 0.0
      %4968 = vmatpush2.msra.mxu0 0.0
      %4969 = vmatprep.subr.mxu0 0.0
      %4970 = vmatpush2.msra.mxu0 0.0
      %4971 = vmatprep.subr.mxu0 0.0
      %4972 = vmatpush2.msra.mxu0 0.0
      %4973 = vmatprep.subr.mxu0 0.0
      %4974 = vmatpush2.msra.mxu0 0.0
      %4975 = vmatprep.mubr.f32.mxu0 0.0
      %4976 = vmatmul.mubr.f32.gmra.mxu0 %v4864
      %v4977 = vpop.f32.mrf.mxu0
      %v4978 = vadd.f32 0.0, %v4977
      %v4979 = vpop.f32.mrf.mxu0
      %4980 = vmatprep.mubr.f32.mxu0 0.0
      %4981 = vmatmul.mubr.f32.gmra.mxu0 %v4867
      %v4982 = vpop.f32.mrf.mxu0
      %v4983 = vadd.f32 0.0, %v4982
      %v4984 = vpop.f32.mrf.mxu0
      %4985 = vmatprep.mubr.f32.mxu0 0.0
      %4986 = vmatmul.mubr.f32.gmra.mxu0 %v4870
      %v4987 = vpop.f32.mrf.mxu0
      %v4988 = vadd.f32 0.0, %v4987
      %v4989 = vpop.f32.mrf.mxu0
      %4990 = vmatprep.mubr.f32.mxu0 0.0
      %4991 = vmatmul.mubr.f32.gmra.mxu0 %v4873
      %v4992 = vpop.f32.mrf.mxu0
      %v4993 = vadd.f32 0.0, %v4992
      %v4994 = vpop.f32.mrf.mxu0
      %4995 = vmatprep.mubr.f32.mxu0 0.0
      %4996 = vmatmul.mubr.f32.gmra.mxu0 %v4876
      %v4997 = vpop.f32.mrf.mxu0
      %v4998 = vadd.f32 0.0, %v4997
      %v4999 = vpop.f32.mrf.mxu0
      %5000 = vmatprep.mubr.f32.mxu0 0.0
      %5001 = vmatmul.mubr.f32.gmra.mxu0 %v4879
      %v5002 = vpop.f32.mrf.mxu0
      %v5003 = vadd.f32 0.0, %v5002
      %v5004 = vpop.f32.mrf.mxu0
      %5005 = vmatprep.mubr.f32.mxu0 0.0
      %5006 = vmatmul.mubr.f32.gmra.mxu0 %v4882
      %v5007 = vpop.f32.mrf.mxu0
      %v5008 = vadd.f32 0.0, %v5007
      %v5009 = vpop.f32.mrf.mxu0
      %5010 = vmatprep.mubr.f32.mxu0 0.0
      %5011 = vmatmul.mubr.f32.gmra.mxu0 %v4885
      %v5012 = vpop.f32.mrf.mxu0
      %v5013 = vadd.f32 0.0, %v5012
      %v5014 = vpop.f32.mrf.mxu0
      %5015 = vmatprep.mubr.f32.mxu0 0.0
      %5016 = vmatmul.mubr.f32.gmra.mxu0 %v4888
      %v5017 = vpop.f32.mrf.mxu0
      %v5018 = vadd.f32 0.0, %v5017
      %v5019 = vpop.f32.mrf.mxu0
      %5020 = vmatprep.mubr.f32.mxu0 0.0
      %5021 = vmatmul.mubr.f32.gmra.mxu0 %v4891
      %v5022 = vpop.f32.mrf.mxu0
      %v5023 = vadd.f32 0.0, %v5022
      %v5024 = vpop.f32.mrf.mxu0
      %5025 = vmatprep.mubr.f32.mxu0 0.0
      %5026 = vmatmul.mubr.f32.gmra.mxu0 %v4894
      %v5027 = vpop.f32.mrf.mxu0
      %v5028 = vadd.f32 0.0, %v5027
      %v5029 = vpop.f32.mrf.mxu0
      %5030 = vmatprep.mubr.f32.mxu0 0.0
      %5031 = vmatmul.mubr.f32.gmra.mxu0 %v4897
      %v5032 = vpop.f32.mrf.mxu0
      %v5033 = vadd.f32 0.0, %v5032
      %v5034 = vpop.f32.mrf.mxu0
      %5035 = vmatprep.mubr.f32.mxu0 0.0
      %5036 = vmatmul.mubr.f32.gmra.mxu0 %v4900
      %v5037 = vpop.f32.mrf.mxu0
      %v5038 = vadd.f32 0.0, %v5037
      %v5039 = vpop.f32.mrf.mxu0
      %5040 = vmatprep.mubr.f32.mxu0 0.0
      %5041 = vmatmul.mubr.f32.gmra.mxu0 %v4903
      %v5042 = vpop.f32.mrf.mxu0
      %v5043 = vadd.f32 0.0, %v5042
      %v5044 = vpop.f32.mrf.mxu0
      %5045 = vmatprep.mubr.f32.mxu0 0.0
      %5046 = vmatmul.mubr.f32.gmra.mxu0 %v4906
      %v5047 = vpop.f32.mrf.mxu0
      %v5048 = vadd.f32 0.0, %v5047
      %v5049 = vpop.f32.mrf.mxu0
      %5050 = vmatprep.mubr.f32.mxu0 0.0
      %5051 = vmatmul.mubr.f32.gmra.mxu0 %v4909
      %v5052 = vpop.f32.mrf.mxu0
      %v5053 = vadd.f32 0.0, %v5052
      %v5054 = vpop.f32.mrf.mxu0
      %5055 = vdwg.mxu0
      %v5056 = vadd.f32 %v4828, %v4978
      %v5057 = vadd.f32 %v4829, %v4983
      %v5058 = vadd.f32 %v4830, %v4988
      %v5059 = vadd.f32 %v4831, %v4993
      %v5060 = vadd.f32 %v4832, %v4998
      %v5061 = vadd.f32 %v4833, %v5003
      %v5062 = vadd.f32 %v4834, %v5008
      %v5063 = vadd.f32 %v4835, %v5013
      %v5064 = vadd.f32 %v4836, %v5018
      %v5065 = vadd.f32 %v4837, %v5023
      %v5066 = vadd.f32 %v4838, %v5028
      %v5067 = vadd.f32 %v4839, %v5033
      %v5068 = vadd.f32 %v4840, %v5038
      %v5069 = vadd.f32 %v4841, %v5043
      %v5070 = vadd.f32 %v4842, %v5048
      %v5071 = vadd.f32 %v4843, %v5053
      %v5072 = vld [vmem:[%s4844 + $0x1] sm:$0xff]
      %v5073 = vld [vmem:[%s4844 + $0x9] sm:$0xff]
      %v5074 = vld [vmem:[%s4844 + $0x19] sm:$0xff]
      %v5075 = vld [vmem:[%s4844 + $0x21] sm:$0xff]
      %v5076 = vld [vmem:[%s4844 + $0x31] sm:$0xff]
      %v5077 = vld [vmem:[%s4844 + $0x39] sm:$0xff]
      %v5078 = vld [vmem:[%s4844 + $0x49] sm:$0xff]
      %v5079 = vld [vmem:[%s4844 + $0x51] sm:$0xff]
      %v5080 = vld [vmem:[%s4844 + $0x61] sm:$0xff]
      %v5081 = vld [vmem:[%s4844 + $0x69] sm:$0xff]
      %v5082 = vld [vmem:[%s4844 + $0x79] sm:$0xff]
      %v5083 = vld [vmem:[%s4844 + $0x81] sm:$0xff]
      %v5084 = vld [vmem:[%s4844 + $0x91] sm:$0xff]
      %v5085 = vld [vmem:[%s4844 + $0x99] sm:$0xff]
      %v5086 = vld [vmem:[%s4844 + $0xa9] sm:$0xff]
      %v5087 = vld [vmem:[%s4844 + $0xb1] sm:$0xff]
      %s5088 = scalar_lea.vmem %s9, 32
      %v5089 = vld [vmem:[%s5088] sm:$0xff]
      %v5091 = vsel %vm4160, %v5072, 0
      %v5094 = vsel %vm4160, %v5073, 0
      %v5097 = vsel %vm4160, %v5074, 0
      %v5100 = vsel %vm4160, %v5075, 0
      %v5103 = vsel %vm4160, %v5076, 0
      %v5106 = vsel %vm4160, %v5077, 0
      %v5109 = vsel %vm4160, %v5078, 0
      %v5112 = vsel %vm4160, %v5079, 0
      %v5115 = vsel %vm4160, %v5080, 0
      %v5118 = vsel %vm4160, %v5081, 0
      %v5121 = vsel %vm4160, %v5082, 0
      %v5124 = vsel %vm4160, %v5083, 0
      %v5127 = vsel %vm4160, %v5084, 0
      %v5130 = vsel %vm4160, %v5085, 0
      %v5133 = vsel %vm4160, %v5086, 0
      %v5136 = vsel %vm4160, %v5087, 0
      %5138 = vmatprep.subr.mxu0 0.0
      %5139 = vmatpush1.msra.mxu0 0.0
      %5140 = vmatprep.subr.mxu0 0.0
      %5141 = vmatpush1.msra.mxu0 0.0
      %5142 = vmatprep.subr.mxu0 0.0
      %5143 = vmatpush1.msra.mxu0 0.0
      %5144 = vmatprep.subr.mxu0 0.0
      %5145 = vmatpush1.msra.mxu0 0.0
      %5146 = vmatprep.subr.mxu0 0.0
      %5147 = vmatpush1.msra.mxu0 0.0
      %5148 = vmatprep.subr.mxu0 0.0
      %5149 = vmatpush1.msra.mxu0 0.0
      %5150 = vmatprep.subr.mxu0 0.0
      %5151 = vmatpush1.msra.mxu0 0.0
      %5152 = vmatprep.subr.mxu0 0.0
      %5153 = vmatpush1.msra.mxu0 0.0
      %5154 = vmatprep.subr.mxu0 0.0
      %5155 = vmatpush1.msra.mxu0 0.0
      %5156 = vmatprep.subr.mxu0 0.0
      %5157 = vmatpush1.msra.mxu0 0.0
      %5158 = vmatprep.subr.mxu0 0.0
      %5159 = vmatpush1.msra.mxu0 0.0
      %5160 = vmatprep.subr.mxu0 0.0
      %5161 = vmatpush1.msra.mxu0 0.0
      %5162 = vmatprep.subr.mxu0 0.0
      %5163 = vmatpush1.msra.mxu0 0.0
      %5164 = vmatprep.subr.mxu0 0.0
      %5165 = vmatpush1.msra.mxu0 0.0
      %5166 = vmatprep.subr.mxu0 0.0
      %5167 = vmatpush1.msra.mxu0 0.0
      %5168 = vmatprep.subr.mxu0 0.0
      %5169 = vmatpush1.msra.mxu0 %v5089
      %5170 = vmatprep.subr.mxu0 0.0
      %5171 = vmatpush2.msra.mxu0 0.0
      %5172 = vmatprep.subr.mxu0 0.0
      %5173 = vmatpush2.msra.mxu0 0.0
      %5174 = vmatprep.subr.mxu0 0.0
      %5175 = vmatpush2.msra.mxu0 0.0
      %5176 = vmatprep.subr.mxu0 0.0
      %5177 = vmatpush2.msra.mxu0 0.0
      %5178 = vmatprep.subr.mxu0 0.0
      %5179 = vmatpush2.msra.mxu0 0.0
      %5180 = vmatprep.subr.mxu0 0.0
      %5181 = vmatpush2.msra.mxu0 0.0
      %5182 = vmatprep.subr.mxu0 0.0
      %5183 = vmatpush2.msra.mxu0 0.0
      %5184 = vmatprep.subr.mxu0 0.0
      %5185 = vmatpush2.msra.mxu0 0.0
      %5186 = vmatprep.subr.mxu0 0.0
      %5187 = vmatpush2.msra.mxu0 0.0
      %5188 = vmatprep.subr.mxu0 0.0
      %5189 = vmatpush2.msra.mxu0 0.0
      %5190 = vmatprep.subr.mxu0 0.0
      %5191 = vmatpush2.msra.mxu0 0.0
      %5192 = vmatprep.subr.mxu0 0.0
      %5193 = vmatpush2.msra.mxu0 0.0
      %5194 = vmatprep.subr.mxu0 0.0
      %5195 = vmatpush2.msra.mxu0 0.0
      %5196 = vmatprep.subr.mxu0 0.0
      %5197 = vmatpush2.msra.mxu0 0.0
      %5198 = vmatprep.subr.mxu0 0.0
      %5199 = vmatpush2.msra.mxu0 0.0
      %5200 = vmatprep.subr.mxu0 0.0
      %5201 = vmatpush2.msra.mxu0 0.0
      %5202 = vmatprep.mubr.f32.mxu0 0.0
      %5203 = vmatmul.mubr.f32.gmra.mxu0 %v5091
      %v5204 = vpop.f32.mrf.mxu0
      %v5205 = vadd.f32 0.0, %v5204
      %v5206 = vpop.f32.mrf.mxu0
      %5207 = vmatprep.mubr.f32.mxu0 0.0
      %5208 = vmatmul.mubr.f32.gmra.mxu0 %v5094
      %v5209 = vpop.f32.mrf.mxu0
      %v5210 = vadd.f32 0.0, %v5209
      %v5211 = vpop.f32.mrf.mxu0
      %5212 = vmatprep.mubr.f32.mxu0 0.0
      %5213 = vmatmul.mubr.f32.gmra.mxu0 %v5097
      %v5214 = vpop.f32.mrf.mxu0
      %v5215 = vadd.f32 0.0, %v5214
      %v5216 = vpop.f32.mrf.mxu0
      %5217 = vmatprep.mubr.f32.mxu0 0.0
      %5218 = vmatmul.mubr.f32.gmra.mxu0 %v5100
      %v5219 = vpop.f32.mrf.mxu0
      %v5220 = vadd.f32 0.0, %v5219
      %v5221 = vpop.f32.mrf.mxu0
      %5222 = vmatprep.mubr.f32.mxu0 0.0
      %5223 = vmatmul.mubr.f32.gmra.mxu0 %v5103
      %v5224 = vpop.f32.mrf.mxu0
      %v5225 = vadd.f32 0.0, %v5224
      %v5226 = vpop.f32.mrf.mxu0
      %5227 = vmatprep.mubr.f32.mxu0 0.0
      %5228 = vmatmul.mubr.f32.gmra.mxu0 %v5106
      %v5229 = vpop.f32.mrf.mxu0
      %v5230 = vadd.f32 0.0, %v5229
      %v5231 = vpop.f32.mrf.mxu0
      %5232 = vmatprep.mubr.f32.mxu0 0.0
      %5233 = vmatmul.mubr.f32.gmra.mxu0 %v5109
      %v5234 = vpop.f32.mrf.mxu0
      %v5235 = vadd.f32 0.0, %v5234
      %v5236 = vpop.f32.mrf.mxu0
      %5237 = vmatprep.mubr.f32.mxu0 0.0
      %5238 = vmatmul.mubr.f32.gmra.mxu0 %v5112
      %v5239 = vpop.f32.mrf.mxu0
      %v5240 = vadd.f32 0.0, %v5239
      %v5241 = vpop.f32.mrf.mxu0
      %5242 = vmatprep.mubr.f32.mxu0 0.0
      %5243 = vmatmul.mubr.f32.gmra.mxu0 %v5115
      %v5244 = vpop.f32.mrf.mxu0
      %v5245 = vadd.f32 0.0, %v5244
      %v5246 = vpop.f32.mrf.mxu0
      %5247 = vmatprep.mubr.f32.mxu0 0.0
      %5248 = vmatmul.mubr.f32.gmra.mxu0 %v5118
      %v5249 = vpop.f32.mrf.mxu0
      %v5250 = vadd.f32 0.0, %v5249
      %v5251 = vpop.f32.mrf.mxu0
      %5252 = vmatprep.mubr.f32.mxu0 0.0
      %5253 = vmatmul.mubr.f32.gmra.mxu0 %v5121
      %v5254 = vpop.f32.mrf.mxu0
      %v5255 = vadd.f32 0.0, %v5254
      %v5256 = vpop.f32.mrf.mxu0
      %5257 = vmatprep.mubr.f32.mxu0 0.0
      %5258 = vmatmul.mubr.f32.gmra.mxu0 %v5124
      %v5259 = vpop.f32.mrf.mxu0
      %v5260 = vadd.f32 0.0, %v5259
      %v5261 = vpop.f32.mrf.mxu0
      %5262 = vmatprep.mubr.f32.mxu0 0.0
      %5263 = vmatmul.mubr.f32.gmra.mxu0 %v5127
      %v5264 = vpop.f32.mrf.mxu0
      %v5265 = vadd.f32 0.0, %v5264
      %v5266 = vpop.f32.mrf.mxu0
      %5267 = vmatprep.mubr.f32.mxu0 0.0
      %5268 = vmatmul.mubr.f32.gmra.mxu0 %v5130
      %v5269 = vpop.f32.mrf.mxu0
      %v5270 = vadd.f32 0.0, %v5269
      %v5271 = vpop.f32.mrf.mxu0
      %5272 = vmatprep.mubr.f32.mxu0 0.0
      %5273 = vmatmul.mubr.f32.gmra.mxu0 %v5133
      %v5274 = vpop.f32.mrf.mxu0
      %v5275 = vadd.f32 0.0, %v5274
      %v5276 = vpop.f32.mrf.mxu0
      %5277 = vmatprep.mubr.f32.mxu0 0.0
      %5278 = vmatmul.mubr.f32.gmra.mxu0 %v5136
      %v5279 = vpop.f32.mrf.mxu0
      %v5280 = vadd.f32 0.0, %v5279
      %v5281 = vpop.f32.mrf.mxu0
      %5282 = vdwg.mxu0
      %v5283 = vadd.f32 %v5056, %v5205
      %v5284 = vadd.f32 %v5057, %v5210
      %v5285 = vadd.f32 %v5058, %v5215
      %v5286 = vadd.f32 %v5059, %v5220
      %v5287 = vadd.f32 %v5060, %v5225
      %v5288 = vadd.f32 %v5061, %v5230
      %v5289 = vadd.f32 %v5062, %v5235
      %v5290 = vadd.f32 %v5063, %v5240
      %v5291 = vadd.f32 %v5064, %v5245
      %v5292 = vadd.f32 %v5065, %v5250
      %v5293 = vadd.f32 %v5066, %v5255
      %v5294 = vadd.f32 %v5067, %v5260
      %v5295 = vadd.f32 %v5068, %v5265
      %v5296 = vadd.f32 %v5069, %v5270
      %v5297 = vadd.f32 %v5070, %v5275
      %v5298 = vadd.f32 %v5071, %v5280
      %v5299 = vld [vmem:[%s4844 + $0x2] sm:$0xff]
      %v5300 = vld [vmem:[%s4844 + $0xa] sm:$0xff]
      %v5301 = vld [vmem:[%s4844 + $0x1a] sm:$0xff]
      %v5302 = vld [vmem:[%s4844 + $0x22] sm:$0xff]
      %v5303 = vld [vmem:[%s4844 + $0x32] sm:$0xff]
      %v5304 = vld [vmem:[%s4844 + $0x3a] sm:$0xff]
      %v5305 = vld [vmem:[%s4844 + $0x4a] sm:$0xff]
      %v5306 = vld [vmem:[%s4844 + $0x52] sm:$0xff]
      %v5307 = vld [vmem:[%s4844 + $0x62] sm:$0xff]
      %v5308 = vld [vmem:[%s4844 + $0x6a] sm:$0xff]
      %v5309 = vld [vmem:[%s4844 + $0x7a] sm:$0xff]
      %v5310 = vld [vmem:[%s4844 + $0x82] sm:$0xff]
      %v5311 = vld [vmem:[%s4844 + $0x92] sm:$0xff]
      %v5312 = vld [vmem:[%s4844 + $0x9a] sm:$0xff]
      %v5313 = vld [vmem:[%s4844 + $0xaa] sm:$0xff]
      %v5314 = vld [vmem:[%s4844 + $0xb2] sm:$0xff]
      %s5315 = scalar_lea.vmem %s9, 40
      %v5316 = vld [vmem:[%s5315] sm:$0xff]
      %v5318 = vsel %vm4160, %v5299, 0
      %v5321 = vsel %vm4160, %v5300, 0
      %v5324 = vsel %vm4160, %v5301, 0
      %v5327 = vsel %vm4160, %v5302, 0
      %v5330 = vsel %vm4160, %v5303, 0
      %v5333 = vsel %vm4160, %v5304, 0
      %v5336 = vsel %vm4160, %v5305, 0
      %v5339 = vsel %vm4160, %v5306, 0
      %v5342 = vsel %vm4160, %v5307, 0
      %v5345 = vsel %vm4160, %v5308, 0
      %v5348 = vsel %vm4160, %v5309, 0
      %v5351 = vsel %vm4160, %v5310, 0
      %v5354 = vsel %vm4160, %v5311, 0
      %v5357 = vsel %vm4160, %v5312, 0
      %v5360 = vsel %vm4160, %v5313, 0
      %v5363 = vsel %vm4160, %v5314, 0
      %5365 = vmatprep.subr.mxu0 0.0
      %5366 = vmatpush1.msra.mxu0 0.0
      %5367 = vmatprep.subr.mxu0 0.0
      %5368 = vmatpush1.msra.mxu0 0.0
      %5369 = vmatprep.subr.mxu0 0.0
      %5370 = vmatpush1.msra.mxu0 0.0
      %5371 = vmatprep.subr.mxu0 0.0
      %5372 = vmatpush1.msra.mxu0 0.0
      %5373 = vmatprep.subr.mxu0 0.0
      %5374 = vmatpush1.msra.mxu0 0.0
      %5375 = vmatprep.subr.mxu0 0.0
      %5376 = vmatpush1.msra.mxu0 0.0
      %5377 = vmatprep.subr.mxu0 0.0
      %5378 = vmatpush1.msra.mxu0 0.0
      %5379 = vmatprep.subr.mxu0 0.0
      %5380 = vmatpush1.msra.mxu0 0.0
      %5381 = vmatprep.subr.mxu0 0.0
      %5382 = vmatpush1.msra.mxu0 0.0
      %5383 = vmatprep.subr.mxu0 0.0
      %5384 = vmatpush1.msra.mxu0 0.0
      %5385 = vmatprep.subr.mxu0 0.0
      %5386 = vmatpush1.msra.mxu0 0.0
      %5387 = vmatprep.subr.mxu0 0.0
      %5388 = vmatpush1.msra.mxu0 0.0
      %5389 = vmatprep.subr.mxu0 0.0
      %5390 = vmatpush1.msra.mxu0 0.0
      %5391 = vmatprep.subr.mxu0 0.0
      %5392 = vmatpush1.msra.mxu0 0.0
      %5393 = vmatprep.subr.mxu0 0.0
      %5394 = vmatpush1.msra.mxu0 0.0
      %5395 = vmatprep.subr.mxu0 0.0
      %5396 = vmatpush1.msra.mxu0 %v5316
      %5397 = vmatprep.subr.mxu0 0.0
      %5398 = vmatpush2.msra.mxu0 0.0
      %5399 = vmatprep.subr.mxu0 0.0
      %5400 = vmatpush2.msra.mxu0 0.0
      %5401 = vmatprep.subr.mxu0 0.0
      %5402 = vmatpush2.msra.mxu0 0.0
      %5403 = vmatprep.subr.mxu0 0.0
      %5404 = vmatpush2.msra.mxu0 0.0
      %5405 = vmatprep.subr.mxu0 0.0
      %5406 = vmatpush2.msra.mxu0 0.0
      %5407 = vmatprep.subr.mxu0 0.0
      %5408 = vmatpush2.msra.mxu0 0.0
      %5409 = vmatprep.subr.mxu0 0.0
      %5410 = vmatpush2.msra.mxu0 0.0
      %5411 = vmatprep.subr.mxu0 0.0
      %5412 = vmatpush2.msra.mxu0 0.0
      %5413 = vmatprep.subr.mxu0 0.0
      %5414 = vmatpush2.msra.mxu0 0.0
      %5415 = vmatprep.subr.mxu0 0.0
      %5416 = vmatpush2.msra.mxu0 0.0
      %5417 = vmatprep.subr.mxu0 0.0
      %5418 = vmatpush2.msra.mxu0 0.0
      %5419 = vmatprep.subr.mxu0 0.0
      %5420 = vmatpush2.msra.mxu0 0.0
      %5421 = vmatprep.subr.mxu0 0.0
      %5422 = vmatpush2.msra.mxu0 0.0
      %5423 = vmatprep.subr.mxu0 0.0
      %5424 = vmatpush2.msra.mxu0 0.0
      %5425 = vmatprep.subr.mxu0 0.0
      %5426 = vmatpush2.msra.mxu0 0.0
      %5427 = vmatprep.subr.mxu0 0.0
      %5428 = vmatpush2.msra.mxu0 0.0
      %5429 = vmatprep.mubr.f32.mxu0 0.0
      %5430 = vmatmul.mubr.f32.gmra.mxu0 %v5318
      %v5431 = vpop.f32.mrf.mxu0
      %v5432 = vadd.f32 0.0, %v5431
      %v5433 = vpop.f32.mrf.mxu0
      %5434 = vmatprep.mubr.f32.mxu0 0.0
      %5435 = vmatmul.mubr.f32.gmra.mxu0 %v5321
      %v5436 = vpop.f32.mrf.mxu0
      %v5437 = vadd.f32 0.0, %v5436
      %v5438 = vpop.f32.mrf.mxu0
      %5439 = vmatprep.mubr.f32.mxu0 0.0
      %5440 = vmatmul.mubr.f32.gmra.mxu0 %v5324
      %v5441 = vpop.f32.mrf.mxu0
      %v5442 = vadd.f32 0.0, %v5441
      %v5443 = vpop.f32.mrf.mxu0
      %5444 = vmatprep.mubr.f32.mxu0 0.0
      %5445 = vmatmul.mubr.f32.gmra.mxu0 %v5327
      %v5446 = vpop.f32.mrf.mxu0
      %v5447 = vadd.f32 0.0, %v5446
      %v5448 = vpop.f32.mrf.mxu0
      %5449 = vmatprep.mubr.f32.mxu0 0.0
      %5450 = vmatmul.mubr.f32.gmra.mxu0 %v5330
      %v5451 = vpop.f32.mrf.mxu0
      %v5452 = vadd.f32 0.0, %v5451
      %v5453 = vpop.f32.mrf.mxu0
      %5454 = vmatprep.mubr.f32.mxu0 0.0
      %5455 = vmatmul.mubr.f32.gmra.mxu0 %v5333
      %v5456 = vpop.f32.mrf.mxu0
      %v5457 = vadd.f32 0.0, %v5456
      %v5458 = vpop.f32.mrf.mxu0
      %5459 = vmatprep.mubr.f32.mxu0 0.0
      %5460 = vmatmul.mubr.f32.gmra.mxu0 %v5336
      %v5461 = vpop.f32.mrf.mxu0
      %v5462 = vadd.f32 0.0, %v5461
      %v5463 = vpop.f32.mrf.mxu0
      %5464 = vmatprep.mubr.f32.mxu0 0.0
      %5465 = vmatmul.mubr.f32.gmra.mxu0 %v5339
      %v5466 = vpop.f32.mrf.mxu0
      %v5467 = vadd.f32 0.0, %v5466
      %v5468 = vpop.f32.mrf.mxu0
      %5469 = vmatprep.mubr.f32.mxu0 0.0
      %5470 = vmatmul.mubr.f32.gmra.mxu0 %v5342
      %v5471 = vpop.f32.mrf.mxu0
      %v5472 = vadd.f32 0.0, %v5471
      %v5473 = vpop.f32.mrf.mxu0
      %5474 = vmatprep.mubr.f32.mxu0 0.0
      %5475 = vmatmul.mubr.f32.gmra.mxu0 %v5345
      %v5476 = vpop.f32.mrf.mxu0
      %v5477 = vadd.f32 0.0, %v5476
      %v5478 = vpop.f32.mrf.mxu0
      %5479 = vmatprep.mubr.f32.mxu0 0.0
      %5480 = vmatmul.mubr.f32.gmra.mxu0 %v5348
      %v5481 = vpop.f32.mrf.mxu0
      %v5482 = vadd.f32 0.0, %v5481
      %v5483 = vpop.f32.mrf.mxu0
      %5484 = vmatprep.mubr.f32.mxu0 0.0
      %5485 = vmatmul.mubr.f32.gmra.mxu0 %v5351
      %v5486 = vpop.f32.mrf.mxu0
      %v5487 = vadd.f32 0.0, %v5486
      %v5488 = vpop.f32.mrf.mxu0
      %5489 = vmatprep.mubr.f32.mxu0 0.0
      %5490 = vmatmul.mubr.f32.gmra.mxu0 %v5354
      %v5491 = vpop.f32.mrf.mxu0
      %v5492 = vadd.f32 0.0, %v5491
      %v5493 = vpop.f32.mrf.mxu0
      %5494 = vmatprep.mubr.f32.mxu0 0.0
      %5495 = vmatmul.mubr.f32.gmra.mxu0 %v5357
      %v5496 = vpop.f32.mrf.mxu0
      %v5497 = vadd.f32 0.0, %v5496
      %v5498 = vpop.f32.mrf.mxu0
      %5499 = vmatprep.mubr.f32.mxu0 0.0
      %5500 = vmatmul.mubr.f32.gmra.mxu0 %v5360
      %v5501 = vpop.f32.mrf.mxu0
      %v5502 = vadd.f32 0.0, %v5501
      %v5503 = vpop.f32.mrf.mxu0
      %5504 = vmatprep.mubr.f32.mxu0 0.0
      %5505 = vmatmul.mubr.f32.gmra.mxu0 %v5363
      %v5506 = vpop.f32.mrf.mxu0
      %v5507 = vadd.f32 0.0, %v5506
      %v5508 = vpop.f32.mrf.mxu0
      %5509 = vdwg.mxu0
      %v5510 = vadd.f32 %v5283, %v5432
      %v5511 = vadd.f32 %v5284, %v5437
      %v5512 = vadd.f32 %v5285, %v5442
      %v5513 = vadd.f32 %v5286, %v5447
      %v5514 = vadd.f32 %v5287, %v5452
      %v5515 = vadd.f32 %v5288, %v5457
      %v5516 = vadd.f32 %v5289, %v5462
      %v5517 = vadd.f32 %v5290, %v5467
      %v5518 = vadd.f32 %v5291, %v5472
      %v5519 = vadd.f32 %v5292, %v5477
      %v5520 = vadd.f32 %v5293, %v5482
      %v5521 = vadd.f32 %v5294, %v5487
      %v5522 = vadd.f32 %v5295, %v5492
      %v5523 = vadd.f32 %v5296, %v5497
      %v5524 = vadd.f32 %v5297, %v5502
      %v5525 = vadd.f32 %v5298, %v5507
      %s5526 = scalar_lea.vmem [#allocation3], 48
      %v5527 = vld [vmem:[%s5526] sm:$0xff]
      %v5528 = vld [vmem:[%s5526 + $0x8] sm:$0xff]
      %v5529 = vld [vmem:[%s5526 + $0x18] sm:$0xff]
      %v5530 = vld [vmem:[%s5526 + $0x20] sm:$0xff]
      %v5531 = vld [vmem:[%s5526 + $0x30] sm:$0xff]
      %v5532 = vld [vmem:[%s5526 + $0x38] sm:$0xff]
      %v5533 = vld [vmem:[%s5526 + $0x48] sm:$0xff]
      %v5534 = vld [vmem:[%s5526 + $0x50] sm:$0xff]
      %v5535 = vld [vmem:[%s5526 + $0x60] sm:$0xff]
      %v5536 = vld [vmem:[%s5526 + $0x68] sm:$0xff]
      %v5537 = vld [vmem:[%s5526 + $0x78] sm:$0xff]
      %v5538 = vld [vmem:[%s5526 + $0x80] sm:$0xff]
      %v5539 = vld [vmem:[%s5526 + $0x90] sm:$0xff]
      %v5540 = vld [vmem:[%s5526 + $0x98] sm:$0xff]
      %v5541 = vld [vmem:[%s5526 + $0xa8] sm:$0xff]
      %v5542 = vld [vmem:[%s5526 + $0xb0] sm:$0xff]
      %s5543 = scalar_lea.vmem %s9, 48
      %v5544 = vld [vmem:[%s5543] sm:$0xff]
      %v5546 = vsel %vm4160, %v5527, 0
      %v5549 = vsel %vm4160, %v5528, 0
      %v5552 = vsel %vm4160, %v5529, 0
      %v5555 = vsel %vm4160, %v5530, 0
      %v5558 = vsel %vm4160, %v5531, 0
      %v5561 = vsel %vm4160, %v5532, 0
      %v5564 = vsel %vm4160, %v5533, 0
      %v5567 = vsel %vm4160, %v5534, 0
      %v5570 = vsel %vm4160, %v5535, 0
      %v5573 = vsel %vm4160, %v5536, 0
      %v5576 = vsel %vm4160, %v5537, 0
      %v5579 = vsel %vm4160, %v5538, 0
      %v5582 = vsel %vm4160, %v5539, 0
      %v5585 = vsel %vm4160, %v5540, 0
      %v5588 = vsel %vm4160, %v5541, 0
      %v5591 = vsel %vm4160, %v5542, 0
      %5593 = vmatprep.subr.mxu0 0.0
      %5594 = vmatpush1.msra.mxu0 0.0
      %5595 = vmatprep.subr.mxu0 0.0
      %5596 = vmatpush1.msra.mxu0 0.0
      %5597 = vmatprep.subr.mxu0 0.0
      %5598 = vmatpush1.msra.mxu0 0.0
      %5599 = vmatprep.subr.mxu0 0.0
      %5600 = vmatpush1.msra.mxu0 0.0
      %5601 = vmatprep.subr.mxu0 0.0
      %5602 = vmatpush1.msra.mxu0 0.0
      %5603 = vmatprep.subr.mxu0 0.0
      %5604 = vmatpush1.msra.mxu0 0.0
      %5605 = vmatprep.subr.mxu0 0.0
      %5606 = vmatpush1.msra.mxu0 0.0
      %5607 = vmatprep.subr.mxu0 0.0
      %5608 = vmatpush1.msra.mxu0 0.0
      %5609 = vmatprep.subr.mxu0 0.0
      %5610 = vmatpush1.msra.mxu0 0.0
      %5611 = vmatprep.subr.mxu0 0.0
      %5612 = vmatpush1.msra.mxu0 0.0
      %5613 = vmatprep.subr.mxu0 0.0
      %5614 = vmatpush1.msra.mxu0 0.0
      %5615 = vmatprep.subr.mxu0 0.0
      %5616 = vmatpush1.msra.mxu0 0.0
      %5617 = vmatprep.subr.mxu0 0.0
      %5618 = vmatpush1.msra.mxu0 0.0
      %5619 = vmatprep.subr.mxu0 0.0
      %5620 = vmatpush1.msra.mxu0 0.0
      %5621 = vmatprep.subr.mxu0 0.0
      %5622 = vmatpush1.msra.mxu0 0.0
      %5623 = vmatprep.subr.mxu0 0.0
      %5624 = vmatpush1.msra.mxu0 %v5544
      %5625 = vmatprep.subr.mxu0 0.0
      %5626 = vmatpush2.msra.mxu0 0.0
      %5627 = vmatprep.subr.mxu0 0.0
      %5628 = vmatpush2.msra.mxu0 0.0
      %5629 = vmatprep.subr.mxu0 0.0
      %5630 = vmatpush2.msra.mxu0 0.0
      %5631 = vmatprep.subr.mxu0 0.0
      %5632 = vmatpush2.msra.mxu0 0.0
      %5633 = vmatprep.subr.mxu0 0.0
      %5634 = vmatpush2.msra.mxu0 0.0
      %5635 = vmatprep.subr.mxu0 0.0
      %5636 = vmatpush2.msra.mxu0 0.0
      %5637 = vmatprep.subr.mxu0 0.0
      %5638 = vmatpush2.msra.mxu0 0.0
      %5639 = vmatprep.subr.mxu0 0.0
      %5640 = vmatpush2.msra.mxu0 0.0
      %5641 = vmatprep.subr.mxu0 0.0
      %5642 = vmatpush2.msra.mxu0 0.0
      %5643 = vmatprep.subr.mxu0 0.0
      %5644 = vmatpush2.msra.mxu0 0.0
      %5645 = vmatprep.subr.mxu0 0.0
      %5646 = vmatpush2.msra.mxu0 0.0
      %5647 = vmatprep.subr.mxu0 0.0
      %5648 = vmatpush2.msra.mxu0 0.0
      %5649 = vmatprep.subr.mxu0 0.0
      %5650 = vmatpush2.msra.mxu0 0.0
      %5651 = vmatprep.subr.mxu0 0.0
      %5652 = vmatpush2.msra.mxu0 0.0
      %5653 = vmatprep.subr.mxu0 0.0
      %5654 = vmatpush2.msra.mxu0 0.0
      %5655 = vmatprep.subr.mxu0 0.0
      %5656 = vmatpush2.msra.mxu0 0.0
      %5657 = vmatprep.mubr.f32.mxu0 0.0
      %5658 = vmatmul.mubr.f32.gmra.mxu0 %v5546
      %v5659 = vpop.f32.mrf.mxu0
      %v5660 = vadd.f32 0.0, %v5659
      %v5661 = vpop.f32.mrf.mxu0
      %5662 = vmatprep.mubr.f32.mxu0 0.0
      %5663 = vmatmul.mubr.f32.gmra.mxu0 %v5549
      %v5664 = vpop.f32.mrf.mxu0
      %v5665 = vadd.f32 0.0, %v5664
      %v5666 = vpop.f32.mrf.mxu0
      %5667 = vmatprep.mubr.f32.mxu0 0.0
      %5668 = vmatmul.mubr.f32.gmra.mxu0 %v5552
      %v5669 = vpop.f32.mrf.mxu0
      %v5670 = vadd.f32 0.0, %v5669
      %v5671 = vpop.f32.mrf.mxu0
      %5672 = vmatprep.mubr.f32.mxu0 0.0
      %5673 = vmatmul.mubr.f32.gmra.mxu0 %v5555
      %v5674 = vpop.f32.mrf.mxu0
      %v5675 = vadd.f32 0.0, %v5674
      %v5676 = vpop.f32.mrf.mxu0
      %5677 = vmatprep.mubr.f32.mxu0 0.0
      %5678 = vmatmul.mubr.f32.gmra.mxu0 %v5558
      %v5679 = vpop.f32.mrf.mxu0
      %v5680 = vadd.f32 0.0, %v5679
      %v5681 = vpop.f32.mrf.mxu0
      %5682 = vmatprep.mubr.f32.mxu0 0.0
      %5683 = vmatmul.mubr.f32.gmra.mxu0 %v5561
      %v5684 = vpop.f32.mrf.mxu0
      %v5685 = vadd.f32 0.0, %v5684
      %v5686 = vpop.f32.mrf.mxu0
      %5687 = vmatprep.mubr.f32.mxu0 0.0
      %5688 = vmatmul.mubr.f32.gmra.mxu0 %v5564
      %v5689 = vpop.f32.mrf.mxu0
      %v5690 = vadd.f32 0.0, %v5689
      %v5691 = vpop.f32.mrf.mxu0
      %5692 = vmatprep.mubr.f32.mxu0 0.0
      %5693 = vmatmul.mubr.f32.gmra.mxu0 %v5567
      %v5694 = vpop.f32.mrf.mxu0
      %v5695 = vadd.f32 0.0, %v5694
      %v5696 = vpop.f32.mrf.mxu0
      %5697 = vmatprep.mubr.f32.mxu0 0.0
      %5698 = vmatmul.mubr.f32.gmra.mxu0 %v5570
      %v5699 = vpop.f32.mrf.mxu0
      %v5700 = vadd.f32 0.0, %v5699
      %v5701 = vpop.f32.mrf.mxu0
      %5702 = vmatprep.mubr.f32.mxu0 0.0
      %5703 = vmatmul.mubr.f32.gmra.mxu0 %v5573
      %v5704 = vpop.f32.mrf.mxu0
      %v5705 = vadd.f32 0.0, %v5704
      %v5706 = vpop.f32.mrf.mxu0
      %5707 = vmatprep.mubr.f32.mxu0 0.0
      %5708 = vmatmul.mubr.f32.gmra.mxu0 %v5576
      %v5709 = vpop.f32.mrf.mxu0
      %v5710 = vadd.f32 0.0, %v5709
      %v5711 = vpop.f32.mrf.mxu0
      %5712 = vmatprep.mubr.f32.mxu0 0.0
      %5713 = vmatmul.mubr.f32.gmra.mxu0 %v5579
      %v5714 = vpop.f32.mrf.mxu0
      %v5715 = vadd.f32 0.0, %v5714
      %v5716 = vpop.f32.mrf.mxu0
      %5717 = vmatprep.mubr.f32.mxu0 0.0
      %5718 = vmatmul.mubr.f32.gmra.mxu0 %v5582
      %v5719 = vpop.f32.mrf.mxu0
      %v5720 = vadd.f32 0.0, %v5719
      %v5721 = vpop.f32.mrf.mxu0
      %5722 = vmatprep.mubr.f32.mxu0 0.0
      %5723 = vmatmul.mubr.f32.gmra.mxu0 %v5585
      %v5724 = vpop.f32.mrf.mxu0
      %v5725 = vadd.f32 0.0, %v5724
      %v5726 = vpop.f32.mrf.mxu0
      %5727 = vmatprep.mubr.f32.mxu0 0.0
      %5728 = vmatmul.mubr.f32.gmra.mxu0 %v5588
      %v5729 = vpop.f32.mrf.mxu0
      %v5730 = vadd.f32 0.0, %v5729
      %v5731 = vpop.f32.mrf.mxu0
      %5732 = vmatprep.mubr.f32.mxu0 0.0
      %5733 = vmatmul.mubr.f32.gmra.mxu0 %v5591
      %v5734 = vpop.f32.mrf.mxu0
      %v5735 = vadd.f32 0.0, %v5734
      %v5736 = vpop.f32.mrf.mxu0
      %5737 = vdwg.mxu0
      %v5738 = vadd.f32 %v5510, %v5660
      %v5739 = vadd.f32 %v5511, %v5665
      %v5740 = vadd.f32 %v5512, %v5670
      %v5741 = vadd.f32 %v5513, %v5675
      %v5742 = vadd.f32 %v5514, %v5680
      %v5743 = vadd.f32 %v5515, %v5685
      %v5744 = vadd.f32 %v5516, %v5690
      %v5745 = vadd.f32 %v5517, %v5695
      %v5746 = vadd.f32 %v5518, %v5700
      %v5747 = vadd.f32 %v5519, %v5705
      %v5748 = vadd.f32 %v5520, %v5710
      %v5749 = vadd.f32 %v5521, %v5715
      %v5750 = vadd.f32 %v5522, %v5720
      %v5751 = vadd.f32 %v5523, %v5725
      %v5752 = vadd.f32 %v5524, %v5730
      %v5753 = vadd.f32 %v5525, %v5735
      %v5754 = vld [vmem:[%s5526 + $0x1] sm:$0xff]
      %v5755 = vld [vmem:[%s5526 + $0x9] sm:$0xff]
      %v5756 = vld [vmem:[%s5526 + $0x19] sm:$0xff]
      %v5757 = vld [vmem:[%s5526 + $0x21] sm:$0xff]
      %v5758 = vld [vmem:[%s5526 + $0x31] sm:$0xff]
      %v5759 = vld [vmem:[%s5526 + $0x39] sm:$0xff]
      %v5760 = vld [vmem:[%s5526 + $0x49] sm:$0xff]
      %v5761 = vld [vmem:[%s5526 + $0x51] sm:$0xff]
      %v5762 = vld [vmem:[%s5526 + $0x61] sm:$0xff]
      %v5763 = vld [vmem:[%s5526 + $0x69] sm:$0xff]
      %v5764 = vld [vmem:[%s5526 + $0x79] sm:$0xff]
      %v5765 = vld [vmem:[%s5526 + $0x81] sm:$0xff]
      %v5766 = vld [vmem:[%s5526 + $0x91] sm:$0xff]
      %v5767 = vld [vmem:[%s5526 + $0x99] sm:$0xff]
      %v5768 = vld [vmem:[%s5526 + $0xa9] sm:$0xff]
      %v5769 = vld [vmem:[%s5526 + $0xb1] sm:$0xff]
      %s5770 = scalar_lea.vmem %s9, 56
      %v5771 = vld [vmem:[%s5770] sm:$0xff]
      %v5773 = vsel %vm4160, %v5754, 0
      %v5776 = vsel %vm4160, %v5755, 0
      %v5779 = vsel %vm4160, %v5756, 0
      %v5782 = vsel %vm4160, %v5757, 0
      %v5785 = vsel %vm4160, %v5758, 0
      %v5788 = vsel %vm4160, %v5759, 0
      %v5791 = vsel %vm4160, %v5760, 0
      %v5794 = vsel %vm4160, %v5761, 0
      %v5797 = vsel %vm4160, %v5762, 0
      %v5800 = vsel %vm4160, %v5763, 0
      %v5803 = vsel %vm4160, %v5764, 0
      %v5806 = vsel %vm4160, %v5765, 0
      %v5809 = vsel %vm4160, %v5766, 0
      %v5812 = vsel %vm4160, %v5767, 0
      %v5815 = vsel %vm4160, %v5768, 0
      %v5818 = vsel %vm4160, %v5769, 0
      %5820 = vmatprep.subr.mxu0 0.0
      %5821 = vmatpush1.msra.mxu0 0.0
      %5822 = vmatprep.subr.mxu0 0.0
      %5823 = vmatpush1.msra.mxu0 0.0
      %5824 = vmatprep.subr.mxu0 0.0
      %5825 = vmatpush1.msra.mxu0 0.0
      %5826 = vmatprep.subr.mxu0 0.0
      %5827 = vmatpush1.msra.mxu0 0.0
      %5828 = vmatprep.subr.mxu0 0.0
      %5829 = vmatpush1.msra.mxu0 0.0
      %5830 = vmatprep.subr.mxu0 0.0
      %5831 = vmatpush1.msra.mxu0 0.0
      %5832 = vmatprep.subr.mxu0 0.0
      %5833 = vmatpush1.msra.mxu0 0.0
      %5834 = vmatprep.subr.mxu0 0.0
      %5835 = vmatpush1.msra.mxu0 0.0
      %5836 = vmatprep.subr.mxu0 0.0
      %5837 = vmatpush1.msra.mxu0 0.0
      %5838 = vmatprep.subr.mxu0 0.0
      %5839 = vmatpush1.msra.mxu0 0.0
      %5840 = vmatprep.subr.mxu0 0.0
      %5841 = vmatpush1.msra.mxu0 0.0
      %5842 = vmatprep.subr.mxu0 0.0
      %5843 = vmatpush1.msra.mxu0 0.0
      %5844 = vmatprep.subr.mxu0 0.0
      %5845 = vmatpush1.msra.mxu0 0.0
      %5846 = vmatprep.subr.mxu0 0.0
      %5847 = vmatpush1.msra.mxu0 0.0
      %5848 = vmatprep.subr.mxu0 0.0
      %5849 = vmatpush1.msra.mxu0 0.0
      %5850 = vmatprep.subr.mxu0 0.0
      %5851 = vmatpush1.msra.mxu0 %v5771
      %5852 = vmatprep.subr.mxu0 0.0
      %5853 = vmatpush2.msra.mxu0 0.0
      %5854 = vmatprep.subr.mxu0 0.0
      %5855 = vmatpush2.msra.mxu0 0.0
      %5856 = vmatprep.subr.mxu0 0.0
      %5857 = vmatpush2.msra.mxu0 0.0
      %5858 = vmatprep.subr.mxu0 0.0
      %5859 = vmatpush2.msra.mxu0 0.0
      %5860 = vmatprep.subr.mxu0 0.0
      %5861 = vmatpush2.msra.mxu0 0.0
      %5862 = vmatprep.subr.mxu0 0.0
      %5863 = vmatpush2.msra.mxu0 0.0
      %5864 = vmatprep.subr.mxu0 0.0
      %5865 = vmatpush2.msra.mxu0 0.0
      %5866 = vmatprep.subr.mxu0 0.0
      %5867 = vmatpush2.msra.mxu0 0.0
      %5868 = vmatprep.subr.mxu0 0.0
      %5869 = vmatpush2.msra.mxu0 0.0
      %5870 = vmatprep.subr.mxu0 0.0
      %5871 = vmatpush2.msra.mxu0 0.0
      %5872 = vmatprep.subr.mxu0 0.0
      %5873 = vmatpush2.msra.mxu0 0.0
      %5874 = vmatprep.subr.mxu0 0.0
      %5875 = vmatpush2.msra.mxu0 0.0
      %5876 = vmatprep.subr.mxu0 0.0
      %5877 = vmatpush2.msra.mxu0 0.0
      %5878 = vmatprep.subr.mxu0 0.0
      %5879 = vmatpush2.msra.mxu0 0.0
      %5880 = vmatprep.subr.mxu0 0.0
      %5881 = vmatpush2.msra.mxu0 0.0
      %5882 = vmatprep.subr.mxu0 0.0
      %5883 = vmatpush2.msra.mxu0 0.0
      %5884 = vmatprep.mubr.f32.mxu0 0.0
      %5885 = vmatmul.mubr.f32.gmra.mxu0 %v5773
      %v5886 = vpop.f32.mrf.mxu0
      %v5887 = vadd.f32 0.0, %v5886
      %v5888 = vpop.f32.mrf.mxu0
      %5889 = vmatprep.mubr.f32.mxu0 0.0
      %5890 = vmatmul.mubr.f32.gmra.mxu0 %v5776
      %v5891 = vpop.f32.mrf.mxu0
      %v5892 = vadd.f32 0.0, %v5891
      %v5893 = vpop.f32.mrf.mxu0
      %5894 = vmatprep.mubr.f32.mxu0 0.0
      %5895 = vmatmul.mubr.f32.gmra.mxu0 %v5779
      %v5896 = vpop.f32.mrf.mxu0
      %v5897 = vadd.f32 0.0, %v5896
      %v5898 = vpop.f32.mrf.mxu0
      %5899 = vmatprep.mubr.f32.mxu0 0.0
      %5900 = vmatmul.mubr.f32.gmra.mxu0 %v5782
      %v5901 = vpop.f32.mrf.mxu0
      %v5902 = vadd.f32 0.0, %v5901
      %v5903 = vpop.f32.mrf.mxu0
      %5904 = vmatprep.mubr.f32.mxu0 0.0
      %5905 = vmatmul.mubr.f32.gmra.mxu0 %v5785
      %v5906 = vpop.f32.mrf.mxu0
      %v5907 = vadd.f32 0.0, %v5906
      %v5908 = vpop.f32.mrf.mxu0
      %5909 = vmatprep.mubr.f32.mxu0 0.0
      %5910 = vmatmul.mubr.f32.gmra.mxu0 %v5788
      %v5911 = vpop.f32.mrf.mxu0
      %v5912 = vadd.f32 0.0, %v5911
      %v5913 = vpop.f32.mrf.mxu0
      %5914 = vmatprep.mubr.f32.mxu0 0.0
      %5915 = vmatmul.mubr.f32.gmra.mxu0 %v5791
      %v5916 = vpop.f32.mrf.mxu0
      %v5917 = vadd.f32 0.0, %v5916
      %v5918 = vpop.f32.mrf.mxu0
      %5919 = vmatprep.mubr.f32.mxu0 0.0
      %5920 = vmatmul.mubr.f32.gmra.mxu0 %v5794
      %v5921 = vpop.f32.mrf.mxu0
      %v5922 = vadd.f32 0.0, %v5921
      %v5923 = vpop.f32.mrf.mxu0
      %5924 = vmatprep.mubr.f32.mxu0 0.0
      %5925 = vmatmul.mubr.f32.gmra.mxu0 %v5797
      %v5926 = vpop.f32.mrf.mxu0
      %v5927 = vadd.f32 0.0, %v5926
      %v5928 = vpop.f32.mrf.mxu0
      %5929 = vmatprep.mubr.f32.mxu0 0.0
      %5930 = vmatmul.mubr.f32.gmra.mxu0 %v5800
      %v5931 = vpop.f32.mrf.mxu0
      %v5932 = vadd.f32 0.0, %v5931
      %v5933 = vpop.f32.mrf.mxu0
      %5934 = vmatprep.mubr.f32.mxu0 0.0
      %5935 = vmatmul.mubr.f32.gmra.mxu0 %v5803
      %v5936 = vpop.f32.mrf.mxu0
      %v5937 = vadd.f32 0.0, %v5936
      %v5938 = vpop.f32.mrf.mxu0
      %5939 = vmatprep.mubr.f32.mxu0 0.0
      %5940 = vmatmul.mubr.f32.gmra.mxu0 %v5806
      %v5941 = vpop.f32.mrf.mxu0
      %v5942 = vadd.f32 0.0, %v5941
      %v5943 = vpop.f32.mrf.mxu0
      %5944 = vmatprep.mubr.f32.mxu0 0.0
      %5945 = vmatmul.mubr.f32.gmra.mxu0 %v5809
      %v5946 = vpop.f32.mrf.mxu0
      %v5947 = vadd.f32 0.0, %v5946
      %v5948 = vpop.f32.mrf.mxu0
      %5949 = vmatprep.mubr.f32.mxu0 0.0
      %5950 = vmatmul.mubr.f32.gmra.mxu0 %v5812
      %v5951 = vpop.f32.mrf.mxu0
      %v5952 = vadd.f32 0.0, %v5951
      %v5953 = vpop.f32.mrf.mxu0
      %5954 = vmatprep.mubr.f32.mxu0 0.0
      %5955 = vmatmul.mubr.f32.gmra.mxu0 %v5815
      %v5956 = vpop.f32.mrf.mxu0
      %v5957 = vadd.f32 0.0, %v5956
      %v5958 = vpop.f32.mrf.mxu0
      %5959 = vmatprep.mubr.f32.mxu0 0.0
      %5960 = vmatmul.mubr.f32.gmra.mxu0 %v5818
      %v5961 = vpop.f32.mrf.mxu0
      %v5962 = vadd.f32 0.0, %v5961
      %v5963 = vpop.f32.mrf.mxu0
      %5964 = vdwg.mxu0
      %v5965 = vadd.f32 %v5738, %v5887
      %v5966 = vadd.f32 %v5739, %v5892
      %v5967 = vadd.f32 %v5740, %v5897
      %v5968 = vadd.f32 %v5741, %v5902
      %v5969 = vadd.f32 %v5742, %v5907
      %v5970 = vadd.f32 %v5743, %v5912
      %v5971 = vadd.f32 %v5744, %v5917
      %v5972 = vadd.f32 %v5745, %v5922
      %v5973 = vadd.f32 %v5746, %v5927
      %v5974 = vadd.f32 %v5747, %v5932
      %v5975 = vadd.f32 %v5748, %v5937
      %v5976 = vadd.f32 %v5749, %v5942
      %v5977 = vadd.f32 %v5750, %v5947
      %v5978 = vadd.f32 %v5751, %v5952
      %v5979 = vadd.f32 %v5752, %v5957
      %v5980 = vadd.f32 %v5753, %v5962
      %v5981 = vld [vmem:[%s5526 + $0x2] sm:$0xff]
      %v5982 = vld [vmem:[%s5526 + $0xa] sm:$0xff]
      %v5983 = vld [vmem:[%s5526 + $0x1a] sm:$0xff]
      %v5984 = vld [vmem:[%s5526 + $0x22] sm:$0xff]
      %v5985 = vld [vmem:[%s5526 + $0x32] sm:$0xff]
      %v5986 = vld [vmem:[%s5526 + $0x3a] sm:$0xff]
      %v5987 = vld [vmem:[%s5526 + $0x4a] sm:$0xff]
      %v5988 = vld [vmem:[%s5526 + $0x52] sm:$0xff]
      %v5989 = vld [vmem:[%s5526 + $0x62] sm:$0xff]
      %v5990 = vld [vmem:[%s5526 + $0x6a] sm:$0xff]
      %v5991 = vld [vmem:[%s5526 + $0x7a] sm:$0xff]
      %v5992 = vld [vmem:[%s5526 + $0x82] sm:$0xff]
      %v5993 = vld [vmem:[%s5526 + $0x92] sm:$0xff]
      %v5994 = vld [vmem:[%s5526 + $0x9a] sm:$0xff]
      %v5995 = vld [vmem:[%s5526 + $0xaa] sm:$0xff]
      %v5996 = vld [vmem:[%s5526 + $0xb2] sm:$0xff]
      %s5997 = scalar_lea.vmem %s9, 64
      %v5998 = vld [vmem:[%s5997] sm:$0xff]
      %v6000 = vsel %vm4160, %v5981, 0
      %v6003 = vsel %vm4160, %v5982, 0
      %v6006 = vsel %vm4160, %v5983, 0
      %v6009 = vsel %vm4160, %v5984, 0
      %v6012 = vsel %vm4160, %v5985, 0
      %v6015 = vsel %vm4160, %v5986, 0
      %v6018 = vsel %vm4160, %v5987, 0
      %v6021 = vsel %vm4160, %v5988, 0
      %v6024 = vsel %vm4160, %v5989, 0
      %v6027 = vsel %vm4160, %v5990, 0
      %v6030 = vsel %vm4160, %v5991, 0
      %v6033 = vsel %vm4160, %v5992, 0
      %v6036 = vsel %vm4160, %v5993, 0
      %v6039 = vsel %vm4160, %v5994, 0
      %v6042 = vsel %vm4160, %v5995, 0
      %v6045 = vsel %vm4160, %v5996, 0
      %6047 = vmatprep.subr.mxu0 0.0
      %6048 = vmatpush1.msra.mxu0 0.0
      %6049 = vmatprep.subr.mxu0 0.0
      %6050 = vmatpush1.msra.mxu0 0.0
      %6051 = vmatprep.subr.mxu0 0.0
      %6052 = vmatpush1.msra.mxu0 0.0
      %6053 = vmatprep.subr.mxu0 0.0
      %6054 = vmatpush1.msra.mxu0 0.0
      %6055 = vmatprep.subr.mxu0 0.0
      %6056 = vmatpush1.msra.mxu0 0.0
      %6057 = vmatprep.subr.mxu0 0.0
      %6058 = vmatpush1.msra.mxu0 0.0
      %6059 = vmatprep.subr.mxu0 0.0
      %6060 = vmatpush1.msra.mxu0 0.0
      %6061 = vmatprep.subr.mxu0 0.0
      %6062 = vmatpush1.msra.mxu0 0.0
      %6063 = vmatprep.subr.mxu0 0.0
      %6064 = vmatpush1.msra.mxu0 0.0
      %6065 = vmatprep.subr.mxu0 0.0
      %6066 = vmatpush1.msra.mxu0 0.0
      %6067 = vmatprep.subr.mxu0 0.0
      %6068 = vmatpush1.msra.mxu0 0.0
      %6069 = vmatprep.subr.mxu0 0.0
      %6070 = vmatpush1.msra.mxu0 0.0
      %6071 = vmatprep.subr.mxu0 0.0
      %6072 = vmatpush1.msra.mxu0 0.0
      %6073 = vmatprep.subr.mxu0 0.0
      %6074 = vmatpush1.msra.mxu0 0.0
      %6075 = vmatprep.subr.mxu0 0.0
      %6076 = vmatpush1.msra.mxu0 0.0
      %6077 = vmatprep.subr.mxu0 0.0
      %6078 = vmatpush1.msra.mxu0 %v5998
      %6079 = vmatprep.subr.mxu0 0.0
      %6080 = vmatpush2.msra.mxu0 0.0
      %6081 = vmatprep.subr.mxu0 0.0
      %6082 = vmatpush2.msra.mxu0 0.0
      %6083 = vmatprep.subr.mxu0 0.0
      %6084 = vmatpush2.msra.mxu0 0.0
      %6085 = vmatprep.subr.mxu0 0.0
      %6086 = vmatpush2.msra.mxu0 0.0
      %6087 = vmatprep.subr.mxu0 0.0
      %6088 = vmatpush2.msra.mxu0 0.0
      %6089 = vmatprep.subr.mxu0 0.0
      %6090 = vmatpush2.msra.mxu0 0.0
      %6091 = vmatprep.subr.mxu0 0.0
      %6092 = vmatpush2.msra.mxu0 0.0
      %6093 = vmatprep.subr.mxu0 0.0
      %6094 = vmatpush2.msra.mxu0 0.0
      %6095 = vmatprep.subr.mxu0 0.0
      %6096 = vmatpush2.msra.mxu0 0.0
      %6097 = vmatprep.subr.mxu0 0.0
      %6098 = vmatpush2.msra.mxu0 0.0
      %6099 = vmatprep.subr.mxu0 0.0
      %6100 = vmatpush2.msra.mxu0 0.0
      %6101 = vmatprep.subr.mxu0 0.0
      %6102 = vmatpush2.msra.mxu0 0.0
      %6103 = vmatprep.subr.mxu0 0.0
      %6104 = vmatpush2.msra.mxu0 0.0
      %6105 = vmatprep.subr.mxu0 0.0
      %6106 = vmatpush2.msra.mxu0 0.0
      %6107 = vmatprep.subr.mxu0 0.0
      %6108 = vmatpush2.msra.mxu0 0.0
      %6109 = vmatprep.subr.mxu0 0.0
      %6110 = vmatpush2.msra.mxu0 0.0
      %6111 = vmatprep.mubr.f32.mxu0 0.0
      %6112 = vmatmul.mubr.f32.gmra.mxu0 %v6000
      %v6113 = vpop.f32.mrf.mxu0
      %v6114 = vadd.f32 0.0, %v6113
      %v6115 = vpop.f32.mrf.mxu0
      %6116 = vmatprep.mubr.f32.mxu0 0.0
      %6117 = vmatmul.mubr.f32.gmra.mxu0 %v6003
      %v6118 = vpop.f32.mrf.mxu0
      %v6119 = vadd.f32 0.0, %v6118
      %v6120 = vpop.f32.mrf.mxu0
      %6121 = vmatprep.mubr.f32.mxu0 0.0
      %6122 = vmatmul.mubr.f32.gmra.mxu0 %v6006
      %v6123 = vpop.f32.mrf.mxu0
      %v6124 = vadd.f32 0.0, %v6123
      %v6125 = vpop.f32.mrf.mxu0
      %6126 = vmatprep.mubr.f32.mxu0 0.0
      %6127 = vmatmul.mubr.f32.gmra.mxu0 %v6009
      %v6128 = vpop.f32.mrf.mxu0
      %v6129 = vadd.f32 0.0, %v6128
      %v6130 = vpop.f32.mrf.mxu0
      %6131 = vmatprep.mubr.f32.mxu0 0.0
      %6132 = vmatmul.mubr.f32.gmra.mxu0 %v6012
      %v6133 = vpop.f32.mrf.mxu0
      %v6134 = vadd.f32 0.0, %v6133
      %v6135 = vpop.f32.mrf.mxu0
      %6136 = vmatprep.mubr.f32.mxu0 0.0
      %6137 = vmatmul.mubr.f32.gmra.mxu0 %v6015
      %v6138 = vpop.f32.mrf.mxu0
      %v6139 = vadd.f32 0.0, %v6138
      %v6140 = vpop.f32.mrf.mxu0
      %6141 = vmatprep.mubr.f32.mxu0 0.0
      %6142 = vmatmul.mubr.f32.gmra.mxu0 %v6018
      %v6143 = vpop.f32.mrf.mxu0
      %v6144 = vadd.f32 0.0, %v6143
      %v6145 = vpop.f32.mrf.mxu0
      %6146 = vmatprep.mubr.f32.mxu0 0.0
      %6147 = vmatmul.mubr.f32.gmra.mxu0 %v6021
      %v6148 = vpop.f32.mrf.mxu0
      %v6149 = vadd.f32 0.0, %v6148
      %v6150 = vpop.f32.mrf.mxu0
      %6151 = vmatprep.mubr.f32.mxu0 0.0
      %6152 = vmatmul.mubr.f32.gmra.mxu0 %v6024
      %v6153 = vpop.f32.mrf.mxu0
      %v6154 = vadd.f32 0.0, %v6153
      %v6155 = vpop.f32.mrf.mxu0
      %6156 = vmatprep.mubr.f32.mxu0 0.0
      %6157 = vmatmul.mubr.f32.gmra.mxu0 %v6027
      %v6158 = vpop.f32.mrf.mxu0
      %v6159 = vadd.f32 0.0, %v6158
      %v6160 = vpop.f32.mrf.mxu0
      %6161 = vmatprep.mubr.f32.mxu0 0.0
      %6162 = vmatmul.mubr.f32.gmra.mxu0 %v6030
      %v6163 = vpop.f32.mrf.mxu0
      %v6164 = vadd.f32 0.0, %v6163
      %v6165 = vpop.f32.mrf.mxu0
      %6166 = vmatprep.mubr.f32.mxu0 0.0
      %6167 = vmatmul.mubr.f32.gmra.mxu0 %v6033
      %v6168 = vpop.f32.mrf.mxu0
      %v6169 = vadd.f32 0.0, %v6168
      %v6170 = vpop.f32.mrf.mxu0
      %6171 = vmatprep.mubr.f32.mxu0 0.0
      %6172 = vmatmul.mubr.f32.gmra.mxu0 %v6036
      %v6173 = vpop.f32.mrf.mxu0
      %v6174 = vadd.f32 0.0, %v6173
      %v6175 = vpop.f32.mrf.mxu0
      %6176 = vmatprep.mubr.f32.mxu0 0.0
      %6177 = vmatmul.mubr.f32.gmra.mxu0 %v6039
      %v6178 = vpop.f32.mrf.mxu0
      %v6179 = vadd.f32 0.0, %v6178
      %v6180 = vpop.f32.mrf.mxu0
      %6181 = vmatprep.mubr.f32.mxu0 0.0
      %6182 = vmatmul.mubr.f32.gmra.mxu0 %v6042
      %v6183 = vpop.f32.mrf.mxu0
      %v6184 = vadd.f32 0.0, %v6183
      %v6185 = vpop.f32.mrf.mxu0
      %6186 = vmatprep.mubr.f32.mxu0 0.0
      %6187 = vmatmul.mubr.f32.gmra.mxu0 %v6045
      %v6188 = vpop.f32.mrf.mxu0
      %v6189 = vadd.f32 0.0, %v6188
      %v6190 = vpop.f32.mrf.mxu0
      %6191 = vdwg.mxu0
      %v6192 = vadd.f32 %v5965, %v6114
      %v6193 = vadd.f32 %v5966, %v6119
      %v6194 = vadd.f32 %v5967, %v6124
      %v6195 = vadd.f32 %v5968, %v6129
      %v6196 = vadd.f32 %v5969, %v6134
      %v6197 = vadd.f32 %v5970, %v6139
      %v6198 = vadd.f32 %v5971, %v6144
      %v6199 = vadd.f32 %v5972, %v6149
      %v6200 = vadd.f32 %v5973, %v6154
      %v6201 = vadd.f32 %v5974, %v6159
      %v6202 = vadd.f32 %v5975, %v6164
      %v6203 = vadd.f32 %v5976, %v6169
      %v6204 = vadd.f32 %v5977, %v6174
      %v6205 = vadd.f32 %v5978, %v6179
      %v6206 = vadd.f32 %v5979, %v6184
      %v6207 = vadd.f32 %v5980, %v6189
      %v6208 = vld [vmem:[%s10] sm:$0x1]
      %v6210 = vlaneseq
      %v6211 = vshrl.u32 %v6210, 7
      %v6212 = vsub.s32 0, %v6211
      %v6213 = vrot.slane %v6208, %v6212
      %v6215 = vmul.f32 %v6192, %v6213
      %v6216 = vmul.f32 %v6193, %v6213
      %v6217 = vmul.f32 %v6194, %v6213
      %v6218 = vmul.f32 %v6195, %v6213
      %v6219 = vmul.f32 %v6196, %v6213
      %v6220 = vmul.f32 %v6197, %v6213
      %v6221 = vmul.f32 %v6198, %v6213
      %v6222 = vmul.f32 %v6199, %v6213
      %v6223 = vmul.f32 %v6200, %v6213
      %v6224 = vmul.f32 %v6201, %v6213
      %v6225 = vmul.f32 %v6202, %v6213
      %v6226 = vmul.f32 %v6203, %v6213
      %v6227 = vmul.f32 %v6204, %v6213
      %v6228 = vmul.f32 %v6205, %v6213
      %v6229 = vmul.f32 %v6206, %v6213
      %v6230 = vmul.f32 %v6207, %v6213
      %v6231 = vld [vmem:[%s11] sm:$0x1]
      %v6233 = vlaneseq
      %v6234 = vshrl.u32 %v6233, 7
      %v6235 = vsub.s32 0, %v6234
      %v6236 = vrot.slane %v6231, %v6235
      %v6238 = vadd.f32 %v6215, %v6236
      %v6239 = vadd.f32 %v6216, %v6236
      %v6240 = vadd.f32 %v6217, %v6236
      %v6241 = vadd.f32 %v6218, %v6236
      %v6242 = vadd.f32 %v6219, %v6236
      %v6243 = vadd.f32 %v6220, %v6236
      %v6244 = vadd.f32 %v6221, %v6236
      %v6245 = vadd.f32 %v6222, %v6236
      %v6246 = vadd.f32 %v6223, %v6236
      %v6247 = vadd.f32 %v6224, %v6236
      %v6248 = vadd.f32 %v6225, %v6236
      %v6249 = vadd.f32 %v6226, %v6236
      %v6250 = vadd.f32 %v6227, %v6236
      %v6251 = vadd.f32 %v6228, %v6236
      %v6252 = vadd.f32 %v6229, %v6236
      %v6253 = vadd.f32 %v6230, %v6236
      %v6254 = vmax.f32 %v6238, 0.0
      %v6255 = vmax.f32 %v6239, 0.0
      %v6256 = vmax.f32 %v6240, 0.0
      %v6257 = vmax.f32 %v6241, 0.0
      %v6258 = vmax.f32 %v6242, 0.0
      %v6259 = vmax.f32 %v6243, 0.0
      %v6260 = vmax.f32 %v6244, 0.0
      %v6261 = vmax.f32 %v6245, 0.0
      %v6262 = vmax.f32 %v6246, 0.0
      %v6263 = vmax.f32 %v6247, 0.0
      %v6264 = vmax.f32 %v6248, 0.0
      %v6265 = vmax.f32 %v6249, 0.0
      %v6266 = vmax.f32 %v6250, 0.0
      %v6267 = vmax.f32 %v6251, 0.0
      %v6268 = vmax.f32 %v6252, 0.0
      %v6269 = vmax.f32 %v6253, 0.0
      %6270 = vst.msk [vmem:[%s744] sm:$0xff] %vm4160, %v6254
      %6271 = vst.msk [vmem:[%s744 + $0x8] sm:$0xff] %vm4160, %v6255
      %6272 = vst.msk [vmem:[%s744 + $0x10] sm:$0xff] %vm4160, %v6256
      %6273 = vst.msk [vmem:[%s744 + $0x18] sm:$0xff] %vm4160, %v6257
      %6274 = vst.msk [vmem:[%s744 + $0x20] sm:$0xff] %vm4160, %v6258
      %6275 = vst.msk [vmem:[%s744 + $0x28] sm:$0xff] %vm4160, %v6259
      %6276 = vst.msk [vmem:[%s744 + $0x30] sm:$0xff] %vm4160, %v6260
      %6277 = vst.msk [vmem:[%s744 + $0x38] sm:$0xff] %vm4160, %v6261
      %6278 = vst.msk [vmem:[%s744 + $0x40] sm:$0xff] %vm4160, %v6262
      %6279 = vst.msk [vmem:[%s744 + $0x48] sm:$0xff] %vm4160, %v6263
      %6280 = vst.msk [vmem:[%s744 + $0x50] sm:$0xff] %vm4160, %v6264
      %6281 = vst.msk [vmem:[%s744 + $0x58] sm:$0xff] %vm4160, %v6265
      %6282 = vst.msk [vmem:[%s744 + $0x60] sm:$0xff] %vm4160, %v6266
      %6283 = vst.msk [vmem:[%s744 + $0x68] sm:$0xff] %vm4160, %v6267
      %6284 = vst.msk [vmem:[%s744 + $0x70] sm:$0xff] %vm4160, %v6268
      %6285 = vst.msk [vmem:[%s744 + $0x78] sm:$0xff] %vm4160, %v6269
      %s6286 = smul.u32 8, %s28
      %p6287 = scmp.lt.s32.totalorder %s27, 1
      %s6288 = scalar_select %p6287, %s27, 1
      %p6289 = scmp.lt.s32.totalorder %s6286, 15
      %s6290 = scalar_select %p6289, %s6286, 15
      %s6291 = smul.addr %s6290, 2
      %s6292 = smul.addr %s6288, 32
      %s6293 = sadd.s32 %s6291, %s6292
      %s6294 = smul.addr %s6293, 8
      %s6295 = scalar_lea.vmem %s12, %s6294
      // Predicated region
      $region85: #{decoder_block_nhwc.1} parent=67 // pred_check
        %p6296 = pneg %p381
      $region86: #{decoder_block_nhwc.1} parent=67 // pred_check_branch
        %6298 = sbr.rel (%p6296) target = $region88
      $region87: #{decoder_block_nhwc.1} parent=67 // pred_region
        %s6299 = smul.u32 8, %s28
      $region88: #{decoder_block_nhwc.1} parent=67 // pred_fallthru
        _
    $region68: #{decoder_block_nhwc.1} parent=5 // pred_fallthru
      _
    %p6300 = scmp.le.s32.totalorder 2, %s18
    // Predicated region
    $region89: #{decoder_block_nhwc.1} parent=5 // pred_check
      %p6301 = pneg %p6300
    $region90: #{decoder_block_nhwc.1} parent=5 // pred_check_branch
      %6303 = sbr.rel (%p6301) target = $region92
    $region91: #{decoder_block_nhwc.1} parent=5 // pred_region
      %s6304 = ssub.s32 %s18, 2
      // Predicated region
      $region93: #{decoder_block_nhwc.1} parent=91 // pred_check
        %p6305 = pneg %p387
      $region94: #{decoder_block_nhwc.1} parent=91 // pred_check_branch
        %6307 = sbr.rel (%p6305) target = $region96
      $region95: #{decoder_block_nhwc.1} parent=91 // pred_region
        %s6308 = smul.u32 8, %s30
        %p6309 = scmp.lt.s32.totalorder %s29, 1
        %s6310 = scalar_select %p6309, %s29, 1
        %p6311 = scmp.lt.s32.totalorder %s6308, 15
        %s6312 = scalar_select %p6311, %s6308, 15
        %s6313 = smul.addr %s6312, 2
        %s6314 = smul.addr %s6310, 32
        %s6315 = sadd.s32 %s6313, %s6314
        %s6316 = smul.addr %s6315, 8
        %s6317 = scalar_lea.vmem %s12, %s6316
      $region96: #{decoder_block_nhwc.1} parent=91 // pred_fallthru
        _
    $region92: #{decoder_block_nhwc.1} parent=5 // pred_fallthru
      _
  $region6: #{decoder_block_nhwc.1} parent=0 // loop_footer
    %s22 = sadd.s32 1, %s18
  $region7: #{decoder_block_nhwc.1} parent=0 // loop_footer_branch
    %17 = sbr.rel target = $region3
  $region8: #{decoder_block_nhwc.1} parent=0 // loop_exit
    _

</llo_original>
